<compile_context>
chip_gen: v6e
topology: v6e:2x2x1
jax: 0.10.0
libtpu: 0.0.40
codegen_flags: <defaults>
</compile_context>

<pallas_src>
import jax
import jax.numpy as jnp
from jax.experimental import pallas as pl
from jax.experimental.pallas import tpu as pltpu

# ---- problem sizes (small, consistent with the module) ----------------------
N = 16              # nodes per graph
INPUT_DIM = 8       # gene-expression feature dim
HIDDEN = 16         # GATConv hidden dim per head
HEADS = 2           # attention heads
GAT_Z = 4           # latent dim (mu / logvar each GAT_Z wide)

ATT_SLOPE = 0.2     # GATConv internal LeakyReLU slope (PyG default)
ACT_SLOPE = 0.01    # F.leaky_relu default slope between layers
NEG_INF = -1e30

# extended weight width per layer: [xh for all heads | a_src logits | a_dst logits]
EXT = HEADS * HIDDEN + 2 * HEADS            # 36

# ---- parameter-slab layout (row offsets 8-aligned; lane width 128) ----------
ROW_W1, ROW_B1 = 0, 8          # w1_ext:  8 rows, b1: 1 row
ROW_W2, ROW_B2 = 16, 48        # w2_ext: 32 rows, b2: 1 row
ROW_W3, ROW_B3 = 56, 88        # w3_ext: 32 rows, b3: 1 row
ROW_WFC, ROW_BFC = 96, 104     # wfc^T:  8 rows, bfc^T: 8 rows (stored as a column)
SLAB_ROWS, SLAB_COLS = 112, 128

GRAPHS_PER_BLOCK = 8           # G: graphs processed per grid step


# ---- kernel ------------------------------------------------------------------
def _make_kernel(G):
    def kernel(x_ref, bias_ref, params_ref, out_ref):
        # hoisted once (JAX does not CSE broadcast_in_dim)
        zeros_nh = jnp.zeros((N, HIDDEN), jnp.float32)

        def gat_layer(h_all, w_row, w_rows, b_row, b_cols, concat):
            # read per-layer weights straight off the ref (static slices)
            w_ext = params_ref[w_row:w_row + w_rows, :EXT]            # [Fin, 36]
            bias_row = params_ref[b_row:b_row + 1, :b_cols]           # [1, b_cols]

            # one MXU push: projection + both attention logits for ALL G graphs
            proj = jnp.dot(h_all, w_ext,
                           preferred_element_type=jnp.float32)        # [G*N, 36]

            outs = []
            for g in range(G):
                pg = proj[g * N:(g + 1) * N, :]                        # [N, 36]
                xh = pg[:, :HEADS * HIDDEN]                            # [N, 32]
                a_s = pg[:, HEADS * HIDDEN:HEADS * HIDDEN + HEADS].T   # [HEADS, N]
                a_d = pg[:, HEADS * HIDDEN + HEADS:EXT]                # [N, HEADS]
                adj_b = bias_ref[g * N:(g + 1) * N, :]                 # [N, N] additive mask

                # heads stacked on sublanes: rows [0:N] = head0, [N:2N] = head1
                src = jnp.concatenate(
                    [jnp.broadcast_to(a_s[0:1, :], (N, N)),
                     jnp.broadcast_to(a_s[1:2, :], (N, N))], axis=0)   # [2N, N]
                dst = jnp.concatenate([a_d[:, 0:1], a_d[:, 1:2]],
                                      axis=0)                          # [2N, 1]
                e = src + dst                      # e[h*N+i, j] = a_src[j,h] + a_dst[i,h]
                e = jnp.where(e > 0, e, ATT_SLOPE * e)                 # GAT leaky-relu (0.2)
                e = e + jnp.concatenate([adj_b, adj_b], axis=0)        # -1e30 on non-edges
                # masked softmax over sources j; self-loops keep every row non-empty
                e = e - jnp.max(e, axis=1, keepdims=True)
                p = jnp.exp(e)
                alpha = p * pl.reciprocal(jnp.sum(p, axis=1, keepdims=True),
                                          approx=True)                 # [2N, N]

                # fused per-head aggregation: one matmul for both heads
                a_cat = jnp.concatenate([alpha[:N, :], alpha[N:, :]], axis=1)   # [N, 2N]
                if concat:
                    x_blk = jnp.concatenate(
                        [jnp.concatenate([xh[:, :HIDDEN], zeros_nh], axis=1),
                         jnp.concatenate([zeros_nh, xh[:, HIDDEN:]], axis=1)],
                        axis=0)                                        # [2N, 2H] block-diagonal
                    outs.append(jnp.dot(a_cat, x_blk,
                                        preferred_element_type=jnp.float32))    # [N, 2H]
                else:
                    x_stk = jnp.concatenate([xh[:, :HIDDEN], xh[:, HIDDEN:]],
                                            axis=0)                    # [2N, H]
                    outs.append(jnp.dot(a_cat, x_stk,
                                        preferred_element_type=jnp.float32)
                                * (1.0 / HEADS))                       # [N, H] head-mean
            return jnp.concatenate(outs, axis=0) + bias_row            # [G*N, b_cols]

        h = x_ref[...]                                                  # [G*N, INPUT_DIM]
        h = gat_layer(h, ROW_W1, INPUT_DIM, ROW_B1, HEADS * HIDDEN, True)
        h = jnp.where(h > 0, h, ACT_SLOPE * h)
        h = gat_layer(h, ROW_W2, HEADS * HIDDEN, ROW_B2, HEADS * HIDDEN, True)
        h = jnp.where(h > 0, h, ACT_SLOPE * h)
        h = gat_layer(h, ROW_W3, HEADS * HIDDEN, ROW_B3, HIDDEN, False)

        # final Linear computed transposed -> one lane-dense (8, G*N) unmasked store
        wfc_t = params_ref[ROW_WFC:ROW_WFC + 2 * GAT_Z, :HIDDEN]        # [8, 16]
        bfc_t = params_ref[ROW_BFC:ROW_BFC + 2 * GAT_Z, 0:1]            # [8, 1]
        z_t = jnp.dot(wfc_t, h.T, preferred_element_type=jnp.float32) + bfc_t   # [8, G*N]
        out_ref[...] = jnp.concatenate(
            [z_t[:GAT_Z, :], jnp.exp(z_t[GAT_Z:, :])], axis=0)          # [mu ; var]
    return kernel


# ---- host-side parameter handling -------------------------------------------
def _xavier(key, shape):
    fan_in, fan_out = shape[0], shape[1]
    limit = jnp.sqrt(6.0 / (fan_in + fan_out))
    return jax.random.uniform(key, shape, jnp.float32, -limit, limit)


def init_params(key):
    ks = jax.random.split(key, 12)
    p = {}
    # layer 1: in=INPUT_DIM, out=HIDDEN per head, concat=True
    p["w1"] = _xavier(ks[0], (INPUT_DIM, HEADS * HIDDEN))
    p["as1"] = _xavier(ks[1], (HEADS, HIDDEN))
    p["ad1"] = _xavier(ks[2], (HEADS, HIDDEN))
    p["b1"] = jnp.zeros((1, HEADS * HIDDEN), jnp.float32)
    # layer 2: in=HEADS*HIDDEN, concat=True
    p["w2"] = _xavier(ks[3], (HEADS * HIDDEN, HEADS * HIDDEN))
    p["as2"] = _xavier(ks[4], (HEADS, HIDDEN))
    p["ad2"] = _xavier(ks[5], (HEADS, HIDDEN))
    p["b2"] = jnp.zeros((1, HEADS * HIDDEN), jnp.float32)
    # layer 3: in=HEADS*HIDDEN, concat=False (mean over heads)
    p["w3"] = _xavier(ks[6], (HEADS * HIDDEN, HEADS * HIDDEN))
    p["as3"] = _xavier(ks[7], (HEADS, HIDDEN))
    p["ad3"] = _xavier(ks[8], (HEADS, HIDDEN))
    p["b3"] = jnp.zeros((1, HIDDEN), jnp.float32)
    # final Linear(HIDDEN, 2*GAT_Z); stored naturally, transposed when packing
    p["wfc"] = _xavier(ks[9], (HIDDEN, 2 * GAT_Z))
    p["bfc"] = jnp.zeros((1, 2 * GAT_Z), jnp.float32)
    return p


def _fold_att(W, att_src, att_dst):
    """Append per-head attention projections to W (exact algebraic fold)."""
    fin = W.shape[0]
    Wr = W.reshape(fin, HEADS, HIDDEN)
    a_s_proj = jnp.einsum("fhd,hd->fh", Wr, att_src)   # [Fin, HEADS]
    a_d_proj = jnp.einsum("fhd,hd->fh", Wr, att_dst)   # [Fin, HEADS]
    return jnp.concatenate([W, a_s_proj, a_d_proj], axis=1)   # [Fin, EXT]


def pack_params(p):
    """Pack all parameters into one [112, 128] f32 slab (single DMA)."""
    slab = jnp.zeros((SLAB_ROWS, SLAB_COLS), jnp.float32)

    def put(s, row, arr):
        return s.at[row:row + arr.shape[0], :arr.shape[1]].set(arr)

    slab = put(slab, ROW_W1, _fold_att(p["w1"], p["as1"], p["ad1"]))
    slab = put(slab, ROW_B1, p["b1"])
    slab = put(slab, ROW_W2, _fold_att(p["w2"], p["as2"], p["ad2"]))
    slab = put(slab, ROW_B2, p["b2"])
    slab = put(slab, ROW_W3, _fold_att(p["w3"], p["as3"], p["ad3"]))
    slab = put(slab, ROW_B3, p["b3"])
    slab = put(slab, ROW_WFC, p["wfc"].T)      # [2*GAT_Z, HIDDEN]
    slab = put(slab, ROW_BFC, p["bfc"].T)      # [2*GAT_Z, 1]
    return slab


def edge_index_to_att_bias(edge_index, num_nodes):
    """Additive attention bias: 0 on edges (adj[dst, src]=1) + self-loops,
    -1e30 elsewhere. Duplicate edges collapse to a single entry."""
    src, dst = edge_index[0], edge_index[1]
    adj = jnp.zeros((num_nodes, num_nodes), jnp.float32)
    adj = adj.at[dst, src].set(1.0)
    diag = jnp.arange(num_nodes)
    adj = adj.at[diag, diag].set(1.0)
    return jnp.where(adj > 0, 0.0, NEG_INF)


def _cost_estimate(batch):
    per_graph_flops = (
        2 * N * INPUT_DIM * EXT                    # layer-1 projection
        + 2 * N * (2 * N) * (HEADS * HIDDEN)       # layer-1 aggregation
        + 2 * N * (HEADS * HIDDEN) * EXT           # layer-2 projection
        + 2 * N * (2 * N) * (HEADS * HIDDEN)       # layer-2 aggregation
        + 2 * N * (HEADS * HIDDEN) * EXT           # layer-3 projection
        + 2 * N * (2 * N) * HIDDEN                 # layer-3 aggregation
        + 2 * N * HIDDEN * (2 * GAT_Z))            # final FC
    per_graph_transc = 3 * (2 * N) * N + 3 * (2 * N) + N * GAT_Z
    bytes_accessed = 4 * (batch * N * INPUT_DIM + batch * N * N
                          + SLAB_ROWS * SLAB_COLS + 2 * GAT_Z * batch * N)
    return pl.CostEstimate(flops=batch * per_graph_flops,
                           transcendentals=batch * per_graph_transc,
                           bytes_accessed=bytes_accessed)


def gat_encoder_batched(x, att_bias, params, *, graphs_per_block=GRAPHS_PER_BLOCK):
    """x: [B, N, INPUT_DIM]; att_bias: [B, N, N] additive mask.
    Returns (mu [B, N, GAT_Z], var [B, N, GAT_Z])."""
    B = x.shape[0]
    assert x.shape == (B, N, INPUT_DIM) and att_bias.shape == (B, N, N)
    assert B % graphs_per_block == 0
    G = graphs_per_block

    slab = pack_params(params)
    x_flat = x.reshape(B * N, INPUT_DIM).astype(jnp.float32)
    bias_flat = att_bias.reshape(B * N, N).astype(jnp.float32)

    z_t = pl.pallas_call(
        _make_kernel(G),
        out_shape=jax.ShapeDtypeStruct((2 * GAT_Z, B * N), jnp.float32),
        grid=(B // G,),
        in_specs=[
            pl.BlockSpec((G * N, INPUT_DIM), lambda b: (b, 0)),
            pl.BlockSpec((G * N, N), lambda b: (b, 0)),
            pl.BlockSpec((SLAB_ROWS, SLAB_COLS), lambda b: (0, 0)),  # VMEM-resident, 1 DMA
        ],
        out_specs=pl.BlockSpec((2 * GAT_Z, G * N), lambda b: (0, b)),
        compiler_params=pltpu.CompilerParams(dimension_semantics=("parallel",)),
        cost_estimate=_cost_estimate(B),
    )(x_flat, bias_flat, slab)

    # wrapper-side layout plumbing (free): [8, B*N] -> [B, N, 8] -> split
    z = z_t.T.reshape(B, N, 2 * GAT_Z)
    return z[..., :GAT_Z], z[..., GAT_Z:]


if __name__ == "__main__":
    key = jax.random.PRNGKey(0)
    k_x, k_p, k_e = jax.random.split(key, 3)

    B = 16  # batch of graphs (2 grid steps of 8 graphs each)

    # node features (gene expression), [B, N, INPUT_DIM]
    x = jax.random.normal(k_x, (B, N, INPUT_DIM), jnp.float32)

    # per-graph structure: bidirectional ring + a few random chords
    idx = jnp.arange(N)
    ring_src = jnp.concatenate([idx, (idx + 1) % N])
    ring_dst = jnp.concatenate([(idx + 1) % N, idx])
    edge_keys = jax.random.split(k_e, B)
    biases = []
    for b in range(B):
        rand_src = jax.random.randint(edge_keys[b], (8,), 0, N)
        rand_dst = (rand_src + 5) % N
        edge_index = jnp.stack([jnp.concatenate([ring_src, rand_src]),
                                jnp.concatenate([ring_dst, rand_dst])]).astype(jnp.int32)
        biases.append(edge_index_to_att_bias(edge_index, N))
    att_bias = jnp.stack(biases)   # [B, N, N]

    params = init_params(k_p)

    mu, var = gat_encoder_batched(x, att_bias, params)
    jax.block_until_ready((mu, var))
    assert mu.shape == (B, N, GAT_Z) and var.shape == (B, N, GAT_Z)
    assert bool(jnp.all(jnp.isfinite(mu)))
    assert bool(jnp.all(var > 0))
    print("KERNEL_OK")
</pallas_src>

<mosaic_0001>
module attributes {stable_mosaic.version = 11 : i64} {
  func.func @kernel(%arg0: i32, %arg1: memref<128x8xf32, #tpu.memory_space<vmem>>, %arg2: memref<128x16xf32, #tpu.memory_space<vmem>>, %arg3: memref<112x128xf32, #tpu.memory_space<vmem>>, %arg4: memref<8x128xf32, #tpu.memory_space<vmem>>) attributes {dimension_semantics = [#tpu.dimension_semantics<parallel>], iteration_bounds = array<i64: 2>, scalar_prefetch = 0 : i64, scratch_operands = 0 : i64, tpu.core_type = #tpu.core_type<tc>, window_params = [{transform_indices = @transform_0, window_bounds = array<i64: 128, 8>}, {transform_indices = @transform_1, window_bounds = array<i64: 128, 16>}, {pipeline_mode = #tpu.pipeline_mode<synchronous>, transform_indices = @transform_2, window_bounds = array<i64: 112, 128>}, {transform_indices = @transform_3, window_bounds = array<i64: 8, 128>}]} {
    %cst = arith.constant 0.000000e+00 : f32
    %0 = vector.broadcast %cst : f32 to vector<16x16xf32>
    %c0 = arith.constant 0 : index
    %c0_0 = arith.constant 0 : index
    %1 = vector.load %arg1[%c0, %c0_0] : memref<128x8xf32, #tpu.memory_space<vmem>>, vector<128x8xf32>
    %c0_1 = arith.constant 0 : index
    %c0_2 = arith.constant 0 : index
    %2 = vector.load %arg3[%c0_1, %c0_2] : memref<112x128xf32, #tpu.memory_space<vmem>>, vector<8x36xf32>
    %c8 = arith.constant 8 : index
    %c0_3 = arith.constant 0 : index
    %3 = vector.load %arg3[%c8, %c0_3] : memref<112x128xf32, #tpu.memory_space<vmem>>, vector<1x32xf32>
    %cst_4 = arith.constant dense<0.000000e+00> : vector<128x36xf32>
    %4 = tpu.matmul %1, %2, %cst_4 {dimension_numbers = #tpu.dot_dimension_numbers<[1], [0], [0], [1], [0, 0, 1, 1], [], []>} : vector<128x8xf32>, vector<8x36xf32>, vector<128x36xf32> -> vector<128x36xf32>
    %5 = vector.extract_strided_slice %4 {offsets = [0, 0], sizes = [16, 36], strides = [1, 1]} : vector<128x36xf32> to vector<16x36xf32>
    %6 = vector.extract_strided_slice %5 {offsets = [0, 0], sizes = [16, 32], strides = [1, 1]} : vector<16x36xf32> to vector<16x32xf32>
    %7 = vector.extract_strided_slice %5 {offsets = [0, 32], sizes = [16, 2], strides = [1, 1]} : vector<16x36xf32> to vector<16x2xf32>
    %8 = tpu.transpose %7, [1, 0] : vector<16x2xf32> -> vector<2x16xf32>
    %9 = vector.extract_strided_slice %5 {offsets = [0, 34], sizes = [16, 2], strides = [1, 1]} : vector<16x36xf32> to vector<16x2xf32>
    %c0_5 = arith.constant 0 : index
    %c0_6 = arith.constant 0 : index
    %10 = vector.load %arg2[%c0_5, %c0_6] : memref<128x16xf32, #tpu.memory_space<vmem>>, vector<16x16xf32>
    %11 = vector.extract_strided_slice %8 {offsets = [0, 0], sizes = [1, 16], strides = [1, 1]} : vector<2x16xf32> to vector<1x16xf32>
    %12 = vector.shape_cast %11 : vector<1x16xf32> to vector<1x16xf32>
    %13 = vector.broadcast %12 : vector<1x16xf32> to vector<16x16xf32>
    %14 = vector.extract_strided_slice %8 {offsets = [1, 0], sizes = [1, 16], strides = [1, 1]} : vector<2x16xf32> to vector<1x16xf32>
    %15 = vector.shape_cast %14 : vector<1x16xf32> to vector<1x16xf32>
    %16 = vector.broadcast %15 : vector<1x16xf32> to vector<16x16xf32>
    %17 = tpu.concatenate %13, %16 in 0 : vector<16x16xf32>, vector<16x16xf32> -> vector<32x16xf32>
    %18 = vector.extract_strided_slice %9 {offsets = [0, 0], sizes = [16, 1], strides = [1, 1]} : vector<16x2xf32> to vector<16x1xf32>
    %19 = vector.extract_strided_slice %9 {offsets = [0, 1], sizes = [16, 1], strides = [1, 1]} : vector<16x2xf32> to vector<16x1xf32>
    %20 = tpu.concatenate %18, %19 in 0 : vector<16x1xf32>, vector<16x1xf32> -> vector<32x1xf32>
    %21 = vector.broadcast %20 : vector<32x1xf32> to vector<32x16xf32>
    %22 = arith.addf %17, %21 : vector<32x16xf32>
    %cst_7 = arith.constant 0.000000e+00 : f32
    %23 = vector.broadcast %cst_7 : f32 to vector<32x16xf32>
    %24 = arith.cmpf ogt, %22, %23 : vector<32x16xf32>
    %cst_8 = arith.constant 2.000000e-01 : f32
    %25 = vector.broadcast %cst_8 : f32 to vector<32x16xf32>
    %26 = arith.mulf %25, %22 : vector<32x16xf32>
    %27 = arith.select %24, %22, %26 : vector<32x16xi1>, vector<32x16xf32>
    %28 = tpu.concatenate %10, %10 in 0 : vector<16x16xf32>, vector<16x16xf32> -> vector<32x16xf32>
    %29 = arith.addf %27, %28 : vector<32x16xf32>
    %cst_9 = arith.constant dense<0xFF800000> : vector<32xf32>
    %30 = vector.multi_reduction <maximumf>, %29, %cst_9 [1] : vector<32x16xf32> to vector<32xf32>
    %31 = vector.shape_cast %30 : vector<32xf32> to vector<32x1xf32>
    %32 = vector.broadcast %31 : vector<32x1xf32> to vector<32x16xf32>
    %33 = arith.subf %29, %32 : vector<32x16xf32>
    %34 = math.exp %33 : vector<32x16xf32>
    %cst_10 = arith.constant dense<0.000000e+00> : vector<32xf32>
    %35 = vector.multi_reduction <add>, %34, %cst_10 [1] : vector<32x16xf32> to vector<32xf32>
    %36 = vector.shape_cast %35 : vector<32xf32> to vector<32x1xf32>
    %37 = tpu.reciprocal %36 {approx = true} : vector<32x1xf32> -> vector<32x1xf32>
    %38 = vector.broadcast %37 : vector<32x1xf32> to vector<32x16xf32>
    %39 = arith.mulf %34, %38 : vector<32x16xf32>
    %40 = vector.extract_strided_slice %39 {offsets = [0, 0], sizes = [16, 16], strides = [1, 1]} : vector<32x16xf32> to vector<16x16xf32>
    %41 = vector.extract_strided_slice %39 {offsets = [16, 0], sizes = [16, 16], strides = [1, 1]} : vector<32x16xf32> to vector<16x16xf32>
    %42 = tpu.concatenate %40, %41 in 1 : vector<16x16xf32>, vector<16x16xf32> -> vector<16x32xf32>
    %43 = vector.extract_strided_slice %6 {offsets = [0, 0], sizes = [16, 16], strides = [1, 1]} : vector<16x32xf32> to vector<16x16xf32>
    %44 = tpu.concatenate %43, %0 in 1 : vector<16x16xf32>, vector<16x16xf32> -> vector<16x32xf32>
    %45 = vector.extract_strided_slice %6 {offsets = [0, 16], sizes = [16, 16], strides = [1, 1]} : vector<16x32xf32> to vector<16x16xf32>
    %46 = tpu.concatenate %0, %45 in 1 : vector<16x16xf32>, vector<16x16xf32> -> vector<16x32xf32>
    %47 = tpu.concatenate %44, %46 in 0 : vector<16x32xf32>, vector<16x32xf32> -> vector<32x32xf32>
    %cst_11 = arith.constant dense<0.000000e+00> : vector<16x32xf32>
    %48 = tpu.matmul %42, %47, %cst_11 {dimension_numbers = #tpu.dot_dimension_numbers<[1], [0], [0], [1], [0, 0, 1, 1], [], []>} : vector<16x32xf32>, vector<32x32xf32>, vector<16x32xf32> -> vector<16x32xf32>
    %49 = vector.extract_strided_slice %4 {offsets = [16, 0], sizes = [16, 36], strides = [1, 1]} : vector<128x36xf32> to vector<16x36xf32>
    %50 = vector.extract_strided_slice %49 {offsets = [0, 0], sizes = [16, 32], strides = [1, 1]} : vector<16x36xf32> to vector<16x32xf32>
    %51 = vector.extract_strided_slice %49 {offsets = [0, 32], sizes = [16, 2], strides = [1, 1]} : vector<16x36xf32> to vector<16x2xf32>
    %52 = tpu.transpose %51, [1, 0] : vector<16x2xf32> -> vector<2x16xf32>
    %53 = vector.extract_strided_slice %49 {offsets = [0, 34], sizes = [16, 2], strides = [1, 1]} : vector<16x36xf32> to vector<16x2xf32>
    %c16 = arith.constant 16 : index
    %c0_12 = arith.constant 0 : index
    %54 = vector.load %arg2[%c16, %c0_12] : memref<128x16xf32, #tpu.memory_space<vmem>>, vector<16x16xf32>
    %55 = vector.extract_strided_slice %52 {offsets = [0, 0], sizes = [1, 16], strides = [1, 1]} : vector<2x16xf32> to vector<1x16xf32>
    %56 = vector.shape_cast %55 : vector<1x16xf32> to vector<1x16xf32>
    %57 = vector.broadcast %56 : vector<1x16xf32> to vector<16x16xf32>
    %58 = vector.extract_strided_slice %52 {offsets = [1, 0], sizes = [1, 16], strides = [1, 1]} : vector<2x16xf32> to vector<1x16xf32>
    %59 = vector.shape_cast %58 : vector<1x16xf32> to vector<1x16xf32>
    %60 = vector.broadcast %59 : vector<1x16xf32> to vector<16x16xf32>
    %61 = tpu.concatenate %57, %60 in 0 : vector<16x16xf32>, vector<16x16xf32> -> vector<32x16xf32>
    %62 = vector.extract_strided_slice %53 {offsets = [0, 0], sizes = [16, 1], strides = [1, 1]} : vector<16x2xf32> to vector<16x1xf32>
    %63 = vector.extract_strided_slice %53 {offsets = [0, 1], sizes = [16, 1], strides = [1, 1]} : vector<16x2xf32> to vector<16x1xf32>
    %64 = tpu.concatenate %62, %63 in 0 : vector<16x1xf32>, vector<16x1xf32> -> vector<32x1xf32>
    %65 = vector.broadcast %64 : vector<32x1xf32> to vector<32x16xf32>
    %66 = arith.addf %61, %65 : vector<32x16xf32>
    %cst_13 = arith.constant 0.000000e+00 : f32
    %67 = vector.broadcast %cst_13 : f32 to vector<32x16xf32>
    %68 = arith.cmpf ogt, %66, %67 : vector<32x16xf32>
    %cst_14 = arith.constant 2.000000e-01 : f32
    %69 = vector.broadcast %cst_14 : f32 to vector<32x16xf32>
    %70 = arith.mulf %69, %66 : vector<32x16xf32>
    %71 = arith.select %68, %66, %70 : vector<32x16xi1>, vector<32x16xf32>
    %72 = tpu.concatenate %54, %54 in 0 : vector<16x16xf32>, vector<16x16xf32> -> vector<32x16xf32>
    %73 = arith.addf %71, %72 : vector<32x16xf32>
    %cst_15 = arith.constant dense<0xFF800000> : vector<32xf32>
    %74 = vector.multi_reduction <maximumf>, %73, %cst_15 [1] : vector<32x16xf32> to vector<32xf32>
    %75 = vector.shape_cast %74 : vector<32xf32> to vector<32x1xf32>
    %76 = vector.broadcast %75 : vector<32x1xf32> to vector<32x16xf32>
    %77 = arith.subf %73, %76 : vector<32x16xf32>
    %78 = math.exp %77 : vector<32x16xf32>
    %cst_16 = arith.constant dense<0.000000e+00> : vector<32xf32>
    %79 = vector.multi_reduction <add>, %78, %cst_16 [1] : vector<32x16xf32> to vector<32xf32>
    %80 = vector.shape_cast %79 : vector<32xf32> to vector<32x1xf32>
    %81 = tpu.reciprocal %80 {approx = true} : vector<32x1xf32> -> vector<32x1xf32>
    %82 = vector.broadcast %81 : vector<32x1xf32> to vector<32x16xf32>
    %83 = arith.mulf %78, %82 : vector<32x16xf32>
    %84 = vector.extract_strided_slice %83 {offsets = [0, 0], sizes = [16, 16], strides = [1, 1]} : vector<32x16xf32> to vector<16x16xf32>
    %85 = vector.extract_strided_slice %83 {offsets = [16, 0], sizes = [16, 16], strides = [1, 1]} : vector<32x16xf32> to vector<16x16xf32>
    %86 = tpu.concatenate %84, %85 in 1 : vector<16x16xf32>, vector<16x16xf32> -> vector<16x32xf32>
    %87 = vector.extract_strided_slice %50 {offsets = [0, 0], sizes = [16, 16], strides = [1, 1]} : vector<16x32xf32> to vector<16x16xf32>
    %88 = tpu.concatenate %87, %0 in 1 : vector<16x16xf32>, vector<16x16xf32> -> vector<16x32xf32>
    %89 = vector.extract_strided_slice %50 {offsets = [0, 16], sizes = [16, 16], strides = [1, 1]} : vector<16x32xf32> to vector<16x16xf32>
    %90 = tpu.concatenate %0, %89 in 1 : vector<16x16xf32>, vector<16x16xf32> -> vector<16x32xf32>
    %91 = tpu.concatenate %88, %90 in 0 : vector<16x32xf32>, vector<16x32xf32> -> vector<32x32xf32>
    %cst_17 = arith.constant dense<0.000000e+00> : vector<16x32xf32>
    %92 = tpu.matmul %86, %91, %cst_17 {dimension_numbers = #tpu.dot_dimension_numbers<[1], [0], [0], [1], [0, 0, 1, 1], [], []>} : vector<16x32xf32>, vector<32x32xf32>, vector<16x32xf32> -> vector<16x32xf32>
    %93 = vector.extract_strided_slice %4 {offsets = [32, 0], sizes = [16, 36], strides = [1, 1]} : vector<128x36xf32> to vector<16x36xf32>
    %94 = vector.extract_strided_slice %93 {offsets = [0, 0], sizes = [16, 32], strides = [1, 1]} : vector<16x36xf32> to vector<16x32xf32>
    %95 = vector.extract_strided_slice %93 {offsets = [0, 32], sizes = [16, 2], strides = [1, 1]} : vector<16x36xf32> to vector<16x2xf32>
    %96 = tpu.transpose %95, [1, 0] : vector<16x2xf32> -> vector<2x16xf32>
    %97 = vector.extract_strided_slice %93 {offsets = [0, 34], sizes = [16, 2], strides = [1, 1]} : vector<16x36xf32> to vector<16x2xf32>
    %c32 = arith.constant 32 : index
    %c0_18 = arith.constant 0 : index
    %98 = vector.load %arg2[%c32, %c0_18] : memref<128x16xf32, #tpu.memory_space<vmem>>, vector<16x16xf32>
    %99 = vector.extract_strided_slice %96 {offsets = [0, 0], sizes = [1, 16], strides = [1, 1]} : vector<2x16xf32> to vector<1x16xf32>
    %100 = vector.shape_cast %99 : vector<1x16xf32> to vector<1x16xf32>
    %101 = vector.broadcast %100 : vector<1x16xf32> to vector<16x16xf32>
    %102 = vector.extract_strided_slice %96 {offsets = [1, 0], sizes = [1, 16], strides = [1, 1]} : vector<2x16xf32> to vector<1x16xf32>
    %103 = vector.shape_cast %102 : vector<1x16xf32> to vector<1x16xf32>
    %104 = vector.broadcast %103 : vector<1x16xf32> to vector<16x16xf32>
    %105 = tpu.concatenate %101, %104 in 0 : vector<16x16xf32>, vector<16x16xf32> -> vector<32x16xf32>
    %106 = vector.extract_strided_slice %97 {offsets = [0, 0], sizes = [16, 1], strides = [1, 1]} : vector<16x2xf32> to vector<16x1xf32>
    %107 = vector.extract_strided_slice %97 {offsets = [0, 1], sizes = [16, 1], strides = [1, 1]} : vector<16x2xf32> to vector<16x1xf32>
    %108 = tpu.concatenate %106, %107 in 0 : vector<16x1xf32>, vector<16x1xf32> -> vector<32x1xf32>
    %109 = vector.broadcast %108 : vector<32x1xf32> to vector<32x16xf32>
    %110 = arith.addf %105, %109 : vector<32x16xf32>
    %cst_19 = arith.constant 0.000000e+00 : f32
    %111 = vector.broadcast %cst_19 : f32 to vector<32x16xf32>
    %112 = arith.cmpf ogt, %110, %111 : vector<32x16xf32>
    %cst_20 = arith.constant 2.000000e-01 : f32
    %113 = vector.broadcast %cst_20 : f32 to vector<32x16xf32>
    %114 = arith.mulf %113, %110 : vector<32x16xf32>
    %115 = arith.select %112, %110, %114 : vector<32x16xi1>, vector<32x16xf32>
    %116 = tpu.concatenate %98, %98 in 0 : vector<16x16xf32>, vector<16x16xf32> -> vector<32x16xf32>
    %117 = arith.addf %115, %116 : vector<32x16xf32>
    %cst_21 = arith.constant dense<0xFF800000> : vector<32xf32>
    %118 = vector.multi_reduction <maximumf>, %117, %cst_21 [1] : vector<32x16xf32> to vector<32xf32>
    %119 = vector.shape_cast %118 : vector<32xf32> to vector<32x1xf32>
    %120 = vector.broadcast %119 : vector<32x1xf32> to vector<32x16xf32>
    %121 = arith.subf %117, %120 : vector<32x16xf32>
    %122 = math.exp %121 : vector<32x16xf32>
    %cst_22 = arith.constant dense<0.000000e+00> : vector<32xf32>
    %123 = vector.multi_reduction <add>, %122, %cst_22 [1] : vector<32x16xf32> to vector<32xf32>
    %124 = vector.shape_cast %123 : vector<32xf32> to vector<32x1xf32>
    %125 = tpu.reciprocal %124 {approx = true} : vector<32x1xf32> -> vector<32x1xf32>
    %126 = vector.broadcast %125 : vector<32x1xf32> to vector<32x16xf32>
    %127 = arith.mulf %122, %126 : vector<32x16xf32>
    %128 = vector.extract_strided_slice %127 {offsets = [0, 0], sizes = [16, 16], strides = [1, 1]} : vector<32x16xf32> to vector<16x16xf32>
    %129 = vector.extract_strided_slice %127 {offsets = [16, 0], sizes = [16, 16], strides = [1, 1]} : vector<32x16xf32> to vector<16x16xf32>
    %130 = tpu.concatenate %128, %129 in 1 : vector<16x16xf32>, vector<16x16xf32> -> vector<16x32xf32>
    %131 = vector.extract_strided_slice %94 {offsets = [0, 0], sizes = [16, 16], strides = [1, 1]} : vector<16x32xf32> to vector<16x16xf32>
    %132 = tpu.concatenate %131, %0 in 1 : vector<16x16xf32>, vector<16x16xf32> -> vector<16x32xf32>
    %133 = vector.extract_strided_slice %94 {offsets = [0, 16], sizes = [16, 16], strides = [1, 1]} : vector<16x32xf32> to vector<16x16xf32>
    %134 = tpu.concatenate %0, %133 in 1 : vector<16x16xf32>, vector<16x16xf32> -> vector<16x32xf32>
    %135 = tpu.concatenate %132, %134 in 0 : vector<16x32xf32>, vector<16x32xf32> -> vector<32x32xf32>
    %cst_23 = arith.constant dense<0.000000e+00> : vector<16x32xf32>
    %136 = tpu.matmul %130, %135, %cst_23 {dimension_numbers = #tpu.dot_dimension_numbers<[1], [0], [0], [1], [0, 0, 1, 1], [], []>} : vector<16x32xf32>, vector<32x32xf32>, vector<16x32xf32> -> vector<16x32xf32>
    %137 = vector.extract_strided_slice %4 {offsets = [48, 0], sizes = [16, 36], strides = [1, 1]} : vector<128x36xf32> to vector<16x36xf32>
    %138 = vector.extract_strided_slice %137 {offsets = [0, 0], sizes = [16, 32], strides = [1, 1]} : vector<16x36xf32> to vector<16x32xf32>
    %139 = vector.extract_strided_slice %137 {offsets = [0, 32], sizes = [16, 2], strides = [1, 1]} : vector<16x36xf32> to vector<16x2xf32>
    %140 = tpu.transpose %139, [1, 0] : vector<16x2xf32> -> vector<2x16xf32>
    %141 = vector.extract_strided_slice %137 {offsets = [0, 34], sizes = [16, 2], strides = [1, 1]} : vector<16x36xf32> to vector<16x2xf32>
    %c48 = arith.constant 48 : index
    %c0_24 = arith.constant 0 : index
    %142 = vector.load %arg2[%c48, %c0_24] : memref<128x16xf32, #tpu.memory_space<vmem>>, vector<16x16xf32>
    %143 = vector.extract_strided_slice %140 {offsets = [0, 0], sizes = [1, 16], strides = [1, 1]} : vector<2x16xf32> to vector<1x16xf32>
    %144 = vector.shape_cast %143 : vector<1x16xf32> to vector<1x16xf32>
    %145 = vector.broadcast %144 : vector<1x16xf32> to vector<16x16xf32>
    %146 = vector.extract_strided_slice %140 {offsets = [1, 0], sizes = [1, 16], strides = [1, 1]} : vector<2x16xf32> to vector<1x16xf32>
    %147 = vector.shape_cast %146 : vector<1x16xf32> to vector<1x16xf32>
    %148 = vector.broadcast %147 : vector<1x16xf32> to vector<16x16xf32>
    %149 = tpu.concatenate %145, %148 in 0 : vector<16x16xf32>, vector<16x16xf32> -> vector<32x16xf32>
    %150 = vector.extract_strided_slice %141 {offsets = [0, 0], sizes = [16, 1], strides = [1, 1]} : vector<16x2xf32> to vector<16x1xf32>
    %151 = vector.extract_strided_slice %141 {offsets = [0, 1], sizes = [16, 1], strides = [1, 1]} : vector<16x2xf32> to vector<16x1xf32>
    %152 = tpu.concatenate %150, %151 in 0 : vector<16x1xf32>, vector<16x1xf32> -> vector<32x1xf32>
    %153 = vector.broadcast %152 : vector<32x1xf32> to vector<32x16xf32>
    %154 = arith.addf %149, %153 : vector<32x16xf32>
    %cst_25 = arith.constant 0.000000e+00 : f32
    %155 = vector.broadcast %cst_25 : f32 to vector<32x16xf32>
    %156 = arith.cmpf ogt, %154, %155 : vector<32x16xf32>
    %cst_26 = arith.constant 2.000000e-01 : f32
    %157 = vector.broadcast %cst_26 : f32 to vector<32x16xf32>
    %158 = arith.mulf %157, %154 : vector<32x16xf32>
    %159 = arith.select %156, %154, %158 : vector<32x16xi1>, vector<32x16xf32>
    %160 = tpu.concatenate %142, %142 in 0 : vector<16x16xf32>, vector<16x16xf32> -> vector<32x16xf32>
    %161 = arith.addf %159, %160 : vector<32x16xf32>
    %cst_27 = arith.constant dense<0xFF800000> : vector<32xf32>
    %162 = vector.multi_reduction <maximumf>, %161, %cst_27 [1] : vector<32x16xf32> to vector<32xf32>
    %163 = vector.shape_cast %162 : vector<32xf32> to vector<32x1xf32>
    %164 = vector.broadcast %163 : vector<32x1xf32> to vector<32x16xf32>
    %165 = arith.subf %161, %164 : vector<32x16xf32>
    %166 = math.exp %165 : vector<32x16xf32>
    %cst_28 = arith.constant dense<0.000000e+00> : vector<32xf32>
    %167 = vector.multi_reduction <add>, %166, %cst_28 [1] : vector<32x16xf32> to vector<32xf32>
    %168 = vector.shape_cast %167 : vector<32xf32> to vector<32x1xf32>
    %169 = tpu.reciprocal %168 {approx = true} : vector<32x1xf32> -> vector<32x1xf32>
    %170 = vector.broadcast %169 : vector<32x1xf32> to vector<32x16xf32>
    %171 = arith.mulf %166, %170 : vector<32x16xf32>
    %172 = vector.extract_strided_slice %171 {offsets = [0, 0], sizes = [16, 16], strides = [1, 1]} : vector<32x16xf32> to vector<16x16xf32>
    %173 = vector.extract_strided_slice %171 {offsets = [16, 0], sizes = [16, 16], strides = [1, 1]} : vector<32x16xf32> to vector<16x16xf32>
    %174 = tpu.concatenate %172, %173 in 1 : vector<16x16xf32>, vector<16x16xf32> -> vector<16x32xf32>
    %175 = vector.extract_strided_slice %138 {offsets = [0, 0], sizes = [16, 16], strides = [1, 1]} : vector<16x32xf32> to vector<16x16xf32>
    %176 = tpu.concatenate %175, %0 in 1 : vector<16x16xf32>, vector<16x16xf32> -> vector<16x32xf32>
    %177 = vector.extract_strided_slice %138 {offsets = [0, 16], sizes = [16, 16], strides = [1, 1]} : vector<16x32xf32> to vector<16x16xf32>
    %178 = tpu.concatenate %0, %177 in 1 : vector<16x16xf32>, vector<16x16xf32> -> vector<16x32xf32>
    %179 = tpu.concatenate %176, %178 in 0 : vector<16x32xf32>, vector<16x32xf32> -> vector<32x32xf32>
    %cst_29 = arith.constant dense<0.000000e+00> : vector<16x32xf32>
    %180 = tpu.matmul %174, %179, %cst_29 {dimension_numbers = #tpu.dot_dimension_numbers<[1], [0], [0], [1], [0, 0, 1, 1], [], []>} : vector<16x32xf32>, vector<32x32xf32>, vector<16x32xf32> -> vector<16x32xf32>
    %181 = vector.extract_strided_slice %4 {offsets = [64, 0], sizes = [16, 36], strides = [1, 1]} : vector<128x36xf32> to vector<16x36xf32>
    %182 = vector.extract_strided_slice %181 {offsets = [0, 0], sizes = [16, 32], strides = [1, 1]} : vector<16x36xf32> to vector<16x32xf32>
    %183 = vector.extract_strided_slice %181 {offsets = [0, 32], sizes = [16, 2], strides = [1, 1]} : vector<16x36xf32> to vector<16x2xf32>
    %184 = tpu.transpose %183, [1, 0] : vector<16x2xf32> -> vector<2x16xf32>
    %185 = vector.extract_strided_slice %181 {offsets = [0, 34], sizes = [16, 2], strides = [1, 1]} : vector<16x36xf32> to vector<16x2xf32>
    %c64 = arith.constant 64 : index
    %c0_30 = arith.constant 0 : index
    %186 = vector.load %arg2[%c64, %c0_30] : memref<128x16xf32, #tpu.memory_space<vmem>>, vector<16x16xf32>
    %187 = vector.extract_strided_slice %184 {offsets = [0, 0], sizes = [1, 16], strides = [1, 1]} : vector<2x16xf32> to vector<1x16xf32>
    %188 = vector.shape_cast %187 : vector<1x16xf32> to vector<1x16xf32>
    %189 = vector.broadcast %188 : vector<1x16xf32> to vector<16x16xf32>
    %190 = vector.extract_strided_slice %184 {offsets = [1, 0], sizes = [1, 16], strides = [1, 1]} : vector<2x16xf32> to vector<1x16xf32>
    %191 = vector.shape_cast %190 : vector<1x16xf32> to vector<1x16xf32>
    %192 = vector.broadcast %191 : vector<1x16xf32> to vector<16x16xf32>
    %193 = tpu.concatenate %189, %192 in 0 : vector<16x16xf32>, vector<16x16xf32> -> vector<32x16xf32>
    %194 = vector.extract_strided_slice %185 {offsets = [0, 0], sizes = [16, 1], strides = [1, 1]} : vector<16x2xf32> to vector<16x1xf32>
    %195 = vector.extract_strided_slice %185 {offsets = [0, 1], sizes = [16, 1], strides = [1, 1]} : vector<16x2xf32> to vector<16x1xf32>
    %196 = tpu.concatenate %194, %195 in 0 : vector<16x1xf32>, vector<16x1xf32> -> vector<32x1xf32>
    %197 = vector.broadcast %196 : vector<32x1xf32> to vector<32x16xf32>
    %198 = arith.addf %193, %197 : vector<32x16xf32>
    %cst_31 = arith.constant 0.000000e+00 : f32
    %199 = vector.broadcast %cst_31 : f32 to vector<32x16xf32>
    %200 = arith.cmpf ogt, %198, %199 : vector<32x16xf32>
    %cst_32 = arith.constant 2.000000e-01 : f32
    %201 = vector.broadcast %cst_32 : f32 to vector<32x16xf32>
    %202 = arith.mulf %201, %198 : vector<32x16xf32>
    %203 = arith.select %200, %198, %202 : vector<32x16xi1>, vector<32x16xf32>
    %204 = tpu.concatenate %186, %186 in 0 : vector<16x16xf32>, vector<16x16xf32> -> vector<32x16xf32>
    %205 = arith.addf %203, %204 : vector<32x16xf32>
    %cst_33 = arith.constant dense<0xFF800000> : vector<32xf32>
    %206 = vector.multi_reduction <maximumf>, %205, %cst_33 [1] : vector<32x16xf32> to vector<32xf32>
    %207 = vector.shape_cast %206 : vector<32xf32> to vector<32x1xf32>
    %208 = vector.broadcast %207 : vector<32x1xf32> to vector<32x16xf32>
    %209 = arith.subf %205, %208 : vector<32x16xf32>
    %210 = math.exp %209 : vector<32x16xf32>
    %cst_34 = arith.constant dense<0.000000e+00> : vector<32xf32>
    %211 = vector.multi_reduction <add>, %210, %cst_34 [1] : vector<32x16xf32> to vector<32xf32>
    %212 = vector.shape_cast %211 : vector<32xf32> to vector<32x1xf32>
    %213 = tpu.reciprocal %212 {approx = true} : vector<32x1xf32> -> vector<32x1xf32>
    %214 = vector.broadcast %213 : vector<32x1xf32> to vector<32x16xf32>
    %215 = arith.mulf %210, %214 : vector<32x16xf32>
    %216 = vector.extract_strided_slice %215 {offsets = [0, 0], sizes = [16, 16], strides = [1, 1]} : vector<32x16xf32> to vector<16x16xf32>
    %217 = vector.extract_strided_slice %215 {offsets = [16, 0], sizes = [16, 16], strides = [1, 1]} : vector<32x16xf32> to vector<16x16xf32>
    %218 = tpu.concatenate %216, %217 in 1 : vector<16x16xf32>, vector<16x16xf32> -> vector<16x32xf32>
    %219 = vector.extract_strided_slice %182 {offsets = [0, 0], sizes = [16, 16], strides = [1, 1]} : vector<16x32xf32> to vector<16x16xf32>
    %220 = tpu.concatenate %219, %0 in 1 : vector<16x16xf32>, vector<16x16xf32> -> vector<16x32xf32>
    %221 = vector.extract_strided_slice %182 {offsets = [0, 16], sizes = [16, 16], strides = [1, 1]} : vector<16x32xf32> to vector<16x16xf32>
    %222 = tpu.concatenate %0, %221 in 1 : vector<16x16xf32>, vector<16x16xf32> -> vector<16x32xf32>
    %223 = tpu.concatenate %220, %222 in 0 : vector<16x32xf32>, vector<16x32xf32> -> vector<32x32xf32>
    %cst_35 = arith.constant dense<0.000000e+00> : vector<16x32xf32>
    %224 = tpu.matmul %218, %223, %cst_35 {dimension_numbers = #tpu.dot_dimension_numbers<[1], [0], [0], [1], [0, 0, 1, 1], [], []>} : vector<16x32xf32>, vector<32x32xf32>, vector<16x32xf32> -> vector<16x32xf32>
    %225 = vector.extract_strided_slice %4 {offsets = [80, 0], sizes = [16, 36], strides = [1, 1]} : vector<128x36xf32> to vector<16x36xf32>
    %226 = vector.extract_strided_slice %225 {offsets = [0, 0], sizes = [16, 32], strides = [1, 1]} : vector<16x36xf32> to vector<16x32xf32>
    %227 = vector.extract_strided_slice %225 {offsets = [0, 32], sizes = [16, 2], strides = [1, 1]} : vector<16x36xf32> to vector<16x2xf32>
    %228 = tpu.transpose %227, [1, 0] : vector<16x2xf32> -> vector<2x16xf32>
    %229 = vector.extract_strided_slice %225 {offsets = [0, 34], sizes = [16, 2], strides = [1, 1]} : vector<16x36xf32> to vector<16x2xf32>
    %c80 = arith.constant 80 : index
    %c0_36 = arith.constant 0 : index
    %230 = vector.load %arg2[%c80, %c0_36] : memref<128x16xf32, #tpu.memory_space<vmem>>, vector<16x16xf32>
    %231 = vector.extract_strided_slice %228 {offsets = [0, 0], sizes = [1, 16], strides = [1, 1]} : vector<2x16xf32> to vector<1x16xf32>
    %232 = vector.shape_cast %231 : vector<1x16xf32> to vector<1x16xf32>
    %233 = vector.broadcast %232 : vector<1x16xf32> to vector<16x16xf32>
    %234 = vector.extract_strided_slice %228 {offsets = [1, 0], sizes = [1, 16], strides = [1, 1]} : vector<2x16xf32> to vector<1x16xf32>
    %235 = vector.shape_cast %234 : vector<1x16xf32> to vector<1x16xf32>
    %236 = vector.broadcast %235 : vector<1x16xf32> to vector<16x16xf32>
    %237 = tpu.concatenate %233, %236 in 0 : vector<16x16xf32>, vector<16x16xf32> -> vector<32x16xf32>
    %238 = vector.extract_strided_slice %229 {offsets = [0, 0], sizes = [16, 1], strides = [1, 1]} : vector<16x2xf32> to vector<16x1xf32>
    %239 = vector.extract_strided_slice %229 {offsets = [0, 1], sizes = [16, 1], strides = [1, 1]} : vector<16x2xf32> to vector<16x1xf32>
    %240 = tpu.concatenate %238, %239 in 0 : vector<16x1xf32>, vector<16x1xf32> -> vector<32x1xf32>
    %241 = vector.broadcast %240 : vector<32x1xf32> to vector<32x16xf32>
    %242 = arith.addf %237, %241 : vector<32x16xf32>
    %cst_37 = arith.constant 0.000000e+00 : f32
    %243 = vector.broadcast %cst_37 : f32 to vector<32x16xf32>
    %244 = arith.cmpf ogt, %242, %243 : vector<32x16xf32>
    %cst_38 = arith.constant 2.000000e-01 : f32
    %245 = vector.broadcast %cst_38 : f32 to vector<32x16xf32>
    %246 = arith.mulf %245, %242 : vector<32x16xf32>
    %247 = arith.select %244, %242, %246 : vector<32x16xi1>, vector<32x16xf32>
    %248 = tpu.concatenate %230, %230 in 0 : vector<16x16xf32>, vector<16x16xf32> -> vector<32x16xf32>
    %249 = arith.addf %247, %248 : vector<32x16xf32>
    %cst_39 = arith.constant dense<0xFF800000> : vector<32xf32>
    %250 = vector.multi_reduction <maximumf>, %249, %cst_39 [1] : vector<32x16xf32> to vector<32xf32>
    %251 = vector.shape_cast %250 : vector<32xf32> to vector<32x1xf32>
    %252 = vector.broadcast %251 : vector<32x1xf32> to vector<32x16xf32>
    %253 = arith.subf %249, %252 : vector<32x16xf32>
    %254 = math.exp %253 : vector<32x16xf32>
    %cst_40 = arith.constant dense<0.000000e+00> : vector<32xf32>
    %255 = vector.multi_reduction <add>, %254, %cst_40 [1] : vector<32x16xf32> to vector<32xf32>
    %256 = vector.shape_cast %255 : vector<32xf32> to vector<32x1xf32>
    %257 = tpu.reciprocal %256 {approx = true} : vector<32x1xf32> -> vector<32x1xf32>
    %258 = vector.broadcast %257 : vector<32x1xf32> to vector<32x16xf32>
    %259 = arith.mulf %254, %258 : vector<32x16xf32>
    %260 = vector.extract_strided_slice %259 {offsets = [0, 0], sizes = [16, 16], strides = [1, 1]} : vector<32x16xf32> to vector<16x16xf32>
    %261 = vector.extract_strided_slice %259 {offsets = [16, 0], sizes = [16, 16], strides = [1, 1]} : vector<32x16xf32> to vector<16x16xf32>
    %262 = tpu.concatenate %260, %261 in 1 : vector<16x16xf32>, vector<16x16xf32> -> vector<16x32xf32>
    %263 = vector.extract_strided_slice %226 {offsets = [0, 0], sizes = [16, 16], strides = [1, 1]} : vector<16x32xf32> to vector<16x16xf32>
    %264 = tpu.concatenate %263, %0 in 1 : vector<16x16xf32>, vector<16x16xf32> -> vector<16x32xf32>
    %265 = vector.extract_strided_slice %226 {offsets = [0, 16], sizes = [16, 16], strides = [1, 1]} : vector<16x32xf32> to vector<16x16xf32>
    %266 = tpu.concatenate %0, %265 in 1 : vector<16x16xf32>, vector<16x16xf32> -> vector<16x32xf32>
    %267 = tpu.concatenate %264, %266 in 0 : vector<16x32xf32>, vector<16x32xf32> -> vector<32x32xf32>
    %cst_41 = arith.constant dense<0.000000e+00> : vector<16x32xf32>
    %268 = tpu.matmul %262, %267, %cst_41 {dimension_numbers = #tpu.dot_dimension_numbers<[1], [0], [0], [1], [0, 0, 1, 1], [], []>} : vector<16x32xf32>, vector<32x32xf32>, vector<16x32xf32> -> vector<16x32xf32>
    %269 = vector.extract_strided_slice %4 {offsets = [96, 0], sizes = [16, 36], strides = [1, 1]} : vector<128x36xf32> to vector<16x36xf32>
    %270 = vector.extract_strided_slice %269 {offsets = [0, 0], sizes = [16, 32], strides = [1, 1]} : vector<16x36xf32> to vector<16x32xf32>
    %271 = vector.extract_strided_slice %269 {offsets = [0, 32], sizes = [16, 2], strides = [1, 1]} : vector<16x36xf32> to vector<16x2xf32>
    %272 = tpu.transpose %271, [1, 0] : vector<16x2xf32> -> vector<2x16xf32>
    %273 = vector.extract_strided_slice %269 {offsets = [0, 34], sizes = [16, 2], strides = [1, 1]} : vector<16x36xf32> to vector<16x2xf32>
    %c96 = arith.constant 96 : index
    %c0_42 = arith.constant 0 : index
    %274 = vector.load %arg2[%c96, %c0_42] : memref<128x16xf32, #tpu.memory_space<vmem>>, vector<16x16xf32>
    %275 = vector.extract_strided_slice %272 {offsets = [0, 0], sizes = [1, 16], strides = [1, 1]} : vector<2x16xf32> to vector<1x16xf32>
    %276 = vector.shape_cast %275 : vector<1x16xf32> to vector<1x16xf32>
    %277 = vector.broadcast %276 : vector<1x16xf32> to vector<16x16xf32>
    %278 = vector.extract_strided_slice %272 {offsets = [1, 0], sizes = [1, 16], strides = [1, 1]} : vector<2x16xf32> to vector<1x16xf32>
    %279 = vector.shape_cast %278 : vector<1x16xf32> to vector<1x16xf32>
    %280 = vector.broadcast %279 : vector<1x16xf32> to vector<16x16xf32>
    %281 = tpu.concatenate %277, %280 in 0 : vector<16x16xf32>, vector<16x16xf32> -> vector<32x16xf32>
    %282 = vector.extract_strided_slice %273 {offsets = [0, 0], sizes = [16, 1], strides = [1, 1]} : vector<16x2xf32> to vector<16x1xf32>
    %283 = vector.extract_strided_slice %273 {offsets = [0, 1], sizes = [16, 1], strides = [1, 1]} : vector<16x2xf32> to vector<16x1xf32>
    %284 = tpu.concatenate %282, %283 in 0 : vector<16x1xf32>, vector<16x1xf32> -> vector<32x1xf32>
    %285 = vector.broadcast %284 : vector<32x1xf32> to vector<32x16xf32>
    %286 = arith.addf %281, %285 : vector<32x16xf32>
    %cst_43 = arith.constant 0.000000e+00 : f32
    %287 = vector.broadcast %cst_43 : f32 to vector<32x16xf32>
    %288 = arith.cmpf ogt, %286, %287 : vector<32x16xf32>
    %cst_44 = arith.constant 2.000000e-01 : f32
    %289 = vector.broadcast %cst_44 : f32 to vector<32x16xf32>
    %290 = arith.mulf %289, %286 : vector<32x16xf32>
    %291 = arith.select %288, %286, %290 : vector<32x16xi1>, vector<32x16xf32>
    %292 = tpu.concatenate %274, %274 in 0 : vector<16x16xf32>, vector<16x16xf32> -> vector<32x16xf32>
    %293 = arith.addf %291, %292 : vector<32x16xf32>
    %cst_45 = arith.constant dense<0xFF800000> : vector<32xf32>
    %294 = vector.multi_reduction <maximumf>, %293, %cst_45 [1] : vector<32x16xf32> to vector<32xf32>
    %295 = vector.shape_cast %294 : vector<32xf32> to vector<32x1xf32>
    %296 = vector.broadcast %295 : vector<32x1xf32> to vector<32x16xf32>
    %297 = arith.subf %293, %296 : vector<32x16xf32>
    %298 = math.exp %297 : vector<32x16xf32>
    %cst_46 = arith.constant dense<0.000000e+00> : vector<32xf32>
    %299 = vector.multi_reduction <add>, %298, %cst_46 [1] : vector<32x16xf32> to vector<32xf32>
    %300 = vector.shape_cast %299 : vector<32xf32> to vector<32x1xf32>
    %301 = tpu.reciprocal %300 {approx = true} : vector<32x1xf32> -> vector<32x1xf32>
    %302 = vector.broadcast %301 : vector<32x1xf32> to vector<32x16xf32>
    %303 = arith.mulf %298, %302 : vector<32x16xf32>
    %304 = vector.extract_strided_slice %303 {offsets = [0, 0], sizes = [16, 16], strides = [1, 1]} : vector<32x16xf32> to vector<16x16xf32>
    %305 = vector.extract_strided_slice %303 {offsets = [16, 0], sizes = [16, 16], strides = [1, 1]} : vector<32x16xf32> to vector<16x16xf32>
    %306 = tpu.concatenate %304, %305 in 1 : vector<16x16xf32>, vector<16x16xf32> -> vector<16x32xf32>
    %307 = vector.extract_strided_slice %270 {offsets = [0, 0], sizes = [16, 16], strides = [1, 1]} : vector<16x32xf32> to vector<16x16xf32>
    %308 = tpu.concatenate %307, %0 in 1 : vector<16x16xf32>, vector<16x16xf32> -> vector<16x32xf32>
    %309 = vector.extract_strided_slice %270 {offsets = [0, 16], sizes = [16, 16], strides = [1, 1]} : vector<16x32xf32> to vector<16x16xf32>
    %310 = tpu.concatenate %0, %309 in 1 : vector<16x16xf32>, vector<16x16xf32> -> vector<16x32xf32>
    %311 = tpu.concatenate %308, %310 in 0 : vector<16x32xf32>, vector<16x32xf32> -> vector<32x32xf32>
    %cst_47 = arith.constant dense<0.000000e+00> : vector<16x32xf32>
    %312 = tpu.matmul %306, %311, %cst_47 {dimension_numbers = #tpu.dot_dimension_numbers<[1], [0], [0], [1], [0, 0, 1, 1], [], []>} : vector<16x32xf32>, vector<32x32xf32>, vector<16x32xf32> -> vector<16x32xf32>
    %313 = vector.extract_strided_slice %4 {offsets = [112, 0], sizes = [16, 36], strides = [1, 1]} : vector<128x36xf32> to vector<16x36xf32>
    %314 = vector.extract_strided_slice %313 {offsets = [0, 0], sizes = [16, 32], strides = [1, 1]} : vector<16x36xf32> to vector<16x32xf32>
    %315 = vector.extract_strided_slice %313 {offsets = [0, 32], sizes = [16, 2], strides = [1, 1]} : vector<16x36xf32> to vector<16x2xf32>
    %316 = tpu.transpose %315, [1, 0] : vector<16x2xf32> -> vector<2x16xf32>
    %317 = vector.extract_strided_slice %313 {offsets = [0, 34], sizes = [16, 2], strides = [1, 1]} : vector<16x36xf32> to vector<16x2xf32>
    %c112 = arith.constant 112 : index
    %c0_48 = arith.constant 0 : index
    %318 = vector.load %arg2[%c112, %c0_48] : memref<128x16xf32, #tpu.memory_space<vmem>>, vector<16x16xf32>
    %319 = vector.extract_strided_slice %316 {offsets = [0, 0], sizes = [1, 16], strides = [1, 1]} : vector<2x16xf32> to vector<1x16xf32>
    %320 = vector.shape_cast %319 : vector<1x16xf32> to vector<1x16xf32>
    %321 = vector.broadcast %320 : vector<1x16xf32> to vector<16x16xf32>
    %322 = vector.extract_strided_slice %316 {offsets = [1, 0], sizes = [1, 16], strides = [1, 1]} : vector<2x16xf32> to vector<1x16xf32>
    %323 = vector.shape_cast %322 : vector<1x16xf32> to vector<1x16xf32>
    %324 = vector.broadcast %323 : vector<1x16xf32> to vector<16x16xf32>
    %325 = tpu.concatenate %321, %324 in 0 : vector<16x16xf32>, vector<16x16xf32> -> vector<32x16xf32>
    %326 = vector.extract_strided_slice %317 {offsets = [0, 0], sizes = [16, 1], strides = [1, 1]} : vector<16x2xf32> to vector<16x1xf32>
    %327 = vector.extract_strided_slice %317 {offsets = [0, 1], sizes = [16, 1], strides = [1, 1]} : vector<16x2xf32> to vector<16x1xf32>
    %328 = tpu.concatenate %326, %327 in 0 : vector<16x1xf32>, vector<16x1xf32> -> vector<32x1xf32>
    %329 = vector.broadcast %328 : vector<32x1xf32> to vector<32x16xf32>
    %330 = arith.addf %325, %329 : vector<32x16xf32>
    %cst_49 = arith.constant 0.000000e+00 : f32
    %331 = vector.broadcast %cst_49 : f32 to vector<32x16xf32>
    %332 = arith.cmpf ogt, %330, %331 : vector<32x16xf32>
    %cst_50 = arith.constant 2.000000e-01 : f32
    %333 = vector.broadcast %cst_50 : f32 to vector<32x16xf32>
    %334 = arith.mulf %333, %330 : vector<32x16xf32>
    %335 = arith.select %332, %330, %334 : vector<32x16xi1>, vector<32x16xf32>
    %336 = tpu.concatenate %318, %318 in 0 : vector<16x16xf32>, vector<16x16xf32> -> vector<32x16xf32>
    %337 = arith.addf %335, %336 : vector<32x16xf32>
    %cst_51 = arith.constant dense<0xFF800000> : vector<32xf32>
    %338 = vector.multi_reduction <maximumf>, %337, %cst_51 [1] : vector<32x16xf32> to vector<32xf32>
    %339 = vector.shape_cast %338 : vector<32xf32> to vector<32x1xf32>
    %340 = vector.broadcast %339 : vector<32x1xf32> to vector<32x16xf32>
    %341 = arith.subf %337, %340 : vector<32x16xf32>
    %342 = math.exp %341 : vector<32x16xf32>
    %cst_52 = arith.constant dense<0.000000e+00> : vector<32xf32>
    %343 = vector.multi_reduction <add>, %342, %cst_52 [1] : vector<32x16xf32> to vector<32xf32>
    %344 = vector.shape_cast %343 : vector<32xf32> to vector<32x1xf32>
    %345 = tpu.reciprocal %344 {approx = true} : vector<32x1xf32> -> vector<32x1xf32>
    %346 = vector.broadcast %345 : vector<32x1xf32> to vector<32x16xf32>
    %347 = arith.mulf %342, %346 : vector<32x16xf32>
    %348 = vector.extract_strided_slice %347 {offsets = [0, 0], sizes = [16, 16], strides = [1, 1]} : vector<32x16xf32> to vector<16x16xf32>
    %349 = vector.extract_strided_slice %347 {offsets = [16, 0], sizes = [16, 16], strides = [1, 1]} : vector<32x16xf32> to vector<16x16xf32>
    %350 = tpu.concatenate %348, %349 in 1 : vector<16x16xf32>, vector<16x16xf32> -> vector<16x32xf32>
    %351 = vector.extract_strided_slice %314 {offsets = [0, 0], sizes = [16, 16], strides = [1, 1]} : vector<16x32xf32> to vector<16x16xf32>
    %352 = tpu.concatenate %351, %0 in 1 : vector<16x16xf32>, vector<16x16xf32> -> vector<16x32xf32>
    %353 = vector.extract_strided_slice %314 {offsets = [0, 16], sizes = [16, 16], strides = [1, 1]} : vector<16x32xf32> to vector<16x16xf32>
    %354 = tpu.concatenate %0, %353 in 1 : vector<16x16xf32>, vector<16x16xf32> -> vector<16x32xf32>
    %355 = tpu.concatenate %352, %354 in 0 : vector<16x32xf32>, vector<16x32xf32> -> vector<32x32xf32>
    %cst_53 = arith.constant dense<0.000000e+00> : vector<16x32xf32>
    %356 = tpu.matmul %350, %355, %cst_53 {dimension_numbers = #tpu.dot_dimension_numbers<[1], [0], [0], [1], [0, 0, 1, 1], [], []>} : vector<16x32xf32>, vector<32x32xf32>, vector<16x32xf32> -> vector<16x32xf32>
    %357 = tpu.concatenate %48, %92, %136, %180, %224, %268, %312, %356 in 0 : vector<16x32xf32>, vector<16x32xf32>, vector<16x32xf32>, vector<16x32xf32>, vector<16x32xf32>, vector<16x32xf32>, vector<16x32xf32>, vector<16x32xf32> -> vector<128x32xf32>
    %358 = vector.broadcast %3 : vector<1x32xf32> to vector<128x32xf32>
    %359 = arith.addf %357, %358 : vector<128x32xf32>
    %cst_54 = arith.constant 0.000000e+00 : f32
    %360 = vector.broadcast %cst_54 : f32 to vector<128x32xf32>
    %361 = arith.cmpf ogt, %359, %360 : vector<128x32xf32>
    %cst_55 = arith.constant 0.00999999977 : f32
    %362 = vector.broadcast %cst_55 : f32 to vector<128x32xf32>
    %363 = arith.mulf %362, %359 : vector<128x32xf32>
    %364 = arith.select %361, %359, %363 : vector<128x32xi1>, vector<128x32xf32>
    %c16_56 = arith.constant 16 : index
    %c0_57 = arith.constant 0 : index
    %365 = vector.load %arg3[%c16_56, %c0_57] : memref<112x128xf32, #tpu.memory_space<vmem>>, vector<32x36xf32>
    %c48_58 = arith.constant 48 : index
    %c0_59 = arith.constant 0 : index
    %366 = vector.load %arg3[%c48_58, %c0_59] : memref<112x128xf32, #tpu.memory_space<vmem>>, vector<1x32xf32>
    %cst_60 = arith.constant dense<0.000000e+00> : vector<128x36xf32>
    %367 = tpu.matmul %364, %365, %cst_60 {dimension_numbers = #tpu.dot_dimension_numbers<[1], [0], [0], [1], [0, 0, 1, 1], [], []>} : vector<128x32xf32>, vector<32x36xf32>, vector<128x36xf32> -> vector<128x36xf32>
    %368 = vector.extract_strided_slice %367 {offsets = [0, 0], sizes = [16, 36], strides = [1, 1]} : vector<128x36xf32> to vector<16x36xf32>
    %369 = vector.extract_strided_slice %368 {offsets = [0, 0], sizes = [16, 32], strides = [1, 1]} : vector<16x36xf32> to vector<16x32xf32>
    %370 = vector.extract_strided_slice %368 {offsets = [0, 32], sizes = [16, 2], strides = [1, 1]} : vector<16x36xf32> to vector<16x2xf32>
    %371 = tpu.transpose %370, [1, 0] : vector<16x2xf32> -> vector<2x16xf32>
    %372 = vector.extract_strided_slice %368 {offsets = [0, 34], sizes = [16, 2], strides = [1, 1]} : vector<16x36xf32> to vector<16x2xf32>
    %c0_61 = arith.constant 0 : index
    %c0_62 = arith.constant 0 : index
    %373 = vector.load %arg2[%c0_61, %c0_62] : memref<128x16xf32, #tpu.memory_space<vmem>>, vector<16x16xf32>
    %374 = vector.extract_strided_slice %371 {offsets = [0, 0], sizes = [1, 16], strides = [1, 1]} : vector<2x16xf32> to vector<1x16xf32>
    %375 = vector.shape_cast %374 : vector<1x16xf32> to vector<1x16xf32>
    %376 = vector.broadcast %375 : vector<1x16xf32> to vector<16x16xf32>
    %377 = vector.extract_strided_slice %371 {offsets = [1, 0], sizes = [1, 16], strides = [1, 1]} : vector<2x16xf32> to vector<1x16xf32>
    %378 = vector.shape_cast %377 : vector<1x16xf32> to vector<1x16xf32>
    %379 = vector.broadcast %378 : vector<1x16xf32> to vector<16x16xf32>
    %380 = tpu.concatenate %376, %379 in 0 : vector<16x16xf32>, vector<16x16xf32> -> vector<32x16xf32>
    %381 = vector.extract_strided_slice %372 {offsets = [0, 0], sizes = [16, 1], strides = [1, 1]} : vector<16x2xf32> to vector<16x1xf32>
    %382 = vector.extract_strided_slice %372 {offsets = [0, 1], sizes = [16, 1], strides = [1, 1]} : vector<16x2xf32> to vector<16x1xf32>
    %383 = tpu.concatenate %381, %382 in 0 : vector<16x1xf32>, vector<16x1xf32> -> vector<32x1xf32>
    %384 = vector.broadcast %383 : vector<32x1xf32> to vector<32x16xf32>
    %385 = arith.addf %380, %384 : vector<32x16xf32>
    %cst_63 = arith.constant 0.000000e+00 : f32
    %386 = vector.broadcast %cst_63 : f32 to vector<32x16xf32>
    %387 = arith.cmpf ogt, %385, %386 : vector<32x16xf32>
    %cst_64 = arith.constant 2.000000e-01 : f32
    %388 = vector.broadcast %cst_64 : f32 to vector<32x16xf32>
    %389 = arith.mulf %388, %385 : vector<32x16xf32>
    %390 = arith.select %387, %385, %389 : vector<32x16xi1>, vector<32x16xf32>
    %391 = tpu.concatenate %373, %373 in 0 : vector<16x16xf32>, vector<16x16xf32> -> vector<32x16xf32>
    %392 = arith.addf %390, %391 : vector<32x16xf32>
    %cst_65 = arith.constant dense<0xFF800000> : vector<32xf32>
    %393 = vector.multi_reduction <maximumf>, %392, %cst_65 [1] : vector<32x16xf32> to vector<32xf32>
    %394 = vector.shape_cast %393 : vector<32xf32> to vector<32x1xf32>
    %395 = vector.broadcast %394 : vector<32x1xf32> to vector<32x16xf32>
    %396 = arith.subf %392, %395 : vector<32x16xf32>
    %397 = math.exp %396 : vector<32x16xf32>
    %cst_66 = arith.constant dense<0.000000e+00> : vector<32xf32>
    %398 = vector.multi_reduction <add>, %397, %cst_66 [1] : vector<32x16xf32> to vector<32xf32>
    %399 = vector.shape_cast %398 : vector<32xf32> to vector<32x1xf32>
    %400 = tpu.reciprocal %399 {approx = true} : vector<32x1xf32> -> vector<32x1xf32>
    %401 = vector.broadcast %400 : vector<32x1xf32> to vector<32x16xf32>
    %402 = arith.mulf %397, %401 : vector<32x16xf32>
    %403 = vector.extract_strided_slice %402 {offsets = [0, 0], sizes = [16, 16], strides = [1, 1]} : vector<32x16xf32> to vector<16x16xf32>
    %404 = vector.extract_strided_slice %402 {offsets = [16, 0], sizes = [16, 16], strides = [1, 1]} : vector<32x16xf32> to vector<16x16xf32>
    %405 = tpu.concatenate %403, %404 in 1 : vector<16x16xf32>, vector<16x16xf32> -> vector<16x32xf32>
    %406 = vector.extract_strided_slice %369 {offsets = [0, 0], sizes = [16, 16], strides = [1, 1]} : vector<16x32xf32> to vector<16x16xf32>
    %407 = tpu.concatenate %406, %0 in 1 : vector<16x16xf32>, vector<16x16xf32> -> vector<16x32xf32>
    %408 = vector.extract_strided_slice %369 {offsets = [0, 16], sizes = [16, 16], strides = [1, 1]} : vector<16x32xf32> to vector<16x16xf32>
    %409 = tpu.concatenate %0, %408 in 1 : vector<16x16xf32>, vector<16x16xf32> -> vector<16x32xf32>
    %410 = tpu.concatenate %407, %409 in 0 : vector<16x32xf32>, vector<16x32xf32> -> vector<32x32xf32>
    %cst_67 = arith.constant dense<0.000000e+00> : vector<16x32xf32>
    %411 = tpu.matmul %405, %410, %cst_67 {dimension_numbers = #tpu.dot_dimension_numbers<[1], [0], [0], [1], [0, 0, 1, 1], [], []>} : vector<16x32xf32>, vector<32x32xf32>, vector<16x32xf32> -> vector<16x32xf32>
    %412 = vector.extract_strided_slice %367 {offsets = [16, 0], sizes = [16, 36], strides = [1, 1]} : vector<128x36xf32> to vector<16x36xf32>
    %413 = vector.extract_strided_slice %412 {offsets = [0, 0], sizes = [16, 32], strides = [1, 1]} : vector<16x36xf32> to vector<16x32xf32>
    %414 = vector.extract_strided_slice %412 {offsets = [0, 32], sizes = [16, 2], strides = [1, 1]} : vector<16x36xf32> to vector<16x2xf32>
    %415 = tpu.transpose %414, [1, 0] : vector<16x2xf32> -> vector<2x16xf32>
    %416 = vector.extract_strided_slice %412 {offsets = [0, 34], sizes = [16, 2], strides = [1, 1]} : vector<16x36xf32> to vector<16x2xf32>
    %c16_68 = arith.constant 16 : index
    %c0_69 = arith.constant 0 : index
    %417 = vector.load %arg2[%c16_68, %c0_69] : memref<128x16xf32, #tpu.memory_space<vmem>>, vector<16x16xf32>
    %418 = vector.extract_strided_slice %415 {offsets = [0, 0], sizes = [1, 16], strides = [1, 1]} : vector<2x16xf32> to vector<1x16xf32>
    %419 = vector.shape_cast %418 : vector<1x16xf32> to vector<1x16xf32>
    %420 = vector.broadcast %419 : vector<1x16xf32> to vector<16x16xf32>
    %421 = vector.extract_strided_slice %415 {offsets = [1, 0], sizes = [1, 16], strides = [1, 1]} : vector<2x16xf32> to vector<1x16xf32>
    %422 = vector.shape_cast %421 : vector<1x16xf32> to vector<1x16xf32>
    %423 = vector.broadcast %422 : vector<1x16xf32> to vector<16x16xf32>
    %424 = tpu.concatenate %420, %423 in 0 : vector<16x16xf32>, vector<16x16xf32> -> vector<32x16xf32>
    %425 = vector.extract_strided_slice %416 {offsets = [0, 0], sizes = [16, 1], strides = [1, 1]} : vector<16x2xf32> to vector<16x1xf32>
    %426 = vector.extract_strided_slice %416 {offsets = [0, 1], sizes = [16, 1], strides = [1, 1]} : vector<16x2xf32> to vector<16x1xf32>
    %427 = tpu.concatenate %425, %426 in 0 : vector<16x1xf32>, vector<16x1xf32> -> vector<32x1xf32>
    %428 = vector.broadcast %427 : vector<32x1xf32> to vector<32x16xf32>
    %429 = arith.addf %424, %428 : vector<32x16xf32>
    %cst_70 = arith.constant 0.000000e+00 : f32
    %430 = vector.broadcast %cst_70 : f32 to vector<32x16xf32>
    %431 = arith.cmpf ogt, %429, %430 : vector<32x16xf32>
    %cst_71 = arith.constant 2.000000e-01 : f32
    %432 = vector.broadcast %cst_71 : f32 to vector<32x16xf32>
    %433 = arith.mulf %432, %429 : vector<32x16xf32>
    %434 = arith.select %431, %429, %433 : vector<32x16xi1>, vector<32x16xf32>
    %435 = tpu.concatenate %417, %417 in 0 : vector<16x16xf32>, vector<16x16xf32> -> vector<32x16xf32>
    %436 = arith.addf %434, %435 : vector<32x16xf32>
    %cst_72 = arith.constant dense<0xFF800000> : vector<32xf32>
    %437 = vector.multi_reduction <maximumf>, %436, %cst_72 [1] : vector<32x16xf32> to vector<32xf32>
    %438 = vector.shape_cast %437 : vector<32xf32> to vector<32x1xf32>
    %439 = vector.broadcast %438 : vector<32x1xf32> to vector<32x16xf32>
    %440 = arith.subf %436, %439 : vector<32x16xf32>
    %441 = math.exp %440 : vector<32x16xf32>
    %cst_73 = arith.constant dense<0.000000e+00> : vector<32xf32>
    %442 = vector.multi_reduction <add>, %441, %cst_73 [1] : vector<32x16xf32> to vector<32xf32>
    %443 = vector.shape_cast %442 : vector<32xf32> to vector<32x1xf32>
    %444 = tpu.reciprocal %443 {approx = true} : vector<32x1xf32> -> vector<32x1xf32>
    %445 = vector.broadcast %444 : vector<32x1xf32> to vector<32x16xf32>
    %446 = arith.mulf %441, %445 : vector<32x16xf32>
    %447 = vector.extract_strided_slice %446 {offsets = [0, 0], sizes = [16, 16], strides = [1, 1]} : vector<32x16xf32> to vector<16x16xf32>
    %448 = vector.extract_strided_slice %446 {offsets = [16, 0], sizes = [16, 16], strides = [1, 1]} : vector<32x16xf32> to vector<16x16xf32>
    %449 = tpu.concatenate %447, %448 in 1 : vector<16x16xf32>, vector<16x16xf32> -> vector<16x32xf32>
    %450 = vector.extract_strided_slice %413 {offsets = [0, 0], sizes = [16, 16], strides = [1, 1]} : vector<16x32xf32> to vector<16x16xf32>
    %451 = tpu.concatenate %450, %0 in 1 : vector<16x16xf32>, vector<16x16xf32> -> vector<16x32xf32>
    %452 = vector.extract_strided_slice %413 {offsets = [0, 16], sizes = [16, 16], strides = [1, 1]} : vector<16x32xf32> to vector<16x16xf32>
    %453 = tpu.concatenate %0, %452 in 1 : vector<16x16xf32>, vector<16x16xf32> -> vector<16x32xf32>
    %454 = tpu.concatenate %451, %453 in 0 : vector<16x32xf32>, vector<16x32xf32> -> vector<32x32xf32>
    %cst_74 = arith.constant dense<0.000000e+00> : vector<16x32xf32>
    %455 = tpu.matmul %449, %454, %cst_74 {dimension_numbers = #tpu.dot_dimension_numbers<[1], [0], [0], [1], [0, 0, 1, 1], [], []>} : vector<16x32xf32>, vector<32x32xf32>, vector<16x32xf32> -> vector<16x32xf32>
    %456 = vector.extract_strided_slice %367 {offsets = [32, 0], sizes = [16, 36], strides = [1, 1]} : vector<128x36xf32> to vector<16x36xf32>
    %457 = vector.extract_strided_slice %456 {offsets = [0, 0], sizes = [16, 32], strides = [1, 1]} : vector<16x36xf32> to vector<16x32xf32>
    %458 = vector.extract_strided_slice %456 {offsets = [0, 32], sizes = [16, 2], strides = [1, 1]} : vector<16x36xf32> to vector<16x2xf32>
    %459 = tpu.transpose %458, [1, 0] : vector<16x2xf32> -> vector<2x16xf32>
    %460 = vector.extract_strided_slice %456 {offsets = [0, 34], sizes = [16, 2], strides = [1, 1]} : vector<16x36xf32> to vector<16x2xf32>
    %c32_75 = arith.constant 32 : index
    %c0_76 = arith.constant 0 : index
    %461 = vector.load %arg2[%c32_75, %c0_76] : memref<128x16xf32, #tpu.memory_space<vmem>>, vector<16x16xf32>
    %462 = vector.extract_strided_slice %459 {offsets = [0, 0], sizes = [1, 16], strides = [1, 1]} : vector<2x16xf32> to vector<1x16xf32>
    %463 = vector.shape_cast %462 : vector<1x16xf32> to vector<1x16xf32>
    %464 = vector.broadcast %463 : vector<1x16xf32> to vector<16x16xf32>
    %465 = vector.extract_strided_slice %459 {offsets = [1, 0], sizes = [1, 16], strides = [1, 1]} : vector<2x16xf32> to vector<1x16xf32>
    %466 = vector.shape_cast %465 : vector<1x16xf32> to vector<1x16xf32>
    %467 = vector.broadcast %466 : vector<1x16xf32> to vector<16x16xf32>
    %468 = tpu.concatenate %464, %467 in 0 : vector<16x16xf32>, vector<16x16xf32> -> vector<32x16xf32>
    %469 = vector.extract_strided_slice %460 {offsets = [0, 0], sizes = [16, 1], strides = [1, 1]} : vector<16x2xf32> to vector<16x1xf32>
    %470 = vector.extract_strided_slice %460 {offsets = [0, 1], sizes = [16, 1], strides = [1, 1]} : vector<16x2xf32> to vector<16x1xf32>
    %471 = tpu.concatenate %469, %470 in 0 : vector<16x1xf32>, vector<16x1xf32> -> vector<32x1xf32>
    %472 = vector.broadcast %471 : vector<32x1xf32> to vector<32x16xf32>
    %473 = arith.addf %468, %472 : vector<32x16xf32>
    %cst_77 = arith.constant 0.000000e+00 : f32
    %474 = vector.broadcast %cst_77 : f32 to vector<32x16xf32>
    %475 = arith.cmpf ogt, %473, %474 : vector<32x16xf32>
    %cst_78 = arith.constant 2.000000e-01 : f32
    %476 = vector.broadcast %cst_78 : f32 to vector<32x16xf32>
    %477 = arith.mulf %476, %473 : vector<32x16xf32>
    %478 = arith.select %475, %473, %477 : vector<32x16xi1>, vector<32x16xf32>
    %479 = tpu.concatenate %461, %461 in 0 : vector<16x16xf32>, vector<16x16xf32> -> vector<32x16xf32>
    %480 = arith.addf %478, %479 : vector<32x16xf32>
    %cst_79 = arith.constant dense<0xFF800000> : vector<32xf32>
    %481 = vector.multi_reduction <maximumf>, %480, %cst_79 [1] : vector<32x16xf32> to vector<32xf32>
    %482 = vector.shape_cast %481 : vector<32xf32> to vector<32x1xf32>
    %483 = vector.broadcast %482 : vector<32x1xf32> to vector<32x16xf32>
    %484 = arith.subf %480, %483 : vector<32x16xf32>
    %485 = math.exp %484 : vector<32x16xf32>
    %cst_80 = arith.constant dense<0.000000e+00> : vector<32xf32>
    %486 = vector.multi_reduction <add>, %485, %cst_80 [1] : vector<32x16xf32> to vector<32xf32>
    %487 = vector.shape_cast %486 : vector<32xf32> to vector<32x1xf32>
    %488 = tpu.reciprocal %487 {approx = true} : vector<32x1xf32> -> vector<32x1xf32>
    %489 = vector.broadcast %488 : vector<32x1xf32> to vector<32x16xf32>
    %490 = arith.mulf %485, %489 : vector<32x16xf32>
    %491 = vector.extract_strided_slice %490 {offsets = [0, 0], sizes = [16, 16], strides = [1, 1]} : vector<32x16xf32> to vector<16x16xf32>
    %492 = vector.extract_strided_slice %490 {offsets = [16, 0], sizes = [16, 16], strides = [1, 1]} : vector<32x16xf32> to vector<16x16xf32>
    %493 = tpu.concatenate %491, %492 in 1 : vector<16x16xf32>, vector<16x16xf32> -> vector<16x32xf32>
    %494 = vector.extract_strided_slice %457 {offsets = [0, 0], sizes = [16, 16], strides = [1, 1]} : vector<16x32xf32> to vector<16x16xf32>
    %495 = tpu.concatenate %494, %0 in 1 : vector<16x16xf32>, vector<16x16xf32> -> vector<16x32xf32>
    %496 = vector.extract_strided_slice %457 {offsets = [0, 16], sizes = [16, 16], strides = [1, 1]} : vector<16x32xf32> to vector<16x16xf32>
    %497 = tpu.concatenate %0, %496 in 1 : vector<16x16xf32>, vector<16x16xf32> -> vector<16x32xf32>
    %498 = tpu.concatenate %495, %497 in 0 : vector<16x32xf32>, vector<16x32xf32> -> vector<32x32xf32>
    %cst_81 = arith.constant dense<0.000000e+00> : vector<16x32xf32>
    %499 = tpu.matmul %493, %498, %cst_81 {dimension_numbers = #tpu.dot_dimension_numbers<[1], [0], [0], [1], [0, 0, 1, 1], [], []>} : vector<16x32xf32>, vector<32x32xf32>, vector<16x32xf32> -> vector<16x32xf32>
    %500 = vector.extract_strided_slice %367 {offsets = [48, 0], sizes = [16, 36], strides = [1, 1]} : vector<128x36xf32> to vector<16x36xf32>
    %501 = vector.extract_strided_slice %500 {offsets = [0, 0], sizes = [16, 32], strides = [1, 1]} : vector<16x36xf32> to vector<16x32xf32>
    %502 = vector.extract_strided_slice %500 {offsets = [0, 32], sizes = [16, 2], strides = [1, 1]} : vector<16x36xf32> to vector<16x2xf32>
    %503 = tpu.transpose %502, [1, 0] : vector<16x2xf32> -> vector<2x16xf32>
    %504 = vector.extract_strided_slice %500 {offsets = [0, 34], sizes = [16, 2], strides = [1, 1]} : vector<16x36xf32> to vector<16x2xf32>
    %c48_82 = arith.constant 48 : index
    %c0_83 = arith.constant 0 : index
    %505 = vector.load %arg2[%c48_82, %c0_83] : memref<128x16xf32, #tpu.memory_space<vmem>>, vector<16x16xf32>
    %506 = vector.extract_strided_slice %503 {offsets = [0, 0], sizes = [1, 16], strides = [1, 1]} : vector<2x16xf32> to vector<1x16xf32>
    %507 = vector.shape_cast %506 : vector<1x16xf32> to vector<1x16xf32>
    %508 = vector.broadcast %507 : vector<1x16xf32> to vector<16x16xf32>
    %509 = vector.extract_strided_slice %503 {offsets = [1, 0], sizes = [1, 16], strides = [1, 1]} : vector<2x16xf32> to vector<1x16xf32>
    %510 = vector.shape_cast %509 : vector<1x16xf32> to vector<1x16xf32>
    %511 = vector.broadcast %510 : vector<1x16xf32> to vector<16x16xf32>
    %512 = tpu.concatenate %508, %511 in 0 : vector<16x16xf32>, vector<16x16xf32> -> vector<32x16xf32>
    %513 = vector.extract_strided_slice %504 {offsets = [0, 0], sizes = [16, 1], strides = [1, 1]} : vector<16x2xf32> to vector<16x1xf32>
    %514 = vector.extract_strided_slice %504 {offsets = [0, 1], sizes = [16, 1], strides = [1, 1]} : vector<16x2xf32> to vector<16x1xf32>
    %515 = tpu.concatenate %513, %514 in 0 : vector<16x1xf32>, vector<16x1xf32> -> vector<32x1xf32>
    %516 = vector.broadcast %515 : vector<32x1xf32> to vector<32x16xf32>
    %517 = arith.addf %512, %516 : vector<32x16xf32>
    %cst_84 = arith.constant 0.000000e+00 : f32
    %518 = vector.broadcast %cst_84 : f32 to vector<32x16xf32>
    %519 = arith.cmpf ogt, %517, %518 : vector<32x16xf32>
    %cst_85 = arith.constant 2.000000e-01 : f32
    %520 = vector.broadcast %cst_85 : f32 to vector<32x16xf32>
    %521 = arith.mulf %520, %517 : vector<32x16xf32>
    %522 = arith.select %519, %517, %521 : vector<32x16xi1>, vector<32x16xf32>
    %523 = tpu.concatenate %505, %505 in 0 : vector<16x16xf32>, vector<16x16xf32> -> vector<32x16xf32>
    %524 = arith.addf %522, %523 : vector<32x16xf32>
    %cst_86 = arith.constant dense<0xFF800000> : vector<32xf32>
    %525 = vector.multi_reduction <maximumf>, %524, %cst_86 [1] : vector<32x16xf32> to vector<32xf32>
    %526 = vector.shape_cast %525 : vector<32xf32> to vector<32x1xf32>
    %527 = vector.broadcast %526 : vector<32x1xf32> to vector<32x16xf32>
    %528 = arith.subf %524, %527 : vector<32x16xf32>
    %529 = math.exp %528 : vector<32x16xf32>
    %cst_87 = arith.constant dense<0.000000e+00> : vector<32xf32>
    %530 = vector.multi_reduction <add>, %529, %cst_87 [1] : vector<32x16xf32> to vector<32xf32>
    %531 = vector.shape_cast %530 : vector<32xf32> to vector<32x1xf32>
    %532 = tpu.reciprocal %531 {approx = true} : vector<32x1xf32> -> vector<32x1xf32>
    %533 = vector.broadcast %532 : vector<32x1xf32> to vector<32x16xf32>
    %534 = arith.mulf %529, %533 : vector<32x16xf32>
    %535 = vector.extract_strided_slice %534 {offsets = [0, 0], sizes = [16, 16], strides = [1, 1]} : vector<32x16xf32> to vector<16x16xf32>
    %536 = vector.extract_strided_slice %534 {offsets = [16, 0], sizes = [16, 16], strides = [1, 1]} : vector<32x16xf32> to vector<16x16xf32>
    %537 = tpu.concatenate %535, %536 in 1 : vector<16x16xf32>, vector<16x16xf32> -> vector<16x32xf32>
    %538 = vector.extract_strided_slice %501 {offsets = [0, 0], sizes = [16, 16], strides = [1, 1]} : vector<16x32xf32> to vector<16x16xf32>
    %539 = tpu.concatenate %538, %0 in 1 : vector<16x16xf32>, vector<16x16xf32> -> vector<16x32xf32>
    %540 = vector.extract_strided_slice %501 {offsets = [0, 16], sizes = [16, 16], strides = [1, 1]} : vector<16x32xf32> to vector<16x16xf32>
    %541 = tpu.concatenate %0, %540 in 1 : vector<16x16xf32>, vector<16x16xf32> -> vector<16x32xf32>
    %542 = tpu.concatenate %539, %541 in 0 : vector<16x32xf32>, vector<16x32xf32> -> vector<32x32xf32>
    %cst_88 = arith.constant dense<0.000000e+00> : vector<16x32xf32>
    %543 = tpu.matmul %537, %542, %cst_88 {dimension_numbers = #tpu.dot_dimension_numbers<[1], [0], [0], [1], [0, 0, 1, 1], [], []>} : vector<16x32xf32>, vector<32x32xf32>, vector<16x32xf32> -> vector<16x32xf32>
    %544 = vector.extract_strided_slice %367 {offsets = [64, 0], sizes = [16, 36], strides = [1, 1]} : vector<128x36xf32> to vector<16x36xf32>
    %545 = vector.extract_strided_slice %544 {offsets = [0, 0], sizes = [16, 32], strides = [1, 1]} : vector<16x36xf32> to vector<16x32xf32>
    %546 = vector.extract_strided_slice %544 {offsets = [0, 32], sizes = [16, 2], strides = [1, 1]} : vector<16x36xf32> to vector<16x2xf32>
    %547 = tpu.transpose %546, [1, 0] : vector<16x2xf32> -> vector<2x16xf32>
    %548 = vector.extract_strided_slice %544 {offsets = [0, 34], sizes = [16, 2], strides = [1, 1]} : vector<16x36xf32> to vector<16x2xf32>
    %c64_89 = arith.constant 64 : index
    %c0_90 = arith.constant 0 : index
    %549 = vector.load %arg2[%c64_89, %c0_90] : memref<128x16xf32, #tpu.memory_space<vmem>>, vector<16x16xf32>
    %550 = vector.extract_strided_slice %547 {offsets = [0, 0], sizes = [1, 16], strides = [1, 1]} : vector<2x16xf32> to vector<1x16xf32>
    %551 = vector.shape_cast %550 : vector<1x16xf32> to vector<1x16xf32>
    %552 = vector.broadcast %551 : vector<1x16xf32> to vector<16x16xf32>
    %553 = vector.extract_strided_slice %547 {offsets = [1, 0], sizes = [1, 16], strides = [1, 1]} : vector<2x16xf32> to vector<1x16xf32>
    %554 = vector.shape_cast %553 : vector<1x16xf32> to vector<1x16xf32>
    %555 = vector.broadcast %554 : vector<1x16xf32> to vector<16x16xf32>
    %556 = tpu.concatenate %552, %555 in 0 : vector<16x16xf32>, vector<16x16xf32> -> vector<32x16xf32>
    %557 = vector.extract_strided_slice %548 {offsets = [0, 0], sizes = [16, 1], strides = [1, 1]} : vector<16x2xf32> to vector<16x1xf32>
    %558 = vector.extract_strided_slice %548 {offsets = [0, 1], sizes = [16, 1], strides = [1, 1]} : vector<16x2xf32> to vector<16x1xf32>
    %559 = tpu.concatenate %557, %558 in 0 : vector<16x1xf32>, vector<16x1xf32> -> vector<32x1xf32>
    %560 = vector.broadcast %559 : vector<32x1xf32> to vector<32x16xf32>
    %561 = arith.addf %556, %560 : vector<32x16xf32>
    %cst_91 = arith.constant 0.000000e+00 : f32
    %562 = vector.broadcast %cst_91 : f32 to vector<32x16xf32>
    %563 = arith.cmpf ogt, %561, %562 : vector<32x16xf32>
    %cst_92 = arith.constant 2.000000e-01 : f32
    %564 = vector.broadcast %cst_92 : f32 to vector<32x16xf32>
    %565 = arith.mulf %564, %561 : vector<32x16xf32>
    %566 = arith.select %563, %561, %565 : vector<32x16xi1>, vector<32x16xf32>
    %567 = tpu.concatenate %549, %549 in 0 : vector<16x16xf32>, vector<16x16xf32> -> vector<32x16xf32>
    %568 = arith.addf %566, %567 : vector<32x16xf32>
    %cst_93 = arith.constant dense<0xFF800000> : vector<32xf32>
    %569 = vector.multi_reduction <maximumf>, %568, %cst_93 [1] : vector<32x16xf32> to vector<32xf32>
    %570 = vector.shape_cast %569 : vector<32xf32> to vector<32x1xf32>
    %571 = vector.broadcast %570 : vector<32x1xf32> to vector<32x16xf32>
    %572 = arith.subf %568, %571 : vector<32x16xf32>
    %573 = math.exp %572 : vector<32x16xf32>
    %cst_94 = arith.constant dense<0.000000e+00> : vector<32xf32>
    %574 = vector.multi_reduction <add>, %573, %cst_94 [1] : vector<32x16xf32> to vector<32xf32>
    %575 = vector.shape_cast %574 : vector<32xf32> to vector<32x1xf32>
    %576 = tpu.reciprocal %575 {approx = true} : vector<32x1xf32> -> vector<32x1xf32>
    %577 = vector.broadcast %576 : vector<32x1xf32> to vector<32x16xf32>
    %578 = arith.mulf %573, %577 : vector<32x16xf32>
    %579 = vector.extract_strided_slice %578 {offsets = [0, 0], sizes = [16, 16], strides = [1, 1]} : vector<32x16xf32> to vector<16x16xf32>
    %580 = vector.extract_strided_slice %578 {offsets = [16, 0], sizes = [16, 16], strides = [1, 1]} : vector<32x16xf32> to vector<16x16xf32>
    %581 = tpu.concatenate %579, %580 in 1 : vector<16x16xf32>, vector<16x16xf32> -> vector<16x32xf32>
    %582 = vector.extract_strided_slice %545 {offsets = [0, 0], sizes = [16, 16], strides = [1, 1]} : vector<16x32xf32> to vector<16x16xf32>
    %583 = tpu.concatenate %582, %0 in 1 : vector<16x16xf32>, vector<16x16xf32> -> vector<16x32xf32>
    %584 = vector.extract_strided_slice %545 {offsets = [0, 16], sizes = [16, 16], strides = [1, 1]} : vector<16x32xf32> to vector<16x16xf32>
    %585 = tpu.concatenate %0, %584 in 1 : vector<16x16xf32>, vector<16x16xf32> -> vector<16x32xf32>
    %586 = tpu.concatenate %583, %585 in 0 : vector<16x32xf32>, vector<16x32xf32> -> vector<32x32xf32>
    %cst_95 = arith.constant dense<0.000000e+00> : vector<16x32xf32>
    %587 = tpu.matmul %581, %586, %cst_95 {dimension_numbers = #tpu.dot_dimension_numbers<[1], [0], [0], [1], [0, 0, 1, 1], [], []>} : vector<16x32xf32>, vector<32x32xf32>, vector<16x32xf32> -> vector<16x32xf32>
    %588 = vector.extract_strided_slice %367 {offsets = [80, 0], sizes = [16, 36], strides = [1, 1]} : vector<128x36xf32> to vector<16x36xf32>
    %589 = vector.extract_strided_slice %588 {offsets = [0, 0], sizes = [16, 32], strides = [1, 1]} : vector<16x36xf32> to vector<16x32xf32>
    %590 = vector.extract_strided_slice %588 {offsets = [0, 32], sizes = [16, 2], strides = [1, 1]} : vector<16x36xf32> to vector<16x2xf32>
    %591 = tpu.transpose %590, [1, 0] : vector<16x2xf32> -> vector<2x16xf32>
    %592 = vector.extract_strided_slice %588 {offsets = [0, 34], sizes = [16, 2], strides = [1, 1]} : vector<16x36xf32> to vector<16x2xf32>
    %c80_96 = arith.constant 80 : index
    %c0_97 = arith.constant 0 : index
    %593 = vector.load %arg2[%c80_96, %c0_97] : memref<128x16xf32, #tpu.memory_space<vmem>>, vector<16x16xf32>
    %594 = vector.extract_strided_slice %591 {offsets = [0, 0], sizes = [1, 16], strides = [1, 1]} : vector<2x16xf32> to vector<1x16xf32>
    %595 = vector.shape_cast %594 : vector<1x16xf32> to vector<1x16xf32>
    %596 = vector.broadcast %595 : vector<1x16xf32> to vector<16x16xf32>
    %597 = vector.extract_strided_slice %591 {offsets = [1, 0], sizes = [1, 16], strides = [1, 1]} : vector<2x16xf32> to vector<1x16xf32>
    %598 = vector.shape_cast %597 : vector<1x16xf32> to vector<1x16xf32>
    %599 = vector.broadcast %598 : vector<1x16xf32> to vector<16x16xf32>
    %600 = tpu.concatenate %596, %599 in 0 : vector<16x16xf32>, vector<16x16xf32> -> vector<32x16xf32>
    %601 = vector.extract_strided_slice %592 {offsets = [0, 0], sizes = [16, 1], strides = [1, 1]} : vector<16x2xf32> to vector<16x1xf32>
    %602 = vector.extract_strided_slice %592 {offsets = [0, 1], sizes = [16, 1], strides = [1, 1]} : vector<16x2xf32> to vector<16x1xf32>
    %603 = tpu.concatenate %601, %602 in 0 : vector<16x1xf32>, vector<16x1xf32> -> vector<32x1xf32>
    %604 = vector.broadcast %603 : vector<32x1xf32> to vector<32x16xf32>
    %605 = arith.addf %600, %604 : vector<32x16xf32>
    %cst_98 = arith.constant 0.000000e+00 : f32
    %606 = vector.broadcast %cst_98 : f32 to vector<32x16xf32>
    %607 = arith.cmpf ogt, %605, %606 : vector<32x16xf32>
    %cst_99 = arith.constant 2.000000e-01 : f32
    %608 = vector.broadcast %cst_99 : f32 to vector<32x16xf32>
    %609 = arith.mulf %608, %605 : vector<32x16xf32>
    %610 = arith.select %607, %605, %609 : vector<32x16xi1>, vector<32x16xf32>
    %611 = tpu.concatenate %593, %593 in 0 : vector<16x16xf32>, vector<16x16xf32> -> vector<32x16xf32>
    %612 = arith.addf %610, %611 : vector<32x16xf32>
    %cst_100 = arith.constant dense<0xFF800000> : vector<32xf32>
    %613 = vector.multi_reduction <maximumf>, %612, %cst_100 [1] : vector<32x16xf32> to vector<32xf32>
    %614 = vector.shape_cast %613 : vector<32xf32> to vector<32x1xf32>
    %615 = vector.broadcast %614 : vector<32x1xf32> to vector<32x16xf32>
    %616 = arith.subf %612, %615 : vector<32x16xf32>
    %617 = math.exp %616 : vector<32x16xf32>
    %cst_101 = arith.constant dense<0.000000e+00> : vector<32xf32>
    %618 = vector.multi_reduction <add>, %617, %cst_101 [1] : vector<32x16xf32> to vector<32xf32>
    %619 = vector.shape_cast %618 : vector<32xf32> to vector<32x1xf32>
    %620 = tpu.reciprocal %619 {approx = true} : vector<32x1xf32> -> vector<32x1xf32>
    %621 = vector.broadcast %620 : vector<32x1xf32> to vector<32x16xf32>
    %622 = arith.mulf %617, %621 : vector<32x16xf32>
    %623 = vector.extract_strided_slice %622 {offsets = [0, 0], sizes = [16, 16], strides = [1, 1]} : vector<32x16xf32> to vector<16x16xf32>
    %624 = vector.extract_strided_slice %622 {offsets = [16, 0], sizes = [16, 16], strides = [1, 1]} : vector<32x16xf32> to vector<16x16xf32>
    %625 = tpu.concatenate %623, %624 in 1 : vector<16x16xf32>, vector<16x16xf32> -> vector<16x32xf32>
    %626 = vector.extract_strided_slice %589 {offsets = [0, 0], sizes = [16, 16], strides = [1, 1]} : vector<16x32xf32> to vector<16x16xf32>
    %627 = tpu.concatenate %626, %0 in 1 : vector<16x16xf32>, vector<16x16xf32> -> vector<16x32xf32>
    %628 = vector.extract_strided_slice %589 {offsets = [0, 16], sizes = [16, 16], strides = [1, 1]} : vector<16x32xf32> to vector<16x16xf32>
    %629 = tpu.concatenate %0, %628 in 1 : vector<16x16xf32>, vector<16x16xf32> -> vector<16x32xf32>
    %630 = tpu.concatenate %627, %629 in 0 : vector<16x32xf32>, vector<16x32xf32> -> vector<32x32xf32>
    %cst_102 = arith.constant dense<0.000000e+00> : vector<16x32xf32>
    %631 = tpu.matmul %625, %630, %cst_102 {dimension_numbers = #tpu.dot_dimension_numbers<[1], [0], [0], [1], [0, 0, 1, 1], [], []>} : vector<16x32xf32>, vector<32x32xf32>, vector<16x32xf32> -> vector<16x32xf32>
    %632 = vector.extract_strided_slice %367 {offsets = [96, 0], sizes = [16, 36], strides = [1, 1]} : vector<128x36xf32> to vector<16x36xf32>
    %633 = vector.extract_strided_slice %632 {offsets = [0, 0], sizes = [16, 32], strides = [1, 1]} : vector<16x36xf32> to vector<16x32xf32>
    %634 = vector.extract_strided_slice %632 {offsets = [0, 32], sizes = [16, 2], strides = [1, 1]} : vector<16x36xf32> to vector<16x2xf32>
    %635 = tpu.transpose %634, [1, 0] : vector<16x2xf32> -> vector<2x16xf32>
    %636 = vector.extract_strided_slice %632 {offsets = [0, 34], sizes = [16, 2], strides = [1, 1]} : vector<16x36xf32> to vector<16x2xf32>
    %c96_103 = arith.constant 96 : index
    %c0_104 = arith.constant 0 : index
    %637 = vector.load %arg2[%c96_103, %c0_104] : memref<128x16xf32, #tpu.memory_space<vmem>>, vector<16x16xf32>
    %638 = vector.extract_strided_slice %635 {offsets = [0, 0], sizes = [1, 16], strides = [1, 1]} : vector<2x16xf32> to vector<1x16xf32>
    %639 = vector.shape_cast %638 : vector<1x16xf32> to vector<1x16xf32>
    %640 = vector.broadcast %639 : vector<1x16xf32> to vector<16x16xf32>
    %641 = vector.extract_strided_slice %635 {offsets = [1, 0], sizes = [1, 16], strides = [1, 1]} : vector<2x16xf32> to vector<1x16xf32>
    %642 = vector.shape_cast %641 : vector<1x16xf32> to vector<1x16xf32>
    %643 = vector.broadcast %642 : vector<1x16xf32> to vector<16x16xf32>
    %644 = tpu.concatenate %640, %643 in 0 : vector<16x16xf32>, vector<16x16xf32> -> vector<32x16xf32>
    %645 = vector.extract_strided_slice %636 {offsets = [0, 0], sizes = [16, 1], strides = [1, 1]} : vector<16x2xf32> to vector<16x1xf32>
    %646 = vector.extract_strided_slice %636 {offsets = [0, 1], sizes = [16, 1], strides = [1, 1]} : vector<16x2xf32> to vector<16x1xf32>
    %647 = tpu.concatenate %645, %646 in 0 : vector<16x1xf32>, vector<16x1xf32> -> vector<32x1xf32>
    %648 = vector.broadcast %647 : vector<32x1xf32> to vector<32x16xf32>
    %649 = arith.addf %644, %648 : vector<32x16xf32>
    %cst_105 = arith.constant 0.000000e+00 : f32
    %650 = vector.broadcast %cst_105 : f32 to vector<32x16xf32>
    %651 = arith.cmpf ogt, %649, %650 : vector<32x16xf32>
    %cst_106 = arith.constant 2.000000e-01 : f32
    %652 = vector.broadcast %cst_106 : f32 to vector<32x16xf32>
    %653 = arith.mulf %652, %649 : vector<32x16xf32>
    %654 = arith.select %651, %649, %653 : vector<32x16xi1>, vector<32x16xf32>
    %655 = tpu.concatenate %637, %637 in 0 : vector<16x16xf32>, vector<16x16xf32> -> vector<32x16xf32>
    %656 = arith.addf %654, %655 : vector<32x16xf32>
    %cst_107 = arith.constant dense<0xFF800000> : vector<32xf32>
    %657 = vector.multi_reduction <maximumf>, %656, %cst_107 [1] : vector<32x16xf32> to vector<32xf32>
    %658 = vector.shape_cast %657 : vector<32xf32> to vector<32x1xf32>
    %659 = vector.broadcast %658 : vector<32x1xf32> to vector<32x16xf32>
    %660 = arith.subf %656, %659 : vector<32x16xf32>
    %661 = math.exp %660 : vector<32x16xf32>
    %cst_108 = arith.constant dense<0.000000e+00> : vector<32xf32>
    %662 = vector.multi_reduction <add>, %661, %cst_108 [1] : vector<32x16xf32> to vector<32xf32>
    %663 = vector.shape_cast %662 : vector<32xf32> to vector<32x1xf32>
    %664 = tpu.reciprocal %663 {approx = true} : vector<32x1xf32> -> vector<32x1xf32>
    %665 = vector.broadcast %664 : vector<32x1xf32> to vector<32x16xf32>
    %666 = arith.mulf %661, %665 : vector<32x16xf32>
    %667 = vector.extract_strided_slice %666 {offsets = [0, 0], sizes = [16, 16], strides = [1, 1]} : vector<32x16xf32> to vector<16x16xf32>
    %668 = vector.extract_strided_slice %666 {offsets = [16, 0], sizes = [16, 16], strides = [1, 1]} : vector<32x16xf32> to vector<16x16xf32>
    %669 = tpu.concatenate %667, %668 in 1 : vector<16x16xf32>, vector<16x16xf32> -> vector<16x32xf32>
    %670 = vector.extract_strided_slice %633 {offsets = [0, 0], sizes = [16, 16], strides = [1, 1]} : vector<16x32xf32> to vector<16x16xf32>
    %671 = tpu.concatenate %670, %0 in 1 : vector<16x16xf32>, vector<16x16xf32> -> vector<16x32xf32>
    %672 = vector.extract_strided_slice %633 {offsets = [0, 16], sizes = [16, 16], strides = [1, 1]} : vector<16x32xf32> to vector<16x16xf32>
    %673 = tpu.concatenate %0, %672 in 1 : vector<16x16xf32>, vector<16x16xf32> -> vector<16x32xf32>
    %674 = tpu.concatenate %671, %673 in 0 : vector<16x32xf32>, vector<16x32xf32> -> vector<32x32xf32>
    %cst_109 = arith.constant dense<0.000000e+00> : vector<16x32xf32>
    %675 = tpu.matmul %669, %674, %cst_109 {dimension_numbers = #tpu.dot_dimension_numbers<[1], [0], [0], [1], [0, 0, 1, 1], [], []>} : vector<16x32xf32>, vector<32x32xf32>, vector<16x32xf32> -> vector<16x32xf32>
    %676 = vector.extract_strided_slice %367 {offsets = [112, 0], sizes = [16, 36], strides = [1, 1]} : vector<128x36xf32> to vector<16x36xf32>
    %677 = vector.extract_strided_slice %676 {offsets = [0, 0], sizes = [16, 32], strides = [1, 1]} : vector<16x36xf32> to vector<16x32xf32>
    %678 = vector.extract_strided_slice %676 {offsets = [0, 32], sizes = [16, 2], strides = [1, 1]} : vector<16x36xf32> to vector<16x2xf32>
    %679 = tpu.transpose %678, [1, 0] : vector<16x2xf32> -> vector<2x16xf32>
    %680 = vector.extract_strided_slice %676 {offsets = [0, 34], sizes = [16, 2], strides = [1, 1]} : vector<16x36xf32> to vector<16x2xf32>
    %c112_110 = arith.constant 112 : index
    %c0_111 = arith.constant 0 : index
    %681 = vector.load %arg2[%c112_110, %c0_111] : memref<128x16xf32, #tpu.memory_space<vmem>>, vector<16x16xf32>
    %682 = vector.extract_strided_slice %679 {offsets = [0, 0], sizes = [1, 16], strides = [1, 1]} : vector<2x16xf32> to vector<1x16xf32>
    %683 = vector.shape_cast %682 : vector<1x16xf32> to vector<1x16xf32>
    %684 = vector.broadcast %683 : vector<1x16xf32> to vector<16x16xf32>
    %685 = vector.extract_strided_slice %679 {offsets = [1, 0], sizes = [1, 16], strides = [1, 1]} : vector<2x16xf32> to vector<1x16xf32>
    %686 = vector.shape_cast %685 : vector<1x16xf32> to vector<1x16xf32>
    %687 = vector.broadcast %686 : vector<1x16xf32> to vector<16x16xf32>
    %688 = tpu.concatenate %684, %687 in 0 : vector<16x16xf32>, vector<16x16xf32> -> vector<32x16xf32>
    %689 = vector.extract_strided_slice %680 {offsets = [0, 0], sizes = [16, 1], strides = [1, 1]} : vector<16x2xf32> to vector<16x1xf32>
    %690 = vector.extract_strided_slice %680 {offsets = [0, 1], sizes = [16, 1], strides = [1, 1]} : vector<16x2xf32> to vector<16x1xf32>
    %691 = tpu.concatenate %689, %690 in 0 : vector<16x1xf32>, vector<16x1xf32> -> vector<32x1xf32>
    %692 = vector.broadcast %691 : vector<32x1xf32> to vector<32x16xf32>
    %693 = arith.addf %688, %692 : vector<32x16xf32>
    %cst_112 = arith.constant 0.000000e+00 : f32
    %694 = vector.broadcast %cst_112 : f32 to vector<32x16xf32>
    %695 = arith.cmpf ogt, %693, %694 : vector<32x16xf32>
    %cst_113 = arith.constant 2.000000e-01 : f32
    %696 = vector.broadcast %cst_113 : f32 to vector<32x16xf32>
    %697 = arith.mulf %696, %693 : vector<32x16xf32>
    %698 = arith.select %695, %693, %697 : vector<32x16xi1>, vector<32x16xf32>
    %699 = tpu.concatenate %681, %681 in 0 : vector<16x16xf32>, vector<16x16xf32> -> vector<32x16xf32>
    %700 = arith.addf %698, %699 : vector<32x16xf32>
    %cst_114 = arith.constant dense<0xFF800000> : vector<32xf32>
    %701 = vector.multi_reduction <maximumf>, %700, %cst_114 [1] : vector<32x16xf32> to vector<32xf32>
    %702 = vector.shape_cast %701 : vector<32xf32> to vector<32x1xf32>
    %703 = vector.broadcast %702 : vector<32x1xf32> to vector<32x16xf32>
    %704 = arith.subf %700, %703 : vector<32x16xf32>
    %705 = math.exp %704 : vector<32x16xf32>
    %cst_115 = arith.constant dense<0.000000e+00> : vector<32xf32>
    %706 = vector.multi_reduction <add>, %705, %cst_115 [1] : vector<32x16xf32> to vector<32xf32>
    %707 = vector.shape_cast %706 : vector<32xf32> to vector<32x1xf32>
    %708 = tpu.reciprocal %707 {approx = true} : vector<32x1xf32> -> vector<32x1xf32>
    %709 = vector.broadcast %708 : vector<32x1xf32> to vector<32x16xf32>
    %710 = arith.mulf %705, %709 : vector<32x16xf32>
    %711 = vector.extract_strided_slice %710 {offsets = [0, 0], sizes = [16, 16], strides = [1, 1]} : vector<32x16xf32> to vector<16x16xf32>
    %712 = vector.extract_strided_slice %710 {offsets = [16, 0], sizes = [16, 16], strides = [1, 1]} : vector<32x16xf32> to vector<16x16xf32>
    %713 = tpu.concatenate %711, %712 in 1 : vector<16x16xf32>, vector<16x16xf32> -> vector<16x32xf32>
    %714 = vector.extract_strided_slice %677 {offsets = [0, 0], sizes = [16, 16], strides = [1, 1]} : vector<16x32xf32> to vector<16x16xf32>
    %715 = tpu.concatenate %714, %0 in 1 : vector<16x16xf32>, vector<16x16xf32> -> vector<16x32xf32>
    %716 = vector.extract_strided_slice %677 {offsets = [0, 16], sizes = [16, 16], strides = [1, 1]} : vector<16x32xf32> to vector<16x16xf32>
    %717 = tpu.concatenate %0, %716 in 1 : vector<16x16xf32>, vector<16x16xf32> -> vector<16x32xf32>
    %718 = tpu.concatenate %715, %717 in 0 : vector<16x32xf32>, vector<16x32xf32> -> vector<32x32xf32>
    %cst_116 = arith.constant dense<0.000000e+00> : vector<16x32xf32>
    %719 = tpu.matmul %713, %718, %cst_116 {dimension_numbers = #tpu.dot_dimension_numbers<[1], [0], [0], [1], [0, 0, 1, 1], [], []>} : vector<16x32xf32>, vector<32x32xf32>, vector<16x32xf32> -> vector<16x32xf32>
    %720 = tpu.concatenate %411, %455, %499, %543, %587, %631, %675, %719 in 0 : vector<16x32xf32>, vector<16x32xf32>, vector<16x32xf32>, vector<16x32xf32>, vector<16x32xf32>, vector<16x32xf32>, vector<16x32xf32>, vector<16x32xf32> -> vector<128x32xf32>
    %721 = vector.broadcast %366 : vector<1x32xf32> to vector<128x32xf32>
    %722 = arith.addf %720, %721 : vector<128x32xf32>
    %cst_117 = arith.constant 0.000000e+00 : f32
    %723 = vector.broadcast %cst_117 : f32 to vector<128x32xf32>
    %724 = arith.cmpf ogt, %722, %723 : vector<128x32xf32>
    %cst_118 = arith.constant 0.00999999977 : f32
    %725 = vector.broadcast %cst_118 : f32 to vector<128x32xf32>
    %726 = arith.mulf %725, %722 : vector<128x32xf32>
    %727 = arith.select %724, %722, %726 : vector<128x32xi1>, vector<128x32xf32>
    %c56 = arith.constant 56 : index
    %c0_119 = arith.constant 0 : index
    %728 = vector.load %arg3[%c56, %c0_119] : memref<112x128xf32, #tpu.memory_space<vmem>>, vector<32x36xf32>
    %c88 = arith.constant 88 : index
    %c0_120 = arith.constant 0 : index
    %729 = vector.load %arg3[%c88, %c0_120] : memref<112x128xf32, #tpu.memory_space<vmem>>, vector<1x16xf32>
    %cst_121 = arith.constant dense<0.000000e+00> : vector<128x36xf32>
    %730 = tpu.matmul %727, %728, %cst_121 {dimension_numbers = #tpu.dot_dimension_numbers<[1], [0], [0], [1], [0, 0, 1, 1], [], []>} : vector<128x32xf32>, vector<32x36xf32>, vector<128x36xf32> -> vector<128x36xf32>
    %731 = vector.extract_strided_slice %730 {offsets = [0, 0], sizes = [16, 36], strides = [1, 1]} : vector<128x36xf32> to vector<16x36xf32>
    %732 = vector.extract_strided_slice %731 {offsets = [0, 0], sizes = [16, 32], strides = [1, 1]} : vector<16x36xf32> to vector<16x32xf32>
    %733 = vector.extract_strided_slice %731 {offsets = [0, 32], sizes = [16, 2], strides = [1, 1]} : vector<16x36xf32> to vector<16x2xf32>
    %734 = tpu.transpose %733, [1, 0] : vector<16x2xf32> -> vector<2x16xf32>
    %735 = vector.extract_strided_slice %731 {offsets = [0, 34], sizes = [16, 2], strides = [1, 1]} : vector<16x36xf32> to vector<16x2xf32>
    %c0_122 = arith.constant 0 : index
    %c0_123 = arith.constant 0 : index
    %736 = vector.load %arg2[%c0_122, %c0_123] : memref<128x16xf32, #tpu.memory_space<vmem>>, vector<16x16xf32>
    %737 = vector.extract_strided_slice %734 {offsets = [0, 0], sizes = [1, 16], strides = [1, 1]} : vector<2x16xf32> to vector<1x16xf32>
    %738 = vector.shape_cast %737 : vector<1x16xf32> to vector<1x16xf32>
    %739 = vector.broadcast %738 : vector<1x16xf32> to vector<16x16xf32>
    %740 = vector.extract_strided_slice %734 {offsets = [1, 0], sizes = [1, 16], strides = [1, 1]} : vector<2x16xf32> to vector<1x16xf32>
    %741 = vector.shape_cast %740 : vector<1x16xf32> to vector<1x16xf32>
    %742 = vector.broadcast %741 : vector<1x16xf32> to vector<16x16xf32>
    %743 = tpu.concatenate %739, %742 in 0 : vector<16x16xf32>, vector<16x16xf32> -> vector<32x16xf32>
    %744 = vector.extract_strided_slice %735 {offsets = [0, 0], sizes = [16, 1], strides = [1, 1]} : vector<16x2xf32> to vector<16x1xf32>
    %745 = vector.extract_strided_slice %735 {offsets = [0, 1], sizes = [16, 1], strides = [1, 1]} : vector<16x2xf32> to vector<16x1xf32>
    %746 = tpu.concatenate %744, %745 in 0 : vector<16x1xf32>, vector<16x1xf32> -> vector<32x1xf32>
    %747 = vector.broadcast %746 : vector<32x1xf32> to vector<32x16xf32>
    %748 = arith.addf %743, %747 : vector<32x16xf32>
    %cst_124 = arith.constant 0.000000e+00 : f32
    %749 = vector.broadcast %cst_124 : f32 to vector<32x16xf32>
    %750 = arith.cmpf ogt, %748, %749 : vector<32x16xf32>
    %cst_125 = arith.constant 2.000000e-01 : f32
    %751 = vector.broadcast %cst_125 : f32 to vector<32x16xf32>
    %752 = arith.mulf %751, %748 : vector<32x16xf32>
    %753 = arith.select %750, %748, %752 : vector<32x16xi1>, vector<32x16xf32>
    %754 = tpu.concatenate %736, %736 in 0 : vector<16x16xf32>, vector<16x16xf32> -> vector<32x16xf32>
    %755 = arith.addf %753, %754 : vector<32x16xf32>
    %cst_126 = arith.constant dense<0xFF800000> : vector<32xf32>
    %756 = vector.multi_reduction <maximumf>, %755, %cst_126 [1] : vector<32x16xf32> to vector<32xf32>
    %757 = vector.shape_cast %756 : vector<32xf32> to vector<32x1xf32>
    %758 = vector.broadcast %757 : vector<32x1xf32> to vector<32x16xf32>
    %759 = arith.subf %755, %758 : vector<32x16xf32>
    %760 = math.exp %759 : vector<32x16xf32>
    %cst_127 = arith.constant dense<0.000000e+00> : vector<32xf32>
    %761 = vector.multi_reduction <add>, %760, %cst_127 [1] : vector<32x16xf32> to vector<32xf32>
    %762 = vector.shape_cast %761 : vector<32xf32> to vector<32x1xf32>
    %763 = tpu.reciprocal %762 {approx = true} : vector<32x1xf32> -> vector<32x1xf32>
    %764 = vector.broadcast %763 : vector<32x1xf32> to vector<32x16xf32>
    %765 = arith.mulf %760, %764 : vector<32x16xf32>
    %766 = vector.extract_strided_slice %765 {offsets = [0, 0], sizes = [16, 16], strides = [1, 1]} : vector<32x16xf32> to vector<16x16xf32>
    %767 = vector.extract_strided_slice %765 {offsets = [16, 0], sizes = [16, 16], strides = [1, 1]} : vector<32x16xf32> to vector<16x16xf32>
    %768 = tpu.concatenate %766, %767 in 1 : vector<16x16xf32>, vector<16x16xf32> -> vector<16x32xf32>
    %769 = vector.extract_strided_slice %732 {offsets = [0, 0], sizes = [16, 16], strides = [1, 1]} : vector<16x32xf32> to vector<16x16xf32>
    %770 = vector.extract_strided_slice %732 {offsets = [0, 16], sizes = [16, 16], strides = [1, 1]} : vector<16x32xf32> to vector<16x16xf32>
    %771 = tpu.concatenate %769, %770 in 0 : vector<16x16xf32>, vector<16x16xf32> -> vector<32x16xf32>
    %cst_128 = arith.constant dense<0.000000e+00> : vector<16x16xf32>
    %772 = tpu.matmul %768, %771, %cst_128 {dimension_numbers = #tpu.dot_dimension_numbers<[1], [0], [0], [1], [0, 0, 1, 1], [], []>} : vector<16x32xf32>, vector<32x16xf32>, vector<16x16xf32> -> vector<16x16xf32>
    %cst_129 = arith.constant 5.000000e-01 : f32
    %773 = vector.broadcast %cst_129 : f32 to vector<16x16xf32>
    %774 = arith.mulf %772, %773 : vector<16x16xf32>
    %775 = vector.extract_strided_slice %730 {offsets = [16, 0], sizes = [16, 36], strides = [1, 1]} : vector<128x36xf32> to vector<16x36xf32>
    %776 = vector.extract_strided_slice %775 {offsets = [0, 0], sizes = [16, 32], strides = [1, 1]} : vector<16x36xf32> to vector<16x32xf32>
    %777 = vector.extract_strided_slice %775 {offsets = [0, 32], sizes = [16, 2], strides = [1, 1]} : vector<16x36xf32> to vector<16x2xf32>
    %778 = tpu.transpose %777, [1, 0] : vector<16x2xf32> -> vector<2x16xf32>
    %779 = vector.extract_strided_slice %775 {offsets = [0, 34], sizes = [16, 2], strides = [1, 1]} : vector<16x36xf32> to vector<16x2xf32>
    %c16_130 = arith.constant 16 : index
    %c0_131 = arith.constant 0 : index
    %780 = vector.load %arg2[%c16_130, %c0_131] : memref<128x16xf32, #tpu.memory_space<vmem>>, vector<16x16xf32>
    %781 = vector.extract_strided_slice %778 {offsets = [0, 0], sizes = [1, 16], strides = [1, 1]} : vector<2x16xf32> to vector<1x16xf32>
    %782 = vector.shape_cast %781 : vector<1x16xf32> to vector<1x16xf32>
    %783 = vector.broadcast %782 : vector<1x16xf32> to vector<16x16xf32>
    %784 = vector.extract_strided_slice %778 {offsets = [1, 0], sizes = [1, 16], strides = [1, 1]} : vector<2x16xf32> to vector<1x16xf32>
    %785 = vector.shape_cast %784 : vector<1x16xf32> to vector<1x16xf32>
    %786 = vector.broadcast %785 : vector<1x16xf32> to vector<16x16xf32>
    %787 = tpu.concatenate %783, %786 in 0 : vector<16x16xf32>, vector<16x16xf32> -> vector<32x16xf32>
    %788 = vector.extract_strided_slice %779 {offsets = [0, 0], sizes = [16, 1], strides = [1, 1]} : vector<16x2xf32> to vector<16x1xf32>
    %789 = vector.extract_strided_slice %779 {offsets = [0, 1], sizes = [16, 1], strides = [1, 1]} : vector<16x2xf32> to vector<16x1xf32>
    %790 = tpu.concatenate %788, %789 in 0 : vector<16x1xf32>, vector<16x1xf32> -> vector<32x1xf32>
    %791 = vector.broadcast %790 : vector<32x1xf32> to vector<32x16xf32>
    %792 = arith.addf %787, %791 : vector<32x16xf32>
    %cst_132 = arith.constant 0.000000e+00 : f32
    %793 = vector.broadcast %cst_132 : f32 to vector<32x16xf32>
    %794 = arith.cmpf ogt, %792, %793 : vector<32x16xf32>
    %cst_133 = arith.constant 2.000000e-01 : f32
    %795 = vector.broadcast %cst_133 : f32 to vector<32x16xf32>
    %796 = arith.mulf %795, %792 : vector<32x16xf32>
    %797 = arith.select %794, %792, %796 : vector<32x16xi1>, vector<32x16xf32>
    %798 = tpu.concatenate %780, %780 in 0 : vector<16x16xf32>, vector<16x16xf32> -> vector<32x16xf32>
    %799 = arith.addf %797, %798 : vector<32x16xf32>
    %cst_134 = arith.constant dense<0xFF800000> : vector<32xf32>
    %800 = vector.multi_reduction <maximumf>, %799, %cst_134 [1] : vector<32x16xf32> to vector<32xf32>
    %801 = vector.shape_cast %800 : vector<32xf32> to vector<32x1xf32>
    %802 = vector.broadcast %801 : vector<32x1xf32> to vector<32x16xf32>
    %803 = arith.subf %799, %802 : vector<32x16xf32>
    %804 = math.exp %803 : vector<32x16xf32>
    %cst_135 = arith.constant dense<0.000000e+00> : vector<32xf32>
    %805 = vector.multi_reduction <add>, %804, %cst_135 [1] : vector<32x16xf32> to vector<32xf32>
    %806 = vector.shape_cast %805 : vector<32xf32> to vector<32x1xf32>
    %807 = tpu.reciprocal %806 {approx = true} : vector<32x1xf32> -> vector<32x1xf32>
    %808 = vector.broadcast %807 : vector<32x1xf32> to vector<32x16xf32>
    %809 = arith.mulf %804, %808 : vector<32x16xf32>
    %810 = vector.extract_strided_slice %809 {offsets = [0, 0], sizes = [16, 16], strides = [1, 1]} : vector<32x16xf32> to vector<16x16xf32>
    %811 = vector.extract_strided_slice %809 {offsets = [16, 0], sizes = [16, 16], strides = [1, 1]} : vector<32x16xf32> to vector<16x16xf32>
    %812 = tpu.concatenate %810, %811 in 1 : vector<16x16xf32>, vector<16x16xf32> -> vector<16x32xf32>
    %813 = vector.extract_strided_slice %776 {offsets = [0, 0], sizes = [16, 16], strides = [1, 1]} : vector<16x32xf32> to vector<16x16xf32>
    %814 = vector.extract_strided_slice %776 {offsets = [0, 16], sizes = [16, 16], strides = [1, 1]} : vector<16x32xf32> to vector<16x16xf32>
    %815 = tpu.concatenate %813, %814 in 0 : vector<16x16xf32>, vector<16x16xf32> -> vector<32x16xf32>
    %cst_136 = arith.constant dense<0.000000e+00> : vector<16x16xf32>
    %816 = tpu.matmul %812, %815, %cst_136 {dimension_numbers = #tpu.dot_dimension_numbers<[1], [0], [0], [1], [0, 0, 1, 1], [], []>} : vector<16x32xf32>, vector<32x16xf32>, vector<16x16xf32> -> vector<16x16xf32>
    %cst_137 = arith.constant 5.000000e-01 : f32
    %817 = vector.broadcast %cst_137 : f32 to vector<16x16xf32>
    %818 = arith.mulf %816, %817 : vector<16x16xf32>
    %819 = vector.extract_strided_slice %730 {offsets = [32, 0], sizes = [16, 36], strides = [1, 1]} : vector<128x36xf32> to vector<16x36xf32>
    %820 = vector.extract_strided_slice %819 {offsets = [0, 0], sizes = [16, 32], strides = [1, 1]} : vector<16x36xf32> to vector<16x32xf32>
    %821 = vector.extract_strided_slice %819 {offsets = [0, 32], sizes = [16, 2], strides = [1, 1]} : vector<16x36xf32> to vector<16x2xf32>
    %822 = tpu.transpose %821, [1, 0] : vector<16x2xf32> -> vector<2x16xf32>
    %823 = vector.extract_strided_slice %819 {offsets = [0, 34], sizes = [16, 2], strides = [1, 1]} : vector<16x36xf32> to vector<16x2xf32>
    %c32_138 = arith.constant 32 : index
    %c0_139 = arith.constant 0 : index
    %824 = vector.load %arg2[%c32_138, %c0_139] : memref<128x16xf32, #tpu.memory_space<vmem>>, vector<16x16xf32>
    %825 = vector.extract_strided_slice %822 {offsets = [0, 0], sizes = [1, 16], strides = [1, 1]} : vector<2x16xf32> to vector<1x16xf32>
    %826 = vector.shape_cast %825 : vector<1x16xf32> to vector<1x16xf32>
    %827 = vector.broadcast %826 : vector<1x16xf32> to vector<16x16xf32>
    %828 = vector.extract_strided_slice %822 {offsets = [1, 0], sizes = [1, 16], strides = [1, 1]} : vector<2x16xf32> to vector<1x16xf32>
    %829 = vector.shape_cast %828 : vector<1x16xf32> to vector<1x16xf32>
    %830 = vector.broadcast %829 : vector<1x16xf32> to vector<16x16xf32>
    %831 = tpu.concatenate %827, %830 in 0 : vector<16x16xf32>, vector<16x16xf32> -> vector<32x16xf32>
    %832 = vector.extract_strided_slice %823 {offsets = [0, 0], sizes = [16, 1], strides = [1, 1]} : vector<16x2xf32> to vector<16x1xf32>
    %833 = vector.extract_strided_slice %823 {offsets = [0, 1], sizes = [16, 1], strides = [1, 1]} : vector<16x2xf32> to vector<16x1xf32>
    %834 = tpu.concatenate %832, %833 in 0 : vector<16x1xf32>, vector<16x1xf32> -> vector<32x1xf32>
    %835 = vector.broadcast %834 : vector<32x1xf32> to vector<32x16xf32>
    %836 = arith.addf %831, %835 : vector<32x16xf32>
    %cst_140 = arith.constant 0.000000e+00 : f32
    %837 = vector.broadcast %cst_140 : f32 to vector<32x16xf32>
    %838 = arith.cmpf ogt, %836, %837 : vector<32x16xf32>
    %cst_141 = arith.constant 2.000000e-01 : f32
    %839 = vector.broadcast %cst_141 : f32 to vector<32x16xf32>
    %840 = arith.mulf %839, %836 : vector<32x16xf32>
    %841 = arith.select %838, %836, %840 : vector<32x16xi1>, vector<32x16xf32>
    %842 = tpu.concatenate %824, %824 in 0 : vector<16x16xf32>, vector<16x16xf32> -> vector<32x16xf32>
    %843 = arith.addf %841, %842 : vector<32x16xf32>
    %cst_142 = arith.constant dense<0xFF800000> : vector<32xf32>
    %844 = vector.multi_reduction <maximumf>, %843, %cst_142 [1] : vector<32x16xf32> to vector<32xf32>
    %845 = vector.shape_cast %844 : vector<32xf32> to vector<32x1xf32>
    %846 = vector.broadcast %845 : vector<32x1xf32> to vector<32x16xf32>
    %847 = arith.subf %843, %846 : vector<32x16xf32>
    %848 = math.exp %847 : vector<32x16xf32>
    %cst_143 = arith.constant dense<0.000000e+00> : vector<32xf32>
    %849 = vector.multi_reduction <add>, %848, %cst_143 [1] : vector<32x16xf32> to vector<32xf32>
    %850 = vector.shape_cast %849 : vector<32xf32> to vector<32x1xf32>
    %851 = tpu.reciprocal %850 {approx = true} : vector<32x1xf32> -> vector<32x1xf32>
    %852 = vector.broadcast %851 : vector<32x1xf32> to vector<32x16xf32>
    %853 = arith.mulf %848, %852 : vector<32x16xf32>
    %854 = vector.extract_strided_slice %853 {offsets = [0, 0], sizes = [16, 16], strides = [1, 1]} : vector<32x16xf32> to vector<16x16xf32>
    %855 = vector.extract_strided_slice %853 {offsets = [16, 0], sizes = [16, 16], strides = [1, 1]} : vector<32x16xf32> to vector<16x16xf32>
    %856 = tpu.concatenate %854, %855 in 1 : vector<16x16xf32>, vector<16x16xf32> -> vector<16x32xf32>
    %857 = vector.extract_strided_slice %820 {offsets = [0, 0], sizes = [16, 16], strides = [1, 1]} : vector<16x32xf32> to vector<16x16xf32>
    %858 = vector.extract_strided_slice %820 {offsets = [0, 16], sizes = [16, 16], strides = [1, 1]} : vector<16x32xf32> to vector<16x16xf32>
    %859 = tpu.concatenate %857, %858 in 0 : vector<16x16xf32>, vector<16x16xf32> -> vector<32x16xf32>
    %cst_144 = arith.constant dense<0.000000e+00> : vector<16x16xf32>
    %860 = tpu.matmul %856, %859, %cst_144 {dimension_numbers = #tpu.dot_dimension_numbers<[1], [0], [0], [1], [0, 0, 1, 1], [], []>} : vector<16x32xf32>, vector<32x16xf32>, vector<16x16xf32> -> vector<16x16xf32>
    %cst_145 = arith.constant 5.000000e-01 : f32
    %861 = vector.broadcast %cst_145 : f32 to vector<16x16xf32>
    %862 = arith.mulf %860, %861 : vector<16x16xf32>
    %863 = vector.extract_strided_slice %730 {offsets = [48, 0], sizes = [16, 36], strides = [1, 1]} : vector<128x36xf32> to vector<16x36xf32>
    %864 = vector.extract_strided_slice %863 {offsets = [0, 0], sizes = [16, 32], strides = [1, 1]} : vector<16x36xf32> to vector<16x32xf32>
    %865 = vector.extract_strided_slice %863 {offsets = [0, 32], sizes = [16, 2], strides = [1, 1]} : vector<16x36xf32> to vector<16x2xf32>
    %866 = tpu.transpose %865, [1, 0] : vector<16x2xf32> -> vector<2x16xf32>
    %867 = vector.extract_strided_slice %863 {offsets = [0, 34], sizes = [16, 2], strides = [1, 1]} : vector<16x36xf32> to vector<16x2xf32>
    %c48_146 = arith.constant 48 : index
    %c0_147 = arith.constant 0 : index
    %868 = vector.load %arg2[%c48_146, %c0_147] : memref<128x16xf32, #tpu.memory_space<vmem>>, vector<16x16xf32>
    %869 = vector.extract_strided_slice %866 {offsets = [0, 0], sizes = [1, 16], strides = [1, 1]} : vector<2x16xf32> to vector<1x16xf32>
    %870 = vector.shape_cast %869 : vector<1x16xf32> to vector<1x16xf32>
    %871 = vector.broadcast %870 : vector<1x16xf32> to vector<16x16xf32>
    %872 = vector.extract_strided_slice %866 {offsets = [1, 0], sizes = [1, 16], strides = [1, 1]} : vector<2x16xf32> to vector<1x16xf32>
    %873 = vector.shape_cast %872 : vector<1x16xf32> to vector<1x16xf32>
    %874 = vector.broadcast %873 : vector<1x16xf32> to vector<16x16xf32>
    %875 = tpu.concatenate %871, %874 in 0 : vector<16x16xf32>, vector<16x16xf32> -> vector<32x16xf32>
    %876 = vector.extract_strided_slice %867 {offsets = [0, 0], sizes = [16, 1], strides = [1, 1]} : vector<16x2xf32> to vector<16x1xf32>
    %877 = vector.extract_strided_slice %867 {offsets = [0, 1], sizes = [16, 1], strides = [1, 1]} : vector<16x2xf32> to vector<16x1xf32>
    %878 = tpu.concatenate %876, %877 in 0 : vector<16x1xf32>, vector<16x1xf32> -> vector<32x1xf32>
    %879 = vector.broadcast %878 : vector<32x1xf32> to vector<32x16xf32>
    %880 = arith.addf %875, %879 : vector<32x16xf32>
    %cst_148 = arith.constant 0.000000e+00 : f32
    %881 = vector.broadcast %cst_148 : f32 to vector<32x16xf32>
    %882 = arith.cmpf ogt, %880, %881 : vector<32x16xf32>
    %cst_149 = arith.constant 2.000000e-01 : f32
    %883 = vector.broadcast %cst_149 : f32 to vector<32x16xf32>
    %884 = arith.mulf %883, %880 : vector<32x16xf32>
    %885 = arith.select %882, %880, %884 : vector<32x16xi1>, vector<32x16xf32>
    %886 = tpu.concatenate %868, %868 in 0 : vector<16x16xf32>, vector<16x16xf32> -> vector<32x16xf32>
    %887 = arith.addf %885, %886 : vector<32x16xf32>
    %cst_150 = arith.constant dense<0xFF800000> : vector<32xf32>
    %888 = vector.multi_reduction <maximumf>, %887, %cst_150 [1] : vector<32x16xf32> to vector<32xf32>
    %889 = vector.shape_cast %888 : vector<32xf32> to vector<32x1xf32>
    %890 = vector.broadcast %889 : vector<32x1xf32> to vector<32x16xf32>
    %891 = arith.subf %887, %890 : vector<32x16xf32>
    %892 = math.exp %891 : vector<32x16xf32>
    %cst_151 = arith.constant dense<0.000000e+00> : vector<32xf32>
    %893 = vector.multi_reduction <add>, %892, %cst_151 [1] : vector<32x16xf32> to vector<32xf32>
    %894 = vector.shape_cast %893 : vector<32xf32> to vector<32x1xf32>
    %895 = tpu.reciprocal %894 {approx = true} : vector<32x1xf32> -> vector<32x1xf32>
    %896 = vector.broadcast %895 : vector<32x1xf32> to vector<32x16xf32>
    %897 = arith.mulf %892, %896 : vector<32x16xf32>
    %898 = vector.extract_strided_slice %897 {offsets = [0, 0], sizes = [16, 16], strides = [1, 1]} : vector<32x16xf32> to vector<16x16xf32>
    %899 = vector.extract_strided_slice %897 {offsets = [16, 0], sizes = [16, 16], strides = [1, 1]} : vector<32x16xf32> to vector<16x16xf32>
    %900 = tpu.concatenate %898, %899 in 1 : vector<16x16xf32>, vector<16x16xf32> -> vector<16x32xf32>
    %901 = vector.extract_strided_slice %864 {offsets = [0, 0], sizes = [16, 16], strides = [1, 1]} : vector<16x32xf32> to vector<16x16xf32>
    %902 = vector.extract_strided_slice %864 {offsets = [0, 16], sizes = [16, 16], strides = [1, 1]} : vector<16x32xf32> to vector<16x16xf32>
    %903 = tpu.concatenate %901, %902 in 0 : vector<16x16xf32>, vector<16x16xf32> -> vector<32x16xf32>
    %cst_152 = arith.constant dense<0.000000e+00> : vector<16x16xf32>
    %904 = tpu.matmul %900, %903, %cst_152 {dimension_numbers = #tpu.dot_dimension_numbers<[1], [0], [0], [1], [0, 0, 1, 1], [], []>} : vector<16x32xf32>, vector<32x16xf32>, vector<16x16xf32> -> vector<16x16xf32>
    %cst_153 = arith.constant 5.000000e-01 : f32
    %905 = vector.broadcast %cst_153 : f32 to vector<16x16xf32>
    %906 = arith.mulf %904, %905 : vector<16x16xf32>
    %907 = vector.extract_strided_slice %730 {offsets = [64, 0], sizes = [16, 36], strides = [1, 1]} : vector<128x36xf32> to vector<16x36xf32>
    %908 = vector.extract_strided_slice %907 {offsets = [0, 0], sizes = [16, 32], strides = [1, 1]} : vector<16x36xf32> to vector<16x32xf32>
    %909 = vector.extract_strided_slice %907 {offsets = [0, 32], sizes = [16, 2], strides = [1, 1]} : vector<16x36xf32> to vector<16x2xf32>
    %910 = tpu.transpose %909, [1, 0] : vector<16x2xf32> -> vector<2x16xf32>
    %911 = vector.extract_strided_slice %907 {offsets = [0, 34], sizes = [16, 2], strides = [1, 1]} : vector<16x36xf32> to vector<16x2xf32>
    %c64_154 = arith.constant 64 : index
    %c0_155 = arith.constant 0 : index
    %912 = vector.load %arg2[%c64_154, %c0_155] : memref<128x16xf32, #tpu.memory_space<vmem>>, vector<16x16xf32>
    %913 = vector.extract_strided_slice %910 {offsets = [0, 0], sizes = [1, 16], strides = [1, 1]} : vector<2x16xf32> to vector<1x16xf32>
    %914 = vector.shape_cast %913 : vector<1x16xf32> to vector<1x16xf32>
    %915 = vector.broadcast %914 : vector<1x16xf32> to vector<16x16xf32>
    %916 = vector.extract_strided_slice %910 {offsets = [1, 0], sizes = [1, 16], strides = [1, 1]} : vector<2x16xf32> to vector<1x16xf32>
    %917 = vector.shape_cast %916 : vector<1x16xf32> to vector<1x16xf32>
    %918 = vector.broadcast %917 : vector<1x16xf32> to vector<16x16xf32>
    %919 = tpu.concatenate %915, %918 in 0 : vector<16x16xf32>, vector<16x16xf32> -> vector<32x16xf32>
    %920 = vector.extract_strided_slice %911 {offsets = [0, 0], sizes = [16, 1], strides = [1, 1]} : vector<16x2xf32> to vector<16x1xf32>
    %921 = vector.extract_strided_slice %911 {offsets = [0, 1], sizes = [16, 1], strides = [1, 1]} : vector<16x2xf32> to vector<16x1xf32>
    %922 = tpu.concatenate %920, %921 in 0 : vector<16x1xf32>, vector<16x1xf32> -> vector<32x1xf32>
    %923 = vector.broadcast %922 : vector<32x1xf32> to vector<32x16xf32>
    %924 = arith.addf %919, %923 : vector<32x16xf32>
    %cst_156 = arith.constant 0.000000e+00 : f32
    %925 = vector.broadcast %cst_156 : f32 to vector<32x16xf32>
    %926 = arith.cmpf ogt, %924, %925 : vector<32x16xf32>
    %cst_157 = arith.constant 2.000000e-01 : f32
    %927 = vector.broadcast %cst_157 : f32 to vector<32x16xf32>
    %928 = arith.mulf %927, %924 : vector<32x16xf32>
    %929 = arith.select %926, %924, %928 : vector<32x16xi1>, vector<32x16xf32>
    %930 = tpu.concatenate %912, %912 in 0 : vector<16x16xf32>, vector<16x16xf32> -> vector<32x16xf32>
    %931 = arith.addf %929, %930 : vector<32x16xf32>
    %cst_158 = arith.constant dense<0xFF800000> : vector<32xf32>
    %932 = vector.multi_reduction <maximumf>, %931, %cst_158 [1] : vector<32x16xf32> to vector<32xf32>
    %933 = vector.shape_cast %932 : vector<32xf32> to vector<32x1xf32>
    %934 = vector.broadcast %933 : vector<32x1xf32> to vector<32x16xf32>
    %935 = arith.subf %931, %934 : vector<32x16xf32>
    %936 = math.exp %935 : vector<32x16xf32>
    %cst_159 = arith.constant dense<0.000000e+00> : vector<32xf32>
    %937 = vector.multi_reduction <add>, %936, %cst_159 [1] : vector<32x16xf32> to vector<32xf32>
    %938 = vector.shape_cast %937 : vector<32xf32> to vector<32x1xf32>
    %939 = tpu.reciprocal %938 {approx = true} : vector<32x1xf32> -> vector<32x1xf32>
    %940 = vector.broadcast %939 : vector<32x1xf32> to vector<32x16xf32>
    %941 = arith.mulf %936, %940 : vector<32x16xf32>
    %942 = vector.extract_strided_slice %941 {offsets = [0, 0], sizes = [16, 16], strides = [1, 1]} : vector<32x16xf32> to vector<16x16xf32>
    %943 = vector.extract_strided_slice %941 {offsets = [16, 0], sizes = [16, 16], strides = [1, 1]} : vector<32x16xf32> to vector<16x16xf32>
    %944 = tpu.concatenate %942, %943 in 1 : vector<16x16xf32>, vector<16x16xf32> -> vector<16x32xf32>
    %945 = vector.extract_strided_slice %908 {offsets = [0, 0], sizes = [16, 16], strides = [1, 1]} : vector<16x32xf32> to vector<16x16xf32>
    %946 = vector.extract_strided_slice %908 {offsets = [0, 16], sizes = [16, 16], strides = [1, 1]} : vector<16x32xf32> to vector<16x16xf32>
    %947 = tpu.concatenate %945, %946 in 0 : vector<16x16xf32>, vector<16x16xf32> -> vector<32x16xf32>
    %cst_160 = arith.constant dense<0.000000e+00> : vector<16x16xf32>
    %948 = tpu.matmul %944, %947, %cst_160 {dimension_numbers = #tpu.dot_dimension_numbers<[1], [0], [0], [1], [0, 0, 1, 1], [], []>} : vector<16x32xf32>, vector<32x16xf32>, vector<16x16xf32> -> vector<16x16xf32>
    %cst_161 = arith.constant 5.000000e-01 : f32
    %949 = vector.broadcast %cst_161 : f32 to vector<16x16xf32>
    %950 = arith.mulf %948, %949 : vector<16x16xf32>
    %951 = vector.extract_strided_slice %730 {offsets = [80, 0], sizes = [16, 36], strides = [1, 1]} : vector<128x36xf32> to vector<16x36xf32>
    %952 = vector.extract_strided_slice %951 {offsets = [0, 0], sizes = [16, 32], strides = [1, 1]} : vector<16x36xf32> to vector<16x32xf32>
    %953 = vector.extract_strided_slice %951 {offsets = [0, 32], sizes = [16, 2], strides = [1, 1]} : vector<16x36xf32> to vector<16x2xf32>
    %954 = tpu.transpose %953, [1, 0] : vector<16x2xf32> -> vector<2x16xf32>
    %955 = vector.extract_strided_slice %951 {offsets = [0, 34], sizes = [16, 2], strides = [1, 1]} : vector<16x36xf32> to vector<16x2xf32>
    %c80_162 = arith.constant 80 : index
    %c0_163 = arith.constant 0 : index
    %956 = vector.load %arg2[%c80_162, %c0_163] : memref<128x16xf32, #tpu.memory_space<vmem>>, vector<16x16xf32>
    %957 = vector.extract_strided_slice %954 {offsets = [0, 0], sizes = [1, 16], strides = [1, 1]} : vector<2x16xf32> to vector<1x16xf32>
    %958 = vector.shape_cast %957 : vector<1x16xf32> to vector<1x16xf32>
    %959 = vector.broadcast %958 : vector<1x16xf32> to vector<16x16xf32>
    %960 = vector.extract_strided_slice %954 {offsets = [1, 0], sizes = [1, 16], strides = [1, 1]} : vector<2x16xf32> to vector<1x16xf32>
    %961 = vector.shape_cast %960 : vector<1x16xf32> to vector<1x16xf32>
    %962 = vector.broadcast %961 : vector<1x16xf32> to vector<16x16xf32>
    %963 = tpu.concatenate %959, %962 in 0 : vector<16x16xf32>, vector<16x16xf32> -> vector<32x16xf32>
    %964 = vector.extract_strided_slice %955 {offsets = [0, 0], sizes = [16, 1], strides = [1, 1]} : vector<16x2xf32> to vector<16x1xf32>
    %965 = vector.extract_strided_slice %955 {offsets = [0, 1], sizes = [16, 1], strides = [1, 1]} : vector<16x2xf32> to vector<16x1xf32>
    %966 = tpu.concatenate %964, %965 in 0 : vector<16x1xf32>, vector<16x1xf32> -> vector<32x1xf32>
    %967 = vector.broadcast %966 : vector<32x1xf32> to vector<32x16xf32>
    %968 = arith.addf %963, %967 : vector<32x16xf32>
    %cst_164 = arith.constant 0.000000e+00 : f32
    %969 = vector.broadcast %cst_164 : f32 to vector<32x16xf32>
    %970 = arith.cmpf ogt, %968, %969 : vector<32x16xf32>
    %cst_165 = arith.constant 2.000000e-01 : f32
    %971 = vector.broadcast %cst_165 : f32 to vector<32x16xf32>
    %972 = arith.mulf %971, %968 : vector<32x16xf32>
    %973 = arith.select %970, %968, %972 : vector<32x16xi1>, vector<32x16xf32>
    %974 = tpu.concatenate %956, %956 in 0 : vector<16x16xf32>, vector<16x16xf32> -> vector<32x16xf32>
    %975 = arith.addf %973, %974 : vector<32x16xf32>
    %cst_166 = arith.constant dense<0xFF800000> : vector<32xf32>
    %976 = vector.multi_reduction <maximumf>, %975, %cst_166 [1] : vector<32x16xf32> to vector<32xf32>
    %977 = vector.shape_cast %976 : vector<32xf32> to vector<32x1xf32>
    %978 = vector.broadcast %977 : vector<32x1xf32> to vector<32x16xf32>
    %979 = arith.subf %975, %978 : vector<32x16xf32>
    %980 = math.exp %979 : vector<32x16xf32>
    %cst_167 = arith.constant dense<0.000000e+00> : vector<32xf32>
    %981 = vector.multi_reduction <add>, %980, %cst_167 [1] : vector<32x16xf32> to vector<32xf32>
    %982 = vector.shape_cast %981 : vector<32xf32> to vector<32x1xf32>
    %983 = tpu.reciprocal %982 {approx = true} : vector<32x1xf32> -> vector<32x1xf32>
    %984 = vector.broadcast %983 : vector<32x1xf32> to vector<32x16xf32>
    %985 = arith.mulf %980, %984 : vector<32x16xf32>
    %986 = vector.extract_strided_slice %985 {offsets = [0, 0], sizes = [16, 16], strides = [1, 1]} : vector<32x16xf32> to vector<16x16xf32>
    %987 = vector.extract_strided_slice %985 {offsets = [16, 0], sizes = [16, 16], strides = [1, 1]} : vector<32x16xf32> to vector<16x16xf32>
    %988 = tpu.concatenate %986, %987 in 1 : vector<16x16xf32>, vector<16x16xf32> -> vector<16x32xf32>
    %989 = vector.extract_strided_slice %952 {offsets = [0, 0], sizes = [16, 16], strides = [1, 1]} : vector<16x32xf32> to vector<16x16xf32>
    %990 = vector.extract_strided_slice %952 {offsets = [0, 16], sizes = [16, 16], strides = [1, 1]} : vector<16x32xf32> to vector<16x16xf32>
    %991 = tpu.concatenate %989, %990 in 0 : vector<16x16xf32>, vector<16x16xf32> -> vector<32x16xf32>
    %cst_168 = arith.constant dense<0.000000e+00> : vector<16x16xf32>
    %992 = tpu.matmul %988, %991, %cst_168 {dimension_numbers = #tpu.dot_dimension_numbers<[1], [0], [0], [1], [0, 0, 1, 1], [], []>} : vector<16x32xf32>, vector<32x16xf32>, vector<16x16xf32> -> vector<16x16xf32>
    %cst_169 = arith.constant 5.000000e-01 : f32
    %993 = vector.broadcast %cst_169 : f32 to vector<16x16xf32>
    %994 = arith.mulf %992, %993 : vector<16x16xf32>
    %995 = vector.extract_strided_slice %730 {offsets = [96, 0], sizes = [16, 36], strides = [1, 1]} : vector<128x36xf32> to vector<16x36xf32>
    %996 = vector.extract_strided_slice %995 {offsets = [0, 0], sizes = [16, 32], strides = [1, 1]} : vector<16x36xf32> to vector<16x32xf32>
    %997 = vector.extract_strided_slice %995 {offsets = [0, 32], sizes = [16, 2], strides = [1, 1]} : vector<16x36xf32> to vector<16x2xf32>
    %998 = tpu.transpose %997, [1, 0] : vector<16x2xf32> -> vector<2x16xf32>
    %999 = vector.extract_strided_slice %995 {offsets = [0, 34], sizes = [16, 2], strides = [1, 1]} : vector<16x36xf32> to vector<16x2xf32>
    %c96_170 = arith.constant 96 : index
    %c0_171 = arith.constant 0 : index
    %1000 = vector.load %arg2[%c96_170, %c0_171] : memref<128x16xf32, #tpu.memory_space<vmem>>, vector<16x16xf32>
    %1001 = vector.extract_strided_slice %998 {offsets = [0, 0], sizes = [1, 16], strides = [1, 1]} : vector<2x16xf32> to vector<1x16xf32>
    %1002 = vector.shape_cast %1001 : vector<1x16xf32> to vector<1x16xf32>
    %1003 = vector.broadcast %1002 : vector<1x16xf32> to vector<16x16xf32>
    %1004 = vector.extract_strided_slice %998 {offsets = [1, 0], sizes = [1, 16], strides = [1, 1]} : vector<2x16xf32> to vector<1x16xf32>
    %1005 = vector.shape_cast %1004 : vector<1x16xf32> to vector<1x16xf32>
    %1006 = vector.broadcast %1005 : vector<1x16xf32> to vector<16x16xf32>
    %1007 = tpu.concatenate %1003, %1006 in 0 : vector<16x16xf32>, vector<16x16xf32> -> vector<32x16xf32>
    %1008 = vector.extract_strided_slice %999 {offsets = [0, 0], sizes = [16, 1], strides = [1, 1]} : vector<16x2xf32> to vector<16x1xf32>
    %1009 = vector.extract_strided_slice %999 {offsets = [0, 1], sizes = [16, 1], strides = [1, 1]} : vector<16x2xf32> to vector<16x1xf32>
    %1010 = tpu.concatenate %1008, %1009 in 0 : vector<16x1xf32>, vector<16x1xf32> -> vector<32x1xf32>
    %1011 = vector.broadcast %1010 : vector<32x1xf32> to vector<32x16xf32>
    %1012 = arith.addf %1007, %1011 : vector<32x16xf32>
    %cst_172 = arith.constant 0.000000e+00 : f32
    %1013 = vector.broadcast %cst_172 : f32 to vector<32x16xf32>
    %1014 = arith.cmpf ogt, %1012, %1013 : vector<32x16xf32>
    %cst_173 = arith.constant 2.000000e-01 : f32
    %1015 = vector.broadcast %cst_173 : f32 to vector<32x16xf32>
    %1016 = arith.mulf %1015, %1012 : vector<32x16xf32>
    %1017 = arith.select %1014, %1012, %1016 : vector<32x16xi1>, vector<32x16xf32>
    %1018 = tpu.concatenate %1000, %1000 in 0 : vector<16x16xf32>, vector<16x16xf32> -> vector<32x16xf32>
    %1019 = arith.addf %1017, %1018 : vector<32x16xf32>
    %cst_174 = arith.constant dense<0xFF800000> : vector<32xf32>
    %1020 = vector.multi_reduction <maximumf>, %1019, %cst_174 [1] : vector<32x16xf32> to vector<32xf32>
    %1021 = vector.shape_cast %1020 : vector<32xf32> to vector<32x1xf32>
    %1022 = vector.broadcast %1021 : vector<32x1xf32> to vector<32x16xf32>
    %1023 = arith.subf %1019, %1022 : vector<32x16xf32>
    %1024 = math.exp %1023 : vector<32x16xf32>
    %cst_175 = arith.constant dense<0.000000e+00> : vector<32xf32>
    %1025 = vector.multi_reduction <add>, %1024, %cst_175 [1] : vector<32x16xf32> to vector<32xf32>
    %1026 = vector.shape_cast %1025 : vector<32xf32> to vector<32x1xf32>
    %1027 = tpu.reciprocal %1026 {approx = true} : vector<32x1xf32> -> vector<32x1xf32>
    %1028 = vector.broadcast %1027 : vector<32x1xf32> to vector<32x16xf32>
    %1029 = arith.mulf %1024, %1028 : vector<32x16xf32>
    %1030 = vector.extract_strided_slice %1029 {offsets = [0, 0], sizes = [16, 16], strides = [1, 1]} : vector<32x16xf32> to vector<16x16xf32>
    %1031 = vector.extract_strided_slice %1029 {offsets = [16, 0], sizes = [16, 16], strides = [1, 1]} : vector<32x16xf32> to vector<16x16xf32>
    %1032 = tpu.concatenate %1030, %1031 in 1 : vector<16x16xf32>, vector<16x16xf32> -> vector<16x32xf32>
    %1033 = vector.extract_strided_slice %996 {offsets = [0, 0], sizes = [16, 16], strides = [1, 1]} : vector<16x32xf32> to vector<16x16xf32>
    %1034 = vector.extract_strided_slice %996 {offsets = [0, 16], sizes = [16, 16], strides = [1, 1]} : vector<16x32xf32> to vector<16x16xf32>
    %1035 = tpu.concatenate %1033, %1034 in 0 : vector<16x16xf32>, vector<16x16xf32> -> vector<32x16xf32>
    %cst_176 = arith.constant dense<0.000000e+00> : vector<16x16xf32>
    %1036 = tpu.matmul %1032, %1035, %cst_176 {dimension_numbers = #tpu.dot_dimension_numbers<[1], [0], [0], [1], [0, 0, 1, 1], [], []>} : vector<16x32xf32>, vector<32x16xf32>, vector<16x16xf32> -> vector<16x16xf32>
    %cst_177 = arith.constant 5.000000e-01 : f32
    %1037 = vector.broadcast %cst_177 : f32 to vector<16x16xf32>
    %1038 = arith.mulf %1036, %1037 : vector<16x16xf32>
    %1039 = vector.extract_strided_slice %730 {offsets = [112, 0], sizes = [16, 36], strides = [1, 1]} : vector<128x36xf32> to vector<16x36xf32>
    %1040 = vector.extract_strided_slice %1039 {offsets = [0, 0], sizes = [16, 32], strides = [1, 1]} : vector<16x36xf32> to vector<16x32xf32>
    %1041 = vector.extract_strided_slice %1039 {offsets = [0, 32], sizes = [16, 2], strides = [1, 1]} : vector<16x36xf32> to vector<16x2xf32>
    %1042 = tpu.transpose %1041, [1, 0] : vector<16x2xf32> -> vector<2x16xf32>
    %1043 = vector.extract_strided_slice %1039 {offsets = [0, 34], sizes = [16, 2], strides = [1, 1]} : vector<16x36xf32> to vector<16x2xf32>
    %c112_178 = arith.constant 112 : index
    %c0_179 = arith.constant 0 : index
    %1044 = vector.load %arg2[%c112_178, %c0_179] : memref<128x16xf32, #tpu.memory_space<vmem>>, vector<16x16xf32>
    %1045 = vector.extract_strided_slice %1042 {offsets = [0, 0], sizes = [1, 16], strides = [1, 1]} : vector<2x16xf32> to vector<1x16xf32>
    %1046 = vector.shape_cast %1045 : vector<1x16xf32> to vector<1x16xf32>
    %1047 = vector.broadcast %1046 : vector<1x16xf32> to vector<16x16xf32>
    %1048 = vector.extract_strided_slice %1042 {offsets = [1, 0], sizes = [1, 16], strides = [1, 1]} : vector<2x16xf32> to vector<1x16xf32>
    %1049 = vector.shape_cast %1048 : vector<1x16xf32> to vector<1x16xf32>
    %1050 = vector.broadcast %1049 : vector<1x16xf32> to vector<16x16xf32>
    %1051 = tpu.concatenate %1047, %1050 in 0 : vector<16x16xf32>, vector<16x16xf32> -> vector<32x16xf32>
    %1052 = vector.extract_strided_slice %1043 {offsets = [0, 0], sizes = [16, 1], strides = [1, 1]} : vector<16x2xf32> to vector<16x1xf32>
    %1053 = vector.extract_strided_slice %1043 {offsets = [0, 1], sizes = [16, 1], strides = [1, 1]} : vector<16x2xf32> to vector<16x1xf32>
    %1054 = tpu.concatenate %1052, %1053 in 0 : vector<16x1xf32>, vector<16x1xf32> -> vector<32x1xf32>
    %1055 = vector.broadcast %1054 : vector<32x1xf32> to vector<32x16xf32>
    %1056 = arith.addf %1051, %1055 : vector<32x16xf32>
    %cst_180 = arith.constant 0.000000e+00 : f32
    %1057 = vector.broadcast %cst_180 : f32 to vector<32x16xf32>
    %1058 = arith.cmpf ogt, %1056, %1057 : vector<32x16xf32>
    %cst_181 = arith.constant 2.000000e-01 : f32
    %1059 = vector.broadcast %cst_181 : f32 to vector<32x16xf32>
    %1060 = arith.mulf %1059, %1056 : vector<32x16xf32>
    %1061 = arith.select %1058, %1056, %1060 : vector<32x16xi1>, vector<32x16xf32>
    %1062 = tpu.concatenate %1044, %1044 in 0 : vector<16x16xf32>, vector<16x16xf32> -> vector<32x16xf32>
    %1063 = arith.addf %1061, %1062 : vector<32x16xf32>
    %cst_182 = arith.constant dense<0xFF800000> : vector<32xf32>
    %1064 = vector.multi_reduction <maximumf>, %1063, %cst_182 [1] : vector<32x16xf32> to vector<32xf32>
    %1065 = vector.shape_cast %1064 : vector<32xf32> to vector<32x1xf32>
    %1066 = vector.broadcast %1065 : vector<32x1xf32> to vector<32x16xf32>
    %1067 = arith.subf %1063, %1066 : vector<32x16xf32>
    %1068 = math.exp %1067 : vector<32x16xf32>
    %cst_183 = arith.constant dense<0.000000e+00> : vector<32xf32>
    %1069 = vector.multi_reduction <add>, %1068, %cst_183 [1] : vector<32x16xf32> to vector<32xf32>
    %1070 = vector.shape_cast %1069 : vector<32xf32> to vector<32x1xf32>
    %1071 = tpu.reciprocal %1070 {approx = true} : vector<32x1xf32> -> vector<32x1xf32>
    %1072 = vector.broadcast %1071 : vector<32x1xf32> to vector<32x16xf32>
    %1073 = arith.mulf %1068, %1072 : vector<32x16xf32>
    %1074 = vector.extract_strided_slice %1073 {offsets = [0, 0], sizes = [16, 16], strides = [1, 1]} : vector<32x16xf32> to vector<16x16xf32>
    %1075 = vector.extract_strided_slice %1073 {offsets = [16, 0], sizes = [16, 16], strides = [1, 1]} : vector<32x16xf32> to vector<16x16xf32>
    %1076 = tpu.concatenate %1074, %1075 in 1 : vector<16x16xf32>, vector<16x16xf32> -> vector<16x32xf32>
    %1077 = vector.extract_strided_slice %1040 {offsets = [0, 0], sizes = [16, 16], strides = [1, 1]} : vector<16x32xf32> to vector<16x16xf32>
    %1078 = vector.extract_strided_slice %1040 {offsets = [0, 16], sizes = [16, 16], strides = [1, 1]} : vector<16x32xf32> to vector<16x16xf32>
    %1079 = tpu.concatenate %1077, %1078 in 0 : vector<16x16xf32>, vector<16x16xf32> -> vector<32x16xf32>
    %cst_184 = arith.constant dense<0.000000e+00> : vector<16x16xf32>
    %1080 = tpu.matmul %1076, %1079, %cst_184 {dimension_numbers = #tpu.dot_dimension_numbers<[1], [0], [0], [1], [0, 0, 1, 1], [], []>} : vector<16x32xf32>, vector<32x16xf32>, vector<16x16xf32> -> vector<16x16xf32>
    %cst_185 = arith.constant 5.000000e-01 : f32
    %1081 = vector.broadcast %cst_185 : f32 to vector<16x16xf32>
    %1082 = arith.mulf %1080, %1081 : vector<16x16xf32>
    %1083 = tpu.concatenate %774, %818, %862, %906, %950, %994, %1038, %1082 in 0 : vector<16x16xf32>, vector<16x16xf32>, vector<16x16xf32>, vector<16x16xf32>, vector<16x16xf32>, vector<16x16xf32>, vector<16x16xf32>, vector<16x16xf32> -> vector<128x16xf32>
    %1084 = vector.broadcast %729 : vector<1x16xf32> to vector<128x16xf32>
    %1085 = arith.addf %1083, %1084 : vector<128x16xf32>
    %c96_186 = arith.constant 96 : index
    %c0_187 = arith.constant 0 : index
    %1086 = vector.load %arg3[%c96_186, %c0_187] : memref<112x128xf32, #tpu.memory_space<vmem>>, vector<8x16xf32>
    %c104 = arith.constant 104 : index
    %c0_188 = arith.constant 0 : index
    %1087 = vector.load %arg3[%c104, %c0_188] : memref<112x128xf32, #tpu.memory_space<vmem>>, vector<8x1xf32>
    %1088 = tpu.transpose %1085, [1, 0] : vector<128x16xf32> -> vector<16x128xf32>
    %cst_189 = arith.constant dense<0.000000e+00> : vector<8x128xf32>
    %1089 = tpu.matmul %1086, %1088, %cst_189 {dimension_numbers = #tpu.dot_dimension_numbers<[1], [0], [0], [1], [0, 0, 1, 1], [], []>} : vector<8x16xf32>, vector<16x128xf32>, vector<8x128xf32> -> vector<8x128xf32>
    %1090 = vector.broadcast %1087 : vector<8x1xf32> to vector<8x128xf32>
    %1091 = arith.addf %1089, %1090 : vector<8x128xf32>
    %1092 = vector.extract_strided_slice %1091 {offsets = [0, 0], sizes = [4, 128], strides = [1, 1]} : vector<8x128xf32> to vector<4x128xf32>
    %1093 = vector.extract_strided_slice %1091 {offsets = [4, 0], sizes = [4, 128], strides = [1, 1]} : vector<8x128xf32> to vector<4x128xf32>
    %1094 = math.exp %1093 : vector<4x128xf32>
    %1095 = tpu.concatenate %1092, %1094 in 0 : vector<4x128xf32>, vector<4x128xf32> -> vector<8x128xf32>
    %c0_190 = arith.constant 0 : index
    %c0_191 = arith.constant 0 : index
    %1096 = vector.load %arg4[%c0_190, %c0_191] : memref<8x128xf32, #tpu.memory_space<vmem>>, vector<8x128xf32>
    tpu.vector_store %arg4[%c0_190, %c0_191], %1095 {strides = array<i32>} : memref<8x128xf32, #tpu.memory_space<vmem>>, vector<8x128xf32>,
    return
  }
  func.func @transform_0(%arg0: i32) -> (i32, i32) {
    %c0_i32 = arith.constant 0 : i32
    %c0_i32_0 = arith.constant 0 : i32
    return %arg0, %c0_i32 : i32, i32
  }
  func.func @transform_1(%arg0: i32) -> (i32, i32) {
    %c0_i32 = arith.constant 0 : i32
    %c0_i32_0 = arith.constant 0 : i32
    return %arg0, %c0_i32 : i32, i32
  }
  func.func @transform_2(%arg0: i32) -> (i32, i32) {
    %c0_i32 = arith.constant 0 : i32
    %c0_i32_0 = arith.constant 0 : i32
    %c0_i32_1 = arith.constant 0 : i32
    return %c0_i32, %c0_i32_0 : i32, i32
  }
  func.func @transform_3(%arg0: i32) -> (i32, i32) {
    %c0_i32 = arith.constant 0 : i32
    %c0_i32_0 = arith.constant 0 : i32
    return %c0_i32, %arg0 : i32, i32
  }
}

</mosaic_0001>

<llo_original>
// kernel: tpu_custom_call.1
$region0: #{tpu_custom_call.1}
  #allocation0 [shape = 'u32[]', space=smem, size = 0x4, offset = 0x4, fixed_abs, tag = 'smem constant byte address 0x4 - core index']
  #allocation1 [shape = 'u32[144,128]{1,0:T(1,128)}', space=vmem, size = 0x12000, scoped, tag = 'internal scratch']
  %s0 = inlined_call_operand.vmem [shape: f32[256,8], index: 0, kind: input, shape index: {}]
  %s1 = inlined_call_operand.vmem [shape: f32[256,16], index: 1, kind: input, shape index: {}]
  %s2 = inlined_call_operand.vmem [shape: f32[112,128], index: 2, kind: input, shape index: {}]
  %s3 = inlined_call_operand.hbm [shape: f32[8,256], index: 3, kind: output, shape index: {}]
  %s4 = sld [smem:[#allocation0]]
  $region45: #{tpu_custom_call.1} parent=0
    _
  %s6 = ssub.s32 1, %s4
  %s7 = scalar_select 0, %s6, %s4
  $region1: #{tpu_custom_call.1} parent=0
    #allocation2 [shape = 'u8[8192]{0}', space=vmem, size = 0x2000, scoped, tag = 'output window, operand 0']
    #allocation3 [shape = 's32[2]{0}', space=sflag, size = 0x8, scoped, tag = 'scoped memory for tpu_custom_call.1']
    %8 = vsyncpa [#allocation3], 0
    %s9 = scalar_lea.sflag [#allocation3], 1
    %10 = vsyncpa %s9, 0
    loop: start=0, step=1, limit=4
    $region2: #{tpu_custom_call.1} parent=1 // loop_pre_header
      _
    $region3: #{tpu_custom_call.1} parent=1 // loop_header
      %s12 = sphi 0, %s16
      %p13 = scmp.ge.s32.totalorder %s12, 4
      %s22 = sphi 0, %s24
      %s25 = sphi 0, %s22
      %s26 = sphi 0, %s25
      %s42 = sphi 0, %s26
      %s48 = sphi 0, %s50
      %s51 = sphi 0, %s48
      %s52 = sphi 0, %s51
      %s68 = sphi 0, %s52
      %s72 = sphi 0, %s72
      %s74 = sphi 0, %s72
      %s75 = sphi 0, %s74
      %s89 = sphi 0, %s75
      %s95 = sphi 0, %s97
      %s98 = sphi 0, %s95
      %s99 = sphi 0, %s98
      %s115 = sphi 0, %s99
    $region4: #{tpu_custom_call.1} parent=1 // loop_header_branch
      %15 = sbr.rel (%p13) target = $region8
    $region5: #{tpu_custom_call.1} parent=1 // loop_body
      %s17 = ssub.s32 %s12, 1
      %s18 = ssub.s32 %s12, 2
      %s19 = sadd.s32 %s12, 1
      %s20 = ssub.s32 %s12, %s19
      %p21 = scmp.eq.s32.totalorder %s20, 0
      %s23 = sadd.s32 %s22, 1
      %s24 = scalar_select %p21, %s22, %s23
      %p27 = pneg %p21
      %p28 = scmp.eq.s32.totalorder %s12, 1
      %p29 = por %p27, %p28
      %p30 = scmp.ne.s32.totalorder %s22, %s25
      %p31 = scmp.eq.s32.totalorder %s12, 0
      %p32 = por %p30, %p31
      %p33 = scmp.ne.s32.totalorder %s22, %s25
      %p34 = scmp.eq.s32.totalorder %s17, 1
      %p35 = por %p33, %p34
      %p36 = scmp.ne.s32.totalorder %s25, %s26
      %p37 = scmp.eq.s32.totalorder %s17, 0
      %p38 = por %p36, %p37
      %p39 = scmp.ne.s32.totalorder %s25, %s26
      %p40 = scmp.eq.s32.totalorder %s18, 1
      %p41 = por %p39, %p40
      %p43 = scmp.ne.s32.totalorder %s26, %s42
      %p44 = scmp.eq.s32.totalorder %s18, 0
      %p45 = por %p43, %p44
      %s46 = ssub.s32 %s12, %s19
      %p47 = scmp.eq.s32.totalorder %s46, 0
      %s49 = sadd.s32 %s48, 1
      %s50 = scalar_select %p47, %s48, %s49
      %p53 = pneg %p47
      %p54 = scmp.eq.s32.totalorder %s12, 1
      %p55 = por %p53, %p54
      %p56 = scmp.ne.s32.totalorder %s48, %s51
      %p57 = scmp.eq.s32.totalorder %s12, 0
      %p58 = por %p56, %p57
      %p59 = scmp.ne.s32.totalorder %s48, %s51
      %p60 = scmp.eq.s32.totalorder %s17, 1
      %p61 = por %p59, %p60
      %p62 = scmp.ne.s32.totalorder %s51, %s52
      %p63 = scmp.eq.s32.totalorder %s17, 0
      %p64 = por %p62, %p63
      %p65 = scmp.ne.s32.totalorder %s51, %s52
      %p66 = scmp.eq.s32.totalorder %s18, 1
      %p67 = por %p65, %p66
      %p69 = scmp.ne.s32.totalorder %s52, %s68
      %p70 = scmp.eq.s32.totalorder %s18, 0
      %p71 = por %p69, %p70
      %s73 = sadd.s32 %s72, 1
      %p76 = scmp.eq.s32.totalorder %s12, 1
      %p77 = scmp.ne.s32.totalorder %s72, %s74
      %p78 = scmp.eq.s32.totalorder %s12, 0
      %p79 = por %p77, %p78
      %p80 = scmp.ne.s32.totalorder %s72, %s74
      %p81 = scmp.eq.s32.totalorder %s17, 1
      %p82 = por %p80, %p81
      %p83 = scmp.ne.s32.totalorder %s74, %s75
      %p84 = scmp.eq.s32.totalorder %s17, 0
      %p85 = por %p83, %p84
      %p86 = scmp.ne.s32.totalorder %s74, %s75
      %p87 = scmp.eq.s32.totalorder %s18, 1
      %p88 = por %p86, %p87
      %p90 = scmp.ne.s32.totalorder %s75, %s89
      %p91 = scmp.eq.s32.totalorder %s18, 0
      %p92 = por %p90, %p91
      %s93 = ssub.s32 %s12, %s19
      %p94 = scmp.eq.s32.totalorder %s93, 0
      %s96 = sadd.s32 %s95, 1
      %s97 = scalar_select %p94, %s95, %s96
      %p100 = pneg %p94
      %p101 = scmp.eq.s32.totalorder %s12, 1
      %p102 = por %p100, %p101
      %p103 = scmp.ne.s32.totalorder %s95, %s98
      %p104 = scmp.eq.s32.totalorder %s12, 0
      %p105 = por %p103, %p104
      %p106 = scmp.ne.s32.totalorder %s95, %s98
      %p107 = scmp.eq.s32.totalorder %s17, 1
      %p108 = por %p106, %p107
      %p109 = scmp.ne.s32.totalorder %s98, %s99
      %p110 = scmp.eq.s32.totalorder %s17, 0
      %p111 = por %p109, %p110
      %p112 = scmp.ne.s32.totalorder %s98, %s99
      %p113 = scmp.eq.s32.totalorder %s18, 1
      %p114 = por %p112, %p113
      %p116 = scmp.ne.s32.totalorder %s99, %s115
      %p117 = scmp.eq.s32.totalorder %s18, 0
      %p118 = por %p116, %p117
      %p119 = scmp.le.s32.totalorder 1, %s12
      %p120 = scmp.lt.s32.totalorder %s12, 3
      %p121 = pnand %p119, %p120
      %p122 = pneg %p121
      // Predicated region
      $region9: #{tpu_custom_call.1} parent=5 // pred_check
        _
      $region10: #{tpu_custom_call.1} parent=5 // pred_check_branch
        %124 = sbr.rel (%p121) target = $region12
      $region11: #{tpu_custom_call.1} parent=5 // pred_region
        %s125 = ssub.s32 %s12, 1
        // Predicated region
        $region13: #{tpu_custom_call.1} parent=11 // pred_check
          %p126 = pneg %p85
        $region14: #{tpu_custom_call.1} parent=11 // pred_check_branch
          %128 = sbr.rel (%p126) target = $region16
        $region15: #{tpu_custom_call.1} parent=11 // pred_region
          _
        $region16: #{tpu_custom_call.1} parent=11 // pred_fallthru
          _
      $region12: #{tpu_custom_call.1} parent=5 // pred_fallthru
        _
      %p129 = scmp.lt.s32.totalorder %s12, 2
      // Predicated region
      $region17: #{tpu_custom_call.1} parent=5 // pred_check
        %p130 = pneg %p129
      $region18: #{tpu_custom_call.1} parent=5 // pred_check_branch
        %132 = sbr.rel (%p130) target = $region20
      $region19: #{tpu_custom_call.1} parent=5 // pred_region
        // Predicated region
        $region21: #{tpu_custom_call.1} parent=19 // pred_check
          %p133 = pneg %p32
        $region22: #{tpu_custom_call.1} parent=19 // pred_check_branch
          %135 = sbr.rel (%p133) target = $region24
        $region23: #{tpu_custom_call.1} parent=19 // pred_region
          %s136 = smul.u32 16, %s12
          %p137 = scmp.lt.s32.totalorder %s136, 31
          %s138 = scalar_select %p137, %s136, 31
          %s139 = smul.addr %s138, 8
          %s140 = scalar_lea.vmem %s0, %s139
          %s141 = smul.u32 16, %s12
        $region24: #{tpu_custom_call.1} parent=19 // pred_fallthru
          _
        // Predicated region
        $region25: #{tpu_custom_call.1} parent=19 // pred_check
          %p142 = pneg %p58
        $region26: #{tpu_custom_call.1} parent=19 // pred_check_branch
          %144 = sbr.rel (%p142) target = $region28
        $region27: #{tpu_custom_call.1} parent=19 // pred_region
          %s145 = smul.u32 16, %s12
          %p146 = scmp.lt.s32.totalorder %s145, 31
          %s147 = scalar_select %p146, %s145, 31
          %s148 = smul.addr %s147, 8
          %s149 = scalar_lea.vmem %s1, %s148
          %s150 = smul.u32 16, %s12
        $region28: #{tpu_custom_call.1} parent=19 // pred_fallthru
          _
      $region20: #{tpu_custom_call.1} parent=5 // pred_fallthru
        _
      %p151 = scmp.le.s32.totalorder 1, %s12
      %p152 = scmp.lt.s32.totalorder %s12, 3
      %p153 = pnand %p151, %p152
      %p154 = pneg %p153
      // Predicated region
      $region29: #{tpu_custom_call.1} parent=5 // pred_check
        _
      $region30: #{tpu_custom_call.1} parent=5 // pred_check_branch
        %156 = sbr.rel (%p153) target = $region32
      $region31: #{tpu_custom_call.1} parent=5 // pred_region
        %s157 = ssub.s32 %s12, 1
        %s158 = smul.u32 16, %s17
        %p159 = scmp.lt.s32.totalorder %s158, 31
        %s160 = scalar_select %p159, %s158, 31
        %s161 = smul.addr %s160, 8
        %s162 = scalar_lea.vmem %s0, %s161
        %p163 = pneg %p38
        %p164 = pneg %p35
        %s165 = smul.u32 16, %s17
        %p166 = scmp.lt.s32.totalorder %s165, 31
        %s167 = scalar_select %p166, %s165, 31
        %s168 = smul.addr %s167, 8
        %s169 = scalar_lea.vmem %s1, %s168
        %p170 = pneg %p64
        %p171 = pneg %p61
        %p172 = pneg %p85
        %p173 = pneg %p82
        %p174 = pneg %p111
        %p175 = pneg %p108
        %s176 = sand.u32 %s98, 1
        %s177 = scalar_lea.sflag [#allocation3], %s176
        %s178 = sand.u32 %s98, 1
        %s179 = smul.addr %s178, 8
        %s180 = scalar_lea.vmem [#allocation2], %s179
        %s181 = smul.u32 16, %s17
        %p182 = scmp.lt.s32.totalorder %s181, 31
        %s183 = scalar_select %p182, %s181, 31
        %s184 = smul.addr %s183, 8
        %s185 = scalar_lea.vmem %s0, %s184
        %s186 = smul.u32 16, %s17
        %s187 = smul.u32 16, %s17
        %p188 = scmp.lt.s32.totalorder %s187, 31
        %s189 = scalar_select %p188, %s187, 31
        %s190 = smul.addr %s189, 8
        %s191 = scalar_lea.vmem %s1, %s190
        %s192 = smul.u32 16, %s17
        %v193 = vld [vmem:[%s185] sm:$0xff]
        %v194 = vld [vmem:[%s185 + $0x8] sm:$0xff]
        %v195 = vld [vmem:[%s185 + $0x10] sm:$0xff]
        %v196 = vld [vmem:[%s185 + $0x18] sm:$0xff]
        %v197 = vld [vmem:[%s185 + $0x20] sm:$0xff]
        %v198 = vld [vmem:[%s185 + $0x28] sm:$0xff]
        %v199 = vld [vmem:[%s185 + $0x30] sm:$0xff]
        %v200 = vld [vmem:[%s185 + $0x38] sm:$0xff]
        %v201 = vld [vmem:[%s185 + $0x40] sm:$0xff]
        %v202 = vld [vmem:[%s185 + $0x48] sm:$0xff]
        %v203 = vld [vmem:[%s185 + $0x50] sm:$0xff]
        %v204 = vld [vmem:[%s185 + $0x58] sm:$0xff]
        %v205 = vld [vmem:[%s185 + $0x60] sm:$0xff]
        %v206 = vld [vmem:[%s185 + $0x68] sm:$0xff]
        %v207 = vld [vmem:[%s185 + $0x70] sm:$0xff]
        %v208 = vld [vmem:[%s185 + $0x78] sm:$0xff]
        %v209 = vld [vmem:[%s2] sm:$0xff]
        %v210 = vld [vmem:[%s2 + $0x8] sm:$0x1]
        %vm211 = vcmask 64512
        %v213 = vsel %vm211, %v193, 0
        %v216 = vsel %vm211, %v194, 0
        %v219 = vsel %vm211, %v195, 0
        %v222 = vsel %vm211, %v196, 0
        %v225 = vsel %vm211, %v197, 0
        %v228 = vsel %vm211, %v198, 0
        %v231 = vsel %vm211, %v199, 0
        %v234 = vsel %vm211, %v200, 0
        %v237 = vsel %vm211, %v201, 0
        %v240 = vsel %vm211, %v202, 0
        %v243 = vsel %vm211, %v203, 0
        %v246 = vsel %vm211, %v204, 0
        %v249 = vsel %vm211, %v205, 0
        %v252 = vsel %vm211, %v206, 0
        %v255 = vsel %vm211, %v207, 0
        %v258 = vsel %vm211, %v208, 0
        %260 = vmatprep.subr.mxu0 0.0
        %261 = vmatpush1.msra.mxu0 0.0
        %262 = vmatprep.subr.mxu0 0.0
        %263 = vmatpush1.msra.mxu0 0.0
        %264 = vmatprep.subr.mxu0 0.0
        %265 = vmatpush1.msra.mxu0 0.0
        %266 = vmatprep.subr.mxu0 0.0
        %267 = vmatpush1.msra.mxu0 0.0
        %268 = vmatprep.subr.mxu0 0.0
        %269 = vmatpush1.msra.mxu0 0.0
        %270 = vmatprep.subr.mxu0 0.0
        %271 = vmatpush1.msra.mxu0 0.0
        %272 = vmatprep.subr.mxu0 0.0
        %273 = vmatpush1.msra.mxu0 0.0
        %274 = vmatprep.subr.mxu0 0.0
        %275 = vmatpush1.msra.mxu0 0.0
        %276 = vmatprep.subr.mxu0 0.0
        %277 = vmatpush1.msra.mxu0 0.0
        %278 = vmatprep.subr.mxu0 0.0
        %279 = vmatpush1.msra.mxu0 0.0
        %280 = vmatprep.subr.mxu0 0.0
        %281 = vmatpush1.msra.mxu0 0.0
        %282 = vmatprep.subr.mxu0 0.0
        %283 = vmatpush1.msra.mxu0 0.0
        %284 = vmatprep.subr.mxu0 0.0
        %285 = vmatpush1.msra.mxu0 0.0
        %286 = vmatprep.subr.mxu0 0.0
        %287 = vmatpush1.msra.mxu0 0.0
        %288 = vmatprep.subr.mxu0 0.0
        %289 = vmatpush1.msra.mxu0 0.0
        %290 = vmatprep.subr.mxu0 0.0
        %291 = vmatpush1.msra.mxu0 %v209
        %292 = vmatprep.subr.mxu0 0.0
        %293 = vmatpush2.msra.mxu0 0.0
        %294 = vmatprep.subr.mxu0 0.0
        %295 = vmatpush2.msra.mxu0 0.0
        %296 = vmatprep.subr.mxu0 0.0
        %297 = vmatpush2.msra.mxu0 0.0
        %298 = vmatprep.subr.mxu0 0.0
        %299 = vmatpush2.msra.mxu0 0.0
        %300 = vmatprep.subr.mxu0 0.0
        %301 = vmatpush2.msra.mxu0 0.0
        %302 = vmatprep.subr.mxu0 0.0
        %303 = vmatpush2.msra.mxu0 0.0
        %304 = vmatprep.subr.mxu0 0.0
        %305 = vmatpush2.msra.mxu0 0.0
        %306 = vmatprep.subr.mxu0 0.0
        %307 = vmatpush2.msra.mxu0 0.0
        %308 = vmatprep.subr.mxu0 0.0
        %309 = vmatpush2.msra.mxu0 0.0
        %310 = vmatprep.subr.mxu0 0.0
        %311 = vmatpush2.msra.mxu0 0.0
        %312 = vmatprep.subr.mxu0 0.0
        %313 = vmatpush2.msra.mxu0 0.0
        %314 = vmatprep.subr.mxu0 0.0
        %315 = vmatpush2.msra.mxu0 0.0
        %316 = vmatprep.subr.mxu0 0.0
        %317 = vmatpush2.msra.mxu0 0.0
        %318 = vmatprep.subr.mxu0 0.0
        %319 = vmatpush2.msra.mxu0 0.0
        %320 = vmatprep.subr.mxu0 0.0
        %321 = vmatpush2.msra.mxu0 0.0
        %322 = vmatprep.subr.mxu0 0.0
        %323 = vmatpush2.msra.mxu0 0.0
        %324 = vmatprep.mubr.f32.mxu0 0.0
        %325 = vmatmul.mubr.f32.gmra.mxu0 %v213
        %v326 = vpop.f32.mrf.mxu0
        %v327 = vadd.f32 0.0, %v326
        %v328 = vpop.f32.mrf.mxu0
        %329 = vmatprep.mubr.f32.mxu0 0.0
        %330 = vmatmul.mubr.f32.gmra.mxu0 %v216
        %v331 = vpop.f32.mrf.mxu0
        %v332 = vadd.f32 0.0, %v331
        %v333 = vpop.f32.mrf.mxu0
        %334 = vmatprep.mubr.f32.mxu0 0.0
        %335 = vmatmul.mubr.f32.gmra.mxu0 %v219
        %v336 = vpop.f32.mrf.mxu0
        %v337 = vadd.f32 0.0, %v336
        %v338 = vpop.f32.mrf.mxu0
        %339 = vmatprep.mubr.f32.mxu0 0.0
        %340 = vmatmul.mubr.f32.gmra.mxu0 %v222
        %v341 = vpop.f32.mrf.mxu0
        %v342 = vadd.f32 0.0, %v341
        %v343 = vpop.f32.mrf.mxu0
        %344 = vmatprep.mubr.f32.mxu0 0.0
        %345 = vmatmul.mubr.f32.gmra.mxu0 %v225
        %v346 = vpop.f32.mrf.mxu0
        %v347 = vadd.f32 0.0, %v346
        %v348 = vpop.f32.mrf.mxu0
        %349 = vmatprep.mubr.f32.mxu0 0.0
        %350 = vmatmul.mubr.f32.gmra.mxu0 %v228
        %v351 = vpop.f32.mrf.mxu0
        %v352 = vadd.f32 0.0, %v351
        %v353 = vpop.f32.mrf.mxu0
        %354 = vmatprep.mubr.f32.mxu0 0.0
        %355 = vmatmul.mubr.f32.gmra.mxu0 %v231
        %v356 = vpop.f32.mrf.mxu0
        %v357 = vadd.f32 0.0, %v356
        %v358 = vpop.f32.mrf.mxu0
        %359 = vmatprep.mubr.f32.mxu0 0.0
        %360 = vmatmul.mubr.f32.gmra.mxu0 %v234
        %v361 = vpop.f32.mrf.mxu0
        %v362 = vadd.f32 0.0, %v361
        %v363 = vpop.f32.mrf.mxu0
        %364 = vmatprep.mubr.f32.mxu0 0.0
        %365 = vmatmul.mubr.f32.gmra.mxu0 %v237
        %v366 = vpop.f32.mrf.mxu0
        %v367 = vadd.f32 0.0, %v366
        %v368 = vpop.f32.mrf.mxu0
        %369 = vmatprep.mubr.f32.mxu0 0.0
        %370 = vmatmul.mubr.f32.gmra.mxu0 %v240
        %v371 = vpop.f32.mrf.mxu0
        %v372 = vadd.f32 0.0, %v371
        %v373 = vpop.f32.mrf.mxu0
        %374 = vmatprep.mubr.f32.mxu0 0.0
        %375 = vmatmul.mubr.f32.gmra.mxu0 %v243
        %v376 = vpop.f32.mrf.mxu0
        %v377 = vadd.f32 0.0, %v376
        %v378 = vpop.f32.mrf.mxu0
        %379 = vmatprep.mubr.f32.mxu0 0.0
        %380 = vmatmul.mubr.f32.gmra.mxu0 %v246
        %v381 = vpop.f32.mrf.mxu0
        %v382 = vadd.f32 0.0, %v381
        %v383 = vpop.f32.mrf.mxu0
        %384 = vmatprep.mubr.f32.mxu0 0.0
        %385 = vmatmul.mubr.f32.gmra.mxu0 %v249
        %v386 = vpop.f32.mrf.mxu0
        %v387 = vadd.f32 0.0, %v386
        %v388 = vpop.f32.mrf.mxu0
        %389 = vmatprep.mubr.f32.mxu0 0.0
        %390 = vmatmul.mubr.f32.gmra.mxu0 %v252
        %v391 = vpop.f32.mrf.mxu0
        %v392 = vadd.f32 0.0, %v391
        %v393 = vpop.f32.mrf.mxu0
        %394 = vmatprep.mubr.f32.mxu0 0.0
        %395 = vmatmul.mubr.f32.gmra.mxu0 %v255
        %v396 = vpop.f32.mrf.mxu0
        %v397 = vadd.f32 0.0, %v396
        %v398 = vpop.f32.mrf.mxu0
        %399 = vmatprep.mubr.f32.mxu0 0.0
        %400 = vmatmul.mubr.f32.gmra.mxu0 %v258
        %v401 = vpop.f32.mrf.mxu0
        %v402 = vadd.f32 0.0, %v401
        %v403 = vpop.f32.mrf.mxu0
        %404 = vdwg.mxu0
        %407 = vrot.lane.b32.xlu0 %v327, 96
        %v408 = vpop.permute.xlu0 %407
        %409 = vrot.lane.b32.xlu0 %v332, 96
        %v410 = vpop.permute.xlu0 %409
        %413 = vxpose.xlu0.b32.start [1/16] %v408, 128
        %414 = vxpose.xlu0.b32.cont [2/16] %v410, 128
        %415 = vxpose.xlu0.b32.cont [3/16] 0.0, 128
        %416 = vxpose.xlu0.b32.cont [4/16] 0.0, 128
        %417 = vxpose.xlu0.b32.cont [5/16] 0.0, 128
        %418 = vxpose.xlu0.b32.cont [6/16] 0.0, 128
        %419 = vxpose.xlu0.b32.cont [7/16] 0.0, 128
        %420 = vxpose.xlu0.b32.cont [8/16] 0.0, 128
        %421 = vxpose.xlu0.b32.cont [9/16] 0.0, 128
        %422 = vxpose.xlu0.b32.cont [10/16] 0.0, 128
        %423 = vxpose.xlu0.b32.cont [11/16] 0.0, 128
        %424 = vxpose.xlu0.b32.cont [12/16] 0.0, 128
        %425 = vxpose.xlu0.b32.cont [13/16] 0.0, 128
        %426 = vxpose.xlu0.b32.cont [14/16] 0.0, 128
        %427 = vxpose.xlu0.b32.cont [15/16] 0.0, 128
        %428 = vxpose.xlu0.b32.end [16/16] 0.0, 128
        %v429 = vpop.trf.xlu0
        %v430 = vpop.trf.xlu0
        %v431 = vpop.trf.xlu0
        %v432 = vpop.trf.xlu0
        %v433 = vpop.trf.xlu0
        %v434 = vpop.trf.xlu0
        %v435 = vpop.trf.xlu0
        %v436 = vpop.trf.xlu0
        %v437 = vpop.trf.xlu0
        %v438 = vpop.trf.xlu0
        %v439 = vpop.trf.xlu0
        %v440 = vpop.trf.xlu0
        %v441 = vpop.trf.xlu0
        %v442 = vpop.trf.xlu0
        %v443 = vpop.trf.xlu0
        %v444 = vpop.trf.xlu0
        %v445 = vld [vmem:[%s191] sm:$0xff]
        %v446 = vld [vmem:[%s191 + $0x8] sm:$0xff]
        %v447 = vlaneseq
        %v448 = vshrl.u32 %v447, 7
        %v449 = vsub.s32 0, %v448
        %v450 = vrot.slane %v429, %v449
        %v451 = vlaneseq
        %v452 = vshrl.u32 %v451, 7
        %v453 = vsub.s32 1, %v452
        %v454 = vrot.slane %v429, %v453
        %455 = vrot.lane.b32.xlu0 %v327, 127
        %v456 = vpop.permute.xlu0 %455
        %457 = vrot.lane.b32.xlu0 %v332, 127
        %v458 = vpop.permute.xlu0 %457
        %459 = vset.pattern.permute.xlu0 34
        %460 = vperm.xlu0 %459, %v327
        %v461 = vpop.permute.xlu0 %460
        %463 = vset.pattern.permute.xlu0 34
        %464 = vperm.xlu0 %463, %v332
        %v465 = vpop.permute.xlu0 %464
        %467 = vset.pattern.permute.xlu0 34
        %468 = vperm.xlu0 %467, %v456
        %v469 = vpop.permute.xlu0 %468
        %471 = vset.pattern.permute.xlu0 34
        %472 = vperm.xlu0 %471, %v458
        %v473 = vpop.permute.xlu0 %472
        %v475 = vadd.f32 %v450, %v461
        %v476 = vadd.f32 %v450, %v465
        %v477 = vadd.f32 %v454, %v469
        %v478 = vadd.f32 %v454, %v473
        %vm479 = vcmp.gt.f32.partialorder %v475, 0.0
        %vm480 = vcmp.gt.f32.partialorder %v476, 0.0
        %vm481 = vcmp.gt.f32.partialorder %v477, 0.0
        %vm482 = vcmp.gt.f32.partialorder %v478, 0.0
        %v483 = vmul.f32 %v475, 0.2
        %v484 = vmul.f32 %v476, 0.2
        %v485 = vmul.f32 %v477, 0.2
        %v486 = vmul.f32 %v478, 0.2
        %v487 = vsel %vm479, %v475, %v483
        %v488 = vsel %vm480, %v476, %v484
        %v489 = vsel %vm481, %v477, %v485
        %v490 = vsel %vm482, %v478, %v486
        %v491 = vadd.f32 %v487, %v445
        %v492 = vadd.f32 %v488, %v446
        %v493 = vadd.f32 %v489, %v445
        %v494 = vadd.f32 %v490, %v446
        %vm495 = vcmask 130048
        %v496 = vsel %vm495, %v491, -inf
        %497 = vmax.xlane.f32.xlu0 %v496
        %v498 = vpop.xlane.xlu0 %497
        %v499 = vsel %vm495, %v492, -inf
        %500 = vmax.xlane.f32.xlu0 %v499
        %v501 = vpop.xlane.xlu0 %500
        %v502 = vsel %vm495, %v493, -inf
        %503 = vmax.xlane.f32.xlu0 %v502
        %v504 = vpop.xlane.xlu0 %503
        %v505 = vsel %vm495, %v494, -inf
        %506 = vmax.xlane.f32.xlu0 %v505
        %v507 = vpop.xlane.xlu0 %506
        %v508 = vsub.f32 %v491, %v498
        %v509 = vsub.f32 %v492, %v501
        %v510 = vsub.f32 %v493, %v504
        %v511 = vsub.f32 %v494, %v507
        %v512 = vmul.f32 %v508, 1.442695
        %v513 = vpow.pop %v512
        %v514 = vmul.f32 %v509, 1.442695
        %v515 = vpow.pop %v514
        %v516 = vmul.f32 %v510, 1.442695
        %v517 = vpow.pop %v516
        %v518 = vmul.f32 %v511, 1.442695
        %v519 = vpow.pop %v518
        %v520 = vsel %vm495, %v513, 0.0
        %521 = vadd.xlane.f32.xlu0 %v520
        %v522 = vpop.xlane.xlu0 %521
        %v523 = vsel %vm495, %v515, 0.0
        %524 = vadd.xlane.f32.xlu0 %v523
        %v525 = vpop.xlane.xlu0 %524
        %v526 = vsel %vm495, %v517, 0.0
        %527 = vadd.xlane.f32.xlu0 %v526
        %v528 = vpop.xlane.xlu0 %527
        %v529 = vsel %vm495, %v519, 0.0
        %530 = vadd.xlane.f32.xlu0 %v529
        %v531 = vpop.xlane.xlu0 %530
        %v532 = vrcp.pop %v522
        %v533 = vrcp.pop %v525
        %v534 = vrcp.pop %v528
        %v535 = vrcp.pop %v531
        %v536 = vmul.f32 %v513, %v532
        %v537 = vmul.f32 %v515, %v533
        %v538 = vmul.f32 %v517, %v534
        %v539 = vmul.f32 %v519, %v535
        %542 = vrot.lane.b32.xlu0 %v538, 16
        %v543 = vpop.permute.xlu0 %542
        %544 = vrot.lane.b32.xlu0 %v539, 16
        %v545 = vpop.permute.xlu0 %544
        %v548 = vsel %vm495, %v536, %v543
        %v549 = vsel %vm495, %v537, %v545
        %v550 = vsel %vm495, %v327, 0.0
        %v551 = vsel %vm495, %v332, 0.0
        %v552 = vsel %vm495, 0.0, %v327
        %v553 = vsel %vm495, 0.0, %v332
        %vm554 = vcmask 261120
        %v556 = vsel %vm554, %v548, 0
        %v559 = vsel %vm554, %v549, 0
        %561 = vmatprep.subr.mxu0 0.0
        %562 = vmatpush1.msra.mxu0 0.0
        %563 = vmatprep.subr.mxu0 0.0
        %564 = vmatpush1.msra.mxu0 0.0
        %565 = vmatprep.subr.mxu0 0.0
        %566 = vmatpush1.msra.mxu0 0.0
        %567 = vmatprep.subr.mxu0 0.0
        %568 = vmatpush1.msra.mxu0 0.0
        %569 = vmatprep.subr.mxu0 0.0
        %570 = vmatpush1.msra.mxu0 0.0
        %571 = vmatprep.subr.mxu0 0.0
        %572 = vmatpush1.msra.mxu0 0.0
        %573 = vmatprep.subr.mxu0 0.0
        %574 = vmatpush1.msra.mxu0 0.0
        %575 = vmatprep.subr.mxu0 0.0
        %576 = vmatpush1.msra.mxu0 0.0
        %577 = vmatprep.subr.mxu0 0.0
        %578 = vmatpush1.msra.mxu0 0.0
        %579 = vmatprep.subr.mxu0 0.0
        %580 = vmatpush1.msra.mxu0 0.0
        %581 = vmatprep.subr.mxu0 0.0
        %582 = vmatpush1.msra.mxu0 0.0
        %583 = vmatprep.subr.mxu0 0.0
        %584 = vmatpush1.msra.mxu0 0.0
        %585 = vmatprep.subr.mxu0 0.0
        %586 = vmatpush1.msra.mxu0 %v553
        %587 = vmatprep.subr.mxu0 0.0
        %588 = vmatpush1.msra.mxu0 %v552
        %589 = vmatprep.subr.mxu0 0.0
        %590 = vmatpush1.msra.mxu0 %v551
        %591 = vmatprep.subr.mxu0 0.0
        %592 = vmatpush1.msra.mxu0 %v550
        %593 = vmatprep.subr.mxu0 0.0
        %594 = vmatpush2.msra.mxu0 0.0
        %595 = vmatprep.subr.mxu0 0.0
        %596 = vmatpush2.msra.mxu0 0.0
        %597 = vmatprep.subr.mxu0 0.0
        %598 = vmatpush2.msra.mxu0 0.0
        %599 = vmatprep.subr.mxu0 0.0
        %600 = vmatpush2.msra.mxu0 0.0
        %601 = vmatprep.subr.mxu0 0.0
        %602 = vmatpush2.msra.mxu0 0.0
        %603 = vmatprep.subr.mxu0 0.0
        %604 = vmatpush2.msra.mxu0 0.0
        %605 = vmatprep.subr.mxu0 0.0
        %606 = vmatpush2.msra.mxu0 0.0
        %607 = vmatprep.subr.mxu0 0.0
        %608 = vmatpush2.msra.mxu0 0.0
        %609 = vmatprep.subr.mxu0 0.0
        %610 = vmatpush2.msra.mxu0 0.0
        %611 = vmatprep.subr.mxu0 0.0
        %612 = vmatpush2.msra.mxu0 0.0
        %613 = vmatprep.subr.mxu0 0.0
        %614 = vmatpush2.msra.mxu0 0.0
        %615 = vmatprep.subr.mxu0 0.0
        %616 = vmatpush2.msra.mxu0 0.0
        %617 = vmatprep.subr.mxu0 0.0
        %618 = vmatpush2.msra.mxu0 0.0
        %619 = vmatprep.subr.mxu0 0.0
        %620 = vmatpush2.msra.mxu0 0.0
        %621 = vmatprep.subr.mxu0 0.0
        %622 = vmatpush2.msra.mxu0 0.0
        %623 = vmatprep.subr.mxu0 0.0
        %624 = vmatpush2.msra.mxu0 0.0
        %625 = vmatprep.mubr.f32.mxu0 0.0
        %626 = vmatmul.mubr.f32.gmra.mxu0 %v556
        %v627 = vpop.f32.mrf.mxu0
        %v628 = vadd.f32 0.0, %v627
        %v629 = vpop.f32.mrf.mxu0
        %630 = vmatprep.mubr.f32.mxu0 0.0
        %631 = vmatmul.mubr.f32.gmra.mxu0 %v559
        %v632 = vpop.f32.mrf.mxu0
        %v633 = vadd.f32 0.0, %v632
        %v634 = vpop.f32.mrf.mxu0
        %635 = vdwg.mxu0
        %638 = vrot.lane.b32.xlu0 %v337, 96
        %v639 = vpop.permute.xlu0 %638
        %640 = vrot.lane.b32.xlu0 %v342, 96
        %v641 = vpop.permute.xlu0 %640
        %644 = vxpose.xlu0.b32.start [1/16] %v639, 128
        %645 = vxpose.xlu0.b32.cont [2/16] %v641, 128
        %646 = vxpose.xlu0.b32.cont [3/16] 0.0, 128
        %647 = vxpose.xlu0.b32.cont [4/16] 0.0, 128
        %648 = vxpose.xlu0.b32.cont [5/16] 0.0, 128
        %649 = vxpose.xlu0.b32.cont [6/16] 0.0, 128
        %650 = vxpose.xlu0.b32.cont [7/16] 0.0, 128
        %651 = vxpose.xlu0.b32.cont [8/16] 0.0, 128
        %652 = vxpose.xlu0.b32.cont [9/16] 0.0, 128
        %653 = vxpose.xlu0.b32.cont [10/16] 0.0, 128
        %654 = vxpose.xlu0.b32.cont [11/16] 0.0, 128
        %655 = vxpose.xlu0.b32.cont [12/16] 0.0, 128
        %656 = vxpose.xlu0.b32.cont [13/16] 0.0, 128
        %657 = vxpose.xlu0.b32.cont [14/16] 0.0, 128
        %658 = vxpose.xlu0.b32.cont [15/16] 0.0, 128
        %659 = vxpose.xlu0.b32.end [16/16] 0.0, 128
        %v660 = vpop.trf.xlu0
        %v661 = vpop.trf.xlu0
        %v662 = vpop.trf.xlu0
        %v663 = vpop.trf.xlu0
        %v664 = vpop.trf.xlu0
        %v665 = vpop.trf.xlu0
        %v666 = vpop.trf.xlu0
        %v667 = vpop.trf.xlu0
        %v668 = vpop.trf.xlu0
        %v669 = vpop.trf.xlu0
        %v670 = vpop.trf.xlu0
        %v671 = vpop.trf.xlu0
        %v672 = vpop.trf.xlu0
        %v673 = vpop.trf.xlu0
        %v674 = vpop.trf.xlu0
        %v675 = vpop.trf.xlu0
        %v676 = vld [vmem:[%s191 + $0x10] sm:$0xff]
        %v677 = vld [vmem:[%s191 + $0x18] sm:$0xff]
        %v678 = vlaneseq
        %v679 = vshrl.u32 %v678, 7
        %v680 = vsub.s32 0, %v679
        %v681 = vrot.slane %v660, %v680
        %v682 = vlaneseq
        %v683 = vshrl.u32 %v682, 7
        %v684 = vsub.s32 1, %v683
        %v685 = vrot.slane %v660, %v684
        %686 = vrot.lane.b32.xlu0 %v337, 127
        %v687 = vpop.permute.xlu0 %686
        %688 = vrot.lane.b32.xlu0 %v342, 127
        %v689 = vpop.permute.xlu0 %688
        %690 = vset.pattern.permute.xlu0 34
        %691 = vperm.xlu0 %690, %v337
        %v692 = vpop.permute.xlu0 %691
        %694 = vset.pattern.permute.xlu0 34
        %695 = vperm.xlu0 %694, %v342
        %v696 = vpop.permute.xlu0 %695
        %698 = vset.pattern.permute.xlu0 34
        %699 = vperm.xlu0 %698, %v687
        %v700 = vpop.permute.xlu0 %699
        %702 = vset.pattern.permute.xlu0 34
        %703 = vperm.xlu0 %702, %v689
        %v704 = vpop.permute.xlu0 %703
        %v706 = vadd.f32 %v681, %v692
        %v707 = vadd.f32 %v681, %v696
        %v708 = vadd.f32 %v685, %v700
        %v709 = vadd.f32 %v685, %v704
        %vm710 = vcmp.gt.f32.partialorder %v706, 0.0
        %vm711 = vcmp.gt.f32.partialorder %v707, 0.0
        %vm712 = vcmp.gt.f32.partialorder %v708, 0.0
        %vm713 = vcmp.gt.f32.partialorder %v709, 0.0
        %v714 = vmul.f32 %v706, 0.2
        %v715 = vmul.f32 %v707, 0.2
        %v716 = vmul.f32 %v708, 0.2
        %v717 = vmul.f32 %v709, 0.2
        %v718 = vsel %vm710, %v706, %v714
        %v719 = vsel %vm711, %v707, %v715
        %v720 = vsel %vm712, %v708, %v716
        %v721 = vsel %vm713, %v709, %v717
        %v722 = vadd.f32 %v718, %v676
        %v723 = vadd.f32 %v719, %v677
        %v724 = vadd.f32 %v720, %v676
        %v725 = vadd.f32 %v721, %v677
        %v726 = vsel %vm495, %v722, -inf
        %727 = vmax.xlane.f32.xlu0 %v726
        %v728 = vpop.xlane.xlu0 %727
        %v729 = vsel %vm495, %v723, -inf
        %730 = vmax.xlane.f32.xlu0 %v729
        %v731 = vpop.xlane.xlu0 %730
        %v732 = vsel %vm495, %v724, -inf
        %733 = vmax.xlane.f32.xlu0 %v732
        %v734 = vpop.xlane.xlu0 %733
        %v735 = vsel %vm495, %v725, -inf
        %736 = vmax.xlane.f32.xlu0 %v735
        %v737 = vpop.xlane.xlu0 %736
        %v738 = vsub.f32 %v722, %v728
        %v739 = vsub.f32 %v723, %v731
        %v740 = vsub.f32 %v724, %v734
        %v741 = vsub.f32 %v725, %v737
        %v742 = vmul.f32 %v738, 1.442695
        %v743 = vpow.pop %v742
        %v744 = vmul.f32 %v739, 1.442695
        %v745 = vpow.pop %v744
        %v746 = vmul.f32 %v740, 1.442695
        %v747 = vpow.pop %v746
        %v748 = vmul.f32 %v741, 1.442695
        %v749 = vpow.pop %v748
        %v750 = vsel %vm495, %v743, 0.0
        %751 = vadd.xlane.f32.xlu0 %v750
        %v752 = vpop.xlane.xlu0 %751
        %v753 = vsel %vm495, %v745, 0.0
        %754 = vadd.xlane.f32.xlu0 %v753
        %v755 = vpop.xlane.xlu0 %754
        %v756 = vsel %vm495, %v747, 0.0
        %757 = vadd.xlane.f32.xlu0 %v756
        %v758 = vpop.xlane.xlu0 %757
        %v759 = vsel %vm495, %v749, 0.0
        %760 = vadd.xlane.f32.xlu0 %v759
        %v761 = vpop.xlane.xlu0 %760
        %v762 = vrcp.pop %v752
        %v763 = vrcp.pop %v755
        %v764 = vrcp.pop %v758
        %v765 = vrcp.pop %v761
        %v766 = vmul.f32 %v743, %v762
        %v767 = vmul.f32 %v745, %v763
        %v768 = vmul.f32 %v747, %v764
        %v769 = vmul.f32 %v749, %v765
        %772 = vrot.lane.b32.xlu0 %v768, 16
        %v773 = vpop.permute.xlu0 %772
        %774 = vrot.lane.b32.xlu0 %v769, 16
        %v775 = vpop.permute.xlu0 %774
        %v778 = vsel %vm495, %v766, %v773
        %v779 = vsel %vm495, %v767, %v775
        %v780 = vsel %vm495, %v337, 0.0
        %v781 = vsel %vm495, %v342, 0.0
        %v782 = vsel %vm495, 0.0, %v337
        %v783 = vsel %vm495, 0.0, %v342
        %v785 = vsel %vm554, %v778, 0
        %v788 = vsel %vm554, %v779, 0
        %790 = vmatprep.subr.mxu0 0.0
        %791 = vmatpush1.msra.mxu0 0.0
        %792 = vmatprep.subr.mxu0 0.0
        %793 = vmatpush1.msra.mxu0 0.0
        %794 = vmatprep.subr.mxu0 0.0
        %795 = vmatpush1.msra.mxu0 0.0
        %796 = vmatprep.subr.mxu0 0.0
        %797 = vmatpush1.msra.mxu0 0.0
        %798 = vmatprep.subr.mxu0 0.0
        %799 = vmatpush1.msra.mxu0 0.0
        %800 = vmatprep.subr.mxu0 0.0
        %801 = vmatpush1.msra.mxu0 0.0
        %802 = vmatprep.subr.mxu0 0.0
        %803 = vmatpush1.msra.mxu0 0.0
        %804 = vmatprep.subr.mxu0 0.0
        %805 = vmatpush1.msra.mxu0 0.0
        %806 = vmatprep.subr.mxu0 0.0
        %807 = vmatpush1.msra.mxu0 0.0
        %808 = vmatprep.subr.mxu0 0.0
        %809 = vmatpush1.msra.mxu0 0.0
        %810 = vmatprep.subr.mxu0 0.0
        %811 = vmatpush1.msra.mxu0 0.0
        %812 = vmatprep.subr.mxu0 0.0
        %813 = vmatpush1.msra.mxu0 0.0
        %814 = vmatprep.subr.mxu0 0.0
        %815 = vmatpush1.msra.mxu0 %v783
        %816 = vmatprep.subr.mxu0 0.0
        %817 = vmatpush1.msra.mxu0 %v782
        %818 = vmatprep.subr.mxu0 0.0
        %819 = vmatpush1.msra.mxu0 %v781
        %820 = vmatprep.subr.mxu0 0.0
        %821 = vmatpush1.msra.mxu0 %v780
        %822 = vmatprep.subr.mxu0 0.0
        %823 = vmatpush2.msra.mxu0 0.0
        %824 = vmatprep.subr.mxu0 0.0
        %825 = vmatpush2.msra.mxu0 0.0
        %826 = vmatprep.subr.mxu0 0.0
        %827 = vmatpush2.msra.mxu0 0.0
        %828 = vmatprep.subr.mxu0 0.0
        %829 = vmatpush2.msra.mxu0 0.0
        %830 = vmatprep.subr.mxu0 0.0
        %831 = vmatpush2.msra.mxu0 0.0
        %832 = vmatprep.subr.mxu0 0.0
        %833 = vmatpush2.msra.mxu0 0.0
        %834 = vmatprep.subr.mxu0 0.0
        %835 = vmatpush2.msra.mxu0 0.0
        %836 = vmatprep.subr.mxu0 0.0
        %837 = vmatpush2.msra.mxu0 0.0
        %838 = vmatprep.subr.mxu0 0.0
        %839 = vmatpush2.msra.mxu0 0.0
        %840 = vmatprep.subr.mxu0 0.0
        %841 = vmatpush2.msra.mxu0 0.0
        %842 = vmatprep.subr.mxu0 0.0
        %843 = vmatpush2.msra.mxu0 0.0
        %844 = vmatprep.subr.mxu0 0.0
        %845 = vmatpush2.msra.mxu0 0.0
        %846 = vmatprep.subr.mxu0 0.0
        %847 = vmatpush2.msra.mxu0 0.0
        %848 = vmatprep.subr.mxu0 0.0
        %849 = vmatpush2.msra.mxu0 0.0
        %850 = vmatprep.subr.mxu0 0.0
        %851 = vmatpush2.msra.mxu0 0.0
        %852 = vmatprep.subr.mxu0 0.0
        %853 = vmatpush2.msra.mxu0 0.0
        %854 = vmatprep.mubr.f32.mxu0 0.0
        %855 = vmatmul.mubr.f32.gmra.mxu0 %v785
        %v856 = vpop.f32.mrf.mxu0
        %v857 = vadd.f32 0.0, %v856
        %v858 = vpop.f32.mrf.mxu0
        %859 = vmatprep.mubr.f32.mxu0 0.0
        %860 = vmatmul.mubr.f32.gmra.mxu0 %v788
        %v861 = vpop.f32.mrf.mxu0
        %v862 = vadd.f32 0.0, %v861
        %v863 = vpop.f32.mrf.mxu0
        %864 = vdwg.mxu0
        %867 = vrot.lane.b32.xlu0 %v347, 96
        %v868 = vpop.permute.xlu0 %867
        %869 = vrot.lane.b32.xlu0 %v352, 96
        %v870 = vpop.permute.xlu0 %869
        %873 = vxpose.xlu0.b32.start [1/16] %v868, 128
        %874 = vxpose.xlu0.b32.cont [2/16] %v870, 128
        %875 = vxpose.xlu0.b32.cont [3/16] 0.0, 128
        %876 = vxpose.xlu0.b32.cont [4/16] 0.0, 128
        %877 = vxpose.xlu0.b32.cont [5/16] 0.0, 128
        %878 = vxpose.xlu0.b32.cont [6/16] 0.0, 128
        %879 = vxpose.xlu0.b32.cont [7/16] 0.0, 128
        %880 = vxpose.xlu0.b32.cont [8/16] 0.0, 128
        %881 = vxpose.xlu0.b32.cont [9/16] 0.0, 128
        %882 = vxpose.xlu0.b32.cont [10/16] 0.0, 128
        %883 = vxpose.xlu0.b32.cont [11/16] 0.0, 128
        %884 = vxpose.xlu0.b32.cont [12/16] 0.0, 128
        %885 = vxpose.xlu0.b32.cont [13/16] 0.0, 128
        %886 = vxpose.xlu0.b32.cont [14/16] 0.0, 128
        %887 = vxpose.xlu0.b32.cont [15/16] 0.0, 128
        %888 = vxpose.xlu0.b32.end [16/16] 0.0, 128
        %v889 = vpop.trf.xlu0
        %v890 = vpop.trf.xlu0
        %v891 = vpop.trf.xlu0
        %v892 = vpop.trf.xlu0
        %v893 = vpop.trf.xlu0
        %v894 = vpop.trf.xlu0
        %v895 = vpop.trf.xlu0
        %v896 = vpop.trf.xlu0
        %v897 = vpop.trf.xlu0
        %v898 = vpop.trf.xlu0
        %v899 = vpop.trf.xlu0
        %v900 = vpop.trf.xlu0
        %v901 = vpop.trf.xlu0
        %v902 = vpop.trf.xlu0
        %v903 = vpop.trf.xlu0
        %v904 = vpop.trf.xlu0
        %v905 = vld [vmem:[%s191 + $0x20] sm:$0xff]
        %v906 = vld [vmem:[%s191 + $0x28] sm:$0xff]
        %v907 = vlaneseq
        %v908 = vshrl.u32 %v907, 7
        %v909 = vsub.s32 0, %v908
        %v910 = vrot.slane %v889, %v909
        %v911 = vlaneseq
        %v912 = vshrl.u32 %v911, 7
        %v913 = vsub.s32 1, %v912
        %v914 = vrot.slane %v889, %v913
        %915 = vrot.lane.b32.xlu0 %v347, 127
        %v916 = vpop.permute.xlu0 %915
        %917 = vrot.lane.b32.xlu0 %v352, 127
        %v918 = vpop.permute.xlu0 %917
        %919 = vset.pattern.permute.xlu0 34
        %920 = vperm.xlu0 %919, %v347
        %v921 = vpop.permute.xlu0 %920
        %923 = vset.pattern.permute.xlu0 34
        %924 = vperm.xlu0 %923, %v352
        %v925 = vpop.permute.xlu0 %924
        %927 = vset.pattern.permute.xlu0 34
        %928 = vperm.xlu0 %927, %v916
        %v929 = vpop.permute.xlu0 %928
        %931 = vset.pattern.permute.xlu0 34
        %932 = vperm.xlu0 %931, %v918
        %v933 = vpop.permute.xlu0 %932
        %v935 = vadd.f32 %v910, %v921
        %v936 = vadd.f32 %v910, %v925
        %v937 = vadd.f32 %v914, %v929
        %v938 = vadd.f32 %v914, %v933
        %vm939 = vcmp.gt.f32.partialorder %v935, 0.0
        %vm940 = vcmp.gt.f32.partialorder %v936, 0.0
        %vm941 = vcmp.gt.f32.partialorder %v937, 0.0
        %vm942 = vcmp.gt.f32.partialorder %v938, 0.0
        %v943 = vmul.f32 %v935, 0.2
        %v944 = vmul.f32 %v936, 0.2
        %v945 = vmul.f32 %v937, 0.2
        %v946 = vmul.f32 %v938, 0.2
        %v947 = vsel %vm939, %v935, %v943
        %v948 = vsel %vm940, %v936, %v944
        %v949 = vsel %vm941, %v937, %v945
        %v950 = vsel %vm942, %v938, %v946
        %v951 = vadd.f32 %v947, %v905
        %v952 = vadd.f32 %v948, %v906
        %v953 = vadd.f32 %v949, %v905
        %v954 = vadd.f32 %v950, %v906
        %v955 = vsel %vm495, %v951, -inf
        %956 = vmax.xlane.f32.xlu0 %v955
        %v957 = vpop.xlane.xlu0 %956
        %v958 = vsel %vm495, %v952, -inf
        %959 = vmax.xlane.f32.xlu0 %v958
        %v960 = vpop.xlane.xlu0 %959
        %v961 = vsel %vm495, %v953, -inf
        %962 = vmax.xlane.f32.xlu0 %v961
        %v963 = vpop.xlane.xlu0 %962
        %v964 = vsel %vm495, %v954, -inf
        %965 = vmax.xlane.f32.xlu0 %v964
        %v966 = vpop.xlane.xlu0 %965
        %v967 = vsub.f32 %v951, %v957
        %v968 = vsub.f32 %v952, %v960
        %v969 = vsub.f32 %v953, %v963
        %v970 = vsub.f32 %v954, %v966
        %v971 = vmul.f32 %v967, 1.442695
        %v972 = vpow.pop %v971
        %v973 = vmul.f32 %v968, 1.442695
        %v974 = vpow.pop %v973
        %v975 = vmul.f32 %v969, 1.442695
        %v976 = vpow.pop %v975
        %v977 = vmul.f32 %v970, 1.442695
        %v978 = vpow.pop %v977
        %v979 = vsel %vm495, %v972, 0.0
        %980 = vadd.xlane.f32.xlu0 %v979
        %v981 = vpop.xlane.xlu0 %980
        %v982 = vsel %vm495, %v974, 0.0
        %983 = vadd.xlane.f32.xlu0 %v982
        %v984 = vpop.xlane.xlu0 %983
        %v985 = vsel %vm495, %v976, 0.0
        %986 = vadd.xlane.f32.xlu0 %v985
        %v987 = vpop.xlane.xlu0 %986
        %v988 = vsel %vm495, %v978, 0.0
        %989 = vadd.xlane.f32.xlu0 %v988
        %v990 = vpop.xlane.xlu0 %989
        %v991 = vrcp.pop %v981
        %v992 = vrcp.pop %v984
        %v993 = vrcp.pop %v987
        %v994 = vrcp.pop %v990
        %v995 = vmul.f32 %v972, %v991
        %v996 = vmul.f32 %v974, %v992
        %v997 = vmul.f32 %v976, %v993
        %v998 = vmul.f32 %v978, %v994
        %1001 = vrot.lane.b32.xlu0 %v997, 16
        %v1002 = vpop.permute.xlu0 %1001
        %1003 = vrot.lane.b32.xlu0 %v998, 16
        %v1004 = vpop.permute.xlu0 %1003
        %v1007 = vsel %vm495, %v995, %v1002
        %v1008 = vsel %vm495, %v996, %v1004
        %v1009 = vsel %vm495, %v347, 0.0
        %v1010 = vsel %vm495, %v352, 0.0
        %v1011 = vsel %vm495, 0.0, %v347
        %v1012 = vsel %vm495, 0.0, %v352
        %v1014 = vsel %vm554, %v1007, 0
        %v1017 = vsel %vm554, %v1008, 0
        %1019 = vmatprep.subr.mxu0 0.0
        %1020 = vmatpush1.msra.mxu0 0.0
        %1021 = vmatprep.subr.mxu0 0.0
        %1022 = vmatpush1.msra.mxu0 0.0
        %1023 = vmatprep.subr.mxu0 0.0
        %1024 = vmatpush1.msra.mxu0 0.0
        %1025 = vmatprep.subr.mxu0 0.0
        %1026 = vmatpush1.msra.mxu0 0.0
        %1027 = vmatprep.subr.mxu0 0.0
        %1028 = vmatpush1.msra.mxu0 0.0
        %1029 = vmatprep.subr.mxu0 0.0
        %1030 = vmatpush1.msra.mxu0 0.0
        %1031 = vmatprep.subr.mxu0 0.0
        %1032 = vmatpush1.msra.mxu0 0.0
        %1033 = vmatprep.subr.mxu0 0.0
        %1034 = vmatpush1.msra.mxu0 0.0
        %1035 = vmatprep.subr.mxu0 0.0
        %1036 = vmatpush1.msra.mxu0 0.0
        %1037 = vmatprep.subr.mxu0 0.0
        %1038 = vmatpush1.msra.mxu0 0.0
        %1039 = vmatprep.subr.mxu0 0.0
        %1040 = vmatpush1.msra.mxu0 0.0
        %1041 = vmatprep.subr.mxu0 0.0
        %1042 = vmatpush1.msra.mxu0 0.0
        %1043 = vmatprep.subr.mxu0 0.0
        %1044 = vmatpush1.msra.mxu0 %v1012
        %1045 = vmatprep.subr.mxu0 0.0
        %1046 = vmatpush1.msra.mxu0 %v1011
        %1047 = vmatprep.subr.mxu0 0.0
        %1048 = vmatpush1.msra.mxu0 %v1010
        %1049 = vmatprep.subr.mxu0 0.0
        %1050 = vmatpush1.msra.mxu0 %v1009
        %1051 = vmatprep.subr.mxu0 0.0
        %1052 = vmatpush2.msra.mxu0 0.0
        %1053 = vmatprep.subr.mxu0 0.0
        %1054 = vmatpush2.msra.mxu0 0.0
        %1055 = vmatprep.subr.mxu0 0.0
        %1056 = vmatpush2.msra.mxu0 0.0
        %1057 = vmatprep.subr.mxu0 0.0
        %1058 = vmatpush2.msra.mxu0 0.0
        %1059 = vmatprep.subr.mxu0 0.0
        %1060 = vmatpush2.msra.mxu0 0.0
        %1061 = vmatprep.subr.mxu0 0.0
        %1062 = vmatpush2.msra.mxu0 0.0
        %1063 = vmatprep.subr.mxu0 0.0
        %1064 = vmatpush2.msra.mxu0 0.0
        %1065 = vmatprep.subr.mxu0 0.0
        %1066 = vmatpush2.msra.mxu0 0.0
        %1067 = vmatprep.subr.mxu0 0.0
        %1068 = vmatpush2.msra.mxu0 0.0
        %1069 = vmatprep.subr.mxu0 0.0
        %1070 = vmatpush2.msra.mxu0 0.0
        %1071 = vmatprep.subr.mxu0 0.0
        %1072 = vmatpush2.msra.mxu0 0.0
        %1073 = vmatprep.subr.mxu0 0.0
        %1074 = vmatpush2.msra.mxu0 0.0
        %1075 = vmatprep.subr.mxu0 0.0
        %1076 = vmatpush2.msra.mxu0 0.0
        %1077 = vmatprep.subr.mxu0 0.0
        %1078 = vmatpush2.msra.mxu0 0.0
        %1079 = vmatprep.subr.mxu0 0.0
        %1080 = vmatpush2.msra.mxu0 0.0
        %1081 = vmatprep.subr.mxu0 0.0
        %1082 = vmatpush2.msra.mxu0 0.0
        %1083 = vmatprep.mubr.f32.mxu0 0.0
        %1084 = vmatmul.mubr.f32.gmra.mxu0 %v1014
        %v1085 = vpop.f32.mrf.mxu0
        %v1086 = vadd.f32 0.0, %v1085
        %v1087 = vpop.f32.mrf.mxu0
        %1088 = vmatprep.mubr.f32.mxu0 0.0
        %1089 = vmatmul.mubr.f32.gmra.mxu0 %v1017
        %v1090 = vpop.f32.mrf.mxu0
        %v1091 = vadd.f32 0.0, %v1090
        %v1092 = vpop.f32.mrf.mxu0
        %1093 = vdwg.mxu0
        %1096 = vrot.lane.b32.xlu0 %v357, 96
        %v1097 = vpop.permute.xlu0 %1096
        %1098 = vrot.lane.b32.xlu0 %v362, 96
        %v1099 = vpop.permute.xlu0 %1098
        %1102 = vxpose.xlu0.b32.start [1/16] %v1097, 128
        %1103 = vxpose.xlu0.b32.cont [2/16] %v1099, 128
        %1104 = vxpose.xlu0.b32.cont [3/16] 0.0, 128
        %1105 = vxpose.xlu0.b32.cont [4/16] 0.0, 128
        %1106 = vxpose.xlu0.b32.cont [5/16] 0.0, 128
        %1107 = vxpose.xlu0.b32.cont [6/16] 0.0, 128
        %1108 = vxpose.xlu0.b32.cont [7/16] 0.0, 128
        %1109 = vxpose.xlu0.b32.cont [8/16] 0.0, 128
        %1110 = vxpose.xlu0.b32.cont [9/16] 0.0, 128
        %1111 = vxpose.xlu0.b32.cont [10/16] 0.0, 128
        %1112 = vxpose.xlu0.b32.cont [11/16] 0.0, 128
        %1113 = vxpose.xlu0.b32.cont [12/16] 0.0, 128
        %1114 = vxpose.xlu0.b32.cont [13/16] 0.0, 128
        %1115 = vxpose.xlu0.b32.cont [14/16] 0.0, 128
        %1116 = vxpose.xlu0.b32.cont [15/16] 0.0, 128
        %1117 = vxpose.xlu0.b32.end [16/16] 0.0, 128
        %v1118 = vpop.trf.xlu0
        %v1119 = vpop.trf.xlu0
        %v1120 = vpop.trf.xlu0
        %v1121 = vpop.trf.xlu0
        %v1122 = vpop.trf.xlu0
        %v1123 = vpop.trf.xlu0
        %v1124 = vpop.trf.xlu0
        %v1125 = vpop.trf.xlu0
        %v1126 = vpop.trf.xlu0
        %v1127 = vpop.trf.xlu0
        %v1128 = vpop.trf.xlu0
        %v1129 = vpop.trf.xlu0
        %v1130 = vpop.trf.xlu0
        %v1131 = vpop.trf.xlu0
        %v1132 = vpop.trf.xlu0
        %v1133 = vpop.trf.xlu0
        %v1134 = vld [vmem:[%s191 + $0x30] sm:$0xff]
        %v1135 = vld [vmem:[%s191 + $0x38] sm:$0xff]
        %v1136 = vlaneseq
        %v1137 = vshrl.u32 %v1136, 7
        %v1138 = vsub.s32 0, %v1137
        %v1139 = vrot.slane %v1118, %v1138
        %v1140 = vlaneseq
        %v1141 = vshrl.u32 %v1140, 7
        %v1142 = vsub.s32 1, %v1141
        %v1143 = vrot.slane %v1118, %v1142
        %1144 = vrot.lane.b32.xlu0 %v357, 127
        %v1145 = vpop.permute.xlu0 %1144
        %1146 = vrot.lane.b32.xlu0 %v362, 127
        %v1147 = vpop.permute.xlu0 %1146
        %1148 = vset.pattern.permute.xlu0 34
        %1149 = vperm.xlu0 %1148, %v357
        %v1150 = vpop.permute.xlu0 %1149
        %1152 = vset.pattern.permute.xlu0 34
        %1153 = vperm.xlu0 %1152, %v362
        %v1154 = vpop.permute.xlu0 %1153
        %1156 = vset.pattern.permute.xlu0 34
        %1157 = vperm.xlu0 %1156, %v1145
        %v1158 = vpop.permute.xlu0 %1157
        %1160 = vset.pattern.permute.xlu0 34
        %1161 = vperm.xlu0 %1160, %v1147
        %v1162 = vpop.permute.xlu0 %1161
        %v1164 = vadd.f32 %v1139, %v1150
        %v1165 = vadd.f32 %v1139, %v1154
        %v1166 = vadd.f32 %v1143, %v1158
        %v1167 = vadd.f32 %v1143, %v1162
        %vm1168 = vcmp.gt.f32.partialorder %v1164, 0.0
        %vm1169 = vcmp.gt.f32.partialorder %v1165, 0.0
        %vm1170 = vcmp.gt.f32.partialorder %v1166, 0.0
        %vm1171 = vcmp.gt.f32.partialorder %v1167, 0.0
        %v1172 = vmul.f32 %v1164, 0.2
        %v1173 = vmul.f32 %v1165, 0.2
        %v1174 = vmul.f32 %v1166, 0.2
        %v1175 = vmul.f32 %v1167, 0.2
        %v1176 = vsel %vm1168, %v1164, %v1172
        %v1177 = vsel %vm1169, %v1165, %v1173
        %v1178 = vsel %vm1170, %v1166, %v1174
        %v1179 = vsel %vm1171, %v1167, %v1175
        %v1180 = vadd.f32 %v1176, %v1134
        %v1181 = vadd.f32 %v1177, %v1135
        %v1182 = vadd.f32 %v1178, %v1134
        %v1183 = vadd.f32 %v1179, %v1135
        %v1184 = vsel %vm495, %v1180, -inf
        %1185 = vmax.xlane.f32.xlu0 %v1184
        %v1186 = vpop.xlane.xlu0 %1185
        %v1187 = vsel %vm495, %v1181, -inf
        %1188 = vmax.xlane.f32.xlu0 %v1187
        %v1189 = vpop.xlane.xlu0 %1188
        %v1190 = vsel %vm495, %v1182, -inf
        %1191 = vmax.xlane.f32.xlu0 %v1190
        %v1192 = vpop.xlane.xlu0 %1191
        %v1193 = vsel %vm495, %v1183, -inf
        %1194 = vmax.xlane.f32.xlu0 %v1193
        %v1195 = vpop.xlane.xlu0 %1194
        %v1196 = vsub.f32 %v1180, %v1186
        %v1197 = vsub.f32 %v1181, %v1189
        %v1198 = vsub.f32 %v1182, %v1192
        %v1199 = vsub.f32 %v1183, %v1195
        %v1200 = vmul.f32 %v1196, 1.442695
        %v1201 = vpow.pop %v1200
        %v1202 = vmul.f32 %v1197, 1.442695
        %v1203 = vpow.pop %v1202
        %v1204 = vmul.f32 %v1198, 1.442695
        %v1205 = vpow.pop %v1204
        %v1206 = vmul.f32 %v1199, 1.442695
        %v1207 = vpow.pop %v1206
        %v1208 = vsel %vm495, %v1201, 0.0
        %1209 = vadd.xlane.f32.xlu0 %v1208
        %v1210 = vpop.xlane.xlu0 %1209
        %v1211 = vsel %vm495, %v1203, 0.0
        %1212 = vadd.xlane.f32.xlu0 %v1211
        %v1213 = vpop.xlane.xlu0 %1212
        %v1214 = vsel %vm495, %v1205, 0.0
        %1215 = vadd.xlane.f32.xlu0 %v1214
        %v1216 = vpop.xlane.xlu0 %1215
        %v1217 = vsel %vm495, %v1207, 0.0
        %1218 = vadd.xlane.f32.xlu0 %v1217
        %v1219 = vpop.xlane.xlu0 %1218
        %v1220 = vrcp.pop %v1210
        %v1221 = vrcp.pop %v1213
        %v1222 = vrcp.pop %v1216
        %v1223 = vrcp.pop %v1219
        %v1224 = vmul.f32 %v1201, %v1220
        %v1225 = vmul.f32 %v1203, %v1221
        %v1226 = vmul.f32 %v1205, %v1222
        %v1227 = vmul.f32 %v1207, %v1223
        %1230 = vrot.lane.b32.xlu0 %v1226, 16
        %v1231 = vpop.permute.xlu0 %1230
        %1232 = vrot.lane.b32.xlu0 %v1227, 16
        %v1233 = vpop.permute.xlu0 %1232
        %v1236 = vsel %vm495, %v1224, %v1231
        %v1237 = vsel %vm495, %v1225, %v1233
        %v1238 = vsel %vm495, %v357, 0.0
        %v1239 = vsel %vm495, %v362, 0.0
        %v1240 = vsel %vm495, 0.0, %v357
        %v1241 = vsel %vm495, 0.0, %v362
        %v1243 = vsel %vm554, %v1236, 0
        %v1246 = vsel %vm554, %v1237, 0
        %1248 = vmatprep.subr.mxu0 0.0
        %1249 = vmatpush1.msra.mxu0 0.0
        %1250 = vmatprep.subr.mxu0 0.0
        %1251 = vmatpush1.msra.mxu0 0.0
        %1252 = vmatprep.subr.mxu0 0.0
        %1253 = vmatpush1.msra.mxu0 0.0
        %1254 = vmatprep.subr.mxu0 0.0
        %1255 = vmatpush1.msra.mxu0 0.0
        %1256 = vmatprep.subr.mxu0 0.0
        %1257 = vmatpush1.msra.mxu0 0.0
        %1258 = vmatprep.subr.mxu0 0.0
        %1259 = vmatpush1.msra.mxu0 0.0
        %1260 = vmatprep.subr.mxu0 0.0
        %1261 = vmatpush1.msra.mxu0 0.0
        %1262 = vmatprep.subr.mxu0 0.0
        %1263 = vmatpush1.msra.mxu0 0.0
        %1264 = vmatprep.subr.mxu0 0.0
        %1265 = vmatpush1.msra.mxu0 0.0
        %1266 = vmatprep.subr.mxu0 0.0
        %1267 = vmatpush1.msra.mxu0 0.0
        %1268 = vmatprep.subr.mxu0 0.0
        %1269 = vmatpush1.msra.mxu0 0.0
        %1270 = vmatprep.subr.mxu0 0.0
        %1271 = vmatpush1.msra.mxu0 0.0
        %1272 = vmatprep.subr.mxu0 0.0
        %1273 = vmatpush1.msra.mxu0 %v1241
        %1274 = vmatprep.subr.mxu0 0.0
        %1275 = vmatpush1.msra.mxu0 %v1240
        %1276 = vmatprep.subr.mxu0 0.0
        %1277 = vmatpush1.msra.mxu0 %v1239
        %1278 = vmatprep.subr.mxu0 0.0
        %1279 = vmatpush1.msra.mxu0 %v1238
        %1280 = vmatprep.subr.mxu0 0.0
        %1281 = vmatpush2.msra.mxu0 0.0
        %1282 = vmatprep.subr.mxu0 0.0
        %1283 = vmatpush2.msra.mxu0 0.0
        %1284 = vmatprep.subr.mxu0 0.0
        %1285 = vmatpush2.msra.mxu0 0.0
        %1286 = vmatprep.subr.mxu0 0.0
        %1287 = vmatpush2.msra.mxu0 0.0
        %1288 = vmatprep.subr.mxu0 0.0
        %1289 = vmatpush2.msra.mxu0 0.0
        %1290 = vmatprep.subr.mxu0 0.0
        %1291 = vmatpush2.msra.mxu0 0.0
        %1292 = vmatprep.subr.mxu0 0.0
        %1293 = vmatpush2.msra.mxu0 0.0
        %1294 = vmatprep.subr.mxu0 0.0
        %1295 = vmatpush2.msra.mxu0 0.0
        %1296 = vmatprep.subr.mxu0 0.0
        %1297 = vmatpush2.msra.mxu0 0.0
        %1298 = vmatprep.subr.mxu0 0.0
        %1299 = vmatpush2.msra.mxu0 0.0
        %1300 = vmatprep.subr.mxu0 0.0
        %1301 = vmatpush2.msra.mxu0 0.0
        %1302 = vmatprep.subr.mxu0 0.0
        %1303 = vmatpush2.msra.mxu0 0.0
        %1304 = vmatprep.subr.mxu0 0.0
        %1305 = vmatpush2.msra.mxu0 0.0
        %1306 = vmatprep.subr.mxu0 0.0
        %1307 = vmatpush2.msra.mxu0 0.0
        %1308 = vmatprep.subr.mxu0 0.0
        %1309 = vmatpush2.msra.mxu0 0.0
        %1310 = vmatprep.subr.mxu0 0.0
        %1311 = vmatpush2.msra.mxu0 0.0
        %1312 = vmatprep.mubr.f32.mxu0 0.0
        %1313 = vmatmul.mubr.f32.gmra.mxu0 %v1243
        %v1314 = vpop.f32.mrf.mxu0
        %v1315 = vadd.f32 0.0, %v1314
        %v1316 = vpop.f32.mrf.mxu0
        %1317 = vmatprep.mubr.f32.mxu0 0.0
        %1318 = vmatmul.mubr.f32.gmra.mxu0 %v1246
        %v1319 = vpop.f32.mrf.mxu0
        %v1320 = vadd.f32 0.0, %v1319
        %v1321 = vpop.f32.mrf.mxu0
        %1322 = vdwg.mxu0
        %1325 = vrot.lane.b32.xlu0 %v367, 96
        %v1326 = vpop.permute.xlu0 %1325
        %1327 = vrot.lane.b32.xlu0 %v372, 96
        %v1328 = vpop.permute.xlu0 %1327
        %1331 = vxpose.xlu0.b32.start [1/16] %v1326, 128
        %1332 = vxpose.xlu0.b32.cont [2/16] %v1328, 128
        %1333 = vxpose.xlu0.b32.cont [3/16] 0.0, 128
        %1334 = vxpose.xlu0.b32.cont [4/16] 0.0, 128
        %1335 = vxpose.xlu0.b32.cont [5/16] 0.0, 128
        %1336 = vxpose.xlu0.b32.cont [6/16] 0.0, 128
        %1337 = vxpose.xlu0.b32.cont [7/16] 0.0, 128
        %1338 = vxpose.xlu0.b32.cont [8/16] 0.0, 128
        %1339 = vxpose.xlu0.b32.cont [9/16] 0.0, 128
        %1340 = vxpose.xlu0.b32.cont [10/16] 0.0, 128
        %1341 = vxpose.xlu0.b32.cont [11/16] 0.0, 128
        %1342 = vxpose.xlu0.b32.cont [12/16] 0.0, 128
        %1343 = vxpose.xlu0.b32.cont [13/16] 0.0, 128
        %1344 = vxpose.xlu0.b32.cont [14/16] 0.0, 128
        %1345 = vxpose.xlu0.b32.cont [15/16] 0.0, 128
        %1346 = vxpose.xlu0.b32.end [16/16] 0.0, 128
        %v1347 = vpop.trf.xlu0
        %v1348 = vpop.trf.xlu0
        %v1349 = vpop.trf.xlu0
        %v1350 = vpop.trf.xlu0
        %v1351 = vpop.trf.xlu0
        %v1352 = vpop.trf.xlu0
        %v1353 = vpop.trf.xlu0
        %v1354 = vpop.trf.xlu0
        %v1355 = vpop.trf.xlu0
        %v1356 = vpop.trf.xlu0
        %v1357 = vpop.trf.xlu0
        %v1358 = vpop.trf.xlu0
        %v1359 = vpop.trf.xlu0
        %v1360 = vpop.trf.xlu0
        %v1361 = vpop.trf.xlu0
        %v1362 = vpop.trf.xlu0
        %v1363 = vld [vmem:[%s191 + $0x40] sm:$0xff]
        %v1364 = vld [vmem:[%s191 + $0x48] sm:$0xff]
        %v1365 = vlaneseq
        %v1366 = vshrl.u32 %v1365, 7
        %v1367 = vsub.s32 0, %v1366
        %v1368 = vrot.slane %v1347, %v1367
        %v1369 = vlaneseq
        %v1370 = vshrl.u32 %v1369, 7
        %v1371 = vsub.s32 1, %v1370
        %v1372 = vrot.slane %v1347, %v1371
        %1373 = vrot.lane.b32.xlu0 %v367, 127
        %v1374 = vpop.permute.xlu0 %1373
        %1375 = vrot.lane.b32.xlu0 %v372, 127
        %v1376 = vpop.permute.xlu0 %1375
        %1377 = vset.pattern.permute.xlu0 34
        %1378 = vperm.xlu0 %1377, %v367
        %v1379 = vpop.permute.xlu0 %1378
        %1381 = vset.pattern.permute.xlu0 34
        %1382 = vperm.xlu0 %1381, %v372
        %v1383 = vpop.permute.xlu0 %1382
        %1385 = vset.pattern.permute.xlu0 34
        %1386 = vperm.xlu0 %1385, %v1374
        %v1387 = vpop.permute.xlu0 %1386
        %1389 = vset.pattern.permute.xlu0 34
        %1390 = vperm.xlu0 %1389, %v1376
        %v1391 = vpop.permute.xlu0 %1390
        %v1393 = vadd.f32 %v1368, %v1379
        %v1394 = vadd.f32 %v1368, %v1383
        %v1395 = vadd.f32 %v1372, %v1387
        %v1396 = vadd.f32 %v1372, %v1391
        %vm1397 = vcmp.gt.f32.partialorder %v1393, 0.0
        %vm1398 = vcmp.gt.f32.partialorder %v1394, 0.0
        %vm1399 = vcmp.gt.f32.partialorder %v1395, 0.0
        %vm1400 = vcmp.gt.f32.partialorder %v1396, 0.0
        %v1401 = vmul.f32 %v1393, 0.2
        %v1402 = vmul.f32 %v1394, 0.2
        %v1403 = vmul.f32 %v1395, 0.2
        %v1404 = vmul.f32 %v1396, 0.2
        %v1405 = vsel %vm1397, %v1393, %v1401
        %v1406 = vsel %vm1398, %v1394, %v1402
        %v1407 = vsel %vm1399, %v1395, %v1403
        %v1408 = vsel %vm1400, %v1396, %v1404
        %v1409 = vadd.f32 %v1405, %v1363
        %v1410 = vadd.f32 %v1406, %v1364
        %v1411 = vadd.f32 %v1407, %v1363
        %v1412 = vadd.f32 %v1408, %v1364
        %v1413 = vsel %vm495, %v1409, -inf
        %1414 = vmax.xlane.f32.xlu0 %v1413
        %v1415 = vpop.xlane.xlu0 %1414
        %v1416 = vsel %vm495, %v1410, -inf
        %1417 = vmax.xlane.f32.xlu0 %v1416
        %v1418 = vpop.xlane.xlu0 %1417
        %v1419 = vsel %vm495, %v1411, -inf
        %1420 = vmax.xlane.f32.xlu0 %v1419
        %v1421 = vpop.xlane.xlu0 %1420
        %v1422 = vsel %vm495, %v1412, -inf
        %1423 = vmax.xlane.f32.xlu0 %v1422
        %v1424 = vpop.xlane.xlu0 %1423
        %v1425 = vsub.f32 %v1409, %v1415
        %v1426 = vsub.f32 %v1410, %v1418
        %v1427 = vsub.f32 %v1411, %v1421
        %v1428 = vsub.f32 %v1412, %v1424
        %v1429 = vmul.f32 %v1425, 1.442695
        %v1430 = vpow.pop %v1429
        %v1431 = vmul.f32 %v1426, 1.442695
        %v1432 = vpow.pop %v1431
        %v1433 = vmul.f32 %v1427, 1.442695
        %v1434 = vpow.pop %v1433
        %v1435 = vmul.f32 %v1428, 1.442695
        %v1436 = vpow.pop %v1435
        %v1437 = vsel %vm495, %v1430, 0.0
        %1438 = vadd.xlane.f32.xlu0 %v1437
        %v1439 = vpop.xlane.xlu0 %1438
        %v1440 = vsel %vm495, %v1432, 0.0
        %1441 = vadd.xlane.f32.xlu0 %v1440
        %v1442 = vpop.xlane.xlu0 %1441
        %v1443 = vsel %vm495, %v1434, 0.0
        %1444 = vadd.xlane.f32.xlu0 %v1443
        %v1445 = vpop.xlane.xlu0 %1444
        %v1446 = vsel %vm495, %v1436, 0.0
        %1447 = vadd.xlane.f32.xlu0 %v1446
        %v1448 = vpop.xlane.xlu0 %1447
        %v1449 = vrcp.pop %v1439
        %v1450 = vrcp.pop %v1442
        %v1451 = vrcp.pop %v1445
        %v1452 = vrcp.pop %v1448
        %v1453 = vmul.f32 %v1430, %v1449
        %v1454 = vmul.f32 %v1432, %v1450
        %v1455 = vmul.f32 %v1434, %v1451
        %v1456 = vmul.f32 %v1436, %v1452
        %1459 = vrot.lane.b32.xlu0 %v1455, 16
        %v1460 = vpop.permute.xlu0 %1459
        %1461 = vrot.lane.b32.xlu0 %v1456, 16
        %v1462 = vpop.permute.xlu0 %1461
        %v1465 = vsel %vm495, %v1453, %v1460
        %v1466 = vsel %vm495, %v1454, %v1462
        %v1467 = vsel %vm495, %v367, 0.0
        %v1468 = vsel %vm495, %v372, 0.0
        %v1469 = vsel %vm495, 0.0, %v367
        %v1470 = vsel %vm495, 0.0, %v372
        %v1472 = vsel %vm554, %v1465, 0
        %v1475 = vsel %vm554, %v1466, 0
        %1477 = vmatprep.subr.mxu0 0.0
        %1478 = vmatpush1.msra.mxu0 0.0
        %1479 = vmatprep.subr.mxu0 0.0
        %1480 = vmatpush1.msra.mxu0 0.0
        %1481 = vmatprep.subr.mxu0 0.0
        %1482 = vmatpush1.msra.mxu0 0.0
        %1483 = vmatprep.subr.mxu0 0.0
        %1484 = vmatpush1.msra.mxu0 0.0
        %1485 = vmatprep.subr.mxu0 0.0
        %1486 = vmatpush1.msra.mxu0 0.0
        %1487 = vmatprep.subr.mxu0 0.0
        %1488 = vmatpush1.msra.mxu0 0.0
        %1489 = vmatprep.subr.mxu0 0.0
        %1490 = vmatpush1.msra.mxu0 0.0
        %1491 = vmatprep.subr.mxu0 0.0
        %1492 = vmatpush1.msra.mxu0 0.0
        %1493 = vmatprep.subr.mxu0 0.0
        %1494 = vmatpush1.msra.mxu0 0.0
        %1495 = vmatprep.subr.mxu0 0.0
        %1496 = vmatpush1.msra.mxu0 0.0
        %1497 = vmatprep.subr.mxu0 0.0
        %1498 = vmatpush1.msra.mxu0 0.0
        %1499 = vmatprep.subr.mxu0 0.0
        %1500 = vmatpush1.msra.mxu0 0.0
        %1501 = vmatprep.subr.mxu0 0.0
        %1502 = vmatpush1.msra.mxu0 %v1470
        %1503 = vmatprep.subr.mxu0 0.0
        %1504 = vmatpush1.msra.mxu0 %v1469
        %1505 = vmatprep.subr.mxu0 0.0
        %1506 = vmatpush1.msra.mxu0 %v1468
        %1507 = vmatprep.subr.mxu0 0.0
        %1508 = vmatpush1.msra.mxu0 %v1467
        %1509 = vmatprep.subr.mxu0 0.0
        %1510 = vmatpush2.msra.mxu0 0.0
        %1511 = vmatprep.subr.mxu0 0.0
        %1512 = vmatpush2.msra.mxu0 0.0
        %1513 = vmatprep.subr.mxu0 0.0
        %1514 = vmatpush2.msra.mxu0 0.0
        %1515 = vmatprep.subr.mxu0 0.0
        %1516 = vmatpush2.msra.mxu0 0.0
        %1517 = vmatprep.subr.mxu0 0.0
        %1518 = vmatpush2.msra.mxu0 0.0
        %1519 = vmatprep.subr.mxu0 0.0
        %1520 = vmatpush2.msra.mxu0 0.0
        %1521 = vmatprep.subr.mxu0 0.0
        %1522 = vmatpush2.msra.mxu0 0.0
        %1523 = vmatprep.subr.mxu0 0.0
        %1524 = vmatpush2.msra.mxu0 0.0
        %1525 = vmatprep.subr.mxu0 0.0
        %1526 = vmatpush2.msra.mxu0 0.0
        %1527 = vmatprep.subr.mxu0 0.0
        %1528 = vmatpush2.msra.mxu0 0.0
        %1529 = vmatprep.subr.mxu0 0.0
        %1530 = vmatpush2.msra.mxu0 0.0
        %1531 = vmatprep.subr.mxu0 0.0
        %1532 = vmatpush2.msra.mxu0 0.0
        %1533 = vmatprep.subr.mxu0 0.0
        %1534 = vmatpush2.msra.mxu0 0.0
        %1535 = vmatprep.subr.mxu0 0.0
        %1536 = vmatpush2.msra.mxu0 0.0
        %1537 = vmatprep.subr.mxu0 0.0
        %1538 = vmatpush2.msra.mxu0 0.0
        %1539 = vmatprep.subr.mxu0 0.0
        %1540 = vmatpush2.msra.mxu0 0.0
        %1541 = vmatprep.mubr.f32.mxu0 0.0
        %1542 = vmatmul.mubr.f32.gmra.mxu0 %v1472
        %v1543 = vpop.f32.mrf.mxu0
        %v1544 = vadd.f32 0.0, %v1543
        %v1545 = vpop.f32.mrf.mxu0
        %1546 = vmatprep.mubr.f32.mxu0 0.0
        %1547 = vmatmul.mubr.f32.gmra.mxu0 %v1475
        %v1548 = vpop.f32.mrf.mxu0
        %v1549 = vadd.f32 0.0, %v1548
        %v1550 = vpop.f32.mrf.mxu0
        %1551 = vdwg.mxu0
        %1554 = vrot.lane.b32.xlu0 %v377, 96
        %v1555 = vpop.permute.xlu0 %1554
        %1556 = vrot.lane.b32.xlu0 %v382, 96
        %v1557 = vpop.permute.xlu0 %1556
        %1560 = vxpose.xlu0.b32.start [1/16] %v1555, 128
        %1561 = vxpose.xlu0.b32.cont [2/16] %v1557, 128
        %1562 = vxpose.xlu0.b32.cont [3/16] 0.0, 128
        %1563 = vxpose.xlu0.b32.cont [4/16] 0.0, 128
        %1564 = vxpose.xlu0.b32.cont [5/16] 0.0, 128
        %1565 = vxpose.xlu0.b32.cont [6/16] 0.0, 128
        %1566 = vxpose.xlu0.b32.cont [7/16] 0.0, 128
        %1567 = vxpose.xlu0.b32.cont [8/16] 0.0, 128
        %1568 = vxpose.xlu0.b32.cont [9/16] 0.0, 128
        %1569 = vxpose.xlu0.b32.cont [10/16] 0.0, 128
        %1570 = vxpose.xlu0.b32.cont [11/16] 0.0, 128
        %1571 = vxpose.xlu0.b32.cont [12/16] 0.0, 128
        %1572 = vxpose.xlu0.b32.cont [13/16] 0.0, 128
        %1573 = vxpose.xlu0.b32.cont [14/16] 0.0, 128
        %1574 = vxpose.xlu0.b32.cont [15/16] 0.0, 128
        %1575 = vxpose.xlu0.b32.end [16/16] 0.0, 128
        %v1576 = vpop.trf.xlu0
        %v1577 = vpop.trf.xlu0
        %v1578 = vpop.trf.xlu0
        %v1579 = vpop.trf.xlu0
        %v1580 = vpop.trf.xlu0
        %v1581 = vpop.trf.xlu0
        %v1582 = vpop.trf.xlu0
        %v1583 = vpop.trf.xlu0
        %v1584 = vpop.trf.xlu0
        %v1585 = vpop.trf.xlu0
        %v1586 = vpop.trf.xlu0
        %v1587 = vpop.trf.xlu0
        %v1588 = vpop.trf.xlu0
        %v1589 = vpop.trf.xlu0
        %v1590 = vpop.trf.xlu0
        %v1591 = vpop.trf.xlu0
        %v1592 = vld [vmem:[%s191 + $0x50] sm:$0xff]
        %v1593 = vld [vmem:[%s191 + $0x58] sm:$0xff]
        %v1594 = vlaneseq
        %v1595 = vshrl.u32 %v1594, 7
        %v1596 = vsub.s32 0, %v1595
        %v1597 = vrot.slane %v1576, %v1596
        %v1598 = vlaneseq
        %v1599 = vshrl.u32 %v1598, 7
        %v1600 = vsub.s32 1, %v1599
        %v1601 = vrot.slane %v1576, %v1600
        %1602 = vrot.lane.b32.xlu0 %v377, 127
        %v1603 = vpop.permute.xlu0 %1602
        %1604 = vrot.lane.b32.xlu0 %v382, 127
        %v1605 = vpop.permute.xlu0 %1604
        %1606 = vset.pattern.permute.xlu0 34
        %1607 = vperm.xlu0 %1606, %v377
        %v1608 = vpop.permute.xlu0 %1607
        %1610 = vset.pattern.permute.xlu0 34
        %1611 = vperm.xlu0 %1610, %v382
        %v1612 = vpop.permute.xlu0 %1611
        %1614 = vset.pattern.permute.xlu0 34
        %1615 = vperm.xlu0 %1614, %v1603
        %v1616 = vpop.permute.xlu0 %1615
        %1618 = vset.pattern.permute.xlu0 34
        %1619 = vperm.xlu0 %1618, %v1605
        %v1620 = vpop.permute.xlu0 %1619
        %v1622 = vadd.f32 %v1597, %v1608
        %v1623 = vadd.f32 %v1597, %v1612
        %v1624 = vadd.f32 %v1601, %v1616
        %v1625 = vadd.f32 %v1601, %v1620
        %vm1626 = vcmp.gt.f32.partialorder %v1622, 0.0
        %vm1627 = vcmp.gt.f32.partialorder %v1623, 0.0
        %vm1628 = vcmp.gt.f32.partialorder %v1624, 0.0
        %vm1629 = vcmp.gt.f32.partialorder %v1625, 0.0
        %v1630 = vmul.f32 %v1622, 0.2
        %v1631 = vmul.f32 %v1623, 0.2
        %v1632 = vmul.f32 %v1624, 0.2
        %v1633 = vmul.f32 %v1625, 0.2
        %v1634 = vsel %vm1626, %v1622, %v1630
        %v1635 = vsel %vm1627, %v1623, %v1631
        %v1636 = vsel %vm1628, %v1624, %v1632
        %v1637 = vsel %vm1629, %v1625, %v1633
        %v1638 = vadd.f32 %v1634, %v1592
        %v1639 = vadd.f32 %v1635, %v1593
        %v1640 = vadd.f32 %v1636, %v1592
        %v1641 = vadd.f32 %v1637, %v1593
        %v1642 = vsel %vm495, %v1638, -inf
        %1643 = vmax.xlane.f32.xlu0 %v1642
        %v1644 = vpop.xlane.xlu0 %1643
        %v1645 = vsel %vm495, %v1639, -inf
        %1646 = vmax.xlane.f32.xlu0 %v1645
        %v1647 = vpop.xlane.xlu0 %1646
        %v1648 = vsel %vm495, %v1640, -inf
        %1649 = vmax.xlane.f32.xlu0 %v1648
        %v1650 = vpop.xlane.xlu0 %1649
        %v1651 = vsel %vm495, %v1641, -inf
        %1652 = vmax.xlane.f32.xlu0 %v1651
        %v1653 = vpop.xlane.xlu0 %1652
        %v1654 = vsub.f32 %v1638, %v1644
        %v1655 = vsub.f32 %v1639, %v1647
        %v1656 = vsub.f32 %v1640, %v1650
        %v1657 = vsub.f32 %v1641, %v1653
        %v1658 = vmul.f32 %v1654, 1.442695
        %v1659 = vpow.pop %v1658
        %v1660 = vmul.f32 %v1655, 1.442695
        %v1661 = vpow.pop %v1660
        %v1662 = vmul.f32 %v1656, 1.442695
        %v1663 = vpow.pop %v1662
        %v1664 = vmul.f32 %v1657, 1.442695
        %v1665 = vpow.pop %v1664
        %v1666 = vsel %vm495, %v1659, 0.0
        %1667 = vadd.xlane.f32.xlu0 %v1666
        %v1668 = vpop.xlane.xlu0 %1667
        %v1669 = vsel %vm495, %v1661, 0.0
        %1670 = vadd.xlane.f32.xlu0 %v1669
        %v1671 = vpop.xlane.xlu0 %1670
        %v1672 = vsel %vm495, %v1663, 0.0
        %1673 = vadd.xlane.f32.xlu0 %v1672
        %v1674 = vpop.xlane.xlu0 %1673
        %v1675 = vsel %vm495, %v1665, 0.0
        %1676 = vadd.xlane.f32.xlu0 %v1675
        %v1677 = vpop.xlane.xlu0 %1676
        %v1678 = vrcp.pop %v1668
        %v1679 = vrcp.pop %v1671
        %v1680 = vrcp.pop %v1674
        %v1681 = vrcp.pop %v1677
        %v1682 = vmul.f32 %v1659, %v1678
        %v1683 = vmul.f32 %v1661, %v1679
        %v1684 = vmul.f32 %v1663, %v1680
        %v1685 = vmul.f32 %v1665, %v1681
        %1688 = vrot.lane.b32.xlu0 %v1684, 16
        %v1689 = vpop.permute.xlu0 %1688
        %1690 = vrot.lane.b32.xlu0 %v1685, 16
        %v1691 = vpop.permute.xlu0 %1690
        %v1694 = vsel %vm495, %v1682, %v1689
        %v1695 = vsel %vm495, %v1683, %v1691
        %v1696 = vsel %vm495, %v377, 0.0
        %v1697 = vsel %vm495, %v382, 0.0
        %v1698 = vsel %vm495, 0.0, %v377
        %v1699 = vsel %vm495, 0.0, %v382
        %v1701 = vsel %vm554, %v1694, 0
        %v1704 = vsel %vm554, %v1695, 0
        %1706 = vmatprep.subr.mxu0 0.0
        %1707 = vmatpush1.msra.mxu0 0.0
        %1708 = vmatprep.subr.mxu0 0.0
        %1709 = vmatpush1.msra.mxu0 0.0
        %1710 = vmatprep.subr.mxu0 0.0
        %1711 = vmatpush1.msra.mxu0 0.0
        %1712 = vmatprep.subr.mxu0 0.0
        %1713 = vmatpush1.msra.mxu0 0.0
        %1714 = vmatprep.subr.mxu0 0.0
        %1715 = vmatpush1.msra.mxu0 0.0
        %1716 = vmatprep.subr.mxu0 0.0
        %1717 = vmatpush1.msra.mxu0 0.0
        %1718 = vmatprep.subr.mxu0 0.0
        %1719 = vmatpush1.msra.mxu0 0.0
        %1720 = vmatprep.subr.mxu0 0.0
        %1721 = vmatpush1.msra.mxu0 0.0
        %1722 = vmatprep.subr.mxu0 0.0
        %1723 = vmatpush1.msra.mxu0 0.0
        %1724 = vmatprep.subr.mxu0 0.0
        %1725 = vmatpush1.msra.mxu0 0.0
        %1726 = vmatprep.subr.mxu0 0.0
        %1727 = vmatpush1.msra.mxu0 0.0
        %1728 = vmatprep.subr.mxu0 0.0
        %1729 = vmatpush1.msra.mxu0 0.0
        %1730 = vmatprep.subr.mxu0 0.0
        %1731 = vmatpush1.msra.mxu0 %v1699
        %1732 = vmatprep.subr.mxu0 0.0
        %1733 = vmatpush1.msra.mxu0 %v1698
        %1734 = vmatprep.subr.mxu0 0.0
        %1735 = vmatpush1.msra.mxu0 %v1697
        %1736 = vmatprep.subr.mxu0 0.0
        %1737 = vmatpush1.msra.mxu0 %v1696
        %1738 = vmatprep.subr.mxu0 0.0
        %1739 = vmatpush2.msra.mxu0 0.0
        %1740 = vmatprep.subr.mxu0 0.0
        %1741 = vmatpush2.msra.mxu0 0.0
        %1742 = vmatprep.subr.mxu0 0.0
        %1743 = vmatpush2.msra.mxu0 0.0
        %1744 = vmatprep.subr.mxu0 0.0
        %1745 = vmatpush2.msra.mxu0 0.0
        %1746 = vmatprep.subr.mxu0 0.0
        %1747 = vmatpush2.msra.mxu0 0.0
        %1748 = vmatprep.subr.mxu0 0.0
        %1749 = vmatpush2.msra.mxu0 0.0
        %1750 = vmatprep.subr.mxu0 0.0
        %1751 = vmatpush2.msra.mxu0 0.0
        %1752 = vmatprep.subr.mxu0 0.0
        %1753 = vmatpush2.msra.mxu0 0.0
        %1754 = vmatprep.subr.mxu0 0.0
        %1755 = vmatpush2.msra.mxu0 0.0
        %1756 = vmatprep.subr.mxu0 0.0
        %1757 = vmatpush2.msra.mxu0 0.0
        %1758 = vmatprep.subr.mxu0 0.0
        %1759 = vmatpush2.msra.mxu0 0.0
        %1760 = vmatprep.subr.mxu0 0.0
        %1761 = vmatpush2.msra.mxu0 0.0
        %1762 = vmatprep.subr.mxu0 0.0
        %1763 = vmatpush2.msra.mxu0 0.0
        %1764 = vmatprep.subr.mxu0 0.0
        %1765 = vmatpush2.msra.mxu0 0.0
        %1766 = vmatprep.subr.mxu0 0.0
        %1767 = vmatpush2.msra.mxu0 0.0
        %1768 = vmatprep.subr.mxu0 0.0
        %1769 = vmatpush2.msra.mxu0 0.0
        %1770 = vmatprep.mubr.f32.mxu0 0.0
        %1771 = vmatmul.mubr.f32.gmra.mxu0 %v1701
        %v1772 = vpop.f32.mrf.mxu0
        %v1773 = vadd.f32 0.0, %v1772
        %v1774 = vpop.f32.mrf.mxu0
        %1775 = vmatprep.mubr.f32.mxu0 0.0
        %1776 = vmatmul.mubr.f32.gmra.mxu0 %v1704
        %v1777 = vpop.f32.mrf.mxu0
        %v1778 = vadd.f32 0.0, %v1777
        %v1779 = vpop.f32.mrf.mxu0
        %1780 = vdwg.mxu0
        %1783 = vrot.lane.b32.xlu0 %v387, 96
        %v1784 = vpop.permute.xlu0 %1783
        %1785 = vrot.lane.b32.xlu0 %v392, 96
        %v1786 = vpop.permute.xlu0 %1785
        %1789 = vxpose.xlu0.b32.start [1/16] %v1784, 128
        %1790 = vxpose.xlu0.b32.cont [2/16] %v1786, 128
        %1791 = vxpose.xlu0.b32.cont [3/16] 0.0, 128
        %1792 = vxpose.xlu0.b32.cont [4/16] 0.0, 128
        %1793 = vxpose.xlu0.b32.cont [5/16] 0.0, 128
        %1794 = vxpose.xlu0.b32.cont [6/16] 0.0, 128
        %1795 = vxpose.xlu0.b32.cont [7/16] 0.0, 128
        %1796 = vxpose.xlu0.b32.cont [8/16] 0.0, 128
        %1797 = vxpose.xlu0.b32.cont [9/16] 0.0, 128
        %1798 = vxpose.xlu0.b32.cont [10/16] 0.0, 128
        %1799 = vxpose.xlu0.b32.cont [11/16] 0.0, 128
        %1800 = vxpose.xlu0.b32.cont [12/16] 0.0, 128
        %1801 = vxpose.xlu0.b32.cont [13/16] 0.0, 128
        %1802 = vxpose.xlu0.b32.cont [14/16] 0.0, 128
        %1803 = vxpose.xlu0.b32.cont [15/16] 0.0, 128
        %1804 = vxpose.xlu0.b32.end [16/16] 0.0, 128
        %v1805 = vpop.trf.xlu0
        %v1806 = vpop.trf.xlu0
        %v1807 = vpop.trf.xlu0
        %v1808 = vpop.trf.xlu0
        %v1809 = vpop.trf.xlu0
        %v1810 = vpop.trf.xlu0
        %v1811 = vpop.trf.xlu0
        %v1812 = vpop.trf.xlu0
        %v1813 = vpop.trf.xlu0
        %v1814 = vpop.trf.xlu0
        %v1815 = vpop.trf.xlu0
        %v1816 = vpop.trf.xlu0
        %v1817 = vpop.trf.xlu0
        %v1818 = vpop.trf.xlu0
        %v1819 = vpop.trf.xlu0
        %v1820 = vpop.trf.xlu0
        %v1821 = vld [vmem:[%s191 + $0x60] sm:$0xff]
        %v1822 = vld [vmem:[%s191 + $0x68] sm:$0xff]
        %v1823 = vlaneseq
        %v1824 = vshrl.u32 %v1823, 7
        %v1825 = vsub.s32 0, %v1824
        %v1826 = vrot.slane %v1805, %v1825
        %v1827 = vlaneseq
        %v1828 = vshrl.u32 %v1827, 7
        %v1829 = vsub.s32 1, %v1828
        %v1830 = vrot.slane %v1805, %v1829
        %1831 = vrot.lane.b32.xlu0 %v387, 127
        %v1832 = vpop.permute.xlu0 %1831
        %1833 = vrot.lane.b32.xlu0 %v392, 127
        %v1834 = vpop.permute.xlu0 %1833
        %1835 = vset.pattern.permute.xlu0 34
        %1836 = vperm.xlu0 %1835, %v387
        %v1837 = vpop.permute.xlu0 %1836
        %1839 = vset.pattern.permute.xlu0 34
        %1840 = vperm.xlu0 %1839, %v392
        %v1841 = vpop.permute.xlu0 %1840
        %1843 = vset.pattern.permute.xlu0 34
        %1844 = vperm.xlu0 %1843, %v1832
        %v1845 = vpop.permute.xlu0 %1844
        %1847 = vset.pattern.permute.xlu0 34
        %1848 = vperm.xlu0 %1847, %v1834
        %v1849 = vpop.permute.xlu0 %1848
        %v1851 = vadd.f32 %v1826, %v1837
        %v1852 = vadd.f32 %v1826, %v1841
        %v1853 = vadd.f32 %v1830, %v1845
        %v1854 = vadd.f32 %v1830, %v1849
        %vm1855 = vcmp.gt.f32.partialorder %v1851, 0.0
        %vm1856 = vcmp.gt.f32.partialorder %v1852, 0.0
        %vm1857 = vcmp.gt.f32.partialorder %v1853, 0.0
        %vm1858 = vcmp.gt.f32.partialorder %v1854, 0.0
        %v1859 = vmul.f32 %v1851, 0.2
        %v1860 = vmul.f32 %v1852, 0.2
        %v1861 = vmul.f32 %v1853, 0.2
        %v1862 = vmul.f32 %v1854, 0.2
        %v1863 = vsel %vm1855, %v1851, %v1859
        %v1864 = vsel %vm1856, %v1852, %v1860
        %v1865 = vsel %vm1857, %v1853, %v1861
        %v1866 = vsel %vm1858, %v1854, %v1862
        %v1867 = vadd.f32 %v1863, %v1821
        %v1868 = vadd.f32 %v1864, %v1822
        %v1869 = vadd.f32 %v1865, %v1821
        %v1870 = vadd.f32 %v1866, %v1822
        %v1871 = vsel %vm495, %v1867, -inf
        %1872 = vmax.xlane.f32.xlu0 %v1871
        %v1873 = vpop.xlane.xlu0 %1872
        %v1874 = vsel %vm495, %v1868, -inf
        %1875 = vmax.xlane.f32.xlu0 %v1874
        %v1876 = vpop.xlane.xlu0 %1875
        %v1877 = vsel %vm495, %v1869, -inf
        %1878 = vmax.xlane.f32.xlu0 %v1877
        %v1879 = vpop.xlane.xlu0 %1878
        %v1880 = vsel %vm495, %v1870, -inf
        %1881 = vmax.xlane.f32.xlu0 %v1880
        %v1882 = vpop.xlane.xlu0 %1881
        %v1883 = vsub.f32 %v1867, %v1873
        %v1884 = vsub.f32 %v1868, %v1876
        %v1885 = vsub.f32 %v1869, %v1879
        %v1886 = vsub.f32 %v1870, %v1882
        %v1887 = vmul.f32 %v1883, 1.442695
        %v1888 = vpow.pop %v1887
        %v1889 = vmul.f32 %v1884, 1.442695
        %v1890 = vpow.pop %v1889
        %v1891 = vmul.f32 %v1885, 1.442695
        %v1892 = vpow.pop %v1891
        %v1893 = vmul.f32 %v1886, 1.442695
        %v1894 = vpow.pop %v1893
        %v1895 = vsel %vm495, %v1888, 0.0
        %1896 = vadd.xlane.f32.xlu0 %v1895
        %v1897 = vpop.xlane.xlu0 %1896
        %v1898 = vsel %vm495, %v1890, 0.0
        %1899 = vadd.xlane.f32.xlu0 %v1898
        %v1900 = vpop.xlane.xlu0 %1899
        %v1901 = vsel %vm495, %v1892, 0.0
        %1902 = vadd.xlane.f32.xlu0 %v1901
        %v1903 = vpop.xlane.xlu0 %1902
        %v1904 = vsel %vm495, %v1894, 0.0
        %1905 = vadd.xlane.f32.xlu0 %v1904
        %v1906 = vpop.xlane.xlu0 %1905
        %v1907 = vrcp.pop %v1897
        %v1908 = vrcp.pop %v1900
        %v1909 = vrcp.pop %v1903
        %v1910 = vrcp.pop %v1906
        %v1911 = vmul.f32 %v1888, %v1907
        %v1912 = vmul.f32 %v1890, %v1908
        %v1913 = vmul.f32 %v1892, %v1909
        %v1914 = vmul.f32 %v1894, %v1910
        %1917 = vrot.lane.b32.xlu0 %v1913, 16
        %v1918 = vpop.permute.xlu0 %1917
        %1919 = vrot.lane.b32.xlu0 %v1914, 16
        %v1920 = vpop.permute.xlu0 %1919
        %v1923 = vsel %vm495, %v1911, %v1918
        %v1924 = vsel %vm495, %v1912, %v1920
        %v1925 = vsel %vm495, %v387, 0.0
        %v1926 = vsel %vm495, %v392, 0.0
        %v1927 = vsel %vm495, 0.0, %v387
        %v1928 = vsel %vm495, 0.0, %v392
        %v1930 = vsel %vm554, %v1923, 0
        %v1933 = vsel %vm554, %v1924, 0
        %1935 = vmatprep.subr.mxu0 0.0
        %1936 = vmatpush1.msra.mxu0 0.0
        %1937 = vmatprep.subr.mxu0 0.0
        %1938 = vmatpush1.msra.mxu0 0.0
        %1939 = vmatprep.subr.mxu0 0.0
        %1940 = vmatpush1.msra.mxu0 0.0
        %1941 = vmatprep.subr.mxu0 0.0
        %1942 = vmatpush1.msra.mxu0 0.0
        %1943 = vmatprep.subr.mxu0 0.0
        %1944 = vmatpush1.msra.mxu0 0.0
        %1945 = vmatprep.subr.mxu0 0.0
        %1946 = vmatpush1.msra.mxu0 0.0
        %1947 = vmatprep.subr.mxu0 0.0
        %1948 = vmatpush1.msra.mxu0 0.0
        %1949 = vmatprep.subr.mxu0 0.0
        %1950 = vmatpush1.msra.mxu0 0.0
        %1951 = vmatprep.subr.mxu0 0.0
        %1952 = vmatpush1.msra.mxu0 0.0
        %1953 = vmatprep.subr.mxu0 0.0
        %1954 = vmatpush1.msra.mxu0 0.0
        %1955 = vmatprep.subr.mxu0 0.0
        %1956 = vmatpush1.msra.mxu0 0.0
        %1957 = vmatprep.subr.mxu0 0.0
        %1958 = vmatpush1.msra.mxu0 0.0
        %1959 = vmatprep.subr.mxu0 0.0
        %1960 = vmatpush1.msra.mxu0 %v1928
        %1961 = vmatprep.subr.mxu0 0.0
        %1962 = vmatpush1.msra.mxu0 %v1927
        %1963 = vmatprep.subr.mxu0 0.0
        %1964 = vmatpush1.msra.mxu0 %v1926
        %1965 = vmatprep.subr.mxu0 0.0
        %1966 = vmatpush1.msra.mxu0 %v1925
        %1967 = vmatprep.subr.mxu0 0.0
        %1968 = vmatpush2.msra.mxu0 0.0
        %1969 = vmatprep.subr.mxu0 0.0
        %1970 = vmatpush2.msra.mxu0 0.0
        %1971 = vmatprep.subr.mxu0 0.0
        %1972 = vmatpush2.msra.mxu0 0.0
        %1973 = vmatprep.subr.mxu0 0.0
        %1974 = vmatpush2.msra.mxu0 0.0
        %1975 = vmatprep.subr.mxu0 0.0
        %1976 = vmatpush2.msra.mxu0 0.0
        %1977 = vmatprep.subr.mxu0 0.0
        %1978 = vmatpush2.msra.mxu0 0.0
        %1979 = vmatprep.subr.mxu0 0.0
        %1980 = vmatpush2.msra.mxu0 0.0
        %1981 = vmatprep.subr.mxu0 0.0
        %1982 = vmatpush2.msra.mxu0 0.0
        %1983 = vmatprep.subr.mxu0 0.0
        %1984 = vmatpush2.msra.mxu0 0.0
        %1985 = vmatprep.subr.mxu0 0.0
        %1986 = vmatpush2.msra.mxu0 0.0
        %1987 = vmatprep.subr.mxu0 0.0
        %1988 = vmatpush2.msra.mxu0 0.0
        %1989 = vmatprep.subr.mxu0 0.0
        %1990 = vmatpush2.msra.mxu0 0.0
        %1991 = vmatprep.subr.mxu0 0.0
        %1992 = vmatpush2.msra.mxu0 0.0
        %1993 = vmatprep.subr.mxu0 0.0
        %1994 = vmatpush2.msra.mxu0 0.0
        %1995 = vmatprep.subr.mxu0 0.0
        %1996 = vmatpush2.msra.mxu0 0.0
        %1997 = vmatprep.subr.mxu0 0.0
        %1998 = vmatpush2.msra.mxu0 0.0
        %1999 = vmatprep.mubr.f32.mxu0 0.0
        %2000 = vmatmul.mubr.f32.gmra.mxu0 %v1930
        %v2001 = vpop.f32.mrf.mxu0
        %v2002 = vadd.f32 0.0, %v2001
        %v2003 = vpop.f32.mrf.mxu0
        %2004 = vmatprep.mubr.f32.mxu0 0.0
        %2005 = vmatmul.mubr.f32.gmra.mxu0 %v1933
        %v2006 = vpop.f32.mrf.mxu0
        %v2007 = vadd.f32 0.0, %v2006
        %v2008 = vpop.f32.mrf.mxu0
        %2009 = vdwg.mxu0
        %2012 = vrot.lane.b32.xlu0 %v397, 96
        %v2013 = vpop.permute.xlu0 %2012
        %2014 = vrot.lane.b32.xlu0 %v402, 96
        %v2015 = vpop.permute.xlu0 %2014
        %2018 = vxpose.xlu0.b32.start [1/16] %v2013, 128
        %2019 = vxpose.xlu0.b32.cont [2/16] %v2015, 128
        %2020 = vxpose.xlu0.b32.cont [3/16] 0.0, 128
        %2021 = vxpose.xlu0.b32.cont [4/16] 0.0, 128
        %2022 = vxpose.xlu0.b32.cont [5/16] 0.0, 128
        %2023 = vxpose.xlu0.b32.cont [6/16] 0.0, 128
        %2024 = vxpose.xlu0.b32.cont [7/16] 0.0, 128
        %2025 = vxpose.xlu0.b32.cont [8/16] 0.0, 128
        %2026 = vxpose.xlu0.b32.cont [9/16] 0.0, 128
        %2027 = vxpose.xlu0.b32.cont [10/16] 0.0, 128
        %2028 = vxpose.xlu0.b32.cont [11/16] 0.0, 128
        %2029 = vxpose.xlu0.b32.cont [12/16] 0.0, 128
        %2030 = vxpose.xlu0.b32.cont [13/16] 0.0, 128
        %2031 = vxpose.xlu0.b32.cont [14/16] 0.0, 128
        %2032 = vxpose.xlu0.b32.cont [15/16] 0.0, 128
        %2033 = vxpose.xlu0.b32.end [16/16] 0.0, 128
        %v2034 = vpop.trf.xlu0
        %v2035 = vpop.trf.xlu0
        %v2036 = vpop.trf.xlu0
        %v2037 = vpop.trf.xlu0
        %v2038 = vpop.trf.xlu0
        %v2039 = vpop.trf.xlu0
        %v2040 = vpop.trf.xlu0
        %v2041 = vpop.trf.xlu0
        %v2042 = vpop.trf.xlu0
        %v2043 = vpop.trf.xlu0
        %v2044 = vpop.trf.xlu0
        %v2045 = vpop.trf.xlu0
        %v2046 = vpop.trf.xlu0
        %v2047 = vpop.trf.xlu0
        %v2048 = vpop.trf.xlu0
        %v2049 = vpop.trf.xlu0
        %v2050 = vld [vmem:[%s191 + $0x70] sm:$0xff]
        %v2051 = vld [vmem:[%s191 + $0x78] sm:$0xff]
        %v2052 = vlaneseq
        %v2053 = vshrl.u32 %v2052, 7
        %v2054 = vsub.s32 0, %v2053
        %v2055 = vrot.slane %v2034, %v2054
        %v2056 = vlaneseq
        %v2057 = vshrl.u32 %v2056, 7
        %v2058 = vsub.s32 1, %v2057
        %v2059 = vrot.slane %v2034, %v2058
        %2060 = vrot.lane.b32.xlu0 %v397, 127
        %v2061 = vpop.permute.xlu0 %2060
        %2062 = vrot.lane.b32.xlu0 %v402, 127
        %v2063 = vpop.permute.xlu0 %2062
        %2064 = vset.pattern.permute.xlu0 34
        %2065 = vperm.xlu0 %2064, %v397
        %v2066 = vpop.permute.xlu0 %2065
        %2068 = vset.pattern.permute.xlu0 34
        %2069 = vperm.xlu0 %2068, %v402
        %v2070 = vpop.permute.xlu0 %2069
        %2072 = vset.pattern.permute.xlu0 34
        %2073 = vperm.xlu0 %2072, %v2061
        %v2074 = vpop.permute.xlu0 %2073
        %2076 = vset.pattern.permute.xlu0 34
        %2077 = vperm.xlu0 %2076, %v2063
        %v2078 = vpop.permute.xlu0 %2077
        %v2080 = vadd.f32 %v2055, %v2066
        %v2081 = vadd.f32 %v2055, %v2070
        %v2082 = vadd.f32 %v2059, %v2074
        %v2083 = vadd.f32 %v2059, %v2078
        %vm2084 = vcmp.gt.f32.partialorder %v2080, 0.0
        %vm2085 = vcmp.gt.f32.partialorder %v2081, 0.0
        %vm2086 = vcmp.gt.f32.partialorder %v2082, 0.0
        %vm2087 = vcmp.gt.f32.partialorder %v2083, 0.0
        %v2088 = vmul.f32 %v2080, 0.2
        %v2089 = vmul.f32 %v2081, 0.2
        %v2090 = vmul.f32 %v2082, 0.2
        %v2091 = vmul.f32 %v2083, 0.2
        %v2092 = vsel %vm2084, %v2080, %v2088
        %v2093 = vsel %vm2085, %v2081, %v2089
        %v2094 = vsel %vm2086, %v2082, %v2090
        %v2095 = vsel %vm2087, %v2083, %v2091
        %v2096 = vadd.f32 %v2092, %v2050
        %v2097 = vadd.f32 %v2093, %v2051
        %v2098 = vadd.f32 %v2094, %v2050
        %v2099 = vadd.f32 %v2095, %v2051
        %v2100 = vsel %vm495, %v2096, -inf
        %2101 = vmax.xlane.f32.xlu0 %v2100
        %v2102 = vpop.xlane.xlu0 %2101
        %v2103 = vsel %vm495, %v2097, -inf
        %2104 = vmax.xlane.f32.xlu0 %v2103
        %v2105 = vpop.xlane.xlu0 %2104
        %v2106 = vsel %vm495, %v2098, -inf
        %2107 = vmax.xlane.f32.xlu0 %v2106
        %v2108 = vpop.xlane.xlu0 %2107
        %v2109 = vsel %vm495, %v2099, -inf
        %2110 = vmax.xlane.f32.xlu0 %v2109
        %v2111 = vpop.xlane.xlu0 %2110
        %v2112 = vsub.f32 %v2096, %v2102
        %v2113 = vsub.f32 %v2097, %v2105
        %v2114 = vsub.f32 %v2098, %v2108
        %v2115 = vsub.f32 %v2099, %v2111
        %v2116 = vmul.f32 %v2112, 1.442695
        %v2117 = vpow.pop %v2116
        %v2118 = vmul.f32 %v2113, 1.442695
        %v2119 = vpow.pop %v2118
        %v2120 = vmul.f32 %v2114, 1.442695
        %v2121 = vpow.pop %v2120
        %v2122 = vmul.f32 %v2115, 1.442695
        %v2123 = vpow.pop %v2122
        %v2124 = vsel %vm495, %v2117, 0.0
        %2125 = vadd.xlane.f32.xlu0 %v2124
        %v2126 = vpop.xlane.xlu0 %2125
        %v2127 = vsel %vm495, %v2119, 0.0
        %2128 = vadd.xlane.f32.xlu0 %v2127
        %v2129 = vpop.xlane.xlu0 %2128
        %v2130 = vsel %vm495, %v2121, 0.0
        %2131 = vadd.xlane.f32.xlu0 %v2130
        %v2132 = vpop.xlane.xlu0 %2131
        %v2133 = vsel %vm495, %v2123, 0.0
        %2134 = vadd.xlane.f32.xlu0 %v2133
        %v2135 = vpop.xlane.xlu0 %2134
        %v2136 = vrcp.pop %v2126
        %v2137 = vrcp.pop %v2129
        %v2138 = vrcp.pop %v2132
        %v2139 = vrcp.pop %v2135
        %v2140 = vmul.f32 %v2117, %v2136
        %v2141 = vmul.f32 %v2119, %v2137
        %v2142 = vmul.f32 %v2121, %v2138
        %v2143 = vmul.f32 %v2123, %v2139
        %2146 = vrot.lane.b32.xlu0 %v2142, 16
        %v2147 = vpop.permute.xlu0 %2146
        %2148 = vrot.lane.b32.xlu0 %v2143, 16
        %v2149 = vpop.permute.xlu0 %2148
        %v2152 = vsel %vm495, %v2140, %v2147
        %v2153 = vsel %vm495, %v2141, %v2149
        %v2154 = vsel %vm495, %v397, 0.0
        %v2155 = vsel %vm495, %v402, 0.0
        %v2156 = vsel %vm495, 0.0, %v397
        %v2157 = vsel %vm495, 0.0, %v402
        %v2159 = vsel %vm554, %v2152, 0
        %v2162 = vsel %vm554, %v2153, 0
        %2164 = vmatprep.subr.mxu0 0.0
        %2165 = vmatpush1.msra.mxu0 0.0
        %2166 = vmatprep.subr.mxu0 0.0
        %2167 = vmatpush1.msra.mxu0 0.0
        %2168 = vmatprep.subr.mxu0 0.0
        %2169 = vmatpush1.msra.mxu0 0.0
        %2170 = vmatprep.subr.mxu0 0.0
        %2171 = vmatpush1.msra.mxu0 0.0
        %2172 = vmatprep.subr.mxu0 0.0
        %2173 = vmatpush1.msra.mxu0 0.0
        %2174 = vmatprep.subr.mxu0 0.0
        %2175 = vmatpush1.msra.mxu0 0.0
        %2176 = vmatprep.subr.mxu0 0.0
        %2177 = vmatpush1.msra.mxu0 0.0
        %2178 = vmatprep.subr.mxu0 0.0
        %2179 = vmatpush1.msra.mxu0 0.0
        %2180 = vmatprep.subr.mxu0 0.0
        %2181 = vmatpush1.msra.mxu0 0.0
        %2182 = vmatprep.subr.mxu0 0.0
        %2183 = vmatpush1.msra.mxu0 0.0
        %2184 = vmatprep.subr.mxu0 0.0
        %2185 = vmatpush1.msra.mxu0 0.0
        %2186 = vmatprep.subr.mxu0 0.0
        %2187 = vmatpush1.msra.mxu0 0.0
        %2188 = vmatprep.subr.mxu0 0.0
        %2189 = vmatpush1.msra.mxu0 %v2157
        %2190 = vmatprep.subr.mxu0 0.0
        %2191 = vmatpush1.msra.mxu0 %v2156
        %2192 = vmatprep.subr.mxu0 0.0
        %2193 = vmatpush1.msra.mxu0 %v2155
        %2194 = vmatprep.subr.mxu0 0.0
        %2195 = vmatpush1.msra.mxu0 %v2154
        %2196 = vmatprep.subr.mxu0 0.0
        %2197 = vmatpush2.msra.mxu0 0.0
        %2198 = vmatprep.subr.mxu0 0.0
        %2199 = vmatpush2.msra.mxu0 0.0
        %2200 = vmatprep.subr.mxu0 0.0
        %2201 = vmatpush2.msra.mxu0 0.0
        %2202 = vmatprep.subr.mxu0 0.0
        %2203 = vmatpush2.msra.mxu0 0.0
        %2204 = vmatprep.subr.mxu0 0.0
        %2205 = vmatpush2.msra.mxu0 0.0
        %2206 = vmatprep.subr.mxu0 0.0
        %2207 = vmatpush2.msra.mxu0 0.0
        %2208 = vmatprep.subr.mxu0 0.0
        %2209 = vmatpush2.msra.mxu0 0.0
        %2210 = vmatprep.subr.mxu0 0.0
        %2211 = vmatpush2.msra.mxu0 0.0
        %2212 = vmatprep.subr.mxu0 0.0
        %2213 = vmatpush2.msra.mxu0 0.0
        %2214 = vmatprep.subr.mxu0 0.0
        %2215 = vmatpush2.msra.mxu0 0.0
        %2216 = vmatprep.subr.mxu0 0.0
        %2217 = vmatpush2.msra.mxu0 0.0
        %2218 = vmatprep.subr.mxu0 0.0
        %2219 = vmatpush2.msra.mxu0 0.0
        %2220 = vmatprep.subr.mxu0 0.0
        %2221 = vmatpush2.msra.mxu0 0.0
        %2222 = vmatprep.subr.mxu0 0.0
        %2223 = vmatpush2.msra.mxu0 0.0
        %2224 = vmatprep.subr.mxu0 0.0
        %2225 = vmatpush2.msra.mxu0 0.0
        %2226 = vmatprep.subr.mxu0 0.0
        %2227 = vmatpush2.msra.mxu0 0.0
        %2228 = vmatprep.mubr.f32.mxu0 0.0
        %2229 = vmatmul.mubr.f32.gmra.mxu0 %v2159
        %v2230 = vpop.f32.mrf.mxu0
        %v2231 = vadd.f32 0.0, %v2230
        %v2232 = vpop.f32.mrf.mxu0
        %2233 = vmatprep.mubr.f32.mxu0 0.0
        %2234 = vmatmul.mubr.f32.gmra.mxu0 %v2162
        %v2235 = vpop.f32.mrf.mxu0
        %v2236 = vadd.f32 0.0, %v2235
        %v2237 = vpop.f32.mrf.mxu0
        %2238 = vdwg.mxu0
        %v2239 = vlaneseq
        %v2240 = vshrl.u32 %v2239, 7
        %v2241 = vsub.s32 0, %v2240
        %v2242 = vrot.slane %v210, %v2241
        %v2243 = vadd.f32 %v628, %v2242
        %v2244 = vadd.f32 %v633, %v2242
        %v2245 = vadd.f32 %v857, %v2242
        %v2246 = vadd.f32 %v862, %v2242
        %v2247 = vadd.f32 %v1086, %v2242
        %v2248 = vadd.f32 %v1091, %v2242
        %v2249 = vadd.f32 %v1315, %v2242
        %v2250 = vadd.f32 %v1320, %v2242
        %v2251 = vadd.f32 %v1544, %v2242
        %v2252 = vadd.f32 %v1549, %v2242
        %v2253 = vadd.f32 %v1773, %v2242
        %v2254 = vadd.f32 %v1778, %v2242
        %v2255 = vadd.f32 %v2002, %v2242
        %v2256 = vadd.f32 %v2007, %v2242
        %v2257 = vadd.f32 %v2231, %v2242
        %v2258 = vadd.f32 %v2236, %v2242
        %vm2259 = vcmp.gt.f32.partialorder %v2243, 0.0
        %vm2260 = vcmp.gt.f32.partialorder %v2244, 0.0
        %vm2261 = vcmp.gt.f32.partialorder %v2245, 0.0
        %vm2262 = vcmp.gt.f32.partialorder %v2246, 0.0
        %vm2263 = vcmp.gt.f32.partialorder %v2247, 0.0
        %vm2264 = vcmp.gt.f32.partialorder %v2248, 0.0
        %vm2265 = vcmp.gt.f32.partialorder %v2249, 0.0
        %vm2266 = vcmp.gt.f32.partialorder %v2250, 0.0
        %vm2267 = vcmp.gt.f32.partialorder %v2251, 0.0
        %vm2268 = vcmp.gt.f32.partialorder %v2252, 0.0
        %vm2269 = vcmp.gt.f32.partialorder %v2253, 0.0
        %vm2270 = vcmp.gt.f32.partialorder %v2254, 0.0
        %vm2271 = vcmp.gt.f32.partialorder %v2255, 0.0
        %vm2272 = vcmp.gt.f32.partialorder %v2256, 0.0
        %vm2273 = vcmp.gt.f32.partialorder %v2257, 0.0
        %vm2274 = vcmp.gt.f32.partialorder %v2258, 0.0
        %v2275 = vmul.f32 %v2243, 0.01
        %v2276 = vmul.f32 %v2244, 0.01
        %v2277 = vmul.f32 %v2245, 0.01
        %v2278 = vmul.f32 %v2246, 0.01
        %v2279 = vmul.f32 %v2247, 0.01
        %v2280 = vmul.f32 %v2248, 0.01
        %v2281 = vmul.f32 %v2249, 0.01
        %v2282 = vmul.f32 %v2250, 0.01
        %v2283 = vmul.f32 %v2251, 0.01
        %v2284 = vmul.f32 %v2252, 0.01
        %v2285 = vmul.f32 %v2253, 0.01
        %v2286 = vmul.f32 %v2254, 0.01
        %v2287 = vmul.f32 %v2255, 0.01
        %v2288 = vmul.f32 %v2256, 0.01
        %v2289 = vmul.f32 %v2257, 0.01
        %v2290 = vmul.f32 %v2258, 0.01
        %v2291 = vsel %vm2259, %v2243, %v2275
        %v2292 = vsel %vm2260, %v2244, %v2276
        %v2293 = vsel %vm2261, %v2245, %v2277
        %v2294 = vsel %vm2262, %v2246, %v2278
        %v2295 = vsel %vm2263, %v2247, %v2279
        %v2296 = vsel %vm2264, %v2248, %v2280
        %v2297 = vsel %vm2265, %v2249, %v2281
        %v2298 = vsel %vm2266, %v2250, %v2282
        %v2299 = vsel %vm2267, %v2251, %v2283
        %v2300 = vsel %vm2268, %v2252, %v2284
        %v2301 = vsel %vm2269, %v2253, %v2285
        %v2302 = vsel %vm2270, %v2254, %v2286
        %v2303 = vsel %vm2271, %v2255, %v2287
        %v2304 = vsel %vm2272, %v2256, %v2288
        %v2305 = vsel %vm2273, %v2257, %v2289
        %v2306 = vsel %vm2274, %v2258, %v2290
        %v2307 = vld [vmem:[%s2 + $0x10] sm:$0xff]
        %v2308 = vld [vmem:[%s2 + $0x18] sm:$0xff]
        %v2309 = vld [vmem:[%s2 + $0x20] sm:$0xff]
        %v2310 = vld [vmem:[%s2 + $0x28] sm:$0xff]
        %v2311 = vld [vmem:[%s2 + $0x30] sm:$0x1]
        %v2313 = vsel %vm554, %v2291, 0
        %v2316 = vsel %vm554, %v2292, 0
        %v2319 = vsel %vm554, %v2293, 0
        %v2322 = vsel %vm554, %v2294, 0
        %v2325 = vsel %vm554, %v2295, 0
        %v2328 = vsel %vm554, %v2296, 0
        %v2331 = vsel %vm554, %v2297, 0
        %v2334 = vsel %vm554, %v2298, 0
        %v2337 = vsel %vm554, %v2299, 0
        %v2340 = vsel %vm554, %v2300, 0
        %v2343 = vsel %vm554, %v2301, 0
        %v2346 = vsel %vm554, %v2302, 0
        %v2349 = vsel %vm554, %v2303, 0
        %v2352 = vsel %vm554, %v2304, 0
        %v2355 = vsel %vm554, %v2305, 0
        %v2358 = vsel %vm554, %v2306, 0
        %2360 = vmatprep.subr.mxu0 0.0
        %2361 = vmatpush1.msra.mxu0 0.0
        %2362 = vmatprep.subr.mxu0 0.0
        %2363 = vmatpush1.msra.mxu0 0.0
        %2364 = vmatprep.subr.mxu0 0.0
        %2365 = vmatpush1.msra.mxu0 0.0
        %2366 = vmatprep.subr.mxu0 0.0
        %2367 = vmatpush1.msra.mxu0 0.0
        %2368 = vmatprep.subr.mxu0 0.0
        %2369 = vmatpush1.msra.mxu0 0.0
        %2370 = vmatprep.subr.mxu0 0.0
        %2371 = vmatpush1.msra.mxu0 0.0
        %2372 = vmatprep.subr.mxu0 0.0
        %2373 = vmatpush1.msra.mxu0 0.0
        %2374 = vmatprep.subr.mxu0 0.0
        %2375 = vmatpush1.msra.mxu0 0.0
        %2376 = vmatprep.subr.mxu0 0.0
        %2377 = vmatpush1.msra.mxu0 0.0
        %2378 = vmatprep.subr.mxu0 0.0
        %2379 = vmatpush1.msra.mxu0 0.0
        %2380 = vmatprep.subr.mxu0 0.0
        %2381 = vmatpush1.msra.mxu0 0.0
        %2382 = vmatprep.subr.mxu0 0.0
        %2383 = vmatpush1.msra.mxu0 0.0
        %2384 = vmatprep.subr.mxu0 0.0
        %2385 = vmatpush1.msra.mxu0 %v2310
        %2386 = vmatprep.subr.mxu0 0.0
        %2387 = vmatpush1.msra.mxu0 %v2309
        %2388 = vmatprep.subr.mxu0 0.0
        %2389 = vmatpush1.msra.mxu0 %v2308
        %2390 = vmatprep.subr.mxu0 0.0
        %2391 = vmatpush1.msra.mxu0 %v2307
        %2392 = vmatprep.subr.mxu0 0.0
        %2393 = vmatpush2.msra.mxu0 0.0
        %2394 = vmatprep.subr.mxu0 0.0
        %2395 = vmatpush2.msra.mxu0 0.0
        %2396 = vmatprep.subr.mxu0 0.0
        %2397 = vmatpush2.msra.mxu0 0.0
        %2398 = vmatprep.subr.mxu0 0.0
        %2399 = vmatpush2.msra.mxu0 0.0
        %2400 = vmatprep.subr.mxu0 0.0
        %2401 = vmatpush2.msra.mxu0 0.0
        %2402 = vmatprep.subr.mxu0 0.0
        %2403 = vmatpush2.msra.mxu0 0.0
        %2404 = vmatprep.subr.mxu0 0.0
        %2405 = vmatpush2.msra.mxu0 0.0
        %2406 = vmatprep.subr.mxu0 0.0
        %2407 = vmatpush2.msra.mxu0 0.0
        %2408 = vmatprep.subr.mxu0 0.0
        %2409 = vmatpush2.msra.mxu0 0.0
        %2410 = vmatprep.subr.mxu0 0.0
        %2411 = vmatpush2.msra.mxu0 0.0
        %2412 = vmatprep.subr.mxu0 0.0
        %2413 = vmatpush2.msra.mxu0 0.0
        %2414 = vmatprep.subr.mxu0 0.0
        %2415 = vmatpush2.msra.mxu0 0.0
        %2416 = vmatprep.subr.mxu0 0.0
        %2417 = vmatpush2.msra.mxu0 0.0
        %2418 = vmatprep.subr.mxu0 0.0
        %2419 = vmatpush2.msra.mxu0 0.0
        %2420 = vmatprep.subr.mxu0 0.0
        %2421 = vmatpush2.msra.mxu0 0.0
        %2422 = vmatprep.subr.mxu0 0.0
        %2423 = vmatpush2.msra.mxu0 0.0
        %2424 = vmatprep.mubr.f32.mxu0 0.0
        %2425 = vmatmul.mubr.f32.gmra.mxu0 %v2313
        %v2426 = vpop.f32.mrf.mxu0
        %v2427 = vadd.f32 0.0, %v2426
        %v2428 = vpop.f32.mrf.mxu0
        %2429 = vmatprep.mubr.f32.mxu0 0.0
        %2430 = vmatmul.mubr.f32.gmra.mxu0 %v2316
        %v2431 = vpop.f32.mrf.mxu0
        %v2432 = vadd.f32 0.0, %v2431
        %v2433 = vpop.f32.mrf.mxu0
        %2434 = vmatprep.mubr.f32.mxu0 0.0
        %2435 = vmatmul.mubr.f32.gmra.mxu0 %v2319
        %v2436 = vpop.f32.mrf.mxu0
        %v2437 = vadd.f32 0.0, %v2436
        %v2438 = vpop.f32.mrf.mxu0
        %2439 = vmatprep.mubr.f32.mxu0 0.0
        %2440 = vmatmul.mubr.f32.gmra.mxu0 %v2322
        %v2441 = vpop.f32.mrf.mxu0
        %v2442 = vadd.f32 0.0, %v2441
        %v2443 = vpop.f32.mrf.mxu0
        %2444 = vmatprep.mubr.f32.mxu0 0.0
        %2445 = vmatmul.mubr.f32.gmra.mxu0 %v2325
        %v2446 = vpop.f32.mrf.mxu0
        %v2447 = vadd.f32 0.0, %v2446
        %v2448 = vpop.f32.mrf.mxu0
        %2449 = vmatprep.mubr.f32.mxu0 0.0
        %2450 = vmatmul.mubr.f32.gmra.mxu0 %v2328
        %v2451 = vpop.f32.mrf.mxu0
        %v2452 = vadd.f32 0.0, %v2451
        %v2453 = vpop.f32.mrf.mxu0
        %2454 = vmatprep.mubr.f32.mxu0 0.0
        %2455 = vmatmul.mubr.f32.gmra.mxu0 %v2331
        %v2456 = vpop.f32.mrf.mxu0
        %v2457 = vadd.f32 0.0, %v2456
        %v2458 = vpop.f32.mrf.mxu0
        %2459 = vmatprep.mubr.f32.mxu0 0.0
        %2460 = vmatmul.mubr.f32.gmra.mxu0 %v2334
        %v2461 = vpop.f32.mrf.mxu0
        %v2462 = vadd.f32 0.0, %v2461
        %v2463 = vpop.f32.mrf.mxu0
        %2464 = vmatprep.mubr.f32.mxu0 0.0
        %2465 = vmatmul.mubr.f32.gmra.mxu0 %v2337
        %v2466 = vpop.f32.mrf.mxu0
        %v2467 = vadd.f32 0.0, %v2466
        %v2468 = vpop.f32.mrf.mxu0
        %2469 = vmatprep.mubr.f32.mxu0 0.0
        %2470 = vmatmul.mubr.f32.gmra.mxu0 %v2340
        %v2471 = vpop.f32.mrf.mxu0
        %v2472 = vadd.f32 0.0, %v2471
        %v2473 = vpop.f32.mrf.mxu0
        %2474 = vmatprep.mubr.f32.mxu0 0.0
        %2475 = vmatmul.mubr.f32.gmra.mxu0 %v2343
        %v2476 = vpop.f32.mrf.mxu0
        %v2477 = vadd.f32 0.0, %v2476
        %v2478 = vpop.f32.mrf.mxu0
        %2479 = vmatprep.mubr.f32.mxu0 0.0
        %2480 = vmatmul.mubr.f32.gmra.mxu0 %v2346
        %v2481 = vpop.f32.mrf.mxu0
        %v2482 = vadd.f32 0.0, %v2481
        %v2483 = vpop.f32.mrf.mxu0
        %2484 = vmatprep.mubr.f32.mxu0 0.0
        %2485 = vmatmul.mubr.f32.gmra.mxu0 %v2349
        %v2486 = vpop.f32.mrf.mxu0
        %v2487 = vadd.f32 0.0, %v2486
        %v2488 = vpop.f32.mrf.mxu0
        %2489 = vmatprep.mubr.f32.mxu0 0.0
        %2490 = vmatmul.mubr.f32.gmra.mxu0 %v2352
        %v2491 = vpop.f32.mrf.mxu0
        %v2492 = vadd.f32 0.0, %v2491
        %v2493 = vpop.f32.mrf.mxu0
        %2494 = vmatprep.mubr.f32.mxu0 0.0
        %2495 = vmatmul.mubr.f32.gmra.mxu0 %v2355
        %v2496 = vpop.f32.mrf.mxu0
        %v2497 = vadd.f32 0.0, %v2496
        %v2498 = vpop.f32.mrf.mxu0
        %2499 = vmatprep.mubr.f32.mxu0 0.0
        %2500 = vmatmul.mubr.f32.gmra.mxu0 %v2358
        %v2501 = vpop.f32.mrf.mxu0
        %v2502 = vadd.f32 0.0, %v2501
        %v2503 = vpop.f32.mrf.mxu0
        %2504 = vdwg.mxu0
        %2507 = vrot.lane.b32.xlu0 %v2427, 96
        %v2508 = vpop.permute.xlu0 %2507
        %2509 = vrot.lane.b32.xlu0 %v2432, 96
        %v2510 = vpop.permute.xlu0 %2509
        %2513 = vxpose.xlu0.b32.start [1/16] %v2508, 128
        %2514 = vxpose.xlu0.b32.cont [2/16] %v2510, 128
        %2515 = vxpose.xlu0.b32.cont [3/16] 0.0, 128
        %2516 = vxpose.xlu0.b32.cont [4/16] 0.0, 128
        %2517 = vxpose.xlu0.b32.cont [5/16] 0.0, 128
        %2518 = vxpose.xlu0.b32.cont [6/16] 0.0, 128
        %2519 = vxpose.xlu0.b32.cont [7/16] 0.0, 128
        %2520 = vxpose.xlu0.b32.cont [8/16] 0.0, 128
        %2521 = vxpose.xlu0.b32.cont [9/16] 0.0, 128
        %2522 = vxpose.xlu0.b32.cont [10/16] 0.0, 128
        %2523 = vxpose.xlu0.b32.cont [11/16] 0.0, 128
        %2524 = vxpose.xlu0.b32.cont [12/16] 0.0, 128
        %2525 = vxpose.xlu0.b32.cont [13/16] 0.0, 128
        %2526 = vxpose.xlu0.b32.cont [14/16] 0.0, 128
        %2527 = vxpose.xlu0.b32.cont [15/16] 0.0, 128
        %2528 = vxpose.xlu0.b32.end [16/16] 0.0, 128
        %v2529 = vpop.trf.xlu0
        %v2530 = vpop.trf.xlu0
        %v2531 = vpop.trf.xlu0
        %v2532 = vpop.trf.xlu0
        %v2533 = vpop.trf.xlu0
        %v2534 = vpop.trf.xlu0
        %v2535 = vpop.trf.xlu0
        %v2536 = vpop.trf.xlu0
        %v2537 = vpop.trf.xlu0
        %v2538 = vpop.trf.xlu0
        %v2539 = vpop.trf.xlu0
        %v2540 = vpop.trf.xlu0
        %v2541 = vpop.trf.xlu0
        %v2542 = vpop.trf.xlu0
        %v2543 = vpop.trf.xlu0
        %v2544 = vpop.trf.xlu0
        %v2545 = vlaneseq
        %v2546 = vshrl.u32 %v2545, 7
        %v2547 = vsub.s32 0, %v2546
        %v2548 = vrot.slane %v2529, %v2547
        %v2549 = vlaneseq
        %v2550 = vshrl.u32 %v2549, 7
        %v2551 = vsub.s32 1, %v2550
        %v2552 = vrot.slane %v2529, %v2551
        %2553 = vrot.lane.b32.xlu0 %v2427, 127
        %v2554 = vpop.permute.xlu0 %2553
        %2555 = vrot.lane.b32.xlu0 %v2432, 127
        %v2556 = vpop.permute.xlu0 %2555
        %2557 = vset.pattern.permute.xlu0 34
        %2558 = vperm.xlu0 %2557, %v2427
        %v2559 = vpop.permute.xlu0 %2558
        %2561 = vset.pattern.permute.xlu0 34
        %2562 = vperm.xlu0 %2561, %v2432
        %v2563 = vpop.permute.xlu0 %2562
        %2565 = vset.pattern.permute.xlu0 34
        %2566 = vperm.xlu0 %2565, %v2554
        %v2567 = vpop.permute.xlu0 %2566
        %2569 = vset.pattern.permute.xlu0 34
        %2570 = vperm.xlu0 %2569, %v2556
        %v2571 = vpop.permute.xlu0 %2570
        %v2573 = vadd.f32 %v2548, %v2559
        %v2574 = vadd.f32 %v2548, %v2563
        %v2575 = vadd.f32 %v2552, %v2567
        %v2576 = vadd.f32 %v2552, %v2571
        %vm2577 = vcmp.gt.f32.partialorder %v2573, 0.0
        %vm2578 = vcmp.gt.f32.partialorder %v2574, 0.0
        %vm2579 = vcmp.gt.f32.partialorder %v2575, 0.0
        %vm2580 = vcmp.gt.f32.partialorder %v2576, 0.0
        %v2581 = vmul.f32 %v2573, 0.2
        %v2582 = vmul.f32 %v2574, 0.2
        %v2583 = vmul.f32 %v2575, 0.2
        %v2584 = vmul.f32 %v2576, 0.2
        %v2585 = vsel %vm2577, %v2573, %v2581
        %v2586 = vsel %vm2578, %v2574, %v2582
        %v2587 = vsel %vm2579, %v2575, %v2583
        %v2588 = vsel %vm2580, %v2576, %v2584
        %v2589 = vadd.f32 %v2585, %v445
        %v2590 = vadd.f32 %v2586, %v446
        %v2591 = vadd.f32 %v2587, %v445
        %v2592 = vadd.f32 %v2588, %v446
        %v2593 = vsel %vm495, %v2589, -inf
        %2594 = vmax.xlane.f32.xlu0 %v2593
        %v2595 = vpop.xlane.xlu0 %2594
        %v2596 = vsel %vm495, %v2590, -inf
        %2597 = vmax.xlane.f32.xlu0 %v2596
        %v2598 = vpop.xlane.xlu0 %2597
        %v2599 = vsel %vm495, %v2591, -inf
        %2600 = vmax.xlane.f32.xlu0 %v2599
        %v2601 = vpop.xlane.xlu0 %2600
        %v2602 = vsel %vm495, %v2592, -inf
        %2603 = vmax.xlane.f32.xlu0 %v2602
        %v2604 = vpop.xlane.xlu0 %2603
        %v2605 = vsub.f32 %v2589, %v2595
        %v2606 = vsub.f32 %v2590, %v2598
        %v2607 = vsub.f32 %v2591, %v2601
        %v2608 = vsub.f32 %v2592, %v2604
        %v2609 = vmul.f32 %v2605, 1.442695
        %v2610 = vpow.pop %v2609
        %v2611 = vmul.f32 %v2606, 1.442695
        %v2612 = vpow.pop %v2611
        %v2613 = vmul.f32 %v2607, 1.442695
        %v2614 = vpow.pop %v2613
        %v2615 = vmul.f32 %v2608, 1.442695
        %v2616 = vpow.pop %v2615
        %v2617 = vsel %vm495, %v2610, 0.0
        %2618 = vadd.xlane.f32.xlu0 %v2617
        %v2619 = vpop.xlane.xlu0 %2618
        %v2620 = vsel %vm495, %v2612, 0.0
        %2621 = vadd.xlane.f32.xlu0 %v2620
        %v2622 = vpop.xlane.xlu0 %2621
        %v2623 = vsel %vm495, %v2614, 0.0
        %2624 = vadd.xlane.f32.xlu0 %v2623
        %v2625 = vpop.xlane.xlu0 %2624
        %v2626 = vsel %vm495, %v2616, 0.0
        %2627 = vadd.xlane.f32.xlu0 %v2626
        %v2628 = vpop.xlane.xlu0 %2627
        %v2629 = vrcp.pop %v2619
        %v2630 = vrcp.pop %v2622
        %v2631 = vrcp.pop %v2625
        %v2632 = vrcp.pop %v2628
        %v2633 = vmul.f32 %v2610, %v2629
        %v2634 = vmul.f32 %v2612, %v2630
        %v2635 = vmul.f32 %v2614, %v2631
        %v2636 = vmul.f32 %v2616, %v2632
        %2639 = vrot.lane.b32.xlu0 %v2635, 16
        %v2640 = vpop.permute.xlu0 %2639
        %2641 = vrot.lane.b32.xlu0 %v2636, 16
        %v2642 = vpop.permute.xlu0 %2641
        %v2645 = vsel %vm495, %v2633, %v2640
        %v2646 = vsel %vm495, %v2634, %v2642
        %v2647 = vsel %vm495, %v2427, 0.0
        %v2648 = vsel %vm495, %v2432, 0.0
        %v2649 = vsel %vm495, 0.0, %v2427
        %v2650 = vsel %vm495, 0.0, %v2432
        %v2652 = vsel %vm554, %v2645, 0
        %v2655 = vsel %vm554, %v2646, 0
        %2657 = vmatprep.subr.mxu0 0.0
        %2658 = vmatpush1.msra.mxu0 0.0
        %2659 = vmatprep.subr.mxu0 0.0
        %2660 = vmatpush1.msra.mxu0 0.0
        %2661 = vmatprep.subr.mxu0 0.0
        %2662 = vmatpush1.msra.mxu0 0.0
        %2663 = vmatprep.subr.mxu0 0.0
        %2664 = vmatpush1.msra.mxu0 0.0
        %2665 = vmatprep.subr.mxu0 0.0
        %2666 = vmatpush1.msra.mxu0 0.0
        %2667 = vmatprep.subr.mxu0 0.0
        %2668 = vmatpush1.msra.mxu0 0.0
        %2669 = vmatprep.subr.mxu0 0.0
        %2670 = vmatpush1.msra.mxu0 0.0
        %2671 = vmatprep.subr.mxu0 0.0
        %2672 = vmatpush1.msra.mxu0 0.0
        %2673 = vmatprep.subr.mxu0 0.0
        %2674 = vmatpush1.msra.mxu0 0.0
        %2675 = vmatprep.subr.mxu0 0.0
        %2676 = vmatpush1.msra.mxu0 0.0
        %2677 = vmatprep.subr.mxu0 0.0
        %2678 = vmatpush1.msra.mxu0 0.0
        %2679 = vmatprep.subr.mxu0 0.0
        %2680 = vmatpush1.msra.mxu0 0.0
        %2681 = vmatprep.subr.mxu0 0.0
        %2682 = vmatpush1.msra.mxu0 %v2650
        %2683 = vmatprep.subr.mxu0 0.0
        %2684 = vmatpush1.msra.mxu0 %v2649
        %2685 = vmatprep.subr.mxu0 0.0
        %2686 = vmatpush1.msra.mxu0 %v2648
        %2687 = vmatprep.subr.mxu0 0.0
        %2688 = vmatpush1.msra.mxu0 %v2647
        %2689 = vmatprep.subr.mxu0 0.0
        %2690 = vmatpush2.msra.mxu0 0.0
        %2691 = vmatprep.subr.mxu0 0.0
        %2692 = vmatpush2.msra.mxu0 0.0
        %2693 = vmatprep.subr.mxu0 0.0
        %2694 = vmatpush2.msra.mxu0 0.0
        %2695 = vmatprep.subr.mxu0 0.0
        %2696 = vmatpush2.msra.mxu0 0.0
        %2697 = vmatprep.subr.mxu0 0.0
        %2698 = vmatpush2.msra.mxu0 0.0
        %2699 = vmatprep.subr.mxu0 0.0
        %2700 = vmatpush2.msra.mxu0 0.0
        %2701 = vmatprep.subr.mxu0 0.0
        %2702 = vmatpush2.msra.mxu0 0.0
        %2703 = vmatprep.subr.mxu0 0.0
        %2704 = vmatpush2.msra.mxu0 0.0
        %2705 = vmatprep.subr.mxu0 0.0
        %2706 = vmatpush2.msra.mxu0 0.0
        %2707 = vmatprep.subr.mxu0 0.0
        %2708 = vmatpush2.msra.mxu0 0.0
        %2709 = vmatprep.subr.mxu0 0.0
        %2710 = vmatpush2.msra.mxu0 0.0
        %2711 = vmatprep.subr.mxu0 0.0
        %2712 = vmatpush2.msra.mxu0 0.0
        %2713 = vmatprep.subr.mxu0 0.0
        %2714 = vmatpush2.msra.mxu0 0.0
        %2715 = vmatprep.subr.mxu0 0.0
        %2716 = vmatpush2.msra.mxu0 0.0
        %2717 = vmatprep.subr.mxu0 0.0
        %2718 = vmatpush2.msra.mxu0 0.0
        %2719 = vmatprep.subr.mxu0 0.0
        %2720 = vmatpush2.msra.mxu0 0.0
        %2721 = vmatprep.mubr.f32.mxu0 0.0
        %2722 = vmatmul.mubr.f32.gmra.mxu0 %v2652
        %v2723 = vpop.f32.mrf.mxu0
        %v2724 = vadd.f32 0.0, %v2723
        %v2725 = vpop.f32.mrf.mxu0
        %2726 = vmatprep.mubr.f32.mxu0 0.0
        %2727 = vmatmul.mubr.f32.gmra.mxu0 %v2655
        %v2728 = vpop.f32.mrf.mxu0
        %v2729 = vadd.f32 0.0, %v2728
        %v2730 = vpop.f32.mrf.mxu0
        %2731 = vdwg.mxu0
        %2734 = vrot.lane.b32.xlu0 %v2437, 96
        %v2735 = vpop.permute.xlu0 %2734
        %2736 = vrot.lane.b32.xlu0 %v2442, 96
        %v2737 = vpop.permute.xlu0 %2736
        %2740 = vxpose.xlu0.b32.start [1/16] %v2735, 128
        %2741 = vxpose.xlu0.b32.cont [2/16] %v2737, 128
        %2742 = vxpose.xlu0.b32.cont [3/16] 0.0, 128
        %2743 = vxpose.xlu0.b32.cont [4/16] 0.0, 128
        %2744 = vxpose.xlu0.b32.cont [5/16] 0.0, 128
        %2745 = vxpose.xlu0.b32.cont [6/16] 0.0, 128
        %2746 = vxpose.xlu0.b32.cont [7/16] 0.0, 128
        %2747 = vxpose.xlu0.b32.cont [8/16] 0.0, 128
        %2748 = vxpose.xlu0.b32.cont [9/16] 0.0, 128
        %2749 = vxpose.xlu0.b32.cont [10/16] 0.0, 128
        %2750 = vxpose.xlu0.b32.cont [11/16] 0.0, 128
        %2751 = vxpose.xlu0.b32.cont [12/16] 0.0, 128
        %2752 = vxpose.xlu0.b32.cont [13/16] 0.0, 128
        %2753 = vxpose.xlu0.b32.cont [14/16] 0.0, 128
        %2754 = vxpose.xlu0.b32.cont [15/16] 0.0, 128
        %2755 = vxpose.xlu0.b32.end [16/16] 0.0, 128
        %v2756 = vpop.trf.xlu0
        %v2757 = vpop.trf.xlu0
        %v2758 = vpop.trf.xlu0
        %v2759 = vpop.trf.xlu0
        %v2760 = vpop.trf.xlu0
        %v2761 = vpop.trf.xlu0
        %v2762 = vpop.trf.xlu0
        %v2763 = vpop.trf.xlu0
        %v2764 = vpop.trf.xlu0
        %v2765 = vpop.trf.xlu0
        %v2766 = vpop.trf.xlu0
        %v2767 = vpop.trf.xlu0
        %v2768 = vpop.trf.xlu0
        %v2769 = vpop.trf.xlu0
        %v2770 = vpop.trf.xlu0
        %v2771 = vpop.trf.xlu0
        %v2772 = vlaneseq
        %v2773 = vshrl.u32 %v2772, 7
        %v2774 = vsub.s32 0, %v2773
        %v2775 = vrot.slane %v2756, %v2774
        %v2776 = vlaneseq
        %v2777 = vshrl.u32 %v2776, 7
        %v2778 = vsub.s32 1, %v2777
        %v2779 = vrot.slane %v2756, %v2778
        %2780 = vrot.lane.b32.xlu0 %v2437, 127
        %v2781 = vpop.permute.xlu0 %2780
        %2782 = vrot.lane.b32.xlu0 %v2442, 127
        %v2783 = vpop.permute.xlu0 %2782
        %2784 = vset.pattern.permute.xlu0 34
        %2785 = vperm.xlu0 %2784, %v2437
        %v2786 = vpop.permute.xlu0 %2785
        %2788 = vset.pattern.permute.xlu0 34
        %2789 = vperm.xlu0 %2788, %v2442
        %v2790 = vpop.permute.xlu0 %2789
        %2792 = vset.pattern.permute.xlu0 34
        %2793 = vperm.xlu0 %2792, %v2781
        %v2794 = vpop.permute.xlu0 %2793
        %2796 = vset.pattern.permute.xlu0 34
        %2797 = vperm.xlu0 %2796, %v2783
        %v2798 = vpop.permute.xlu0 %2797
        %v2800 = vadd.f32 %v2775, %v2786
        %v2801 = vadd.f32 %v2775, %v2790
        %v2802 = vadd.f32 %v2779, %v2794
        %v2803 = vadd.f32 %v2779, %v2798
        %vm2804 = vcmp.gt.f32.partialorder %v2800, 0.0
        %vm2805 = vcmp.gt.f32.partialorder %v2801, 0.0
        %vm2806 = vcmp.gt.f32.partialorder %v2802, 0.0
        %vm2807 = vcmp.gt.f32.partialorder %v2803, 0.0
        %v2808 = vmul.f32 %v2800, 0.2
        %v2809 = vmul.f32 %v2801, 0.2
        %v2810 = vmul.f32 %v2802, 0.2
        %v2811 = vmul.f32 %v2803, 0.2
        %v2812 = vsel %vm2804, %v2800, %v2808
        %v2813 = vsel %vm2805, %v2801, %v2809
        %v2814 = vsel %vm2806, %v2802, %v2810
        %v2815 = vsel %vm2807, %v2803, %v2811
        %v2816 = vadd.f32 %v2812, %v676
        %v2817 = vadd.f32 %v2813, %v677
        %v2818 = vadd.f32 %v2814, %v676
        %v2819 = vadd.f32 %v2815, %v677
        %v2820 = vsel %vm495, %v2816, -inf
        %2821 = vmax.xlane.f32.xlu0 %v2820
        %v2822 = vpop.xlane.xlu0 %2821
        %v2823 = vsel %vm495, %v2817, -inf
        %2824 = vmax.xlane.f32.xlu0 %v2823
        %v2825 = vpop.xlane.xlu0 %2824
        %v2826 = vsel %vm495, %v2818, -inf
        %2827 = vmax.xlane.f32.xlu0 %v2826
        %v2828 = vpop.xlane.xlu0 %2827
        %v2829 = vsel %vm495, %v2819, -inf
        %2830 = vmax.xlane.f32.xlu0 %v2829
        %v2831 = vpop.xlane.xlu0 %2830
        %v2832 = vsub.f32 %v2816, %v2822
        %v2833 = vsub.f32 %v2817, %v2825
        %v2834 = vsub.f32 %v2818, %v2828
        %v2835 = vsub.f32 %v2819, %v2831
        %v2836 = vmul.f32 %v2832, 1.442695
        %v2837 = vpow.pop %v2836
        %v2838 = vmul.f32 %v2833, 1.442695
        %v2839 = vpow.pop %v2838
        %v2840 = vmul.f32 %v2834, 1.442695
        %v2841 = vpow.pop %v2840
        %v2842 = vmul.f32 %v2835, 1.442695
        %v2843 = vpow.pop %v2842
        %v2844 = vsel %vm495, %v2837, 0.0
        %2845 = vadd.xlane.f32.xlu0 %v2844
        %v2846 = vpop.xlane.xlu0 %2845
        %v2847 = vsel %vm495, %v2839, 0.0
        %2848 = vadd.xlane.f32.xlu0 %v2847
        %v2849 = vpop.xlane.xlu0 %2848
        %v2850 = vsel %vm495, %v2841, 0.0
        %2851 = vadd.xlane.f32.xlu0 %v2850
        %v2852 = vpop.xlane.xlu0 %2851
        %v2853 = vsel %vm495, %v2843, 0.0
        %2854 = vadd.xlane.f32.xlu0 %v2853
        %v2855 = vpop.xlane.xlu0 %2854
        %v2856 = vrcp.pop %v2846
        %v2857 = vrcp.pop %v2849
        %v2858 = vrcp.pop %v2852
        %v2859 = vrcp.pop %v2855
        %v2860 = vmul.f32 %v2837, %v2856
        %v2861 = vmul.f32 %v2839, %v2857
        %v2862 = vmul.f32 %v2841, %v2858
        %v2863 = vmul.f32 %v2843, %v2859
        %2866 = vrot.lane.b32.xlu0 %v2862, 16
        %v2867 = vpop.permute.xlu0 %2866
        %2868 = vrot.lane.b32.xlu0 %v2863, 16
        %v2869 = vpop.permute.xlu0 %2868
        %v2872 = vsel %vm495, %v2860, %v2867
        %v2873 = vsel %vm495, %v2861, %v2869
        %v2874 = vsel %vm495, %v2437, 0.0
        %v2875 = vsel %vm495, %v2442, 0.0
        %v2876 = vsel %vm495, 0.0, %v2437
        %v2877 = vsel %vm495, 0.0, %v2442
        %v2879 = vsel %vm554, %v2872, 0
        %v2882 = vsel %vm554, %v2873, 0
        %2884 = vmatprep.subr.mxu0 0.0
        %2885 = vmatpush1.msra.mxu0 0.0
        %2886 = vmatprep.subr.mxu0 0.0
        %2887 = vmatpush1.msra.mxu0 0.0
        %2888 = vmatprep.subr.mxu0 0.0
        %2889 = vmatpush1.msra.mxu0 0.0
        %2890 = vmatprep.subr.mxu0 0.0
        %2891 = vmatpush1.msra.mxu0 0.0
        %2892 = vmatprep.subr.mxu0 0.0
        %2893 = vmatpush1.msra.mxu0 0.0
        %2894 = vmatprep.subr.mxu0 0.0
        %2895 = vmatpush1.msra.mxu0 0.0
        %2896 = vmatprep.subr.mxu0 0.0
        %2897 = vmatpush1.msra.mxu0 0.0
        %2898 = vmatprep.subr.mxu0 0.0
        %2899 = vmatpush1.msra.mxu0 0.0
        %2900 = vmatprep.subr.mxu0 0.0
        %2901 = vmatpush1.msra.mxu0 0.0
        %2902 = vmatprep.subr.mxu0 0.0
        %2903 = vmatpush1.msra.mxu0 0.0
        %2904 = vmatprep.subr.mxu0 0.0
        %2905 = vmatpush1.msra.mxu0 0.0
        %2906 = vmatprep.subr.mxu0 0.0
        %2907 = vmatpush1.msra.mxu0 0.0
        %2908 = vmatprep.subr.mxu0 0.0
        %2909 = vmatpush1.msra.mxu0 %v2877
        %2910 = vmatprep.subr.mxu0 0.0
        %2911 = vmatpush1.msra.mxu0 %v2876
        %2912 = vmatprep.subr.mxu0 0.0
        %2913 = vmatpush1.msra.mxu0 %v2875
        %2914 = vmatprep.subr.mxu0 0.0
        %2915 = vmatpush1.msra.mxu0 %v2874
        %2916 = vmatprep.subr.mxu0 0.0
        %2917 = vmatpush2.msra.mxu0 0.0
        %2918 = vmatprep.subr.mxu0 0.0
        %2919 = vmatpush2.msra.mxu0 0.0
        %2920 = vmatprep.subr.mxu0 0.0
        %2921 = vmatpush2.msra.mxu0 0.0
        %2922 = vmatprep.subr.mxu0 0.0
        %2923 = vmatpush2.msra.mxu0 0.0
        %2924 = vmatprep.subr.mxu0 0.0
        %2925 = vmatpush2.msra.mxu0 0.0
        %2926 = vmatprep.subr.mxu0 0.0
        %2927 = vmatpush2.msra.mxu0 0.0
        %2928 = vmatprep.subr.mxu0 0.0
        %2929 = vmatpush2.msra.mxu0 0.0
        %2930 = vmatprep.subr.mxu0 0.0
        %2931 = vmatpush2.msra.mxu0 0.0
        %2932 = vmatprep.subr.mxu0 0.0
        %2933 = vmatpush2.msra.mxu0 0.0
        %2934 = vmatprep.subr.mxu0 0.0
        %2935 = vmatpush2.msra.mxu0 0.0
        %2936 = vmatprep.subr.mxu0 0.0
        %2937 = vmatpush2.msra.mxu0 0.0
        %2938 = vmatprep.subr.mxu0 0.0
        %2939 = vmatpush2.msra.mxu0 0.0
        %2940 = vmatprep.subr.mxu0 0.0
        %2941 = vmatpush2.msra.mxu0 0.0
        %2942 = vmatprep.subr.mxu0 0.0
        %2943 = vmatpush2.msra.mxu0 0.0
        %2944 = vmatprep.subr.mxu0 0.0
        %2945 = vmatpush2.msra.mxu0 0.0
        %2946 = vmatprep.subr.mxu0 0.0
        %2947 = vmatpush2.msra.mxu0 0.0
        %2948 = vmatprep.mubr.f32.mxu0 0.0
        %2949 = vmatmul.mubr.f32.gmra.mxu0 %v2879
        %v2950 = vpop.f32.mrf.mxu0
        %v2951 = vadd.f32 0.0, %v2950
        %v2952 = vpop.f32.mrf.mxu0
        %2953 = vmatprep.mubr.f32.mxu0 0.0
        %2954 = vmatmul.mubr.f32.gmra.mxu0 %v2882
        %v2955 = vpop.f32.mrf.mxu0
        %v2956 = vadd.f32 0.0, %v2955
        %v2957 = vpop.f32.mrf.mxu0
        %2958 = vdwg.mxu0
        %2961 = vrot.lane.b32.xlu0 %v2447, 96
        %v2962 = vpop.permute.xlu0 %2961
        %2963 = vrot.lane.b32.xlu0 %v2452, 96
        %v2964 = vpop.permute.xlu0 %2963
        %2967 = vxpose.xlu0.b32.start [1/16] %v2962, 128
        %2968 = vxpose.xlu0.b32.cont [2/16] %v2964, 128
        %2969 = vxpose.xlu0.b32.cont [3/16] 0.0, 128
        %2970 = vxpose.xlu0.b32.cont [4/16] 0.0, 128
        %2971 = vxpose.xlu0.b32.cont [5/16] 0.0, 128
        %2972 = vxpose.xlu0.b32.cont [6/16] 0.0, 128
        %2973 = vxpose.xlu0.b32.cont [7/16] 0.0, 128
        %2974 = vxpose.xlu0.b32.cont [8/16] 0.0, 128
        %2975 = vxpose.xlu0.b32.cont [9/16] 0.0, 128
        %2976 = vxpose.xlu0.b32.cont [10/16] 0.0, 128
        %2977 = vxpose.xlu0.b32.cont [11/16] 0.0, 128
        %2978 = vxpose.xlu0.b32.cont [12/16] 0.0, 128
        %2979 = vxpose.xlu0.b32.cont [13/16] 0.0, 128
        %2980 = vxpose.xlu0.b32.cont [14/16] 0.0, 128
        %2981 = vxpose.xlu0.b32.cont [15/16] 0.0, 128
        %2982 = vxpose.xlu0.b32.end [16/16] 0.0, 128
        %v2983 = vpop.trf.xlu0
        %v2984 = vpop.trf.xlu0
        %v2985 = vpop.trf.xlu0
        %v2986 = vpop.trf.xlu0
        %v2987 = vpop.trf.xlu0
        %v2988 = vpop.trf.xlu0
        %v2989 = vpop.trf.xlu0
        %v2990 = vpop.trf.xlu0
        %v2991 = vpop.trf.xlu0
        %v2992 = vpop.trf.xlu0
        %v2993 = vpop.trf.xlu0
        %v2994 = vpop.trf.xlu0
        %v2995 = vpop.trf.xlu0
        %v2996 = vpop.trf.xlu0
        %v2997 = vpop.trf.xlu0
        %v2998 = vpop.trf.xlu0
        %v2999 = vlaneseq
        %v3000 = vshrl.u32 %v2999, 7
        %v3001 = vsub.s32 0, %v3000
        %v3002 = vrot.slane %v2983, %v3001
        %v3003 = vlaneseq
        %v3004 = vshrl.u32 %v3003, 7
        %v3005 = vsub.s32 1, %v3004
        %v3006 = vrot.slane %v2983, %v3005
        %3007 = vrot.lane.b32.xlu0 %v2447, 127
        %v3008 = vpop.permute.xlu0 %3007
        %3009 = vrot.lane.b32.xlu0 %v2452, 127
        %v3010 = vpop.permute.xlu0 %3009
        %3011 = vset.pattern.permute.xlu0 34
        %3012 = vperm.xlu0 %3011, %v2447
        %v3013 = vpop.permute.xlu0 %3012
        %3015 = vset.pattern.permute.xlu0 34
        %3016 = vperm.xlu0 %3015, %v2452
        %v3017 = vpop.permute.xlu0 %3016
        %3019 = vset.pattern.permute.xlu0 34
        %3020 = vperm.xlu0 %3019, %v3008
        %v3021 = vpop.permute.xlu0 %3020
        %3023 = vset.pattern.permute.xlu0 34
        %3024 = vperm.xlu0 %3023, %v3010
        %v3025 = vpop.permute.xlu0 %3024
        %v3027 = vadd.f32 %v3002, %v3013
        %v3028 = vadd.f32 %v3002, %v3017
        %v3029 = vadd.f32 %v3006, %v3021
        %v3030 = vadd.f32 %v3006, %v3025
        %vm3031 = vcmp.gt.f32.partialorder %v3027, 0.0
        %vm3032 = vcmp.gt.f32.partialorder %v3028, 0.0
        %vm3033 = vcmp.gt.f32.partialorder %v3029, 0.0
        %vm3034 = vcmp.gt.f32.partialorder %v3030, 0.0
        %v3035 = vmul.f32 %v3027, 0.2
        %v3036 = vmul.f32 %v3028, 0.2
        %v3037 = vmul.f32 %v3029, 0.2
        %v3038 = vmul.f32 %v3030, 0.2
        %v3039 = vsel %vm3031, %v3027, %v3035
        %v3040 = vsel %vm3032, %v3028, %v3036
        %v3041 = vsel %vm3033, %v3029, %v3037
        %v3042 = vsel %vm3034, %v3030, %v3038
        %v3043 = vadd.f32 %v3039, %v905
        %v3044 = vadd.f32 %v3040, %v906
        %v3045 = vadd.f32 %v3041, %v905
        %v3046 = vadd.f32 %v3042, %v906
        %v3047 = vsel %vm495, %v3043, -inf
        %3048 = vmax.xlane.f32.xlu0 %v3047
        %v3049 = vpop.xlane.xlu0 %3048
        %v3050 = vsel %vm495, %v3044, -inf
        %3051 = vmax.xlane.f32.xlu0 %v3050
        %v3052 = vpop.xlane.xlu0 %3051
        %v3053 = vsel %vm495, %v3045, -inf
        %3054 = vmax.xlane.f32.xlu0 %v3053
        %v3055 = vpop.xlane.xlu0 %3054
        %v3056 = vsel %vm495, %v3046, -inf
        %3057 = vmax.xlane.f32.xlu0 %v3056
        %v3058 = vpop.xlane.xlu0 %3057
        %v3059 = vsub.f32 %v3043, %v3049
        %v3060 = vsub.f32 %v3044, %v3052
        %v3061 = vsub.f32 %v3045, %v3055
        %v3062 = vsub.f32 %v3046, %v3058
        %v3063 = vmul.f32 %v3059, 1.442695
        %v3064 = vpow.pop %v3063
        %v3065 = vmul.f32 %v3060, 1.442695
        %v3066 = vpow.pop %v3065
        %v3067 = vmul.f32 %v3061, 1.442695
        %v3068 = vpow.pop %v3067
        %v3069 = vmul.f32 %v3062, 1.442695
        %v3070 = vpow.pop %v3069
        %v3071 = vsel %vm495, %v3064, 0.0
        %3072 = vadd.xlane.f32.xlu0 %v3071
        %v3073 = vpop.xlane.xlu0 %3072
        %v3074 = vsel %vm495, %v3066, 0.0
        %3075 = vadd.xlane.f32.xlu0 %v3074
        %v3076 = vpop.xlane.xlu0 %3075
        %v3077 = vsel %vm495, %v3068, 0.0
        %3078 = vadd.xlane.f32.xlu0 %v3077
        %v3079 = vpop.xlane.xlu0 %3078
        %v3080 = vsel %vm495, %v3070, 0.0
        %3081 = vadd.xlane.f32.xlu0 %v3080
        %v3082 = vpop.xlane.xlu0 %3081
        %v3083 = vrcp.pop %v3073
        %v3084 = vrcp.pop %v3076
        %v3085 = vrcp.pop %v3079
        %v3086 = vrcp.pop %v3082
        %v3087 = vmul.f32 %v3064, %v3083
        %v3088 = vmul.f32 %v3066, %v3084
        %v3089 = vmul.f32 %v3068, %v3085
        %v3090 = vmul.f32 %v3070, %v3086
        %3093 = vrot.lane.b32.xlu0 %v3089, 16
        %v3094 = vpop.permute.xlu0 %3093
        %3095 = vrot.lane.b32.xlu0 %v3090, 16
        %v3096 = vpop.permute.xlu0 %3095
        %v3099 = vsel %vm495, %v3087, %v3094
        %v3100 = vsel %vm495, %v3088, %v3096
        %v3101 = vsel %vm495, %v2447, 0.0
        %v3102 = vsel %vm495, %v2452, 0.0
        %v3103 = vsel %vm495, 0.0, %v2447
        %v3104 = vsel %vm495, 0.0, %v2452
        %v3106 = vsel %vm554, %v3099, 0
        %v3109 = vsel %vm554, %v3100, 0
        %3111 = vmatprep.subr.mxu0 0.0
        %3112 = vmatpush1.msra.mxu0 0.0
        %3113 = vmatprep.subr.mxu0 0.0
        %3114 = vmatpush1.msra.mxu0 0.0
        %3115 = vmatprep.subr.mxu0 0.0
        %3116 = vmatpush1.msra.mxu0 0.0
        %3117 = vmatprep.subr.mxu0 0.0
        %3118 = vmatpush1.msra.mxu0 0.0
        %3119 = vmatprep.subr.mxu0 0.0
        %3120 = vmatpush1.msra.mxu0 0.0
        %3121 = vmatprep.subr.mxu0 0.0
        %3122 = vmatpush1.msra.mxu0 0.0
        %3123 = vmatprep.subr.mxu0 0.0
        %3124 = vmatpush1.msra.mxu0 0.0
        %3125 = vmatprep.subr.mxu0 0.0
        %3126 = vmatpush1.msra.mxu0 0.0
        %3127 = vmatprep.subr.mxu0 0.0
        %3128 = vmatpush1.msra.mxu0 0.0
        %3129 = vmatprep.subr.mxu0 0.0
        %3130 = vmatpush1.msra.mxu0 0.0
        %3131 = vmatprep.subr.mxu0 0.0
        %3132 = vmatpush1.msra.mxu0 0.0
        %3133 = vmatprep.subr.mxu0 0.0
        %3134 = vmatpush1.msra.mxu0 0.0
        %3135 = vmatprep.subr.mxu0 0.0
        %3136 = vmatpush1.msra.mxu0 %v3104
        %3137 = vmatprep.subr.mxu0 0.0
        %3138 = vmatpush1.msra.mxu0 %v3103
        %3139 = vmatprep.subr.mxu0 0.0
        %3140 = vmatpush1.msra.mxu0 %v3102
        %3141 = vmatprep.subr.mxu0 0.0
        %3142 = vmatpush1.msra.mxu0 %v3101
        %3143 = vmatprep.subr.mxu0 0.0
        %3144 = vmatpush2.msra.mxu0 0.0
        %3145 = vmatprep.subr.mxu0 0.0
        %3146 = vmatpush2.msra.mxu0 0.0
        %3147 = vmatprep.subr.mxu0 0.0
        %3148 = vmatpush2.msra.mxu0 0.0
        %3149 = vmatprep.subr.mxu0 0.0
        %3150 = vmatpush2.msra.mxu0 0.0
        %3151 = vmatprep.subr.mxu0 0.0
        %3152 = vmatpush2.msra.mxu0 0.0
        %3153 = vmatprep.subr.mxu0 0.0
        %3154 = vmatpush2.msra.mxu0 0.0
        %3155 = vmatprep.subr.mxu0 0.0
        %3156 = vmatpush2.msra.mxu0 0.0
        %3157 = vmatprep.subr.mxu0 0.0
        %3158 = vmatpush2.msra.mxu0 0.0
        %3159 = vmatprep.subr.mxu0 0.0
        %3160 = vmatpush2.msra.mxu0 0.0
        %3161 = vmatprep.subr.mxu0 0.0
        %3162 = vmatpush2.msra.mxu0 0.0
        %3163 = vmatprep.subr.mxu0 0.0
        %3164 = vmatpush2.msra.mxu0 0.0
        %3165 = vmatprep.subr.mxu0 0.0
        %3166 = vmatpush2.msra.mxu0 0.0
        %3167 = vmatprep.subr.mxu0 0.0
        %3168 = vmatpush2.msra.mxu0 0.0
        %3169 = vmatprep.subr.mxu0 0.0
        %3170 = vmatpush2.msra.mxu0 0.0
        %3171 = vmatprep.subr.mxu0 0.0
        %3172 = vmatpush2.msra.mxu0 0.0
        %3173 = vmatprep.subr.mxu0 0.0
        %3174 = vmatpush2.msra.mxu0 0.0
        %3175 = vmatprep.mubr.f32.mxu0 0.0
        %3176 = vmatmul.mubr.f32.gmra.mxu0 %v3106
        %v3177 = vpop.f32.mrf.mxu0
        %v3178 = vadd.f32 0.0, %v3177
        %v3179 = vpop.f32.mrf.mxu0
        %3180 = vmatprep.mubr.f32.mxu0 0.0
        %3181 = vmatmul.mubr.f32.gmra.mxu0 %v3109
        %v3182 = vpop.f32.mrf.mxu0
        %v3183 = vadd.f32 0.0, %v3182
        %v3184 = vpop.f32.mrf.mxu0
        %3185 = vdwg.mxu0
        %3188 = vrot.lane.b32.xlu0 %v2457, 96
        %v3189 = vpop.permute.xlu0 %3188
        %3190 = vrot.lane.b32.xlu0 %v2462, 96
        %v3191 = vpop.permute.xlu0 %3190
        %3194 = vxpose.xlu0.b32.start [1/16] %v3189, 128
        %3195 = vxpose.xlu0.b32.cont [2/16] %v3191, 128
        %3196 = vxpose.xlu0.b32.cont [3/16] 0.0, 128
        %3197 = vxpose.xlu0.b32.cont [4/16] 0.0, 128
        %3198 = vxpose.xlu0.b32.cont [5/16] 0.0, 128
        %3199 = vxpose.xlu0.b32.cont [6/16] 0.0, 128
        %3200 = vxpose.xlu0.b32.cont [7/16] 0.0, 128
        %3201 = vxpose.xlu0.b32.cont [8/16] 0.0, 128
        %3202 = vxpose.xlu0.b32.cont [9/16] 0.0, 128
        %3203 = vxpose.xlu0.b32.cont [10/16] 0.0, 128
        %3204 = vxpose.xlu0.b32.cont [11/16] 0.0, 128
        %3205 = vxpose.xlu0.b32.cont [12/16] 0.0, 128
        %3206 = vxpose.xlu0.b32.cont [13/16] 0.0, 128
        %3207 = vxpose.xlu0.b32.cont [14/16] 0.0, 128
        %3208 = vxpose.xlu0.b32.cont [15/16] 0.0, 128
        %3209 = vxpose.xlu0.b32.end [16/16] 0.0, 128
        %v3210 = vpop.trf.xlu0
        %v3211 = vpop.trf.xlu0
        %v3212 = vpop.trf.xlu0
        %v3213 = vpop.trf.xlu0
        %v3214 = vpop.trf.xlu0
        %v3215 = vpop.trf.xlu0
        %v3216 = vpop.trf.xlu0
        %v3217 = vpop.trf.xlu0
        %v3218 = vpop.trf.xlu0
        %v3219 = vpop.trf.xlu0
        %v3220 = vpop.trf.xlu0
        %v3221 = vpop.trf.xlu0
        %v3222 = vpop.trf.xlu0
        %v3223 = vpop.trf.xlu0
        %v3224 = vpop.trf.xlu0
        %v3225 = vpop.trf.xlu0
        %v3226 = vlaneseq
        %v3227 = vshrl.u32 %v3226, 7
        %v3228 = vsub.s32 0, %v3227
        %v3229 = vrot.slane %v3210, %v3228
        %v3230 = vlaneseq
        %v3231 = vshrl.u32 %v3230, 7
        %v3232 = vsub.s32 1, %v3231
        %v3233 = vrot.slane %v3210, %v3232
        %3234 = vrot.lane.b32.xlu0 %v2457, 127
        %v3235 = vpop.permute.xlu0 %3234
        %3236 = vrot.lane.b32.xlu0 %v2462, 127
        %v3237 = vpop.permute.xlu0 %3236
        %3238 = vset.pattern.permute.xlu0 34
        %3239 = vperm.xlu0 %3238, %v2457
        %v3240 = vpop.permute.xlu0 %3239
        %3242 = vset.pattern.permute.xlu0 34
        %3243 = vperm.xlu0 %3242, %v2462
        %v3244 = vpop.permute.xlu0 %3243
        %3246 = vset.pattern.permute.xlu0 34
        %3247 = vperm.xlu0 %3246, %v3235
        %v3248 = vpop.permute.xlu0 %3247
        %3250 = vset.pattern.permute.xlu0 34
        %3251 = vperm.xlu0 %3250, %v3237
        %v3252 = vpop.permute.xlu0 %3251
        %v3254 = vadd.f32 %v3229, %v3240
        %v3255 = vadd.f32 %v3229, %v3244
        %v3256 = vadd.f32 %v3233, %v3248
        %v3257 = vadd.f32 %v3233, %v3252
        %vm3258 = vcmp.gt.f32.partialorder %v3254, 0.0
        %vm3259 = vcmp.gt.f32.partialorder %v3255, 0.0
        %vm3260 = vcmp.gt.f32.partialorder %v3256, 0.0
        %vm3261 = vcmp.gt.f32.partialorder %v3257, 0.0
        %v3262 = vmul.f32 %v3254, 0.2
        %v3263 = vmul.f32 %v3255, 0.2
        %v3264 = vmul.f32 %v3256, 0.2
        %v3265 = vmul.f32 %v3257, 0.2
        %v3266 = vsel %vm3258, %v3254, %v3262
        %v3267 = vsel %vm3259, %v3255, %v3263
        %v3268 = vsel %vm3260, %v3256, %v3264
        %v3269 = vsel %vm3261, %v3257, %v3265
        %v3270 = vadd.f32 %v3266, %v1134
        %v3271 = vadd.f32 %v3267, %v1135
        %v3272 = vadd.f32 %v3268, %v1134
        %v3273 = vadd.f32 %v3269, %v1135
        %v3274 = vsel %vm495, %v3270, -inf
        %3275 = vmax.xlane.f32.xlu0 %v3274
        %v3276 = vpop.xlane.xlu0 %3275
        %v3277 = vsel %vm495, %v3271, -inf
        %3278 = vmax.xlane.f32.xlu0 %v3277
        %v3279 = vpop.xlane.xlu0 %3278
        %v3280 = vsel %vm495, %v3272, -inf
        %3281 = vmax.xlane.f32.xlu0 %v3280
        %v3282 = vpop.xlane.xlu0 %3281
        %v3283 = vsel %vm495, %v3273, -inf
        %3284 = vmax.xlane.f32.xlu0 %v3283
        %v3285 = vpop.xlane.xlu0 %3284
        %v3286 = vsub.f32 %v3270, %v3276
        %v3287 = vsub.f32 %v3271, %v3279
        %v3288 = vsub.f32 %v3272, %v3282
        %v3289 = vsub.f32 %v3273, %v3285
        %v3290 = vmul.f32 %v3286, 1.442695
        %v3291 = vpow.pop %v3290
        %v3292 = vmul.f32 %v3287, 1.442695
        %v3293 = vpow.pop %v3292
        %v3294 = vmul.f32 %v3288, 1.442695
        %v3295 = vpow.pop %v3294
        %v3296 = vmul.f32 %v3289, 1.442695
        %v3297 = vpow.pop %v3296
        %v3298 = vsel %vm495, %v3291, 0.0
        %3299 = vadd.xlane.f32.xlu0 %v3298
        %v3300 = vpop.xlane.xlu0 %3299
        %v3301 = vsel %vm495, %v3293, 0.0
        %3302 = vadd.xlane.f32.xlu0 %v3301
        %v3303 = vpop.xlane.xlu0 %3302
        %v3304 = vsel %vm495, %v3295, 0.0
        %3305 = vadd.xlane.f32.xlu0 %v3304
        %v3306 = vpop.xlane.xlu0 %3305
        %v3307 = vsel %vm495, %v3297, 0.0
        %3308 = vadd.xlane.f32.xlu0 %v3307
        %v3309 = vpop.xlane.xlu0 %3308
        %v3310 = vrcp.pop %v3300
        %v3311 = vrcp.pop %v3303
        %v3312 = vrcp.pop %v3306
        %v3313 = vrcp.pop %v3309
        %v3314 = vmul.f32 %v3291, %v3310
        %v3315 = vmul.f32 %v3293, %v3311
        %v3316 = vmul.f32 %v3295, %v3312
        %v3317 = vmul.f32 %v3297, %v3313
        %3320 = vrot.lane.b32.xlu0 %v3316, 16
        %v3321 = vpop.permute.xlu0 %3320
        %3322 = vrot.lane.b32.xlu0 %v3317, 16
        %v3323 = vpop.permute.xlu0 %3322
        %v3326 = vsel %vm495, %v3314, %v3321
        %v3327 = vsel %vm495, %v3315, %v3323
        %v3328 = vsel %vm495, %v2457, 0.0
        %v3329 = vsel %vm495, %v2462, 0.0
        %v3330 = vsel %vm495, 0.0, %v2457
        %v3331 = vsel %vm495, 0.0, %v2462
        %v3333 = vsel %vm554, %v3326, 0
        %v3336 = vsel %vm554, %v3327, 0
        %3338 = vmatprep.subr.mxu0 0.0
        %3339 = vmatpush1.msra.mxu0 0.0
        %3340 = vmatprep.subr.mxu0 0.0
        %3341 = vmatpush1.msra.mxu0 0.0
        %3342 = vmatprep.subr.mxu0 0.0
        %3343 = vmatpush1.msra.mxu0 0.0
        %3344 = vmatprep.subr.mxu0 0.0
        %3345 = vmatpush1.msra.mxu0 0.0
        %3346 = vmatprep.subr.mxu0 0.0
        %3347 = vmatpush1.msra.mxu0 0.0
        %3348 = vmatprep.subr.mxu0 0.0
        %3349 = vmatpush1.msra.mxu0 0.0
        %3350 = vmatprep.subr.mxu0 0.0
        %3351 = vmatpush1.msra.mxu0 0.0
        %3352 = vmatprep.subr.mxu0 0.0
        %3353 = vmatpush1.msra.mxu0 0.0
        %3354 = vmatprep.subr.mxu0 0.0
        %3355 = vmatpush1.msra.mxu0 0.0
        %3356 = vmatprep.subr.mxu0 0.0
        %3357 = vmatpush1.msra.mxu0 0.0
        %3358 = vmatprep.subr.mxu0 0.0
        %3359 = vmatpush1.msra.mxu0 0.0
        %3360 = vmatprep.subr.mxu0 0.0
        %3361 = vmatpush1.msra.mxu0 0.0
        %3362 = vmatprep.subr.mxu0 0.0
        %3363 = vmatpush1.msra.mxu0 %v3331
        %3364 = vmatprep.subr.mxu0 0.0
        %3365 = vmatpush1.msra.mxu0 %v3330
        %3366 = vmatprep.subr.mxu0 0.0
        %3367 = vmatpush1.msra.mxu0 %v3329
        %3368 = vmatprep.subr.mxu0 0.0
        %3369 = vmatpush1.msra.mxu0 %v3328
        %3370 = vmatprep.subr.mxu0 0.0
        %3371 = vmatpush2.msra.mxu0 0.0
        %3372 = vmatprep.subr.mxu0 0.0
        %3373 = vmatpush2.msra.mxu0 0.0
        %3374 = vmatprep.subr.mxu0 0.0
        %3375 = vmatpush2.msra.mxu0 0.0
        %3376 = vmatprep.subr.mxu0 0.0
        %3377 = vmatpush2.msra.mxu0 0.0
        %3378 = vmatprep.subr.mxu0 0.0
        %3379 = vmatpush2.msra.mxu0 0.0
        %3380 = vmatprep.subr.mxu0 0.0
        %3381 = vmatpush2.msra.mxu0 0.0
        %3382 = vmatprep.subr.mxu0 0.0
        %3383 = vmatpush2.msra.mxu0 0.0
        %3384 = vmatprep.subr.mxu0 0.0
        %3385 = vmatpush2.msra.mxu0 0.0
        %3386 = vmatprep.subr.mxu0 0.0
        %3387 = vmatpush2.msra.mxu0 0.0
        %3388 = vmatprep.subr.mxu0 0.0
        %3389 = vmatpush2.msra.mxu0 0.0
        %3390 = vmatprep.subr.mxu0 0.0
        %3391 = vmatpush2.msra.mxu0 0.0
        %3392 = vmatprep.subr.mxu0 0.0
        %3393 = vmatpush2.msra.mxu0 0.0
        %3394 = vmatprep.subr.mxu0 0.0
        %3395 = vmatpush2.msra.mxu0 0.0
        %3396 = vmatprep.subr.mxu0 0.0
        %3397 = vmatpush2.msra.mxu0 0.0
        %3398 = vmatprep.subr.mxu0 0.0
        %3399 = vmatpush2.msra.mxu0 0.0
        %3400 = vmatprep.subr.mxu0 0.0
        %3401 = vmatpush2.msra.mxu0 0.0
        %3402 = vmatprep.mubr.f32.mxu0 0.0
        %3403 = vmatmul.mubr.f32.gmra.mxu0 %v3333
        %v3404 = vpop.f32.mrf.mxu0
        %v3405 = vadd.f32 0.0, %v3404
        %v3406 = vpop.f32.mrf.mxu0
        %3407 = vmatprep.mubr.f32.mxu0 0.0
        %3408 = vmatmul.mubr.f32.gmra.mxu0 %v3336
        %v3409 = vpop.f32.mrf.mxu0
        %v3410 = vadd.f32 0.0, %v3409
        %v3411 = vpop.f32.mrf.mxu0
        %3412 = vdwg.mxu0
        %3415 = vrot.lane.b32.xlu0 %v2467, 96
        %v3416 = vpop.permute.xlu0 %3415
        %3417 = vrot.lane.b32.xlu0 %v2472, 96
        %v3418 = vpop.permute.xlu0 %3417
        %3421 = vxpose.xlu0.b32.start [1/16] %v3416, 128
        %3422 = vxpose.xlu0.b32.cont [2/16] %v3418, 128
        %3423 = vxpose.xlu0.b32.cont [3/16] 0.0, 128
        %3424 = vxpose.xlu0.b32.cont [4/16] 0.0, 128
        %3425 = vxpose.xlu0.b32.cont [5/16] 0.0, 128
        %3426 = vxpose.xlu0.b32.cont [6/16] 0.0, 128
        %3427 = vxpose.xlu0.b32.cont [7/16] 0.0, 128
        %3428 = vxpose.xlu0.b32.cont [8/16] 0.0, 128
        %3429 = vxpose.xlu0.b32.cont [9/16] 0.0, 128
        %3430 = vxpose.xlu0.b32.cont [10/16] 0.0, 128
        %3431 = vxpose.xlu0.b32.cont [11/16] 0.0, 128
        %3432 = vxpose.xlu0.b32.cont [12/16] 0.0, 128
        %3433 = vxpose.xlu0.b32.cont [13/16] 0.0, 128
        %3434 = vxpose.xlu0.b32.cont [14/16] 0.0, 128
        %3435 = vxpose.xlu0.b32.cont [15/16] 0.0, 128
        %3436 = vxpose.xlu0.b32.end [16/16] 0.0, 128
        %v3437 = vpop.trf.xlu0
        %v3438 = vpop.trf.xlu0
        %v3439 = vpop.trf.xlu0
        %v3440 = vpop.trf.xlu0
        %v3441 = vpop.trf.xlu0
        %v3442 = vpop.trf.xlu0
        %v3443 = vpop.trf.xlu0
        %v3444 = vpop.trf.xlu0
        %v3445 = vpop.trf.xlu0
        %v3446 = vpop.trf.xlu0
        %v3447 = vpop.trf.xlu0
        %v3448 = vpop.trf.xlu0
        %v3449 = vpop.trf.xlu0
        %v3450 = vpop.trf.xlu0
        %v3451 = vpop.trf.xlu0
        %v3452 = vpop.trf.xlu0
        %v3453 = vlaneseq
        %v3454 = vshrl.u32 %v3453, 7
        %v3455 = vsub.s32 0, %v3454
        %v3456 = vrot.slane %v3437, %v3455
        %v3457 = vlaneseq
        %v3458 = vshrl.u32 %v3457, 7
        %v3459 = vsub.s32 1, %v3458
        %v3460 = vrot.slane %v3437, %v3459
        %3461 = vrot.lane.b32.xlu0 %v2467, 127
        %v3462 = vpop.permute.xlu0 %3461
        %3463 = vrot.lane.b32.xlu0 %v2472, 127
        %v3464 = vpop.permute.xlu0 %3463
        %3465 = vset.pattern.permute.xlu0 34
        %3466 = vperm.xlu0 %3465, %v2467
        %v3467 = vpop.permute.xlu0 %3466
        %3469 = vset.pattern.permute.xlu0 34
        %3470 = vperm.xlu0 %3469, %v2472
        %v3471 = vpop.permute.xlu0 %3470
        %3473 = vset.pattern.permute.xlu0 34
        %3474 = vperm.xlu0 %3473, %v3462
        %v3475 = vpop.permute.xlu0 %3474
        %3477 = vset.pattern.permute.xlu0 34
        %3478 = vperm.xlu0 %3477, %v3464
        %v3479 = vpop.permute.xlu0 %3478
        %v3481 = vadd.f32 %v3456, %v3467
        %v3482 = vadd.f32 %v3456, %v3471
        %v3483 = vadd.f32 %v3460, %v3475
        %v3484 = vadd.f32 %v3460, %v3479
        %vm3485 = vcmp.gt.f32.partialorder %v3481, 0.0
        %vm3486 = vcmp.gt.f32.partialorder %v3482, 0.0
        %vm3487 = vcmp.gt.f32.partialorder %v3483, 0.0
        %vm3488 = vcmp.gt.f32.partialorder %v3484, 0.0
        %v3489 = vmul.f32 %v3481, 0.2
        %v3490 = vmul.f32 %v3482, 0.2
        %v3491 = vmul.f32 %v3483, 0.2
        %v3492 = vmul.f32 %v3484, 0.2
        %v3493 = vsel %vm3485, %v3481, %v3489
        %v3494 = vsel %vm3486, %v3482, %v3490
        %v3495 = vsel %vm3487, %v3483, %v3491
        %v3496 = vsel %vm3488, %v3484, %v3492
        %v3497 = vadd.f32 %v3493, %v1363
        %v3498 = vadd.f32 %v3494, %v1364
        %v3499 = vadd.f32 %v3495, %v1363
        %v3500 = vadd.f32 %v3496, %v1364
        %v3501 = vsel %vm495, %v3497, -inf
        %3502 = vmax.xlane.f32.xlu0 %v3501
        %v3503 = vpop.xlane.xlu0 %3502
        %v3504 = vsel %vm495, %v3498, -inf
        %3505 = vmax.xlane.f32.xlu0 %v3504
        %v3506 = vpop.xlane.xlu0 %3505
        %v3507 = vsel %vm495, %v3499, -inf
        %3508 = vmax.xlane.f32.xlu0 %v3507
        %v3509 = vpop.xlane.xlu0 %3508
        %v3510 = vsel %vm495, %v3500, -inf
        %3511 = vmax.xlane.f32.xlu0 %v3510
        %v3512 = vpop.xlane.xlu0 %3511
        %v3513 = vsub.f32 %v3497, %v3503
        %v3514 = vsub.f32 %v3498, %v3506
        %v3515 = vsub.f32 %v3499, %v3509
        %v3516 = vsub.f32 %v3500, %v3512
        %v3517 = vmul.f32 %v3513, 1.442695
        %v3518 = vpow.pop %v3517
        %v3519 = vmul.f32 %v3514, 1.442695
        %v3520 = vpow.pop %v3519
        %v3521 = vmul.f32 %v3515, 1.442695
        %v3522 = vpow.pop %v3521
        %v3523 = vmul.f32 %v3516, 1.442695
        %v3524 = vpow.pop %v3523
        %v3525 = vsel %vm495, %v3518, 0.0
        %3526 = vadd.xlane.f32.xlu0 %v3525
        %v3527 = vpop.xlane.xlu0 %3526
        %v3528 = vsel %vm495, %v3520, 0.0
        %3529 = vadd.xlane.f32.xlu0 %v3528
        %v3530 = vpop.xlane.xlu0 %3529
        %v3531 = vsel %vm495, %v3522, 0.0
        %3532 = vadd.xlane.f32.xlu0 %v3531
        %v3533 = vpop.xlane.xlu0 %3532
        %v3534 = vsel %vm495, %v3524, 0.0
        %3535 = vadd.xlane.f32.xlu0 %v3534
        %v3536 = vpop.xlane.xlu0 %3535
        %v3537 = vrcp.pop %v3527
        %v3538 = vrcp.pop %v3530
        %v3539 = vrcp.pop %v3533
        %v3540 = vrcp.pop %v3536
        %v3541 = vmul.f32 %v3518, %v3537
        %v3542 = vmul.f32 %v3520, %v3538
        %v3543 = vmul.f32 %v3522, %v3539
        %v3544 = vmul.f32 %v3524, %v3540
        %3547 = vrot.lane.b32.xlu0 %v3543, 16
        %v3548 = vpop.permute.xlu0 %3547
        %3549 = vrot.lane.b32.xlu0 %v3544, 16
        %v3550 = vpop.permute.xlu0 %3549
        %v3553 = vsel %vm495, %v3541, %v3548
        %v3554 = vsel %vm495, %v3542, %v3550
        %v3555 = vsel %vm495, %v2467, 0.0
        %v3556 = vsel %vm495, %v2472, 0.0
        %v3557 = vsel %vm495, 0.0, %v2467
        %v3558 = vsel %vm495, 0.0, %v2472
        %v3560 = vsel %vm554, %v3553, 0
        %v3563 = vsel %vm554, %v3554, 0
        %3565 = vmatprep.subr.mxu0 0.0
        %3566 = vmatpush1.msra.mxu0 0.0
        %3567 = vmatprep.subr.mxu0 0.0
        %3568 = vmatpush1.msra.mxu0 0.0
        %3569 = vmatprep.subr.mxu0 0.0
        %3570 = vmatpush1.msra.mxu0 0.0
        %3571 = vmatprep.subr.mxu0 0.0
        %3572 = vmatpush1.msra.mxu0 0.0
        %3573 = vmatprep.subr.mxu0 0.0
        %3574 = vmatpush1.msra.mxu0 0.0
        %3575 = vmatprep.subr.mxu0 0.0
        %3576 = vmatpush1.msra.mxu0 0.0
        %3577 = vmatprep.subr.mxu0 0.0
        %3578 = vmatpush1.msra.mxu0 0.0
        %3579 = vmatprep.subr.mxu0 0.0
        %3580 = vmatpush1.msra.mxu0 0.0
        %3581 = vmatprep.subr.mxu0 0.0
        %3582 = vmatpush1.msra.mxu0 0.0
        %3583 = vmatprep.subr.mxu0 0.0
        %3584 = vmatpush1.msra.mxu0 0.0
        %3585 = vmatprep.subr.mxu0 0.0
        %3586 = vmatpush1.msra.mxu0 0.0
        %3587 = vmatprep.subr.mxu0 0.0
        %3588 = vmatpush1.msra.mxu0 0.0
        %3589 = vmatprep.subr.mxu0 0.0
        %3590 = vmatpush1.msra.mxu0 %v3558
        %3591 = vmatprep.subr.mxu0 0.0
        %3592 = vmatpush1.msra.mxu0 %v3557
        %3593 = vmatprep.subr.mxu0 0.0
        %3594 = vmatpush1.msra.mxu0 %v3556
        %3595 = vmatprep.subr.mxu0 0.0
        %3596 = vmatpush1.msra.mxu0 %v3555
        %3597 = vmatprep.subr.mxu0 0.0
        %3598 = vmatpush2.msra.mxu0 0.0
        %3599 = vmatprep.subr.mxu0 0.0
        %3600 = vmatpush2.msra.mxu0 0.0
        %3601 = vmatprep.subr.mxu0 0.0
        %3602 = vmatpush2.msra.mxu0 0.0
        %3603 = vmatprep.subr.mxu0 0.0
        %3604 = vmatpush2.msra.mxu0 0.0
        %3605 = vmatprep.subr.mxu0 0.0
        %3606 = vmatpush2.msra.mxu0 0.0
        %3607 = vmatprep.subr.mxu0 0.0
        %3608 = vmatpush2.msra.mxu0 0.0
        %3609 = vmatprep.subr.mxu0 0.0
        %3610 = vmatpush2.msra.mxu0 0.0
        %3611 = vmatprep.subr.mxu0 0.0
        %3612 = vmatpush2.msra.mxu0 0.0
        %3613 = vmatprep.subr.mxu0 0.0
        %3614 = vmatpush2.msra.mxu0 0.0
        %3615 = vmatprep.subr.mxu0 0.0
        %3616 = vmatpush2.msra.mxu0 0.0
        %3617 = vmatprep.subr.mxu0 0.0
        %3618 = vmatpush2.msra.mxu0 0.0
        %3619 = vmatprep.subr.mxu0 0.0
        %3620 = vmatpush2.msra.mxu0 0.0
        %3621 = vmatprep.subr.mxu0 0.0
        %3622 = vmatpush2.msra.mxu0 0.0
        %3623 = vmatprep.subr.mxu0 0.0
        %3624 = vmatpush2.msra.mxu0 0.0
        %3625 = vmatprep.subr.mxu0 0.0
        %3626 = vmatpush2.msra.mxu0 0.0
        %3627 = vmatprep.subr.mxu0 0.0
        %3628 = vmatpush2.msra.mxu0 0.0
        %3629 = vmatprep.mubr.f32.mxu0 0.0
        %3630 = vmatmul.mubr.f32.gmra.mxu0 %v3560
        %v3631 = vpop.f32.mrf.mxu0
        %v3632 = vadd.f32 0.0, %v3631
        %v3633 = vpop.f32.mrf.mxu0
        %3634 = vmatprep.mubr.f32.mxu0 0.0
        %3635 = vmatmul.mubr.f32.gmra.mxu0 %v3563
        %v3636 = vpop.f32.mrf.mxu0
        %v3637 = vadd.f32 0.0, %v3636
        %v3638 = vpop.f32.mrf.mxu0
        %3639 = vdwg.mxu0
        %3642 = vrot.lane.b32.xlu0 %v2477, 96
        %v3643 = vpop.permute.xlu0 %3642
        %3644 = vrot.lane.b32.xlu0 %v2482, 96
        %v3645 = vpop.permute.xlu0 %3644
        %3648 = vxpose.xlu0.b32.start [1/16] %v3643, 128
        %3649 = vxpose.xlu0.b32.cont [2/16] %v3645, 128
        %3650 = vxpose.xlu0.b32.cont [3/16] 0.0, 128
        %3651 = vxpose.xlu0.b32.cont [4/16] 0.0, 128
        %3652 = vxpose.xlu0.b32.cont [5/16] 0.0, 128
        %3653 = vxpose.xlu0.b32.cont [6/16] 0.0, 128
        %3654 = vxpose.xlu0.b32.cont [7/16] 0.0, 128
        %3655 = vxpose.xlu0.b32.cont [8/16] 0.0, 128
        %3656 = vxpose.xlu0.b32.cont [9/16] 0.0, 128
        %3657 = vxpose.xlu0.b32.cont [10/16] 0.0, 128
        %3658 = vxpose.xlu0.b32.cont [11/16] 0.0, 128
        %3659 = vxpose.xlu0.b32.cont [12/16] 0.0, 128
        %3660 = vxpose.xlu0.b32.cont [13/16] 0.0, 128
        %3661 = vxpose.xlu0.b32.cont [14/16] 0.0, 128
        %3662 = vxpose.xlu0.b32.cont [15/16] 0.0, 128
        %3663 = vxpose.xlu0.b32.end [16/16] 0.0, 128
        %v3664 = vpop.trf.xlu0
        %v3665 = vpop.trf.xlu0
        %v3666 = vpop.trf.xlu0
        %v3667 = vpop.trf.xlu0
        %v3668 = vpop.trf.xlu0
        %v3669 = vpop.trf.xlu0
        %v3670 = vpop.trf.xlu0
        %v3671 = vpop.trf.xlu0
        %v3672 = vpop.trf.xlu0
        %v3673 = vpop.trf.xlu0
        %v3674 = vpop.trf.xlu0
        %v3675 = vpop.trf.xlu0
        %v3676 = vpop.trf.xlu0
        %v3677 = vpop.trf.xlu0
        %v3678 = vpop.trf.xlu0
        %v3679 = vpop.trf.xlu0
        %v3680 = vlaneseq
        %v3681 = vshrl.u32 %v3680, 7
        %v3682 = vsub.s32 0, %v3681
        %v3683 = vrot.slane %v3664, %v3682
        %v3684 = vlaneseq
        %v3685 = vshrl.u32 %v3684, 7
        %v3686 = vsub.s32 1, %v3685
        %v3687 = vrot.slane %v3664, %v3686
        %3688 = vrot.lane.b32.xlu0 %v2477, 127
        %v3689 = vpop.permute.xlu0 %3688
        %3690 = vrot.lane.b32.xlu0 %v2482, 127
        %v3691 = vpop.permute.xlu0 %3690
        %3692 = vset.pattern.permute.xlu0 34
        %3693 = vperm.xlu0 %3692, %v2477
        %v3694 = vpop.permute.xlu0 %3693
        %3696 = vset.pattern.permute.xlu0 34
        %3697 = vperm.xlu0 %3696, %v2482
        %v3698 = vpop.permute.xlu0 %3697
        %3700 = vset.pattern.permute.xlu0 34
        %3701 = vperm.xlu0 %3700, %v3689
        %v3702 = vpop.permute.xlu0 %3701
        %3704 = vset.pattern.permute.xlu0 34
        %3705 = vperm.xlu0 %3704, %v3691
        %v3706 = vpop.permute.xlu0 %3705
        %v3708 = vadd.f32 %v3683, %v3694
        %v3709 = vadd.f32 %v3683, %v3698
        %v3710 = vadd.f32 %v3687, %v3702
        %v3711 = vadd.f32 %v3687, %v3706
        %vm3712 = vcmp.gt.f32.partialorder %v3708, 0.0
        %vm3713 = vcmp.gt.f32.partialorder %v3709, 0.0
        %vm3714 = vcmp.gt.f32.partialorder %v3710, 0.0
        %vm3715 = vcmp.gt.f32.partialorder %v3711, 0.0
        %v3716 = vmul.f32 %v3708, 0.2
        %v3717 = vmul.f32 %v3709, 0.2
        %v3718 = vmul.f32 %v3710, 0.2
        %v3719 = vmul.f32 %v3711, 0.2
        %v3720 = vsel %vm3712, %v3708, %v3716
        %v3721 = vsel %vm3713, %v3709, %v3717
        %v3722 = vsel %vm3714, %v3710, %v3718
        %v3723 = vsel %vm3715, %v3711, %v3719
        %v3724 = vadd.f32 %v3720, %v1592
        %v3725 = vadd.f32 %v3721, %v1593
        %v3726 = vadd.f32 %v3722, %v1592
        %v3727 = vadd.f32 %v3723, %v1593
        %v3728 = vsel %vm495, %v3724, -inf
        %3729 = vmax.xlane.f32.xlu0 %v3728
        %v3730 = vpop.xlane.xlu0 %3729
        %v3731 = vsel %vm495, %v3725, -inf
        %3732 = vmax.xlane.f32.xlu0 %v3731
        %v3733 = vpop.xlane.xlu0 %3732
        %v3734 = vsel %vm495, %v3726, -inf
        %3735 = vmax.xlane.f32.xlu0 %v3734
        %v3736 = vpop.xlane.xlu0 %3735
        %v3737 = vsel %vm495, %v3727, -inf
        %3738 = vmax.xlane.f32.xlu0 %v3737
        %v3739 = vpop.xlane.xlu0 %3738
        %v3740 = vsub.f32 %v3724, %v3730
        %v3741 = vsub.f32 %v3725, %v3733
        %v3742 = vsub.f32 %v3726, %v3736
        %v3743 = vsub.f32 %v3727, %v3739
        %v3744 = vmul.f32 %v3740, 1.442695
        %v3745 = vpow.pop %v3744
        %v3746 = vmul.f32 %v3741, 1.442695
        %v3747 = vpow.pop %v3746
        %v3748 = vmul.f32 %v3742, 1.442695
        %v3749 = vpow.pop %v3748
        %v3750 = vmul.f32 %v3743, 1.442695
        %v3751 = vpow.pop %v3750
        %v3752 = vsel %vm495, %v3745, 0.0
        %3753 = vadd.xlane.f32.xlu0 %v3752
        %v3754 = vpop.xlane.xlu0 %3753
        %v3755 = vsel %vm495, %v3747, 0.0
        %3756 = vadd.xlane.f32.xlu0 %v3755
        %v3757 = vpop.xlane.xlu0 %3756
        %v3758 = vsel %vm495, %v3749, 0.0
        %3759 = vadd.xlane.f32.xlu0 %v3758
        %v3760 = vpop.xlane.xlu0 %3759
        %v3761 = vsel %vm495, %v3751, 0.0
        %3762 = vadd.xlane.f32.xlu0 %v3761
        %v3763 = vpop.xlane.xlu0 %3762
        %v3764 = vrcp.pop %v3754
        %v3765 = vrcp.pop %v3757
        %v3766 = vrcp.pop %v3760
        %v3767 = vrcp.pop %v3763
        %v3768 = vmul.f32 %v3745, %v3764
        %v3769 = vmul.f32 %v3747, %v3765
        %v3770 = vmul.f32 %v3749, %v3766
        %v3771 = vmul.f32 %v3751, %v3767
        %3774 = vrot.lane.b32.xlu0 %v3770, 16
        %v3775 = vpop.permute.xlu0 %3774
        %3776 = vrot.lane.b32.xlu0 %v3771, 16
        %v3777 = vpop.permute.xlu0 %3776
        %v3780 = vsel %vm495, %v3768, %v3775
        %v3781 = vsel %vm495, %v3769, %v3777
        %v3782 = vsel %vm495, %v2477, 0.0
        %v3783 = vsel %vm495, %v2482, 0.0
        %v3784 = vsel %vm495, 0.0, %v2477
        %v3785 = vsel %vm495, 0.0, %v2482
        %v3787 = vsel %vm554, %v3780, 0
        %v3790 = vsel %vm554, %v3781, 0
        %3792 = vmatprep.subr.mxu0 0.0
        %3793 = vmatpush1.msra.mxu0 0.0
        %3794 = vmatprep.subr.mxu0 0.0
        %3795 = vmatpush1.msra.mxu0 0.0
        %3796 = vmatprep.subr.mxu0 0.0
        %3797 = vmatpush1.msra.mxu0 0.0
        %3798 = vmatprep.subr.mxu0 0.0
        %3799 = vmatpush1.msra.mxu0 0.0
        %3800 = vmatprep.subr.mxu0 0.0
        %3801 = vmatpush1.msra.mxu0 0.0
        %3802 = vmatprep.subr.mxu0 0.0
        %3803 = vmatpush1.msra.mxu0 0.0
        %3804 = vmatprep.subr.mxu0 0.0
        %3805 = vmatpush1.msra.mxu0 0.0
        %3806 = vmatprep.subr.mxu0 0.0
        %3807 = vmatpush1.msra.mxu0 0.0
        %3808 = vmatprep.subr.mxu0 0.0
        %3809 = vmatpush1.msra.mxu0 0.0
        %3810 = vmatprep.subr.mxu0 0.0
        %3811 = vmatpush1.msra.mxu0 0.0
        %3812 = vmatprep.subr.mxu0 0.0
        %3813 = vmatpush1.msra.mxu0 0.0
        %3814 = vmatprep.subr.mxu0 0.0
        %3815 = vmatpush1.msra.mxu0 0.0
        %3816 = vmatprep.subr.mxu0 0.0
        %3817 = vmatpush1.msra.mxu0 %v3785
        %3818 = vmatprep.subr.mxu0 0.0
        %3819 = vmatpush1.msra.mxu0 %v3784
        %3820 = vmatprep.subr.mxu0 0.0
        %3821 = vmatpush1.msra.mxu0 %v3783
        %3822 = vmatprep.subr.mxu0 0.0
        %3823 = vmatpush1.msra.mxu0 %v3782
        %3824 = vmatprep.subr.mxu0 0.0
        %3825 = vmatpush2.msra.mxu0 0.0
        %3826 = vmatprep.subr.mxu0 0.0
        %3827 = vmatpush2.msra.mxu0 0.0
        %3828 = vmatprep.subr.mxu0 0.0
        %3829 = vmatpush2.msra.mxu0 0.0
        %3830 = vmatprep.subr.mxu0 0.0
        %3831 = vmatpush2.msra.mxu0 0.0
        %3832 = vmatprep.subr.mxu0 0.0
        %3833 = vmatpush2.msra.mxu0 0.0
        %3834 = vmatprep.subr.mxu0 0.0
        %3835 = vmatpush2.msra.mxu0 0.0
        %3836 = vmatprep.subr.mxu0 0.0
        %3837 = vmatpush2.msra.mxu0 0.0
        %3838 = vmatprep.subr.mxu0 0.0
        %3839 = vmatpush2.msra.mxu0 0.0
        %3840 = vmatprep.subr.mxu0 0.0
        %3841 = vmatpush2.msra.mxu0 0.0
        %3842 = vmatprep.subr.mxu0 0.0
        %3843 = vmatpush2.msra.mxu0 0.0
        %3844 = vmatprep.subr.mxu0 0.0
        %3845 = vmatpush2.msra.mxu0 0.0
        %3846 = vmatprep.subr.mxu0 0.0
        %3847 = vmatpush2.msra.mxu0 0.0
        %3848 = vmatprep.subr.mxu0 0.0
        %3849 = vmatpush2.msra.mxu0 0.0
        %3850 = vmatprep.subr.mxu0 0.0
        %3851 = vmatpush2.msra.mxu0 0.0
        %3852 = vmatprep.subr.mxu0 0.0
        %3853 = vmatpush2.msra.mxu0 0.0
        %3854 = vmatprep.subr.mxu0 0.0
        %3855 = vmatpush2.msra.mxu0 0.0
        %3856 = vmatprep.mubr.f32.mxu0 0.0
        %3857 = vmatmul.mubr.f32.gmra.mxu0 %v3787
        %v3858 = vpop.f32.mrf.mxu0
        %v3859 = vadd.f32 0.0, %v3858
        %v3860 = vpop.f32.mrf.mxu0
        %3861 = vmatprep.mubr.f32.mxu0 0.0
        %3862 = vmatmul.mubr.f32.gmra.mxu0 %v3790
        %v3863 = vpop.f32.mrf.mxu0
        %v3864 = vadd.f32 0.0, %v3863
        %v3865 = vpop.f32.mrf.mxu0
        %3866 = vdwg.mxu0
        %3869 = vrot.lane.b32.xlu0 %v2487, 96
        %v3870 = vpop.permute.xlu0 %3869
        %3871 = vrot.lane.b32.xlu0 %v2492, 96
        %v3872 = vpop.permute.xlu0 %3871
        %3875 = vxpose.xlu0.b32.start [1/16] %v3870, 128
        %3876 = vxpose.xlu0.b32.cont [2/16] %v3872, 128
        %3877 = vxpose.xlu0.b32.cont [3/16] 0.0, 128
        %3878 = vxpose.xlu0.b32.cont [4/16] 0.0, 128
        %3879 = vxpose.xlu0.b32.cont [5/16] 0.0, 128
        %3880 = vxpose.xlu0.b32.cont [6/16] 0.0, 128
        %3881 = vxpose.xlu0.b32.cont [7/16] 0.0, 128
        %3882 = vxpose.xlu0.b32.cont [8/16] 0.0, 128
        %3883 = vxpose.xlu0.b32.cont [9/16] 0.0, 128
        %3884 = vxpose.xlu0.b32.cont [10/16] 0.0, 128
        %3885 = vxpose.xlu0.b32.cont [11/16] 0.0, 128
        %3886 = vxpose.xlu0.b32.cont [12/16] 0.0, 128
        %3887 = vxpose.xlu0.b32.cont [13/16] 0.0, 128
        %3888 = vxpose.xlu0.b32.cont [14/16] 0.0, 128
        %3889 = vxpose.xlu0.b32.cont [15/16] 0.0, 128
        %3890 = vxpose.xlu0.b32.end [16/16] 0.0, 128
        %v3891 = vpop.trf.xlu0
        %v3892 = vpop.trf.xlu0
        %v3893 = vpop.trf.xlu0
        %v3894 = vpop.trf.xlu0
        %v3895 = vpop.trf.xlu0
        %v3896 = vpop.trf.xlu0
        %v3897 = vpop.trf.xlu0
        %v3898 = vpop.trf.xlu0
        %v3899 = vpop.trf.xlu0
        %v3900 = vpop.trf.xlu0
        %v3901 = vpop.trf.xlu0
        %v3902 = vpop.trf.xlu0
        %v3903 = vpop.trf.xlu0
        %v3904 = vpop.trf.xlu0
        %v3905 = vpop.trf.xlu0
        %v3906 = vpop.trf.xlu0
        %v3907 = vlaneseq
        %v3908 = vshrl.u32 %v3907, 7
        %v3909 = vsub.s32 0, %v3908
        %v3910 = vrot.slane %v3891, %v3909
        %v3911 = vlaneseq
        %v3912 = vshrl.u32 %v3911, 7
        %v3913 = vsub.s32 1, %v3912
        %v3914 = vrot.slane %v3891, %v3913
        %3915 = vrot.lane.b32.xlu0 %v2487, 127
        %v3916 = vpop.permute.xlu0 %3915
        %3917 = vrot.lane.b32.xlu0 %v2492, 127
        %v3918 = vpop.permute.xlu0 %3917
        %3919 = vset.pattern.permute.xlu0 34
        %3920 = vperm.xlu0 %3919, %v2487
        %v3921 = vpop.permute.xlu0 %3920
        %3923 = vset.pattern.permute.xlu0 34
        %3924 = vperm.xlu0 %3923, %v2492
        %v3925 = vpop.permute.xlu0 %3924
        %3927 = vset.pattern.permute.xlu0 34
        %3928 = vperm.xlu0 %3927, %v3916
        %v3929 = vpop.permute.xlu0 %3928
        %3931 = vset.pattern.permute.xlu0 34
        %3932 = vperm.xlu0 %3931, %v3918
        %v3933 = vpop.permute.xlu0 %3932
        %v3935 = vadd.f32 %v3910, %v3921
        %v3936 = vadd.f32 %v3910, %v3925
        %v3937 = vadd.f32 %v3914, %v3929
        %v3938 = vadd.f32 %v3914, %v3933
        %vm3939 = vcmp.gt.f32.partialorder %v3935, 0.0
        %vm3940 = vcmp.gt.f32.partialorder %v3936, 0.0
        %vm3941 = vcmp.gt.f32.partialorder %v3937, 0.0
        %vm3942 = vcmp.gt.f32.partialorder %v3938, 0.0
        %v3943 = vmul.f32 %v3935, 0.2
        %v3944 = vmul.f32 %v3936, 0.2
        %v3945 = vmul.f32 %v3937, 0.2
        %v3946 = vmul.f32 %v3938, 0.2
        %v3947 = vsel %vm3939, %v3935, %v3943
        %v3948 = vsel %vm3940, %v3936, %v3944
        %v3949 = vsel %vm3941, %v3937, %v3945
        %v3950 = vsel %vm3942, %v3938, %v3946
        %v3951 = vadd.f32 %v3947, %v1821
        %v3952 = vadd.f32 %v3948, %v1822
        %v3953 = vadd.f32 %v3949, %v1821
        %v3954 = vadd.f32 %v3950, %v1822
        %v3955 = vsel %vm495, %v3951, -inf
        %3956 = vmax.xlane.f32.xlu0 %v3955
        %v3957 = vpop.xlane.xlu0 %3956
        %v3958 = vsel %vm495, %v3952, -inf
        %3959 = vmax.xlane.f32.xlu0 %v3958
        %v3960 = vpop.xlane.xlu0 %3959
        %v3961 = vsel %vm495, %v3953, -inf
        %3962 = vmax.xlane.f32.xlu0 %v3961
        %v3963 = vpop.xlane.xlu0 %3962
        %v3964 = vsel %vm495, %v3954, -inf
        %3965 = vmax.xlane.f32.xlu0 %v3964
        %v3966 = vpop.xlane.xlu0 %3965
        %v3967 = vsub.f32 %v3951, %v3957
        %v3968 = vsub.f32 %v3952, %v3960
        %v3969 = vsub.f32 %v3953, %v3963
        %v3970 = vsub.f32 %v3954, %v3966
        %v3971 = vmul.f32 %v3967, 1.442695
        %v3972 = vpow.pop %v3971
        %v3973 = vmul.f32 %v3968, 1.442695
        %v3974 = vpow.pop %v3973
        %v3975 = vmul.f32 %v3969, 1.442695
        %v3976 = vpow.pop %v3975
        %v3977 = vmul.f32 %v3970, 1.442695
        %v3978 = vpow.pop %v3977
        %v3979 = vsel %vm495, %v3972, 0.0
        %3980 = vadd.xlane.f32.xlu0 %v3979
        %v3981 = vpop.xlane.xlu0 %3980
        %v3982 = vsel %vm495, %v3974, 0.0
        %3983 = vadd.xlane.f32.xlu0 %v3982
        %v3984 = vpop.xlane.xlu0 %3983
        %v3985 = vsel %vm495, %v3976, 0.0
        %3986 = vadd.xlane.f32.xlu0 %v3985
        %v3987 = vpop.xlane.xlu0 %3986
        %v3988 = vsel %vm495, %v3978, 0.0
        %3989 = vadd.xlane.f32.xlu0 %v3988
        %v3990 = vpop.xlane.xlu0 %3989
        %v3991 = vrcp.pop %v3981
        %v3992 = vrcp.pop %v3984
        %v3993 = vrcp.pop %v3987
        %v3994 = vrcp.pop %v3990
        %v3995 = vmul.f32 %v3972, %v3991
        %v3996 = vmul.f32 %v3974, %v3992
        %v3997 = vmul.f32 %v3976, %v3993
        %v3998 = vmul.f32 %v3978, %v3994
        %4001 = vrot.lane.b32.xlu0 %v3997, 16
        %v4002 = vpop.permute.xlu0 %4001
        %4003 = vrot.lane.b32.xlu0 %v3998, 16
        %v4004 = vpop.permute.xlu0 %4003
        %v4007 = vsel %vm495, %v3995, %v4002
        %v4008 = vsel %vm495, %v3996, %v4004
        %v4009 = vsel %vm495, %v2487, 0.0
        %v4010 = vsel %vm495, %v2492, 0.0
        %v4011 = vsel %vm495, 0.0, %v2487
        %v4012 = vsel %vm495, 0.0, %v2492
        %v4014 = vsel %vm554, %v4007, 0
        %v4017 = vsel %vm554, %v4008, 0
        %4019 = vmatprep.subr.mxu0 0.0
        %4020 = vmatpush1.msra.mxu0 0.0
        %4021 = vmatprep.subr.mxu0 0.0
        %4022 = vmatpush1.msra.mxu0 0.0
        %4023 = vmatprep.subr.mxu0 0.0
        %4024 = vmatpush1.msra.mxu0 0.0
        %4025 = vmatprep.subr.mxu0 0.0
        %4026 = vmatpush1.msra.mxu0 0.0
        %4027 = vmatprep.subr.mxu0 0.0
        %4028 = vmatpush1.msra.mxu0 0.0
        %4029 = vmatprep.subr.mxu0 0.0
        %4030 = vmatpush1.msra.mxu0 0.0
        %4031 = vmatprep.subr.mxu0 0.0
        %4032 = vmatpush1.msra.mxu0 0.0
        %4033 = vmatprep.subr.mxu0 0.0
        %4034 = vmatpush1.msra.mxu0 0.0
        %4035 = vmatprep.subr.mxu0 0.0
        %4036 = vmatpush1.msra.mxu0 0.0
        %4037 = vmatprep.subr.mxu0 0.0
        %4038 = vmatpush1.msra.mxu0 0.0
        %4039 = vmatprep.subr.mxu0 0.0
        %4040 = vmatpush1.msra.mxu0 0.0
        %4041 = vmatprep.subr.mxu0 0.0
        %4042 = vmatpush1.msra.mxu0 0.0
        %4043 = vmatprep.subr.mxu0 0.0
        %4044 = vmatpush1.msra.mxu0 %v4012
        %4045 = vmatprep.subr.mxu0 0.0
        %4046 = vmatpush1.msra.mxu0 %v4011
        %4047 = vmatprep.subr.mxu0 0.0
        %4048 = vmatpush1.msra.mxu0 %v4010
        %4049 = vmatprep.subr.mxu0 0.0
        %4050 = vmatpush1.msra.mxu0 %v4009
        %4051 = vmatprep.subr.mxu0 0.0
        %4052 = vmatpush2.msra.mxu0 0.0
        %4053 = vmatprep.subr.mxu0 0.0
        %4054 = vmatpush2.msra.mxu0 0.0
        %4055 = vmatprep.subr.mxu0 0.0
        %4056 = vmatpush2.msra.mxu0 0.0
        %4057 = vmatprep.subr.mxu0 0.0
        %4058 = vmatpush2.msra.mxu0 0.0
        %4059 = vmatprep.subr.mxu0 0.0
        %4060 = vmatpush2.msra.mxu0 0.0
        %4061 = vmatprep.subr.mxu0 0.0
        %4062 = vmatpush2.msra.mxu0 0.0
        %4063 = vmatprep.subr.mxu0 0.0
        %4064 = vmatpush2.msra.mxu0 0.0
        %4065 = vmatprep.subr.mxu0 0.0
        %4066 = vmatpush2.msra.mxu0 0.0
        %4067 = vmatprep.subr.mxu0 0.0
        %4068 = vmatpush2.msra.mxu0 0.0
        %4069 = vmatprep.subr.mxu0 0.0
        %4070 = vmatpush2.msra.mxu0 0.0
        %4071 = vmatprep.subr.mxu0 0.0
        %4072 = vmatpush2.msra.mxu0 0.0
        %4073 = vmatprep.subr.mxu0 0.0
        %4074 = vmatpush2.msra.mxu0 0.0
        %4075 = vmatprep.subr.mxu0 0.0
        %4076 = vmatpush2.msra.mxu0 0.0
        %4077 = vmatprep.subr.mxu0 0.0
        %4078 = vmatpush2.msra.mxu0 0.0
        %4079 = vmatprep.subr.mxu0 0.0
        %4080 = vmatpush2.msra.mxu0 0.0
        %4081 = vmatprep.subr.mxu0 0.0
        %4082 = vmatpush2.msra.mxu0 0.0
        %4083 = vmatprep.mubr.f32.mxu0 0.0
        %4084 = vmatmul.mubr.f32.gmra.mxu0 %v4014
        %v4085 = vpop.f32.mrf.mxu0
        %v4086 = vadd.f32 0.0, %v4085
        %v4087 = vpop.f32.mrf.mxu0
        %4088 = vmatprep.mubr.f32.mxu0 0.0
        %4089 = vmatmul.mubr.f32.gmra.mxu0 %v4017
        %v4090 = vpop.f32.mrf.mxu0
        %v4091 = vadd.f32 0.0, %v4090
        %v4092 = vpop.f32.mrf.mxu0
        %4093 = vdwg.mxu0
        %4096 = vrot.lane.b32.xlu0 %v2497, 96
        %v4097 = vpop.permute.xlu0 %4096
        %4098 = vrot.lane.b32.xlu0 %v2502, 96
        %v4099 = vpop.permute.xlu0 %4098
        %4102 = vxpose.xlu0.b32.start [1/16] %v4097, 128
        %4103 = vxpose.xlu0.b32.cont [2/16] %v4099, 128
        %4104 = vxpose.xlu0.b32.cont [3/16] 0.0, 128
        %4105 = vxpose.xlu0.b32.cont [4/16] 0.0, 128
        %4106 = vxpose.xlu0.b32.cont [5/16] 0.0, 128
        %4107 = vxpose.xlu0.b32.cont [6/16] 0.0, 128
        %4108 = vxpose.xlu0.b32.cont [7/16] 0.0, 128
        %4109 = vxpose.xlu0.b32.cont [8/16] 0.0, 128
        %4110 = vxpose.xlu0.b32.cont [9/16] 0.0, 128
        %4111 = vxpose.xlu0.b32.cont [10/16] 0.0, 128
        %4112 = vxpose.xlu0.b32.cont [11/16] 0.0, 128
        %4113 = vxpose.xlu0.b32.cont [12/16] 0.0, 128
        %4114 = vxpose.xlu0.b32.cont [13/16] 0.0, 128
        %4115 = vxpose.xlu0.b32.cont [14/16] 0.0, 128
        %4116 = vxpose.xlu0.b32.cont [15/16] 0.0, 128
        %4117 = vxpose.xlu0.b32.end [16/16] 0.0, 128
        %v4118 = vpop.trf.xlu0
        %v4119 = vpop.trf.xlu0
        %v4120 = vpop.trf.xlu0
        %v4121 = vpop.trf.xlu0
        %v4122 = vpop.trf.xlu0
        %v4123 = vpop.trf.xlu0
        %v4124 = vpop.trf.xlu0
        %v4125 = vpop.trf.xlu0
        %v4126 = vpop.trf.xlu0
        %v4127 = vpop.trf.xlu0
        %v4128 = vpop.trf.xlu0
        %v4129 = vpop.trf.xlu0
        %v4130 = vpop.trf.xlu0
        %v4131 = vpop.trf.xlu0
        %v4132 = vpop.trf.xlu0
        %v4133 = vpop.trf.xlu0
        %v4134 = vlaneseq
        %v4135 = vshrl.u32 %v4134, 7
        %v4136 = vsub.s32 0, %v4135
        %v4137 = vrot.slane %v4118, %v4136
        %v4138 = vlaneseq
        %v4139 = vshrl.u32 %v4138, 7
        %v4140 = vsub.s32 1, %v4139
        %v4141 = vrot.slane %v4118, %v4140
        %4142 = vrot.lane.b32.xlu0 %v2497, 127
        %v4143 = vpop.permute.xlu0 %4142
        %4144 = vrot.lane.b32.xlu0 %v2502, 127
        %v4145 = vpop.permute.xlu0 %4144
        %4146 = vset.pattern.permute.xlu0 34
        %4147 = vperm.xlu0 %4146, %v2497
        %v4148 = vpop.permute.xlu0 %4147
        %4150 = vset.pattern.permute.xlu0 34
        %4151 = vperm.xlu0 %4150, %v2502
        %v4152 = vpop.permute.xlu0 %4151
        %4154 = vset.pattern.permute.xlu0 34
        %4155 = vperm.xlu0 %4154, %v4143
        %v4156 = vpop.permute.xlu0 %4155
        %4158 = vset.pattern.permute.xlu0 34
        %4159 = vperm.xlu0 %4158, %v4145
        %v4160 = vpop.permute.xlu0 %4159
        %v4162 = vadd.f32 %v4137, %v4148
        %v4163 = vadd.f32 %v4137, %v4152
        %v4164 = vadd.f32 %v4141, %v4156
        %v4165 = vadd.f32 %v4141, %v4160
        %vm4166 = vcmp.gt.f32.partialorder %v4162, 0.0
        %vm4167 = vcmp.gt.f32.partialorder %v4163, 0.0
        %vm4168 = vcmp.gt.f32.partialorder %v4164, 0.0
        %vm4169 = vcmp.gt.f32.partialorder %v4165, 0.0
        %v4170 = vmul.f32 %v4162, 0.2
        %v4171 = vmul.f32 %v4163, 0.2
        %v4172 = vmul.f32 %v4164, 0.2
        %v4173 = vmul.f32 %v4165, 0.2
        %v4174 = vsel %vm4166, %v4162, %v4170
        %v4175 = vsel %vm4167, %v4163, %v4171
        %v4176 = vsel %vm4168, %v4164, %v4172
        %v4177 = vsel %vm4169, %v4165, %v4173
        %v4178 = vadd.f32 %v4174, %v2050
        %v4179 = vadd.f32 %v4175, %v2051
        %v4180 = vadd.f32 %v4176, %v2050
        %v4181 = vadd.f32 %v4177, %v2051
        %v4182 = vsel %vm495, %v4178, -inf
        %4183 = vmax.xlane.f32.xlu0 %v4182
        %v4184 = vpop.xlane.xlu0 %4183
        %v4185 = vsel %vm495, %v4179, -inf
        %4186 = vmax.xlane.f32.xlu0 %v4185
        %v4187 = vpop.xlane.xlu0 %4186
        %v4188 = vsel %vm495, %v4180, -inf
        %4189 = vmax.xlane.f32.xlu0 %v4188
        %v4190 = vpop.xlane.xlu0 %4189
        %v4191 = vsel %vm495, %v4181, -inf
        %4192 = vmax.xlane.f32.xlu0 %v4191
        %v4193 = vpop.xlane.xlu0 %4192
        %v4194 = vsub.f32 %v4178, %v4184
        %v4195 = vsub.f32 %v4179, %v4187
        %v4196 = vsub.f32 %v4180, %v4190
        %v4197 = vsub.f32 %v4181, %v4193
        %v4198 = vmul.f32 %v4194, 1.442695
        %v4199 = vpow.pop %v4198
        %v4200 = vmul.f32 %v4195, 1.442695
        %v4201 = vpow.pop %v4200
        %v4202 = vmul.f32 %v4196, 1.442695
        %v4203 = vpow.pop %v4202
        %v4204 = vmul.f32 %v4197, 1.442695
        %v4205 = vpow.pop %v4204
        %v4206 = vsel %vm495, %v4199, 0.0
        %4207 = vadd.xlane.f32.xlu0 %v4206
        %v4208 = vpop.xlane.xlu0 %4207
        %v4209 = vsel %vm495, %v4201, 0.0
        %4210 = vadd.xlane.f32.xlu0 %v4209
        %v4211 = vpop.xlane.xlu0 %4210
        %v4212 = vsel %vm495, %v4203, 0.0
        %4213 = vadd.xlane.f32.xlu0 %v4212
        %v4214 = vpop.xlane.xlu0 %4213
        %v4215 = vsel %vm495, %v4205, 0.0
        %4216 = vadd.xlane.f32.xlu0 %v4215
        %v4217 = vpop.xlane.xlu0 %4216
        %v4218 = vrcp.pop %v4208
        %v4219 = vrcp.pop %v4211
        %v4220 = vrcp.pop %v4214
        %v4221 = vrcp.pop %v4217
        %v4222 = vmul.f32 %v4199, %v4218
        %v4223 = vmul.f32 %v4201, %v4219
        %v4224 = vmul.f32 %v4203, %v4220
        %v4225 = vmul.f32 %v4205, %v4221
        %4228 = vrot.lane.b32.xlu0 %v4224, 16
        %v4229 = vpop.permute.xlu0 %4228
        %4230 = vrot.lane.b32.xlu0 %v4225, 16
        %v4231 = vpop.permute.xlu0 %4230
        %v4234 = vsel %vm495, %v4222, %v4229
        %v4235 = vsel %vm495, %v4223, %v4231
        %v4236 = vsel %vm495, %v2497, 0.0
        %v4237 = vsel %vm495, %v2502, 0.0
        %v4238 = vsel %vm495, 0.0, %v2497
        %v4239 = vsel %vm495, 0.0, %v2502
        %v4241 = vsel %vm554, %v4234, 0
        %v4244 = vsel %vm554, %v4235, 0
        %4246 = vmatprep.subr.mxu0 0.0
        %4247 = vmatpush1.msra.mxu0 0.0
        %4248 = vmatprep.subr.mxu0 0.0
        %4249 = vmatpush1.msra.mxu0 0.0
        %4250 = vmatprep.subr.mxu0 0.0
        %4251 = vmatpush1.msra.mxu0 0.0
        %4252 = vmatprep.subr.mxu0 0.0
        %4253 = vmatpush1.msra.mxu0 0.0
        %4254 = vmatprep.subr.mxu0 0.0
        %4255 = vmatpush1.msra.mxu0 0.0
        %4256 = vmatprep.subr.mxu0 0.0
        %4257 = vmatpush1.msra.mxu0 0.0
        %4258 = vmatprep.subr.mxu0 0.0
        %4259 = vmatpush1.msra.mxu0 0.0
        %4260 = vmatprep.subr.mxu0 0.0
        %4261 = vmatpush1.msra.mxu0 0.0
        %4262 = vmatprep.subr.mxu0 0.0
        %4263 = vmatpush1.msra.mxu0 0.0
        %4264 = vmatprep.subr.mxu0 0.0
        %4265 = vmatpush1.msra.mxu0 0.0
        %4266 = vmatprep.subr.mxu0 0.0
        %4267 = vmatpush1.msra.mxu0 0.0
        %4268 = vmatprep.subr.mxu0 0.0
        %4269 = vmatpush1.msra.mxu0 0.0
        %4270 = vmatprep.subr.mxu0 0.0
        %4271 = vmatpush1.msra.mxu0 %v4239
        %4272 = vmatprep.subr.mxu0 0.0
        %4273 = vmatpush1.msra.mxu0 %v4238
        %4274 = vmatprep.subr.mxu0 0.0
        %4275 = vmatpush1.msra.mxu0 %v4237
        %4276 = vmatprep.subr.mxu0 0.0
        %4277 = vmatpush1.msra.mxu0 %v4236
        %4278 = vmatprep.subr.mxu0 0.0
        %4279 = vmatpush2.msra.mxu0 0.0
        %4280 = vmatprep.subr.mxu0 0.0
        %4281 = vmatpush2.msra.mxu0 0.0
        %4282 = vmatprep.subr.mxu0 0.0
        %4283 = vmatpush2.msra.mxu0 0.0
        %4284 = vmatprep.subr.mxu0 0.0
        %4285 = vmatpush2.msra.mxu0 0.0
        %4286 = vmatprep.subr.mxu0 0.0
        %4287 = vmatpush2.msra.mxu0 0.0
        %4288 = vmatprep.subr.mxu0 0.0
        %4289 = vmatpush2.msra.mxu0 0.0
        %4290 = vmatprep.subr.mxu0 0.0
        %4291 = vmatpush2.msra.mxu0 0.0
        %4292 = vmatprep.subr.mxu0 0.0
        %4293 = vmatpush2.msra.mxu0 0.0
        %4294 = vmatprep.subr.mxu0 0.0
        %4295 = vmatpush2.msra.mxu0 0.0
        %4296 = vmatprep.subr.mxu0 0.0
        %4297 = vmatpush2.msra.mxu0 0.0
        %4298 = vmatprep.subr.mxu0 0.0
        %4299 = vmatpush2.msra.mxu0 0.0
        %4300 = vmatprep.subr.mxu0 0.0
        %4301 = vmatpush2.msra.mxu0 0.0
        %4302 = vmatprep.subr.mxu0 0.0
        %4303 = vmatpush2.msra.mxu0 0.0
        %4304 = vmatprep.subr.mxu0 0.0
        %4305 = vmatpush2.msra.mxu0 0.0
        %4306 = vmatprep.subr.mxu0 0.0
        %4307 = vmatpush2.msra.mxu0 0.0
        %4308 = vmatprep.subr.mxu0 0.0
        %4309 = vmatpush2.msra.mxu0 0.0
        %4310 = vmatprep.mubr.f32.mxu0 0.0
        %4311 = vmatmul.mubr.f32.gmra.mxu0 %v4241
        %v4312 = vpop.f32.mrf.mxu0
        %v4313 = vadd.f32 0.0, %v4312
        %v4314 = vpop.f32.mrf.mxu0
        %4315 = vmatprep.mubr.f32.mxu0 0.0
        %4316 = vmatmul.mubr.f32.gmra.mxu0 %v4244
        %v4317 = vpop.f32.mrf.mxu0
        %v4318 = vadd.f32 0.0, %v4317
        %v4319 = vpop.f32.mrf.mxu0
        %4320 = vdwg.mxu0
        %v4321 = vlaneseq
        %v4322 = vshrl.u32 %v4321, 7
        %v4323 = vsub.s32 0, %v4322
        %v4324 = vrot.slane %v2311, %v4323
        %v4325 = vadd.f32 %v2724, %v4324
        %v4326 = vadd.f32 %v2729, %v4324
        %v4327 = vadd.f32 %v2951, %v4324
        %v4328 = vadd.f32 %v2956, %v4324
        %v4329 = vadd.f32 %v3178, %v4324
        %v4330 = vadd.f32 %v3183, %v4324
        %v4331 = vadd.f32 %v3405, %v4324
        %v4332 = vadd.f32 %v3410, %v4324
        %v4333 = vadd.f32 %v3632, %v4324
        %v4334 = vadd.f32 %v3637, %v4324
        %v4335 = vadd.f32 %v3859, %v4324
        %v4336 = vadd.f32 %v3864, %v4324
        %v4337 = vadd.f32 %v4086, %v4324
        %v4338 = vadd.f32 %v4091, %v4324
        %v4339 = vadd.f32 %v4313, %v4324
        %v4340 = vadd.f32 %v4318, %v4324
        %vm4341 = vcmp.gt.f32.partialorder %v4325, 0.0
        %vm4342 = vcmp.gt.f32.partialorder %v4326, 0.0
        %vm4343 = vcmp.gt.f32.partialorder %v4327, 0.0
        %vm4344 = vcmp.gt.f32.partialorder %v4328, 0.0
        %vm4345 = vcmp.gt.f32.partialorder %v4329, 0.0
        %vm4346 = vcmp.gt.f32.partialorder %v4330, 0.0
        %vm4347 = vcmp.gt.f32.partialorder %v4331, 0.0
        %vm4348 = vcmp.gt.f32.partialorder %v4332, 0.0
        %vm4349 = vcmp.gt.f32.partialorder %v4333, 0.0
        %vm4350 = vcmp.gt.f32.partialorder %v4334, 0.0
        %vm4351 = vcmp.gt.f32.partialorder %v4335, 0.0
        %vm4352 = vcmp.gt.f32.partialorder %v4336, 0.0
        %vm4353 = vcmp.gt.f32.partialorder %v4337, 0.0
        %vm4354 = vcmp.gt.f32.partialorder %v4338, 0.0
        %vm4355 = vcmp.gt.f32.partialorder %v4339, 0.0
        %vm4356 = vcmp.gt.f32.partialorder %v4340, 0.0
        %v4357 = vmul.f32 %v4325, 0.01
        %v4358 = vmul.f32 %v4326, 0.01
        %v4359 = vmul.f32 %v4327, 0.01
        %v4360 = vmul.f32 %v4328, 0.01
        %v4361 = vmul.f32 %v4329, 0.01
        %v4362 = vmul.f32 %v4330, 0.01
        %v4363 = vmul.f32 %v4331, 0.01
        %v4364 = vmul.f32 %v4332, 0.01
        %v4365 = vmul.f32 %v4333, 0.01
        %v4366 = vmul.f32 %v4334, 0.01
        %v4367 = vmul.f32 %v4335, 0.01
        %v4368 = vmul.f32 %v4336, 0.01
        %v4369 = vmul.f32 %v4337, 0.01
        %v4370 = vmul.f32 %v4338, 0.01
        %v4371 = vmul.f32 %v4339, 0.01
        %v4372 = vmul.f32 %v4340, 0.01
        %v4373 = vsel %vm4341, %v4325, %v4357
        %v4374 = vsel %vm4342, %v4326, %v4358
        %v4375 = vsel %vm4343, %v4327, %v4359
        %v4376 = vsel %vm4344, %v4328, %v4360
        %v4377 = vsel %vm4345, %v4329, %v4361
        %v4378 = vsel %vm4346, %v4330, %v4362
        %v4379 = vsel %vm4347, %v4331, %v4363
        %v4380 = vsel %vm4348, %v4332, %v4364
        %v4381 = vsel %vm4349, %v4333, %v4365
        %v4382 = vsel %vm4350, %v4334, %v4366
        %v4383 = vsel %vm4351, %v4335, %v4367
        %v4384 = vsel %vm4352, %v4336, %v4368
        %v4385 = vsel %vm4353, %v4337, %v4369
        %v4386 = vsel %vm4354, %v4338, %v4370
        %v4387 = vsel %vm4355, %v4339, %v4371
        %v4388 = vsel %vm4356, %v4340, %v4372
        %v4389 = vld [vmem:[%s2 + $0x38] sm:$0xff]
        %v4390 = vld [vmem:[%s2 + $0x40] sm:$0xff]
        %v4391 = vld [vmem:[%s2 + $0x48] sm:$0xff]
        %v4392 = vld [vmem:[%s2 + $0x50] sm:$0xff]
        %v4393 = vld [vmem:[%s2 + $0x58] sm:$0x1]
        %v4395 = vsel %vm554, %v4373, 0
        %v4398 = vsel %vm554, %v4374, 0
        %v4401 = vsel %vm554, %v4375, 0
        %v4404 = vsel %vm554, %v4376, 0
        %v4407 = vsel %vm554, %v4377, 0
        %v4410 = vsel %vm554, %v4378, 0
        %v4413 = vsel %vm554, %v4379, 0
        %v4416 = vsel %vm554, %v4380, 0
        %v4419 = vsel %vm554, %v4381, 0
        %v4422 = vsel %vm554, %v4382, 0
        %v4425 = vsel %vm554, %v4383, 0
        %v4428 = vsel %vm554, %v4384, 0
        %v4431 = vsel %vm554, %v4385, 0
        %v4434 = vsel %vm554, %v4386, 0
        %v4437 = vsel %vm554, %v4387, 0
        %v4440 = vsel %vm554, %v4388, 0
        %4442 = vmatprep.subr.mxu0 0.0
        %4443 = vmatpush1.msra.mxu0 0.0
        %4444 = vmatprep.subr.mxu0 0.0
        %4445 = vmatpush1.msra.mxu0 0.0
        %4446 = vmatprep.subr.mxu0 0.0
        %4447 = vmatpush1.msra.mxu0 0.0
        %4448 = vmatprep.subr.mxu0 0.0
        %4449 = vmatpush1.msra.mxu0 0.0
        %4450 = vmatprep.subr.mxu0 0.0
        %4451 = vmatpush1.msra.mxu0 0.0
        %4452 = vmatprep.subr.mxu0 0.0
        %4453 = vmatpush1.msra.mxu0 0.0
        %4454 = vmatprep.subr.mxu0 0.0
        %4455 = vmatpush1.msra.mxu0 0.0
        %4456 = vmatprep.subr.mxu0 0.0
        %4457 = vmatpush1.msra.mxu0 0.0
        %4458 = vmatprep.subr.mxu0 0.0
        %4459 = vmatpush1.msra.mxu0 0.0
        %4460 = vmatprep.subr.mxu0 0.0
        %4461 = vmatpush1.msra.mxu0 0.0
        %4462 = vmatprep.subr.mxu0 0.0
        %4463 = vmatpush1.msra.mxu0 0.0
        %4464 = vmatprep.subr.mxu0 0.0
        %4465 = vmatpush1.msra.mxu0 0.0
        %4466 = vmatprep.subr.mxu0 0.0
        %4467 = vmatpush1.msra.mxu0 %v4392
        %4468 = vmatprep.subr.mxu0 0.0
        %4469 = vmatpush1.msra.mxu0 %v4391
        %4470 = vmatprep.subr.mxu0 0.0
        %4471 = vmatpush1.msra.mxu0 %v4390
        %4472 = vmatprep.subr.mxu0 0.0
        %4473 = vmatpush1.msra.mxu0 %v4389
        %4474 = vmatprep.subr.mxu0 0.0
        %4475 = vmatpush2.msra.mxu0 0.0
        %4476 = vmatprep.subr.mxu0 0.0
        %4477 = vmatpush2.msra.mxu0 0.0
        %4478 = vmatprep.subr.mxu0 0.0
        %4479 = vmatpush2.msra.mxu0 0.0
        %4480 = vmatprep.subr.mxu0 0.0
        %4481 = vmatpush2.msra.mxu0 0.0
        %4482 = vmatprep.subr.mxu0 0.0
        %4483 = vmatpush2.msra.mxu0 0.0
        %4484 = vmatprep.subr.mxu0 0.0
        %4485 = vmatpush2.msra.mxu0 0.0
        %4486 = vmatprep.subr.mxu0 0.0
        %4487 = vmatpush2.msra.mxu0 0.0
        %4488 = vmatprep.subr.mxu0 0.0
        %4489 = vmatpush2.msra.mxu0 0.0
        %4490 = vmatprep.subr.mxu0 0.0
        %4491 = vmatpush2.msra.mxu0 0.0
        %4492 = vmatprep.subr.mxu0 0.0
        %4493 = vmatpush2.msra.mxu0 0.0
        %4494 = vmatprep.subr.mxu0 0.0
        %4495 = vmatpush2.msra.mxu0 0.0
        %4496 = vmatprep.subr.mxu0 0.0
        %4497 = vmatpush2.msra.mxu0 0.0
        %4498 = vmatprep.subr.mxu0 0.0
        %4499 = vmatpush2.msra.mxu0 0.0
        %4500 = vmatprep.subr.mxu0 0.0
        %4501 = vmatpush2.msra.mxu0 0.0
        %4502 = vmatprep.subr.mxu0 0.0
        %4503 = vmatpush2.msra.mxu0 0.0
        %4504 = vmatprep.subr.mxu0 0.0
        %4505 = vmatpush2.msra.mxu0 0.0
        %4506 = vmatprep.mubr.f32.mxu0 0.0
        %4507 = vmatmul.mubr.f32.gmra.mxu0 %v4395
        %v4508 = vpop.f32.mrf.mxu0
        %v4509 = vadd.f32 0.0, %v4508
        %v4510 = vpop.f32.mrf.mxu0
        %4511 = vmatprep.mubr.f32.mxu0 0.0
        %4512 = vmatmul.mubr.f32.gmra.mxu0 %v4398
        %v4513 = vpop.f32.mrf.mxu0
        %v4514 = vadd.f32 0.0, %v4513
        %v4515 = vpop.f32.mrf.mxu0
        %4516 = vmatprep.mubr.f32.mxu0 0.0
        %4517 = vmatmul.mubr.f32.gmra.mxu0 %v4401
        %v4518 = vpop.f32.mrf.mxu0
        %v4519 = vadd.f32 0.0, %v4518
        %v4520 = vpop.f32.mrf.mxu0
        %4521 = vmatprep.mubr.f32.mxu0 0.0
        %4522 = vmatmul.mubr.f32.gmra.mxu0 %v4404
        %v4523 = vpop.f32.mrf.mxu0
        %v4524 = vadd.f32 0.0, %v4523
        %v4525 = vpop.f32.mrf.mxu0
        %4526 = vmatprep.mubr.f32.mxu0 0.0
        %4527 = vmatmul.mubr.f32.gmra.mxu0 %v4407
        %v4528 = vpop.f32.mrf.mxu0
        %v4529 = vadd.f32 0.0, %v4528
        %v4530 = vpop.f32.mrf.mxu0
        %4531 = vmatprep.mubr.f32.mxu0 0.0
        %4532 = vmatmul.mubr.f32.gmra.mxu0 %v4410
        %v4533 = vpop.f32.mrf.mxu0
        %v4534 = vadd.f32 0.0, %v4533
        %v4535 = vpop.f32.mrf.mxu0
        %4536 = vmatprep.mubr.f32.mxu0 0.0
        %4537 = vmatmul.mubr.f32.gmra.mxu0 %v4413
        %v4538 = vpop.f32.mrf.mxu0
        %v4539 = vadd.f32 0.0, %v4538
        %v4540 = vpop.f32.mrf.mxu0
        %4541 = vmatprep.mubr.f32.mxu0 0.0
        %4542 = vmatmul.mubr.f32.gmra.mxu0 %v4416
        %v4543 = vpop.f32.mrf.mxu0
        %v4544 = vadd.f32 0.0, %v4543
        %v4545 = vpop.f32.mrf.mxu0
        %4546 = vmatprep.mubr.f32.mxu0 0.0
        %4547 = vmatmul.mubr.f32.gmra.mxu0 %v4419
        %v4548 = vpop.f32.mrf.mxu0
        %v4549 = vadd.f32 0.0, %v4548
        %v4550 = vpop.f32.mrf.mxu0
        %4551 = vmatprep.mubr.f32.mxu0 0.0
        %4552 = vmatmul.mubr.f32.gmra.mxu0 %v4422
        %v4553 = vpop.f32.mrf.mxu0
        %v4554 = vadd.f32 0.0, %v4553
        %v4555 = vpop.f32.mrf.mxu0
        %4556 = vmatprep.mubr.f32.mxu0 0.0
        %4557 = vmatmul.mubr.f32.gmra.mxu0 %v4425
        %v4558 = vpop.f32.mrf.mxu0
        %v4559 = vadd.f32 0.0, %v4558
        %v4560 = vpop.f32.mrf.mxu0
        %4561 = vmatprep.mubr.f32.mxu0 0.0
        %4562 = vmatmul.mubr.f32.gmra.mxu0 %v4428
        %v4563 = vpop.f32.mrf.mxu0
        %v4564 = vadd.f32 0.0, %v4563
        %v4565 = vpop.f32.mrf.mxu0
        %4566 = vmatprep.mubr.f32.mxu0 0.0
        %4567 = vmatmul.mubr.f32.gmra.mxu0 %v4431
        %v4568 = vpop.f32.mrf.mxu0
        %v4569 = vadd.f32 0.0, %v4568
        %v4570 = vpop.f32.mrf.mxu0
        %4571 = vmatprep.mubr.f32.mxu0 0.0
        %4572 = vmatmul.mubr.f32.gmra.mxu0 %v4434
        %v4573 = vpop.f32.mrf.mxu0
        %v4574 = vadd.f32 0.0, %v4573
        %v4575 = vpop.f32.mrf.mxu0
        %4576 = vmatprep.mubr.f32.mxu0 0.0
        %4577 = vmatmul.mubr.f32.gmra.mxu0 %v4437
        %v4578 = vpop.f32.mrf.mxu0
        %v4579 = vadd.f32 0.0, %v4578
        %v4580 = vpop.f32.mrf.mxu0
        %4581 = vmatprep.mubr.f32.mxu0 0.0
        %4582 = vmatmul.mubr.f32.gmra.mxu0 %v4440
        %v4583 = vpop.f32.mrf.mxu0
        %v4584 = vadd.f32 0.0, %v4583
        %v4585 = vpop.f32.mrf.mxu0
        %4586 = vdwg.mxu0
        %4589 = vrot.lane.b32.xlu0 %v4509, 96
        %v4590 = vpop.permute.xlu0 %4589
        %4591 = vrot.lane.b32.xlu0 %v4514, 96
        %v4592 = vpop.permute.xlu0 %4591
        %4595 = vxpose.xlu0.b32.start [1/16] %v4590, 128
        %4596 = vxpose.xlu0.b32.cont [2/16] %v4592, 128
        %4597 = vxpose.xlu0.b32.cont [3/16] 0.0, 128
        %4598 = vxpose.xlu0.b32.cont [4/16] 0.0, 128
        %4599 = vxpose.xlu0.b32.cont [5/16] 0.0, 128
        %4600 = vxpose.xlu0.b32.cont [6/16] 0.0, 128
        %4601 = vxpose.xlu0.b32.cont [7/16] 0.0, 128
        %4602 = vxpose.xlu0.b32.cont [8/16] 0.0, 128
        %4603 = vxpose.xlu0.b32.cont [9/16] 0.0, 128
        %4604 = vxpose.xlu0.b32.cont [10/16] 0.0, 128
        %4605 = vxpose.xlu0.b32.cont [11/16] 0.0, 128
        %4606 = vxpose.xlu0.b32.cont [12/16] 0.0, 128
        %4607 = vxpose.xlu0.b32.cont [13/16] 0.0, 128
        %4608 = vxpose.xlu0.b32.cont [14/16] 0.0, 128
        %4609 = vxpose.xlu0.b32.cont [15/16] 0.0, 128
        %4610 = vxpose.xlu0.b32.end [16/16] 0.0, 128
        %v4611 = vpop.trf.xlu0
        %v4612 = vpop.trf.xlu0
        %v4613 = vpop.trf.xlu0
        %v4614 = vpop.trf.xlu0
        %v4615 = vpop.trf.xlu0
        %v4616 = vpop.trf.xlu0
        %v4617 = vpop.trf.xlu0
        %v4618 = vpop.trf.xlu0
        %v4619 = vpop.trf.xlu0
        %v4620 = vpop.trf.xlu0
        %v4621 = vpop.trf.xlu0
        %v4622 = vpop.trf.xlu0
        %v4623 = vpop.trf.xlu0
        %v4624 = vpop.trf.xlu0
        %v4625 = vpop.trf.xlu0
        %v4626 = vpop.trf.xlu0
        %v4627 = vlaneseq
        %v4628 = vshrl.u32 %v4627, 7
        %v4629 = vsub.s32 0, %v4628
        %v4630 = vrot.slane %v4611, %v4629
        %v4631 = vlaneseq
        %v4632 = vshrl.u32 %v4631, 7
        %v4633 = vsub.s32 1, %v4632
        %v4634 = vrot.slane %v4611, %v4633
        %4635 = vrot.lane.b32.xlu0 %v4509, 127
        %v4636 = vpop.permute.xlu0 %4635
        %4637 = vrot.lane.b32.xlu0 %v4514, 127
        %v4638 = vpop.permute.xlu0 %4637
        %4639 = vset.pattern.permute.xlu0 34
        %4640 = vperm.xlu0 %4639, %v4509
        %v4641 = vpop.permute.xlu0 %4640
        %4643 = vset.pattern.permute.xlu0 34
        %4644 = vperm.xlu0 %4643, %v4514
        %v4645 = vpop.permute.xlu0 %4644
        %4647 = vset.pattern.permute.xlu0 34
        %4648 = vperm.xlu0 %4647, %v4636
        %v4649 = vpop.permute.xlu0 %4648
        %4651 = vset.pattern.permute.xlu0 34
        %4652 = vperm.xlu0 %4651, %v4638
        %v4653 = vpop.permute.xlu0 %4652
        %v4655 = vadd.f32 %v4630, %v4641
        %v4656 = vadd.f32 %v4630, %v4645
        %v4657 = vadd.f32 %v4634, %v4649
        %v4658 = vadd.f32 %v4634, %v4653
        %vm4659 = vcmp.gt.f32.partialorder %v4655, 0.0
        %vm4660 = vcmp.gt.f32.partialorder %v4656, 0.0
        %vm4661 = vcmp.gt.f32.partialorder %v4657, 0.0
        %vm4662 = vcmp.gt.f32.partialorder %v4658, 0.0
        %v4663 = vmul.f32 %v4655, 0.2
        %v4664 = vmul.f32 %v4656, 0.2
        %v4665 = vmul.f32 %v4657, 0.2
        %v4666 = vmul.f32 %v4658, 0.2
        %v4667 = vsel %vm4659, %v4655, %v4663
        %v4668 = vsel %vm4660, %v4656, %v4664
        %v4669 = vsel %vm4661, %v4657, %v4665
        %v4670 = vsel %vm4662, %v4658, %v4666
        %v4671 = vadd.f32 %v4667, %v445
        %v4672 = vadd.f32 %v4668, %v446
        %v4673 = vadd.f32 %v4669, %v445
        %v4674 = vadd.f32 %v4670, %v446
        %v4675 = vsel %vm495, %v4671, -inf
        %4676 = vmax.xlane.f32.xlu0 %v4675
        %v4677 = vpop.xlane.xlu0 %4676
        %v4678 = vsel %vm495, %v4672, -inf
        %4679 = vmax.xlane.f32.xlu0 %v4678
        %v4680 = vpop.xlane.xlu0 %4679
        %v4681 = vsel %vm495, %v4673, -inf
        %4682 = vmax.xlane.f32.xlu0 %v4681
        %v4683 = vpop.xlane.xlu0 %4682
        %v4684 = vsel %vm495, %v4674, -inf
        %4685 = vmax.xlane.f32.xlu0 %v4684
        %v4686 = vpop.xlane.xlu0 %4685
        %v4687 = vsub.f32 %v4671, %v4677
        %v4688 = vsub.f32 %v4672, %v4680
        %v4689 = vsub.f32 %v4673, %v4683
        %v4690 = vsub.f32 %v4674, %v4686
        %v4691 = vmul.f32 %v4687, 1.442695
        %v4692 = vpow.pop %v4691
        %v4693 = vmul.f32 %v4688, 1.442695
        %v4694 = vpow.pop %v4693
        %v4695 = vmul.f32 %v4689, 1.442695
        %v4696 = vpow.pop %v4695
        %v4697 = vmul.f32 %v4690, 1.442695
        %v4698 = vpow.pop %v4697
        %v4699 = vsel %vm495, %v4692, 0.0
        %4700 = vadd.xlane.f32.xlu0 %v4699
        %v4701 = vpop.xlane.xlu0 %4700
        %v4702 = vsel %vm495, %v4694, 0.0
        %4703 = vadd.xlane.f32.xlu0 %v4702
        %v4704 = vpop.xlane.xlu0 %4703
        %v4705 = vsel %vm495, %v4696, 0.0
        %4706 = vadd.xlane.f32.xlu0 %v4705
        %v4707 = vpop.xlane.xlu0 %4706
        %v4708 = vsel %vm495, %v4698, 0.0
        %4709 = vadd.xlane.f32.xlu0 %v4708
        %v4710 = vpop.xlane.xlu0 %4709
        %v4711 = vrcp.pop %v4701
        %v4712 = vrcp.pop %v4704
        %v4713 = vrcp.pop %v4707
        %v4714 = vrcp.pop %v4710
        %v4715 = vmul.f32 %v4692, %v4711
        %v4716 = vmul.f32 %v4694, %v4712
        %v4717 = vmul.f32 %v4696, %v4713
        %v4718 = vmul.f32 %v4698, %v4714
        %4721 = vrot.lane.b32.xlu0 %v4717, 16
        %v4722 = vpop.permute.xlu0 %4721
        %4723 = vrot.lane.b32.xlu0 %v4718, 16
        %v4724 = vpop.permute.xlu0 %4723
        %v4727 = vsel %vm495, %v4715, %v4722
        %v4728 = vsel %vm495, %v4716, %v4724
        %4729 = vrot.lane.b32.xlu0 %v4509, 112
        %v4730 = vpop.permute.xlu0 %4729
        %4731 = vrot.lane.b32.xlu0 %v4514, 112
        %v4732 = vpop.permute.xlu0 %4731
        %v4736 = vsel %vm554, %v4727, 0
        %v4739 = vsel %vm554, %v4728, 0
        %4741 = vmatprep.subr.mxu0 0.0
        %4742 = vmatpush1.msra.mxu0 0.0
        %4743 = vmatprep.subr.mxu0 0.0
        %4744 = vmatpush1.msra.mxu0 0.0
        %4745 = vmatprep.subr.mxu0 0.0
        %4746 = vmatpush1.msra.mxu0 0.0
        %4747 = vmatprep.subr.mxu0 0.0
        %4748 = vmatpush1.msra.mxu0 0.0
        %4749 = vmatprep.subr.mxu0 0.0
        %4750 = vmatpush1.msra.mxu0 0.0
        %4751 = vmatprep.subr.mxu0 0.0
        %4752 = vmatpush1.msra.mxu0 0.0
        %4753 = vmatprep.subr.mxu0 0.0
        %4754 = vmatpush1.msra.mxu0 0.0
        %4755 = vmatprep.subr.mxu0 0.0
        %4756 = vmatpush1.msra.mxu0 0.0
        %4757 = vmatprep.subr.mxu0 0.0
        %4758 = vmatpush1.msra.mxu0 0.0
        %4759 = vmatprep.subr.mxu0 0.0
        %4760 = vmatpush1.msra.mxu0 0.0
        %4761 = vmatprep.subr.mxu0 0.0
        %4762 = vmatpush1.msra.mxu0 0.0
        %4763 = vmatprep.subr.mxu0 0.0
        %4764 = vmatpush1.msra.mxu0 0.0
        %4765 = vmatprep.subr.mxu0 0.0
        %4766 = vmatpush1.msra.mxu0 %v4732
        %4767 = vmatprep.subr.mxu0 0.0
        %4768 = vmatpush1.msra.mxu0 %v4730
        %4769 = vmatprep.subr.mxu0 0.0
        %4770 = vmatpush1.msra.mxu0 %v4514
        %4771 = vmatprep.subr.mxu0 0.0
        %4772 = vmatpush1.msra.mxu0 %v4509
        %4773 = vmatprep.subr.mxu0 0.0
        %4774 = vmatpush2.msra.mxu0 0.0
        %4775 = vmatprep.subr.mxu0 0.0
        %4776 = vmatpush2.msra.mxu0 0.0
        %4777 = vmatprep.subr.mxu0 0.0
        %4778 = vmatpush2.msra.mxu0 0.0
        %4779 = vmatprep.subr.mxu0 0.0
        %4780 = vmatpush2.msra.mxu0 0.0
        %4781 = vmatprep.subr.mxu0 0.0
        %4782 = vmatpush2.msra.mxu0 0.0
        %4783 = vmatprep.subr.mxu0 0.0
        %4784 = vmatpush2.msra.mxu0 0.0
        %4785 = vmatprep.subr.mxu0 0.0
        %4786 = vmatpush2.msra.mxu0 0.0
        %4787 = vmatprep.subr.mxu0 0.0
        %4788 = vmatpush2.msra.mxu0 0.0
        %4789 = vmatprep.subr.mxu0 0.0
        %4790 = vmatpush2.msra.mxu0 0.0
        %4791 = vmatprep.subr.mxu0 0.0
        %4792 = vmatpush2.msra.mxu0 0.0
        %4793 = vmatprep.subr.mxu0 0.0
        %4794 = vmatpush2.msra.mxu0 0.0
        %4795 = vmatprep.subr.mxu0 0.0
        %4796 = vmatpush2.msra.mxu0 0.0
        %4797 = vmatprep.subr.mxu0 0.0
        %4798 = vmatpush2.msra.mxu0 0.0
        %4799 = vmatprep.subr.mxu0 0.0
        %4800 = vmatpush2.msra.mxu0 0.0
        %4801 = vmatprep.subr.mxu0 0.0
        %4802 = vmatpush2.msra.mxu0 0.0
        %4803 = vmatprep.subr.mxu0 0.0
        %4804 = vmatpush2.msra.mxu0 0.0
        %4805 = vmatprep.mubr.f32.mxu0 0.0
        %4806 = vmatmul.mubr.f32.gmra.mxu0 %v4736
        %v4807 = vpop.f32.mrf.mxu0
        %v4808 = vadd.f32 0.0, %v4807
        %v4809 = vpop.f32.mrf.mxu0
        %4810 = vmatprep.mubr.f32.mxu0 0.0
        %4811 = vmatmul.mubr.f32.gmra.mxu0 %v4739
        %v4812 = vpop.f32.mrf.mxu0
        %v4813 = vadd.f32 0.0, %v4812
        %v4814 = vpop.f32.mrf.mxu0
        %4815 = vdwg.mxu0
        %v4816 = vmul.f32 %v4808, 0.5
        %v4817 = vmul.f32 %v4813, 0.5
        %4820 = vrot.lane.b32.xlu0 %v4519, 96
        %v4821 = vpop.permute.xlu0 %4820
        %4822 = vrot.lane.b32.xlu0 %v4524, 96
        %v4823 = vpop.permute.xlu0 %4822
        %4826 = vxpose.xlu0.b32.start [1/16] %v4821, 128
        %4827 = vxpose.xlu0.b32.cont [2/16] %v4823, 128
        %4828 = vxpose.xlu0.b32.cont [3/16] 0.0, 128
        %4829 = vxpose.xlu0.b32.cont [4/16] 0.0, 128
        %4830 = vxpose.xlu0.b32.cont [5/16] 0.0, 128
        %4831 = vxpose.xlu0.b32.cont [6/16] 0.0, 128
        %4832 = vxpose.xlu0.b32.cont [7/16] 0.0, 128
        %4833 = vxpose.xlu0.b32.cont [8/16] 0.0, 128
        %4834 = vxpose.xlu0.b32.cont [9/16] 0.0, 128
        %4835 = vxpose.xlu0.b32.cont [10/16] 0.0, 128
        %4836 = vxpose.xlu0.b32.cont [11/16] 0.0, 128
        %4837 = vxpose.xlu0.b32.cont [12/16] 0.0, 128
        %4838 = vxpose.xlu0.b32.cont [13/16] 0.0, 128
        %4839 = vxpose.xlu0.b32.cont [14/16] 0.0, 128
        %4840 = vxpose.xlu0.b32.cont [15/16] 0.0, 128
        %4841 = vxpose.xlu0.b32.end [16/16] 0.0, 128
        %v4842 = vpop.trf.xlu0
        %v4843 = vpop.trf.xlu0
        %v4844 = vpop.trf.xlu0
        %v4845 = vpop.trf.xlu0
        %v4846 = vpop.trf.xlu0
        %v4847 = vpop.trf.xlu0
        %v4848 = vpop.trf.xlu0
        %v4849 = vpop.trf.xlu0
        %v4850 = vpop.trf.xlu0
        %v4851 = vpop.trf.xlu0
        %v4852 = vpop.trf.xlu0
        %v4853 = vpop.trf.xlu0
        %v4854 = vpop.trf.xlu0
        %v4855 = vpop.trf.xlu0
        %v4856 = vpop.trf.xlu0
        %v4857 = vpop.trf.xlu0
        %v4858 = vlaneseq
        %v4859 = vshrl.u32 %v4858, 7
        %v4860 = vsub.s32 0, %v4859
        %v4861 = vrot.slane %v4842, %v4860
        %v4862 = vlaneseq
        %v4863 = vshrl.u32 %v4862, 7
        %v4864 = vsub.s32 1, %v4863
        %v4865 = vrot.slane %v4842, %v4864
        %4866 = vrot.lane.b32.xlu0 %v4519, 127
        %v4867 = vpop.permute.xlu0 %4866
        %4868 = vrot.lane.b32.xlu0 %v4524, 127
        %v4869 = vpop.permute.xlu0 %4868
        %4870 = vset.pattern.permute.xlu0 34
        %4871 = vperm.xlu0 %4870, %v4519
        %v4872 = vpop.permute.xlu0 %4871
        %4874 = vset.pattern.permute.xlu0 34
        %4875 = vperm.xlu0 %4874, %v4524
        %v4876 = vpop.permute.xlu0 %4875
        %4878 = vset.pattern.permute.xlu0 34
        %4879 = vperm.xlu0 %4878, %v4867
        %v4880 = vpop.permute.xlu0 %4879
        %4882 = vset.pattern.permute.xlu0 34
        %4883 = vperm.xlu0 %4882, %v4869
        %v4884 = vpop.permute.xlu0 %4883
        %v4886 = vadd.f32 %v4861, %v4872
        %v4887 = vadd.f32 %v4861, %v4876
        %v4888 = vadd.f32 %v4865, %v4880
        %v4889 = vadd.f32 %v4865, %v4884
        %vm4890 = vcmp.gt.f32.partialorder %v4886, 0.0
        %vm4891 = vcmp.gt.f32.partialorder %v4887, 0.0
        %vm4892 = vcmp.gt.f32.partialorder %v4888, 0.0
        %vm4893 = vcmp.gt.f32.partialorder %v4889, 0.0
        %v4894 = vmul.f32 %v4886, 0.2
        %v4895 = vmul.f32 %v4887, 0.2
        %v4896 = vmul.f32 %v4888, 0.2
        %v4897 = vmul.f32 %v4889, 0.2
        %v4898 = vsel %vm4890, %v4886, %v4894
        %v4899 = vsel %vm4891, %v4887, %v4895
        %v4900 = vsel %vm4892, %v4888, %v4896
        %v4901 = vsel %vm4893, %v4889, %v4897
        %v4902 = vadd.f32 %v4898, %v676
        %v4903 = vadd.f32 %v4899, %v677
        %v4904 = vadd.f32 %v4900, %v676
        %v4905 = vadd.f32 %v4901, %v677
        %v4906 = vsel %vm495, %v4902, -inf
        %4907 = vmax.xlane.f32.xlu0 %v4906
        %v4908 = vpop.xlane.xlu0 %4907
        %v4909 = vsel %vm495, %v4903, -inf
        %4910 = vmax.xlane.f32.xlu0 %v4909
        %v4911 = vpop.xlane.xlu0 %4910
        %v4912 = vsel %vm495, %v4904, -inf
        %4913 = vmax.xlane.f32.xlu0 %v4912
        %v4914 = vpop.xlane.xlu0 %4913
        %v4915 = vsel %vm495, %v4905, -inf
        %4916 = vmax.xlane.f32.xlu0 %v4915
        %v4917 = vpop.xlane.xlu0 %4916
        %v4918 = vsub.f32 %v4902, %v4908
        %v4919 = vsub.f32 %v4903, %v4911
        %v4920 = vsub.f32 %v4904, %v4914
        %v4921 = vsub.f32 %v4905, %v4917
        %v4922 = vmul.f32 %v4918, 1.442695
        %v4923 = vpow.pop %v4922
        %v4924 = vmul.f32 %v4919, 1.442695
        %v4925 = vpow.pop %v4924
        %v4926 = vmul.f32 %v4920, 1.442695
        %v4927 = vpow.pop %v4926
        %v4928 = vmul.f32 %v4921, 1.442695
        %v4929 = vpow.pop %v4928
        %v4930 = vsel %vm495, %v4923, 0.0
        %4931 = vadd.xlane.f32.xlu0 %v4930
        %v4932 = vpop.xlane.xlu0 %4931
        %v4933 = vsel %vm495, %v4925, 0.0
        %4934 = vadd.xlane.f32.xlu0 %v4933
        %v4935 = vpop.xlane.xlu0 %4934
        %v4936 = vsel %vm495, %v4927, 0.0
        %4937 = vadd.xlane.f32.xlu0 %v4936
        %v4938 = vpop.xlane.xlu0 %4937
        %v4939 = vsel %vm495, %v4929, 0.0
        %4940 = vadd.xlane.f32.xlu0 %v4939
        %v4941 = vpop.xlane.xlu0 %4940
        %v4942 = vrcp.pop %v4932
        %v4943 = vrcp.pop %v4935
        %v4944 = vrcp.pop %v4938
        %v4945 = vrcp.pop %v4941
        %v4946 = vmul.f32 %v4923, %v4942
        %v4947 = vmul.f32 %v4925, %v4943
        %v4948 = vmul.f32 %v4927, %v4944
        %v4949 = vmul.f32 %v4929, %v4945
        %4952 = vrot.lane.b32.xlu0 %v4948, 16
        %v4953 = vpop.permute.xlu0 %4952
        %4954 = vrot.lane.b32.xlu0 %v4949, 16
        %v4955 = vpop.permute.xlu0 %4954
        %v4958 = vsel %vm495, %v4946, %v4953
        %v4959 = vsel %vm495, %v4947, %v4955
        %4960 = vrot.lane.b32.xlu0 %v4519, 112
        %v4961 = vpop.permute.xlu0 %4960
        %4962 = vrot.lane.b32.xlu0 %v4524, 112
        %v4963 = vpop.permute.xlu0 %4962
        %v4967 = vsel %vm554, %v4958, 0
        %v4970 = vsel %vm554, %v4959, 0
        %4972 = vmatprep.subr.mxu0 0.0
        %4973 = vmatpush1.msra.mxu0 0.0
        %4974 = vmatprep.subr.mxu0 0.0
        %4975 = vmatpush1.msra.mxu0 0.0
        %4976 = vmatprep.subr.mxu0 0.0
        %4977 = vmatpush1.msra.mxu0 0.0
        %4978 = vmatprep.subr.mxu0 0.0
        %4979 = vmatpush1.msra.mxu0 0.0
        %4980 = vmatprep.subr.mxu0 0.0
        %4981 = vmatpush1.msra.mxu0 0.0
        %4982 = vmatprep.subr.mxu0 0.0
        %4983 = vmatpush1.msra.mxu0 0.0
        %4984 = vmatprep.subr.mxu0 0.0
        %4985 = vmatpush1.msra.mxu0 0.0
        %4986 = vmatprep.subr.mxu0 0.0
        %4987 = vmatpush1.msra.mxu0 0.0
        %4988 = vmatprep.subr.mxu0 0.0
        %4989 = vmatpush1.msra.mxu0 0.0
        %4990 = vmatprep.subr.mxu0 0.0
        %4991 = vmatpush1.msra.mxu0 0.0
        %4992 = vmatprep.subr.mxu0 0.0
        %4993 = vmatpush1.msra.mxu0 0.0
        %4994 = vmatprep.subr.mxu0 0.0
        %4995 = vmatpush1.msra.mxu0 0.0
        %4996 = vmatprep.subr.mxu0 0.0
        %4997 = vmatpush1.msra.mxu0 %v4963
        %4998 = vmatprep.subr.mxu0 0.0
        %4999 = vmatpush1.msra.mxu0 %v4961
        %5000 = vmatprep.subr.mxu0 0.0
        %5001 = vmatpush1.msra.mxu0 %v4524
        %5002 = vmatprep.subr.mxu0 0.0
        %5003 = vmatpush1.msra.mxu0 %v4519
        %5004 = vmatprep.subr.mxu0 0.0
        %5005 = vmatpush2.msra.mxu0 0.0
        %5006 = vmatprep.subr.mxu0 0.0
        %5007 = vmatpush2.msra.mxu0 0.0
        %5008 = vmatprep.subr.mxu0 0.0
        %5009 = vmatpush2.msra.mxu0 0.0
        %5010 = vmatprep.subr.mxu0 0.0
        %5011 = vmatpush2.msra.mxu0 0.0
        %5012 = vmatprep.subr.mxu0 0.0
        %5013 = vmatpush2.msra.mxu0 0.0
        %5014 = vmatprep.subr.mxu0 0.0
        %5015 = vmatpush2.msra.mxu0 0.0
        %5016 = vmatprep.subr.mxu0 0.0
        %5017 = vmatpush2.msra.mxu0 0.0
        %5018 = vmatprep.subr.mxu0 0.0
        %5019 = vmatpush2.msra.mxu0 0.0
        %5020 = vmatprep.subr.mxu0 0.0
        %5021 = vmatpush2.msra.mxu0 0.0
        %5022 = vmatprep.subr.mxu0 0.0
        %5023 = vmatpush2.msra.mxu0 0.0
        %5024 = vmatprep.subr.mxu0 0.0
        %5025 = vmatpush2.msra.mxu0 0.0
        %5026 = vmatprep.subr.mxu0 0.0
        %5027 = vmatpush2.msra.mxu0 0.0
        %5028 = vmatprep.subr.mxu0 0.0
        %5029 = vmatpush2.msra.mxu0 0.0
        %5030 = vmatprep.subr.mxu0 0.0
        %5031 = vmatpush2.msra.mxu0 0.0
        %5032 = vmatprep.subr.mxu0 0.0
        %5033 = vmatpush2.msra.mxu0 0.0
        %5034 = vmatprep.subr.mxu0 0.0
        %5035 = vmatpush2.msra.mxu0 0.0
        %5036 = vmatprep.mubr.f32.mxu0 0.0
        %5037 = vmatmul.mubr.f32.gmra.mxu0 %v4967
        %v5038 = vpop.f32.mrf.mxu0
        %v5039 = vadd.f32 0.0, %v5038
        %v5040 = vpop.f32.mrf.mxu0
        %5041 = vmatprep.mubr.f32.mxu0 0.0
        %5042 = vmatmul.mubr.f32.gmra.mxu0 %v4970
        %v5043 = vpop.f32.mrf.mxu0
        %v5044 = vadd.f32 0.0, %v5043
        %v5045 = vpop.f32.mrf.mxu0
        %5046 = vdwg.mxu0
        %v5047 = vmul.f32 %v5039, 0.5
        %v5048 = vmul.f32 %v5044, 0.5
        %5051 = vrot.lane.b32.xlu0 %v4529, 96
        %v5052 = vpop.permute.xlu0 %5051
        %5053 = vrot.lane.b32.xlu0 %v4534, 96
        %v5054 = vpop.permute.xlu0 %5053
        %5057 = vxpose.xlu0.b32.start [1/16] %v5052, 128
        %5058 = vxpose.xlu0.b32.cont [2/16] %v5054, 128
        %5059 = vxpose.xlu0.b32.cont [3/16] 0.0, 128
        %5060 = vxpose.xlu0.b32.cont [4/16] 0.0, 128
        %5061 = vxpose.xlu0.b32.cont [5/16] 0.0, 128
        %5062 = vxpose.xlu0.b32.cont [6/16] 0.0, 128
        %5063 = vxpose.xlu0.b32.cont [7/16] 0.0, 128
        %5064 = vxpose.xlu0.b32.cont [8/16] 0.0, 128
        %5065 = vxpose.xlu0.b32.cont [9/16] 0.0, 128
        %5066 = vxpose.xlu0.b32.cont [10/16] 0.0, 128
        %5067 = vxpose.xlu0.b32.cont [11/16] 0.0, 128
        %5068 = vxpose.xlu0.b32.cont [12/16] 0.0, 128
        %5069 = vxpose.xlu0.b32.cont [13/16] 0.0, 128
        %5070 = vxpose.xlu0.b32.cont [14/16] 0.0, 128
        %5071 = vxpose.xlu0.b32.cont [15/16] 0.0, 128
        %5072 = vxpose.xlu0.b32.end [16/16] 0.0, 128
        %v5073 = vpop.trf.xlu0
        %v5074 = vpop.trf.xlu0
        %v5075 = vpop.trf.xlu0
        %v5076 = vpop.trf.xlu0
        %v5077 = vpop.trf.xlu0
        %v5078 = vpop.trf.xlu0
        %v5079 = vpop.trf.xlu0
        %v5080 = vpop.trf.xlu0
        %v5081 = vpop.trf.xlu0
        %v5082 = vpop.trf.xlu0
        %v5083 = vpop.trf.xlu0
        %v5084 = vpop.trf.xlu0
        %v5085 = vpop.trf.xlu0
        %v5086 = vpop.trf.xlu0
        %v5087 = vpop.trf.xlu0
        %v5088 = vpop.trf.xlu0
        %v5089 = vlaneseq
        %v5090 = vshrl.u32 %v5089, 7
        %v5091 = vsub.s32 0, %v5090
        %v5092 = vrot.slane %v5073, %v5091
        %v5093 = vlaneseq
        %v5094 = vshrl.u32 %v5093, 7
        %v5095 = vsub.s32 1, %v5094
        %v5096 = vrot.slane %v5073, %v5095
        %5097 = vrot.lane.b32.xlu0 %v4529, 127
        %v5098 = vpop.permute.xlu0 %5097
        %5099 = vrot.lane.b32.xlu0 %v4534, 127
        %v5100 = vpop.permute.xlu0 %5099
        %5101 = vset.pattern.permute.xlu0 34
        %5102 = vperm.xlu0 %5101, %v4529
        %v5103 = vpop.permute.xlu0 %5102
        %5105 = vset.pattern.permute.xlu0 34
        %5106 = vperm.xlu0 %5105, %v4534
        %v5107 = vpop.permute.xlu0 %5106
        %5109 = vset.pattern.permute.xlu0 34
        %5110 = vperm.xlu0 %5109, %v5098
        %v5111 = vpop.permute.xlu0 %5110
        %5113 = vset.pattern.permute.xlu0 34
        %5114 = vperm.xlu0 %5113, %v5100
        %v5115 = vpop.permute.xlu0 %5114
        %v5117 = vadd.f32 %v5092, %v5103
        %v5118 = vadd.f32 %v5092, %v5107
        %v5119 = vadd.f32 %v5096, %v5111
        %v5120 = vadd.f32 %v5096, %v5115
        %vm5121 = vcmp.gt.f32.partialorder %v5117, 0.0
        %vm5122 = vcmp.gt.f32.partialorder %v5118, 0.0
        %vm5123 = vcmp.gt.f32.partialorder %v5119, 0.0
        %vm5124 = vcmp.gt.f32.partialorder %v5120, 0.0
        %v5125 = vmul.f32 %v5117, 0.2
        %v5126 = vmul.f32 %v5118, 0.2
        %v5127 = vmul.f32 %v5119, 0.2
        %v5128 = vmul.f32 %v5120, 0.2
        %v5129 = vsel %vm5121, %v5117, %v5125
        %v5130 = vsel %vm5122, %v5118, %v5126
        %v5131 = vsel %vm5123, %v5119, %v5127
        %v5132 = vsel %vm5124, %v5120, %v5128
        %v5133 = vadd.f32 %v5129, %v905
        %v5134 = vadd.f32 %v5130, %v906
        %v5135 = vadd.f32 %v5131, %v905
        %v5136 = vadd.f32 %v5132, %v906
        %v5137 = vsel %vm495, %v5133, -inf
        %5138 = vmax.xlane.f32.xlu0 %v5137
        %v5139 = vpop.xlane.xlu0 %5138
        %v5140 = vsel %vm495, %v5134, -inf
        %5141 = vmax.xlane.f32.xlu0 %v5140
        %v5142 = vpop.xlane.xlu0 %5141
        %v5143 = vsel %vm495, %v5135, -inf
        %5144 = vmax.xlane.f32.xlu0 %v5143
        %v5145 = vpop.xlane.xlu0 %5144
        %v5146 = vsel %vm495, %v5136, -inf
        %5147 = vmax.xlane.f32.xlu0 %v5146
        %v5148 = vpop.xlane.xlu0 %5147
        %v5149 = vsub.f32 %v5133, %v5139
        %v5150 = vsub.f32 %v5134, %v5142
        %v5151 = vsub.f32 %v5135, %v5145
        %v5152 = vsub.f32 %v5136, %v5148
        %v5153 = vmul.f32 %v5149, 1.442695
        %v5154 = vpow.pop %v5153
        %v5155 = vmul.f32 %v5150, 1.442695
        %v5156 = vpow.pop %v5155
        %v5157 = vmul.f32 %v5151, 1.442695
        %v5158 = vpow.pop %v5157
        %v5159 = vmul.f32 %v5152, 1.442695
        %v5160 = vpow.pop %v5159
        %v5161 = vsel %vm495, %v5154, 0.0
        %5162 = vadd.xlane.f32.xlu0 %v5161
        %v5163 = vpop.xlane.xlu0 %5162
        %v5164 = vsel %vm495, %v5156, 0.0
        %5165 = vadd.xlane.f32.xlu0 %v5164
        %v5166 = vpop.xlane.xlu0 %5165
        %v5167 = vsel %vm495, %v5158, 0.0
        %5168 = vadd.xlane.f32.xlu0 %v5167
        %v5169 = vpop.xlane.xlu0 %5168
        %v5170 = vsel %vm495, %v5160, 0.0
        %5171 = vadd.xlane.f32.xlu0 %v5170
        %v5172 = vpop.xlane.xlu0 %5171
        %v5173 = vrcp.pop %v5163
        %v5174 = vrcp.pop %v5166
        %v5175 = vrcp.pop %v5169
        %v5176 = vrcp.pop %v5172
        %v5177 = vmul.f32 %v5154, %v5173
        %v5178 = vmul.f32 %v5156, %v5174
        %v5179 = vmul.f32 %v5158, %v5175
        %v5180 = vmul.f32 %v5160, %v5176
        %5183 = vrot.lane.b32.xlu0 %v5179, 16
        %v5184 = vpop.permute.xlu0 %5183
        %5185 = vrot.lane.b32.xlu0 %v5180, 16
        %v5186 = vpop.permute.xlu0 %5185
        %v5189 = vsel %vm495, %v5177, %v5184
        %v5190 = vsel %vm495, %v5178, %v5186
        %5191 = vrot.lane.b32.xlu0 %v4529, 112
        %v5192 = vpop.permute.xlu0 %5191
        %5193 = vrot.lane.b32.xlu0 %v4534, 112
        %v5194 = vpop.permute.xlu0 %5193
        %v5198 = vsel %vm554, %v5189, 0
        %v5201 = vsel %vm554, %v5190, 0
        %5203 = vmatprep.subr.mxu0 0.0
        %5204 = vmatpush1.msra.mxu0 0.0
        %5205 = vmatprep.subr.mxu0 0.0
        %5206 = vmatpush1.msra.mxu0 0.0
        %5207 = vmatprep.subr.mxu0 0.0
        %5208 = vmatpush1.msra.mxu0 0.0
        %5209 = vmatprep.subr.mxu0 0.0
        %5210 = vmatpush1.msra.mxu0 0.0
        %5211 = vmatprep.subr.mxu0 0.0
        %5212 = vmatpush1.msra.mxu0 0.0
        %5213 = vmatprep.subr.mxu0 0.0
        %5214 = vmatpush1.msra.mxu0 0.0
        %5215 = vmatprep.subr.mxu0 0.0
        %5216 = vmatpush1.msra.mxu0 0.0
        %5217 = vmatprep.subr.mxu0 0.0
        %5218 = vmatpush1.msra.mxu0 0.0
        %5219 = vmatprep.subr.mxu0 0.0
        %5220 = vmatpush1.msra.mxu0 0.0
        %5221 = vmatprep.subr.mxu0 0.0
        %5222 = vmatpush1.msra.mxu0 0.0
        %5223 = vmatprep.subr.mxu0 0.0
        %5224 = vmatpush1.msra.mxu0 0.0
        %5225 = vmatprep.subr.mxu0 0.0
        %5226 = vmatpush1.msra.mxu0 0.0
        %5227 = vmatprep.subr.mxu0 0.0
        %5228 = vmatpush1.msra.mxu0 %v5194
        %5229 = vmatprep.subr.mxu0 0.0
        %5230 = vmatpush1.msra.mxu0 %v5192
        %5231 = vmatprep.subr.mxu0 0.0
        %5232 = vmatpush1.msra.mxu0 %v4534
        %5233 = vmatprep.subr.mxu0 0.0
        %5234 = vmatpush1.msra.mxu0 %v4529
        %5235 = vmatprep.subr.mxu0 0.0
        %5236 = vmatpush2.msra.mxu0 0.0
        %5237 = vmatprep.subr.mxu0 0.0
        %5238 = vmatpush2.msra.mxu0 0.0
        %5239 = vmatprep.subr.mxu0 0.0
        %5240 = vmatpush2.msra.mxu0 0.0
        %5241 = vmatprep.subr.mxu0 0.0
        %5242 = vmatpush2.msra.mxu0 0.0
        %5243 = vmatprep.subr.mxu0 0.0
        %5244 = vmatpush2.msra.mxu0 0.0
        %5245 = vmatprep.subr.mxu0 0.0
        %5246 = vmatpush2.msra.mxu0 0.0
        %5247 = vmatprep.subr.mxu0 0.0
        %5248 = vmatpush2.msra.mxu0 0.0
        %5249 = vmatprep.subr.mxu0 0.0
        %5250 = vmatpush2.msra.mxu0 0.0
        %5251 = vmatprep.subr.mxu0 0.0
        %5252 = vmatpush2.msra.mxu0 0.0
        %5253 = vmatprep.subr.mxu0 0.0
        %5254 = vmatpush2.msra.mxu0 0.0
        %5255 = vmatprep.subr.mxu0 0.0
        %5256 = vmatpush2.msra.mxu0 0.0
        %5257 = vmatprep.subr.mxu0 0.0
        %5258 = vmatpush2.msra.mxu0 0.0
        %5259 = vmatprep.subr.mxu0 0.0
        %5260 = vmatpush2.msra.mxu0 0.0
        %5261 = vmatprep.subr.mxu0 0.0
        %5262 = vmatpush2.msra.mxu0 0.0
        %5263 = vmatprep.subr.mxu0 0.0
        %5264 = vmatpush2.msra.mxu0 0.0
        %5265 = vmatprep.subr.mxu0 0.0
        %5266 = vmatpush2.msra.mxu0 0.0
        %5267 = vmatprep.mubr.f32.mxu0 0.0
        %5268 = vmatmul.mubr.f32.gmra.mxu0 %v5198
        %v5269 = vpop.f32.mrf.mxu0
        %v5270 = vadd.f32 0.0, %v5269
        %v5271 = vpop.f32.mrf.mxu0
        %5272 = vmatprep.mubr.f32.mxu0 0.0
        %5273 = vmatmul.mubr.f32.gmra.mxu0 %v5201
        %v5274 = vpop.f32.mrf.mxu0
        %v5275 = vadd.f32 0.0, %v5274
        %v5276 = vpop.f32.mrf.mxu0
        %5277 = vdwg.mxu0
        %v5278 = vmul.f32 %v5270, 0.5
        %v5279 = vmul.f32 %v5275, 0.5
        %5282 = vrot.lane.b32.xlu0 %v4539, 96
        %v5283 = vpop.permute.xlu0 %5282
        %5284 = vrot.lane.b32.xlu0 %v4544, 96
        %v5285 = vpop.permute.xlu0 %5284
        %5288 = vxpose.xlu0.b32.start [1/16] %v5283, 128
        %5289 = vxpose.xlu0.b32.cont [2/16] %v5285, 128
        %5290 = vxpose.xlu0.b32.cont [3/16] 0.0, 128
        %5291 = vxpose.xlu0.b32.cont [4/16] 0.0, 128
        %5292 = vxpose.xlu0.b32.cont [5/16] 0.0, 128
        %5293 = vxpose.xlu0.b32.cont [6/16] 0.0, 128
        %5294 = vxpose.xlu0.b32.cont [7/16] 0.0, 128
        %5295 = vxpose.xlu0.b32.cont [8/16] 0.0, 128
        %5296 = vxpose.xlu0.b32.cont [9/16] 0.0, 128
        %5297 = vxpose.xlu0.b32.cont [10/16] 0.0, 128
        %5298 = vxpose.xlu0.b32.cont [11/16] 0.0, 128
        %5299 = vxpose.xlu0.b32.cont [12/16] 0.0, 128
        %5300 = vxpose.xlu0.b32.cont [13/16] 0.0, 128
        %5301 = vxpose.xlu0.b32.cont [14/16] 0.0, 128
        %5302 = vxpose.xlu0.b32.cont [15/16] 0.0, 128
        %5303 = vxpose.xlu0.b32.end [16/16] 0.0, 128
        %v5304 = vpop.trf.xlu0
        %v5305 = vpop.trf.xlu0
        %v5306 = vpop.trf.xlu0
        %v5307 = vpop.trf.xlu0
        %v5308 = vpop.trf.xlu0
        %v5309 = vpop.trf.xlu0
        %v5310 = vpop.trf.xlu0
        %v5311 = vpop.trf.xlu0
        %v5312 = vpop.trf.xlu0
        %v5313 = vpop.trf.xlu0
        %v5314 = vpop.trf.xlu0
        %v5315 = vpop.trf.xlu0
        %v5316 = vpop.trf.xlu0
        %v5317 = vpop.trf.xlu0
        %v5318 = vpop.trf.xlu0
        %v5319 = vpop.trf.xlu0
        %v5320 = vlaneseq
        %v5321 = vshrl.u32 %v5320, 7
        %v5322 = vsub.s32 0, %v5321
        %v5323 = vrot.slane %v5304, %v5322
        %v5324 = vlaneseq
        %v5325 = vshrl.u32 %v5324, 7
        %v5326 = vsub.s32 1, %v5325
        %v5327 = vrot.slane %v5304, %v5326
        %5328 = vrot.lane.b32.xlu0 %v4539, 127
        %v5329 = vpop.permute.xlu0 %5328
        %5330 = vrot.lane.b32.xlu0 %v4544, 127
        %v5331 = vpop.permute.xlu0 %5330
        %5332 = vset.pattern.permute.xlu0 34
        %5333 = vperm.xlu0 %5332, %v4539
        %v5334 = vpop.permute.xlu0 %5333
        %5336 = vset.pattern.permute.xlu0 34
        %5337 = vperm.xlu0 %5336, %v4544
        %v5338 = vpop.permute.xlu0 %5337
        %5340 = vset.pattern.permute.xlu0 34
        %5341 = vperm.xlu0 %5340, %v5329
        %v5342 = vpop.permute.xlu0 %5341
        %5344 = vset.pattern.permute.xlu0 34
        %5345 = vperm.xlu0 %5344, %v5331
        %v5346 = vpop.permute.xlu0 %5345
        %v5348 = vadd.f32 %v5323, %v5334
        %v5349 = vadd.f32 %v5323, %v5338
        %v5350 = vadd.f32 %v5327, %v5342
        %v5351 = vadd.f32 %v5327, %v5346
        %vm5352 = vcmp.gt.f32.partialorder %v5348, 0.0
        %vm5353 = vcmp.gt.f32.partialorder %v5349, 0.0
        %vm5354 = vcmp.gt.f32.partialorder %v5350, 0.0
        %vm5355 = vcmp.gt.f32.partialorder %v5351, 0.0
        %v5356 = vmul.f32 %v5348, 0.2
        %v5357 = vmul.f32 %v5349, 0.2
        %v5358 = vmul.f32 %v5350, 0.2
        %v5359 = vmul.f32 %v5351, 0.2
        %v5360 = vsel %vm5352, %v5348, %v5356
        %v5361 = vsel %vm5353, %v5349, %v5357
        %v5362 = vsel %vm5354, %v5350, %v5358
        %v5363 = vsel %vm5355, %v5351, %v5359
        %v5364 = vadd.f32 %v5360, %v1134
        %v5365 = vadd.f32 %v5361, %v1135
        %v5366 = vadd.f32 %v5362, %v1134
        %v5367 = vadd.f32 %v5363, %v1135
        %v5368 = vsel %vm495, %v5364, -inf
        %5369 = vmax.xlane.f32.xlu0 %v5368
        %v5370 = vpop.xlane.xlu0 %5369
        %v5371 = vsel %vm495, %v5365, -inf
        %5372 = vmax.xlane.f32.xlu0 %v5371
        %v5373 = vpop.xlane.xlu0 %5372
        %v5374 = vsel %vm495, %v5366, -inf
        %5375 = vmax.xlane.f32.xlu0 %v5374
        %v5376 = vpop.xlane.xlu0 %5375
        %v5377 = vsel %vm495, %v5367, -inf
        %5378 = vmax.xlane.f32.xlu0 %v5377
        %v5379 = vpop.xlane.xlu0 %5378
        %v5380 = vsub.f32 %v5364, %v5370
        %v5381 = vsub.f32 %v5365, %v5373
        %v5382 = vsub.f32 %v5366, %v5376
        %v5383 = vsub.f32 %v5367, %v5379
        %v5384 = vmul.f32 %v5380, 1.442695
        %v5385 = vpow.pop %v5384
        %v5386 = vmul.f32 %v5381, 1.442695
        %v5387 = vpow.pop %v5386
        %v5388 = vmul.f32 %v5382, 1.442695
        %v5389 = vpow.pop %v5388
        %v5390 = vmul.f32 %v5383, 1.442695
        %v5391 = vpow.pop %v5390
        %v5392 = vsel %vm495, %v5385, 0.0
        %5393 = vadd.xlane.f32.xlu0 %v5392
        %v5394 = vpop.xlane.xlu0 %5393
        %v5395 = vsel %vm495, %v5387, 0.0
        %5396 = vadd.xlane.f32.xlu0 %v5395
        %v5397 = vpop.xlane.xlu0 %5396
        %v5398 = vsel %vm495, %v5389, 0.0
        %5399 = vadd.xlane.f32.xlu0 %v5398
        %v5400 = vpop.xlane.xlu0 %5399
        %v5401 = vsel %vm495, %v5391, 0.0
        %5402 = vadd.xlane.f32.xlu0 %v5401
        %v5403 = vpop.xlane.xlu0 %5402
        %v5404 = vrcp.pop %v5394
        %v5405 = vrcp.pop %v5397
        %v5406 = vrcp.pop %v5400
        %v5407 = vrcp.pop %v5403
        %v5408 = vmul.f32 %v5385, %v5404
        %v5409 = vmul.f32 %v5387, %v5405
        %v5410 = vmul.f32 %v5389, %v5406
        %v5411 = vmul.f32 %v5391, %v5407
        %5414 = vrot.lane.b32.xlu0 %v5410, 16
        %v5415 = vpop.permute.xlu0 %5414
        %5416 = vrot.lane.b32.xlu0 %v5411, 16
        %v5417 = vpop.permute.xlu0 %5416
        %v5420 = vsel %vm495, %v5408, %v5415
        %v5421 = vsel %vm495, %v5409, %v5417
        %5422 = vrot.lane.b32.xlu0 %v4539, 112
        %v5423 = vpop.permute.xlu0 %5422
        %5424 = vrot.lane.b32.xlu0 %v4544, 112
        %v5425 = vpop.permute.xlu0 %5424
        %v5429 = vsel %vm554, %v5420, 0
        %v5432 = vsel %vm554, %v5421, 0
        %5434 = vmatprep.subr.mxu0 0.0
        %5435 = vmatpush1.msra.mxu0 0.0
        %5436 = vmatprep.subr.mxu0 0.0
        %5437 = vmatpush1.msra.mxu0 0.0
        %5438 = vmatprep.subr.mxu0 0.0
        %5439 = vmatpush1.msra.mxu0 0.0
        %5440 = vmatprep.subr.mxu0 0.0
        %5441 = vmatpush1.msra.mxu0 0.0
        %5442 = vmatprep.subr.mxu0 0.0
        %5443 = vmatpush1.msra.mxu0 0.0
        %5444 = vmatprep.subr.mxu0 0.0
        %5445 = vmatpush1.msra.mxu0 0.0
        %5446 = vmatprep.subr.mxu0 0.0
        %5447 = vmatpush1.msra.mxu0 0.0
        %5448 = vmatprep.subr.mxu0 0.0
        %5449 = vmatpush1.msra.mxu0 0.0
        %5450 = vmatprep.subr.mxu0 0.0
        %5451 = vmatpush1.msra.mxu0 0.0
        %5452 = vmatprep.subr.mxu0 0.0
        %5453 = vmatpush1.msra.mxu0 0.0
        %5454 = vmatprep.subr.mxu0 0.0
        %5455 = vmatpush1.msra.mxu0 0.0
        %5456 = vmatprep.subr.mxu0 0.0
        %5457 = vmatpush1.msra.mxu0 0.0
        %5458 = vmatprep.subr.mxu0 0.0
        %5459 = vmatpush1.msra.mxu0 %v5425
        %5460 = vmatprep.subr.mxu0 0.0
        %5461 = vmatpush1.msra.mxu0 %v5423
        %5462 = vmatprep.subr.mxu0 0.0
        %5463 = vmatpush1.msra.mxu0 %v4544
        %5464 = vmatprep.subr.mxu0 0.0
        %5465 = vmatpush1.msra.mxu0 %v4539
        %5466 = vmatprep.subr.mxu0 0.0
        %5467 = vmatpush2.msra.mxu0 0.0
        %5468 = vmatprep.subr.mxu0 0.0
        %5469 = vmatpush2.msra.mxu0 0.0
        %5470 = vmatprep.subr.mxu0 0.0
        %5471 = vmatpush2.msra.mxu0 0.0
        %5472 = vmatprep.subr.mxu0 0.0
        %5473 = vmatpush2.msra.mxu0 0.0
        %5474 = vmatprep.subr.mxu0 0.0
        %5475 = vmatpush2.msra.mxu0 0.0
        %5476 = vmatprep.subr.mxu0 0.0
        %5477 = vmatpush2.msra.mxu0 0.0
        %5478 = vmatprep.subr.mxu0 0.0
        %5479 = vmatpush2.msra.mxu0 0.0
        %5480 = vmatprep.subr.mxu0 0.0
        %5481 = vmatpush2.msra.mxu0 0.0
        %5482 = vmatprep.subr.mxu0 0.0
        %5483 = vmatpush2.msra.mxu0 0.0
        %5484 = vmatprep.subr.mxu0 0.0
        %5485 = vmatpush2.msra.mxu0 0.0
        %5486 = vmatprep.subr.mxu0 0.0
        %5487 = vmatpush2.msra.mxu0 0.0
        %5488 = vmatprep.subr.mxu0 0.0
        %5489 = vmatpush2.msra.mxu0 0.0
        %5490 = vmatprep.subr.mxu0 0.0
        %5491 = vmatpush2.msra.mxu0 0.0
        %5492 = vmatprep.subr.mxu0 0.0
        %5493 = vmatpush2.msra.mxu0 0.0
        %5494 = vmatprep.subr.mxu0 0.0
        %5495 = vmatpush2.msra.mxu0 0.0
        %5496 = vmatprep.subr.mxu0 0.0
        %5497 = vmatpush2.msra.mxu0 0.0
        %5498 = vmatprep.mubr.f32.mxu0 0.0
        %5499 = vmatmul.mubr.f32.gmra.mxu0 %v5429
        %v5500 = vpop.f32.mrf.mxu0
        %v5501 = vadd.f32 0.0, %v5500
        %v5502 = vpop.f32.mrf.mxu0
        %5503 = vmatprep.mubr.f32.mxu0 0.0
        %5504 = vmatmul.mubr.f32.gmra.mxu0 %v5432
        %v5505 = vpop.f32.mrf.mxu0
        %v5506 = vadd.f32 0.0, %v5505
        %v5507 = vpop.f32.mrf.mxu0
        %5508 = vdwg.mxu0
        %v5509 = vmul.f32 %v5501, 0.5
        %v5510 = vmul.f32 %v5506, 0.5
        %5513 = vrot.lane.b32.xlu0 %v4549, 96
        %v5514 = vpop.permute.xlu0 %5513
        %5515 = vrot.lane.b32.xlu0 %v4554, 96
        %v5516 = vpop.permute.xlu0 %5515
        %5519 = vxpose.xlu0.b32.start [1/16] %v5514, 128
        %5520 = vxpose.xlu0.b32.cont [2/16] %v5516, 128
        %5521 = vxpose.xlu0.b32.cont [3/16] 0.0, 128
        %5522 = vxpose.xlu0.b32.cont [4/16] 0.0, 128
        %5523 = vxpose.xlu0.b32.cont [5/16] 0.0, 128
        %5524 = vxpose.xlu0.b32.cont [6/16] 0.0, 128
        %5525 = vxpose.xlu0.b32.cont [7/16] 0.0, 128
        %5526 = vxpose.xlu0.b32.cont [8/16] 0.0, 128
        %5527 = vxpose.xlu0.b32.cont [9/16] 0.0, 128
        %5528 = vxpose.xlu0.b32.cont [10/16] 0.0, 128
        %5529 = vxpose.xlu0.b32.cont [11/16] 0.0, 128
        %5530 = vxpose.xlu0.b32.cont [12/16] 0.0, 128
        %5531 = vxpose.xlu0.b32.cont [13/16] 0.0, 128
        %5532 = vxpose.xlu0.b32.cont [14/16] 0.0, 128
        %5533 = vxpose.xlu0.b32.cont [15/16] 0.0, 128
        %5534 = vxpose.xlu0.b32.end [16/16] 0.0, 128
        %v5535 = vpop.trf.xlu0
        %v5536 = vpop.trf.xlu0
        %v5537 = vpop.trf.xlu0
        %v5538 = vpop.trf.xlu0
        %v5539 = vpop.trf.xlu0
        %v5540 = vpop.trf.xlu0
        %v5541 = vpop.trf.xlu0
        %v5542 = vpop.trf.xlu0
        %v5543 = vpop.trf.xlu0
        %v5544 = vpop.trf.xlu0
        %v5545 = vpop.trf.xlu0
        %v5546 = vpop.trf.xlu0
        %v5547 = vpop.trf.xlu0
        %v5548 = vpop.trf.xlu0
        %v5549 = vpop.trf.xlu0
        %v5550 = vpop.trf.xlu0
        %v5551 = vlaneseq
        %v5552 = vshrl.u32 %v5551, 7
        %v5553 = vsub.s32 0, %v5552
        %v5554 = vrot.slane %v5535, %v5553
        %v5555 = vlaneseq
        %v5556 = vshrl.u32 %v5555, 7
        %v5557 = vsub.s32 1, %v5556
        %v5558 = vrot.slane %v5535, %v5557
        %5559 = vrot.lane.b32.xlu0 %v4549, 127
        %v5560 = vpop.permute.xlu0 %5559
        %5561 = vrot.lane.b32.xlu0 %v4554, 127
        %v5562 = vpop.permute.xlu0 %5561
        %5563 = vset.pattern.permute.xlu0 34
        %5564 = vperm.xlu0 %5563, %v4549
        %v5565 = vpop.permute.xlu0 %5564
        %5567 = vset.pattern.permute.xlu0 34
        %5568 = vperm.xlu0 %5567, %v4554
        %v5569 = vpop.permute.xlu0 %5568
        %5571 = vset.pattern.permute.xlu0 34
        %5572 = vperm.xlu0 %5571, %v5560
        %v5573 = vpop.permute.xlu0 %5572
        %5575 = vset.pattern.permute.xlu0 34
        %5576 = vperm.xlu0 %5575, %v5562
        %v5577 = vpop.permute.xlu0 %5576
        %v5579 = vadd.f32 %v5554, %v5565
        %v5580 = vadd.f32 %v5554, %v5569
        %v5581 = vadd.f32 %v5558, %v5573
        %v5582 = vadd.f32 %v5558, %v5577
        %vm5583 = vcmp.gt.f32.partialorder %v5579, 0.0
        %vm5584 = vcmp.gt.f32.partialorder %v5580, 0.0
        %vm5585 = vcmp.gt.f32.partialorder %v5581, 0.0
        %vm5586 = vcmp.gt.f32.partialorder %v5582, 0.0
        %v5587 = vmul.f32 %v5579, 0.2
        %v5588 = vmul.f32 %v5580, 0.2
        %v5589 = vmul.f32 %v5581, 0.2
        %v5590 = vmul.f32 %v5582, 0.2
        %v5591 = vsel %vm5583, %v5579, %v5587
        %v5592 = vsel %vm5584, %v5580, %v5588
        %v5593 = vsel %vm5585, %v5581, %v5589
        %v5594 = vsel %vm5586, %v5582, %v5590
        %v5595 = vadd.f32 %v5591, %v1363
        %v5596 = vadd.f32 %v5592, %v1364
        %v5597 = vadd.f32 %v5593, %v1363
        %v5598 = vadd.f32 %v5594, %v1364
        %v5599 = vsel %vm495, %v5595, -inf
        %5600 = vmax.xlane.f32.xlu0 %v5599
        %v5601 = vpop.xlane.xlu0 %5600
        %v5602 = vsel %vm495, %v5596, -inf
        %5603 = vmax.xlane.f32.xlu0 %v5602
        %v5604 = vpop.xlane.xlu0 %5603
        %v5605 = vsel %vm495, %v5597, -inf
        %5606 = vmax.xlane.f32.xlu0 %v5605
        %v5607 = vpop.xlane.xlu0 %5606
        %v5608 = vsel %vm495, %v5598, -inf
        %5609 = vmax.xlane.f32.xlu0 %v5608
        %v5610 = vpop.xlane.xlu0 %5609
        %v5611 = vsub.f32 %v5595, %v5601
        %v5612 = vsub.f32 %v5596, %v5604
        %v5613 = vsub.f32 %v5597, %v5607
        %v5614 = vsub.f32 %v5598, %v5610
        %v5615 = vmul.f32 %v5611, 1.442695
        %v5616 = vpow.pop %v5615
        %v5617 = vmul.f32 %v5612, 1.442695
        %v5618 = vpow.pop %v5617
        %v5619 = vmul.f32 %v5613, 1.442695
        %v5620 = vpow.pop %v5619
        %v5621 = vmul.f32 %v5614, 1.442695
        %v5622 = vpow.pop %v5621
        %v5623 = vsel %vm495, %v5616, 0.0
        %5624 = vadd.xlane.f32.xlu0 %v5623
        %v5625 = vpop.xlane.xlu0 %5624
        %v5626 = vsel %vm495, %v5618, 0.0
        %5627 = vadd.xlane.f32.xlu0 %v5626
        %v5628 = vpop.xlane.xlu0 %5627
        %v5629 = vsel %vm495, %v5620, 0.0
        %5630 = vadd.xlane.f32.xlu0 %v5629
        %v5631 = vpop.xlane.xlu0 %5630
        %v5632 = vsel %vm495, %v5622, 0.0
        %5633 = vadd.xlane.f32.xlu0 %v5632
        %v5634 = vpop.xlane.xlu0 %5633
        %v5635 = vrcp.pop %v5625
        %v5636 = vrcp.pop %v5628
        %v5637 = vrcp.pop %v5631
        %v5638 = vrcp.pop %v5634
        %v5639 = vmul.f32 %v5616, %v5635
        %v5640 = vmul.f32 %v5618, %v5636
        %v5641 = vmul.f32 %v5620, %v5637
        %v5642 = vmul.f32 %v5622, %v5638
        %5645 = vrot.lane.b32.xlu0 %v5641, 16
        %v5646 = vpop.permute.xlu0 %5645
        %5647 = vrot.lane.b32.xlu0 %v5642, 16
        %v5648 = vpop.permute.xlu0 %5647
        %v5651 = vsel %vm495, %v5639, %v5646
        %v5652 = vsel %vm495, %v5640, %v5648
        %5653 = vrot.lane.b32.xlu0 %v4549, 112
        %v5654 = vpop.permute.xlu0 %5653
        %5655 = vrot.lane.b32.xlu0 %v4554, 112
        %v5656 = vpop.permute.xlu0 %5655
        %v5660 = vsel %vm554, %v5651, 0
        %v5663 = vsel %vm554, %v5652, 0
        %5665 = vmatprep.subr.mxu0 0.0
        %5666 = vmatpush1.msra.mxu0 0.0
        %5667 = vmatprep.subr.mxu0 0.0
        %5668 = vmatpush1.msra.mxu0 0.0
        %5669 = vmatprep.subr.mxu0 0.0
        %5670 = vmatpush1.msra.mxu0 0.0
        %5671 = vmatprep.subr.mxu0 0.0
        %5672 = vmatpush1.msra.mxu0 0.0
        %5673 = vmatprep.subr.mxu0 0.0
        %5674 = vmatpush1.msra.mxu0 0.0
        %5675 = vmatprep.subr.mxu0 0.0
        %5676 = vmatpush1.msra.mxu0 0.0
        %5677 = vmatprep.subr.mxu0 0.0
        %5678 = vmatpush1.msra.mxu0 0.0
        %5679 = vmatprep.subr.mxu0 0.0
        %5680 = vmatpush1.msra.mxu0 0.0
        %5681 = vmatprep.subr.mxu0 0.0
        %5682 = vmatpush1.msra.mxu0 0.0
        %5683 = vmatprep.subr.mxu0 0.0
        %5684 = vmatpush1.msra.mxu0 0.0
        %5685 = vmatprep.subr.mxu0 0.0
        %5686 = vmatpush1.msra.mxu0 0.0
        %5687 = vmatprep.subr.mxu0 0.0
        %5688 = vmatpush1.msra.mxu0 0.0
        %5689 = vmatprep.subr.mxu0 0.0
        %5690 = vmatpush1.msra.mxu0 %v5656
        %5691 = vmatprep.subr.mxu0 0.0
        %5692 = vmatpush1.msra.mxu0 %v5654
        %5693 = vmatprep.subr.mxu0 0.0
        %5694 = vmatpush1.msra.mxu0 %v4554
        %5695 = vmatprep.subr.mxu0 0.0
        %5696 = vmatpush1.msra.mxu0 %v4549
        %5697 = vmatprep.subr.mxu0 0.0
        %5698 = vmatpush2.msra.mxu0 0.0
        %5699 = vmatprep.subr.mxu0 0.0
        %5700 = vmatpush2.msra.mxu0 0.0
        %5701 = vmatprep.subr.mxu0 0.0
        %5702 = vmatpush2.msra.mxu0 0.0
        %5703 = vmatprep.subr.mxu0 0.0
        %5704 = vmatpush2.msra.mxu0 0.0
        %5705 = vmatprep.subr.mxu0 0.0
        %5706 = vmatpush2.msra.mxu0 0.0
        %5707 = vmatprep.subr.mxu0 0.0
        %5708 = vmatpush2.msra.mxu0 0.0
        %5709 = vmatprep.subr.mxu0 0.0
        %5710 = vmatpush2.msra.mxu0 0.0
        %5711 = vmatprep.subr.mxu0 0.0
        %5712 = vmatpush2.msra.mxu0 0.0
        %5713 = vmatprep.subr.mxu0 0.0
        %5714 = vmatpush2.msra.mxu0 0.0
        %5715 = vmatprep.subr.mxu0 0.0
        %5716 = vmatpush2.msra.mxu0 0.0
        %5717 = vmatprep.subr.mxu0 0.0
        %5718 = vmatpush2.msra.mxu0 0.0
        %5719 = vmatprep.subr.mxu0 0.0
        %5720 = vmatpush2.msra.mxu0 0.0
        %5721 = vmatprep.subr.mxu0 0.0
        %5722 = vmatpush2.msra.mxu0 0.0
        %5723 = vmatprep.subr.mxu0 0.0
        %5724 = vmatpush2.msra.mxu0 0.0
        %5725 = vmatprep.subr.mxu0 0.0
        %5726 = vmatpush2.msra.mxu0 0.0
        %5727 = vmatprep.subr.mxu0 0.0
        %5728 = vmatpush2.msra.mxu0 0.0
        %5729 = vmatprep.mubr.f32.mxu0 0.0
        %5730 = vmatmul.mubr.f32.gmra.mxu0 %v5660
        %v5731 = vpop.f32.mrf.mxu0
        %v5732 = vadd.f32 0.0, %v5731
        %v5733 = vpop.f32.mrf.mxu0
        %5734 = vmatprep.mubr.f32.mxu0 0.0
        %5735 = vmatmul.mubr.f32.gmra.mxu0 %v5663
        %v5736 = vpop.f32.mrf.mxu0
        %v5737 = vadd.f32 0.0, %v5736
        %v5738 = vpop.f32.mrf.mxu0
        %5739 = vdwg.mxu0
        %v5740 = vmul.f32 %v5732, 0.5
        %v5741 = vmul.f32 %v5737, 0.5
        %5744 = vrot.lane.b32.xlu0 %v4559, 96
        %v5745 = vpop.permute.xlu0 %5744
        %5746 = vrot.lane.b32.xlu0 %v4564, 96
        %v5747 = vpop.permute.xlu0 %5746
        %5750 = vxpose.xlu0.b32.start [1/16] %v5745, 128
        %5751 = vxpose.xlu0.b32.cont [2/16] %v5747, 128
        %5752 = vxpose.xlu0.b32.cont [3/16] 0.0, 128
        %5753 = vxpose.xlu0.b32.cont [4/16] 0.0, 128
        %5754 = vxpose.xlu0.b32.cont [5/16] 0.0, 128
        %5755 = vxpose.xlu0.b32.cont [6/16] 0.0, 128
        %5756 = vxpose.xlu0.b32.cont [7/16] 0.0, 128
        %5757 = vxpose.xlu0.b32.cont [8/16] 0.0, 128
        %5758 = vxpose.xlu0.b32.cont [9/16] 0.0, 128
        %5759 = vxpose.xlu0.b32.cont [10/16] 0.0, 128
        %5760 = vxpose.xlu0.b32.cont [11/16] 0.0, 128
        %5761 = vxpose.xlu0.b32.cont [12/16] 0.0, 128
        %5762 = vxpose.xlu0.b32.cont [13/16] 0.0, 128
        %5763 = vxpose.xlu0.b32.cont [14/16] 0.0, 128
        %5764 = vxpose.xlu0.b32.cont [15/16] 0.0, 128
        %5765 = vxpose.xlu0.b32.end [16/16] 0.0, 128
        %v5766 = vpop.trf.xlu0
        %v5767 = vpop.trf.xlu0
        %v5768 = vpop.trf.xlu0
        %v5769 = vpop.trf.xlu0
        %v5770 = vpop.trf.xlu0
        %v5771 = vpop.trf.xlu0
        %v5772 = vpop.trf.xlu0
        %v5773 = vpop.trf.xlu0
        %v5774 = vpop.trf.xlu0
        %v5775 = vpop.trf.xlu0
        %v5776 = vpop.trf.xlu0
        %v5777 = vpop.trf.xlu0
        %v5778 = vpop.trf.xlu0
        %v5779 = vpop.trf.xlu0
        %v5780 = vpop.trf.xlu0
        %v5781 = vpop.trf.xlu0
        %v5782 = vlaneseq
        %v5783 = vshrl.u32 %v5782, 7
        %v5784 = vsub.s32 0, %v5783
        %v5785 = vrot.slane %v5766, %v5784
        %v5786 = vlaneseq
        %v5787 = vshrl.u32 %v5786, 7
        %v5788 = vsub.s32 1, %v5787
        %v5789 = vrot.slane %v5766, %v5788
        %5790 = vrot.lane.b32.xlu0 %v4559, 127
        %v5791 = vpop.permute.xlu0 %5790
        %5792 = vrot.lane.b32.xlu0 %v4564, 127
        %v5793 = vpop.permute.xlu0 %5792
        %5794 = vset.pattern.permute.xlu0 34
        %5795 = vperm.xlu0 %5794, %v4559
        %v5796 = vpop.permute.xlu0 %5795
        %5798 = vset.pattern.permute.xlu0 34
        %5799 = vperm.xlu0 %5798, %v4564
        %v5800 = vpop.permute.xlu0 %5799
        %5802 = vset.pattern.permute.xlu0 34
        %5803 = vperm.xlu0 %5802, %v5791
        %v5804 = vpop.permute.xlu0 %5803
        %5806 = vset.pattern.permute.xlu0 34
        %5807 = vperm.xlu0 %5806, %v5793
        %v5808 = vpop.permute.xlu0 %5807
        %v5810 = vadd.f32 %v5785, %v5796
        %v5811 = vadd.f32 %v5785, %v5800
        %v5812 = vadd.f32 %v5789, %v5804
        %v5813 = vadd.f32 %v5789, %v5808
        %vm5814 = vcmp.gt.f32.partialorder %v5810, 0.0
        %vm5815 = vcmp.gt.f32.partialorder %v5811, 0.0
        %vm5816 = vcmp.gt.f32.partialorder %v5812, 0.0
        %vm5817 = vcmp.gt.f32.partialorder %v5813, 0.0
        %v5818 = vmul.f32 %v5810, 0.2
        %v5819 = vmul.f32 %v5811, 0.2
        %v5820 = vmul.f32 %v5812, 0.2
        %v5821 = vmul.f32 %v5813, 0.2
        %v5822 = vsel %vm5814, %v5810, %v5818
        %v5823 = vsel %vm5815, %v5811, %v5819
        %v5824 = vsel %vm5816, %v5812, %v5820
        %v5825 = vsel %vm5817, %v5813, %v5821
        %v5826 = vadd.f32 %v5822, %v1592
        %v5827 = vadd.f32 %v5823, %v1593
        %v5828 = vadd.f32 %v5824, %v1592
        %v5829 = vadd.f32 %v5825, %v1593
        %v5830 = vsel %vm495, %v5826, -inf
        %5831 = vmax.xlane.f32.xlu0 %v5830
        %v5832 = vpop.xlane.xlu0 %5831
        %v5833 = vsel %vm495, %v5827, -inf
        %5834 = vmax.xlane.f32.xlu0 %v5833
        %v5835 = vpop.xlane.xlu0 %5834
        %v5836 = vsel %vm495, %v5828, -inf
        %5837 = vmax.xlane.f32.xlu0 %v5836
        %v5838 = vpop.xlane.xlu0 %5837
        %v5839 = vsel %vm495, %v5829, -inf
        %5840 = vmax.xlane.f32.xlu0 %v5839
        %v5841 = vpop.xlane.xlu0 %5840
        %v5842 = vsub.f32 %v5826, %v5832
        %v5843 = vsub.f32 %v5827, %v5835
        %v5844 = vsub.f32 %v5828, %v5838
        %v5845 = vsub.f32 %v5829, %v5841
        %v5846 = vmul.f32 %v5842, 1.442695
        %v5847 = vpow.pop %v5846
        %v5848 = vmul.f32 %v5843, 1.442695
        %v5849 = vpow.pop %v5848
        %v5850 = vmul.f32 %v5844, 1.442695
        %v5851 = vpow.pop %v5850
        %v5852 = vmul.f32 %v5845, 1.442695
        %v5853 = vpow.pop %v5852
        %v5854 = vsel %vm495, %v5847, 0.0
        %5855 = vadd.xlane.f32.xlu0 %v5854
        %v5856 = vpop.xlane.xlu0 %5855
        %v5857 = vsel %vm495, %v5849, 0.0
        %5858 = vadd.xlane.f32.xlu0 %v5857
        %v5859 = vpop.xlane.xlu0 %5858
        %v5860 = vsel %vm495, %v5851, 0.0
        %5861 = vadd.xlane.f32.xlu0 %v5860
        %v5862 = vpop.xlane.xlu0 %5861
        %v5863 = vsel %vm495, %v5853, 0.0
        %5864 = vadd.xlane.f32.xlu0 %v5863
        %v5865 = vpop.xlane.xlu0 %5864
        %v5866 = vrcp.pop %v5856
        %v5867 = vrcp.pop %v5859
        %v5868 = vrcp.pop %v5862
        %v5869 = vrcp.pop %v5865
        %v5870 = vmul.f32 %v5847, %v5866
        %v5871 = vmul.f32 %v5849, %v5867
        %v5872 = vmul.f32 %v5851, %v5868
        %v5873 = vmul.f32 %v5853, %v5869
        %5876 = vrot.lane.b32.xlu0 %v5872, 16
        %v5877 = vpop.permute.xlu0 %5876
        %5878 = vrot.lane.b32.xlu0 %v5873, 16
        %v5879 = vpop.permute.xlu0 %5878
        %v5882 = vsel %vm495, %v5870, %v5877
        %v5883 = vsel %vm495, %v5871, %v5879
        %5884 = vrot.lane.b32.xlu0 %v4559, 112
        %v5885 = vpop.permute.xlu0 %5884
        %5886 = vrot.lane.b32.xlu0 %v4564, 112
        %v5887 = vpop.permute.xlu0 %5886
        %v5891 = vsel %vm554, %v5882, 0
        %v5894 = vsel %vm554, %v5883, 0
        %5896 = vmatprep.subr.mxu0 0.0
        %5897 = vmatpush1.msra.mxu0 0.0
        %5898 = vmatprep.subr.mxu0 0.0
        %5899 = vmatpush1.msra.mxu0 0.0
        %5900 = vmatprep.subr.mxu0 0.0
        %5901 = vmatpush1.msra.mxu0 0.0
        %5902 = vmatprep.subr.mxu0 0.0
        %5903 = vmatpush1.msra.mxu0 0.0
        %5904 = vmatprep.subr.mxu0 0.0
        %5905 = vmatpush1.msra.mxu0 0.0
        %5906 = vmatprep.subr.mxu0 0.0
        %5907 = vmatpush1.msra.mxu0 0.0
        %5908 = vmatprep.subr.mxu0 0.0
        %5909 = vmatpush1.msra.mxu0 0.0
        %5910 = vmatprep.subr.mxu0 0.0
        %5911 = vmatpush1.msra.mxu0 0.0
        %5912 = vmatprep.subr.mxu0 0.0
        %5913 = vmatpush1.msra.mxu0 0.0
        %5914 = vmatprep.subr.mxu0 0.0
        %5915 = vmatpush1.msra.mxu0 0.0
        %5916 = vmatprep.subr.mxu0 0.0
        %5917 = vmatpush1.msra.mxu0 0.0
        %5918 = vmatprep.subr.mxu0 0.0
        %5919 = vmatpush1.msra.mxu0 0.0
        %5920 = vmatprep.subr.mxu0 0.0
        %5921 = vmatpush1.msra.mxu0 %v5887
        %5922 = vmatprep.subr.mxu0 0.0
        %5923 = vmatpush1.msra.mxu0 %v5885
        %5924 = vmatprep.subr.mxu0 0.0
        %5925 = vmatpush1.msra.mxu0 %v4564
        %5926 = vmatprep.subr.mxu0 0.0
        %5927 = vmatpush1.msra.mxu0 %v4559
        %5928 = vmatprep.subr.mxu0 0.0
        %5929 = vmatpush2.msra.mxu0 0.0
        %5930 = vmatprep.subr.mxu0 0.0
        %5931 = vmatpush2.msra.mxu0 0.0
        %5932 = vmatprep.subr.mxu0 0.0
        %5933 = vmatpush2.msra.mxu0 0.0
        %5934 = vmatprep.subr.mxu0 0.0
        %5935 = vmatpush2.msra.mxu0 0.0
        %5936 = vmatprep.subr.mxu0 0.0
        %5937 = vmatpush2.msra.mxu0 0.0
        %5938 = vmatprep.subr.mxu0 0.0
        %5939 = vmatpush2.msra.mxu0 0.0
        %5940 = vmatprep.subr.mxu0 0.0
        %5941 = vmatpush2.msra.mxu0 0.0
        %5942 = vmatprep.subr.mxu0 0.0
        %5943 = vmatpush2.msra.mxu0 0.0
        %5944 = vmatprep.subr.mxu0 0.0
        %5945 = vmatpush2.msra.mxu0 0.0
        %5946 = vmatprep.subr.mxu0 0.0
        %5947 = vmatpush2.msra.mxu0 0.0
        %5948 = vmatprep.subr.mxu0 0.0
        %5949 = vmatpush2.msra.mxu0 0.0
        %5950 = vmatprep.subr.mxu0 0.0
        %5951 = vmatpush2.msra.mxu0 0.0
        %5952 = vmatprep.subr.mxu0 0.0
        %5953 = vmatpush2.msra.mxu0 0.0
        %5954 = vmatprep.subr.mxu0 0.0
        %5955 = vmatpush2.msra.mxu0 0.0
        %5956 = vmatprep.subr.mxu0 0.0
        %5957 = vmatpush2.msra.mxu0 0.0
        %5958 = vmatprep.subr.mxu0 0.0
        %5959 = vmatpush2.msra.mxu0 0.0
        %5960 = vmatprep.mubr.f32.mxu0 0.0
        %5961 = vmatmul.mubr.f32.gmra.mxu0 %v5891
        %v5962 = vpop.f32.mrf.mxu0
        %v5963 = vadd.f32 0.0, %v5962
        %v5964 = vpop.f32.mrf.mxu0
        %5965 = vmatprep.mubr.f32.mxu0 0.0
        %5966 = vmatmul.mubr.f32.gmra.mxu0 %v5894
        %v5967 = vpop.f32.mrf.mxu0
        %v5968 = vadd.f32 0.0, %v5967
        %v5969 = vpop.f32.mrf.mxu0
        %5970 = vdwg.mxu0
        %v5971 = vmul.f32 %v5963, 0.5
        %v5972 = vmul.f32 %v5968, 0.5
        %5975 = vrot.lane.b32.xlu0 %v4569, 96
        %v5976 = vpop.permute.xlu0 %5975
        %5977 = vrot.lane.b32.xlu0 %v4574, 96
        %v5978 = vpop.permute.xlu0 %5977
        %5981 = vxpose.xlu0.b32.start [1/16] %v5976, 128
        %5982 = vxpose.xlu0.b32.cont [2/16] %v5978, 128
        %5983 = vxpose.xlu0.b32.cont [3/16] 0.0, 128
        %5984 = vxpose.xlu0.b32.cont [4/16] 0.0, 128
        %5985 = vxpose.xlu0.b32.cont [5/16] 0.0, 128
        %5986 = vxpose.xlu0.b32.cont [6/16] 0.0, 128
        %5987 = vxpose.xlu0.b32.cont [7/16] 0.0, 128
        %5988 = vxpose.xlu0.b32.cont [8/16] 0.0, 128
        %5989 = vxpose.xlu0.b32.cont [9/16] 0.0, 128
        %5990 = vxpose.xlu0.b32.cont [10/16] 0.0, 128
        %5991 = vxpose.xlu0.b32.cont [11/16] 0.0, 128
        %5992 = vxpose.xlu0.b32.cont [12/16] 0.0, 128
        %5993 = vxpose.xlu0.b32.cont [13/16] 0.0, 128
        %5994 = vxpose.xlu0.b32.cont [14/16] 0.0, 128
        %5995 = vxpose.xlu0.b32.cont [15/16] 0.0, 128
        %5996 = vxpose.xlu0.b32.end [16/16] 0.0, 128
        %v5997 = vpop.trf.xlu0
        %v5998 = vpop.trf.xlu0
        %v5999 = vpop.trf.xlu0
        %v6000 = vpop.trf.xlu0
        %v6001 = vpop.trf.xlu0
        %v6002 = vpop.trf.xlu0
        %v6003 = vpop.trf.xlu0
        %v6004 = vpop.trf.xlu0
        %v6005 = vpop.trf.xlu0
        %v6006 = vpop.trf.xlu0
        %v6007 = vpop.trf.xlu0
        %v6008 = vpop.trf.xlu0
        %v6009 = vpop.trf.xlu0
        %v6010 = vpop.trf.xlu0
        %v6011 = vpop.trf.xlu0
        %v6012 = vpop.trf.xlu0
        %v6013 = vlaneseq
        %v6014 = vshrl.u32 %v6013, 7
        %v6015 = vsub.s32 0, %v6014
        %v6016 = vrot.slane %v5997, %v6015
        %v6017 = vlaneseq
        %v6018 = vshrl.u32 %v6017, 7
        %v6019 = vsub.s32 1, %v6018
        %v6020 = vrot.slane %v5997, %v6019
        %6021 = vrot.lane.b32.xlu0 %v4569, 127
        %v6022 = vpop.permute.xlu0 %6021
        %6023 = vrot.lane.b32.xlu0 %v4574, 127
        %v6024 = vpop.permute.xlu0 %6023
        %6025 = vset.pattern.permute.xlu0 34
        %6026 = vperm.xlu0 %6025, %v4569
        %v6027 = vpop.permute.xlu0 %6026
        %6029 = vset.pattern.permute.xlu0 34
        %6030 = vperm.xlu0 %6029, %v4574
        %v6031 = vpop.permute.xlu0 %6030
        %6033 = vset.pattern.permute.xlu0 34
        %6034 = vperm.xlu0 %6033, %v6022
        %v6035 = vpop.permute.xlu0 %6034
        %6037 = vset.pattern.permute.xlu0 34
        %6038 = vperm.xlu0 %6037, %v6024
        %v6039 = vpop.permute.xlu0 %6038
        %v6041 = vadd.f32 %v6016, %v6027
        %v6042 = vadd.f32 %v6016, %v6031
        %v6043 = vadd.f32 %v6020, %v6035
        %v6044 = vadd.f32 %v6020, %v6039
        %vm6045 = vcmp.gt.f32.partialorder %v6041, 0.0
        %vm6046 = vcmp.gt.f32.partialorder %v6042, 0.0
        %vm6047 = vcmp.gt.f32.partialorder %v6043, 0.0
        %vm6048 = vcmp.gt.f32.partialorder %v6044, 0.0
        %v6049 = vmul.f32 %v6041, 0.2
        %v6050 = vmul.f32 %v6042, 0.2
        %v6051 = vmul.f32 %v6043, 0.2
        %v6052 = vmul.f32 %v6044, 0.2
        %v6053 = vsel %vm6045, %v6041, %v6049
        %v6054 = vsel %vm6046, %v6042, %v6050
        %v6055 = vsel %vm6047, %v6043, %v6051
        %v6056 = vsel %vm6048, %v6044, %v6052
        %v6057 = vadd.f32 %v6053, %v1821
        %v6058 = vadd.f32 %v6054, %v1822
        %v6059 = vadd.f32 %v6055, %v1821
        %v6060 = vadd.f32 %v6056, %v1822
        %v6061 = vsel %vm495, %v6057, -inf
        %6062 = vmax.xlane.f32.xlu0 %v6061
        %v6063 = vpop.xlane.xlu0 %6062
        %v6064 = vsel %vm495, %v6058, -inf
        %6065 = vmax.xlane.f32.xlu0 %v6064
        %v6066 = vpop.xlane.xlu0 %6065
        %v6067 = vsel %vm495, %v6059, -inf
        %6068 = vmax.xlane.f32.xlu0 %v6067
        %v6069 = vpop.xlane.xlu0 %6068
        %v6070 = vsel %vm495, %v6060, -inf
        %6071 = vmax.xlane.f32.xlu0 %v6070
        %v6072 = vpop.xlane.xlu0 %6071
        %v6073 = vsub.f32 %v6057, %v6063
        %v6074 = vsub.f32 %v6058, %v6066
        %v6075 = vsub.f32 %v6059, %v6069
        %v6076 = vsub.f32 %v6060, %v6072
        %v6077 = vmul.f32 %v6073, 1.442695
        %v6078 = vpow.pop %v6077
        %v6079 = vmul.f32 %v6074, 1.442695
        %v6080 = vpow.pop %v6079
        %v6081 = vmul.f32 %v6075, 1.442695
        %v6082 = vpow.pop %v6081
        %v6083 = vmul.f32 %v6076, 1.442695
        %v6084 = vpow.pop %v6083
        %v6085 = vsel %vm495, %v6078, 0.0
        %6086 = vadd.xlane.f32.xlu0 %v6085
        %v6087 = vpop.xlane.xlu0 %6086
        %v6088 = vsel %vm495, %v6080, 0.0
        %6089 = vadd.xlane.f32.xlu0 %v6088
        %v6090 = vpop.xlane.xlu0 %6089
        %v6091 = vsel %vm495, %v6082, 0.0
        %6092 = vadd.xlane.f32.xlu0 %v6091
        %v6093 = vpop.xlane.xlu0 %6092
        %v6094 = vsel %vm495, %v6084, 0.0
        %6095 = vadd.xlane.f32.xlu0 %v6094
        %v6096 = vpop.xlane.xlu0 %6095
        %v6097 = vrcp.pop %v6087
        %v6098 = vrcp.pop %v6090
        %v6099 = vrcp.pop %v6093
        %v6100 = vrcp.pop %v6096
        %v6101 = vmul.f32 %v6078, %v6097
        %v6102 = vmul.f32 %v6080, %v6098
        %v6103 = vmul.f32 %v6082, %v6099
        %v6104 = vmul.f32 %v6084, %v6100
        %6107 = vrot.lane.b32.xlu0 %v6103, 16
        %v6108 = vpop.permute.xlu0 %6107
        %6109 = vrot.lane.b32.xlu0 %v6104, 16
        %v6110 = vpop.permute.xlu0 %6109
        %v6113 = vsel %vm495, %v6101, %v6108
        %v6114 = vsel %vm495, %v6102, %v6110
        %6115 = vrot.lane.b32.xlu0 %v4569, 112
        %v6116 = vpop.permute.xlu0 %6115
        %6117 = vrot.lane.b32.xlu0 %v4574, 112
        %v6118 = vpop.permute.xlu0 %6117
        %v6122 = vsel %vm554, %v6113, 0
        %v6125 = vsel %vm554, %v6114, 0
        %6127 = vmatprep.subr.mxu0 0.0
        %6128 = vmatpush1.msra.mxu0 0.0
        %6129 = vmatprep.subr.mxu0 0.0
        %6130 = vmatpush1.msra.mxu0 0.0
        %6131 = vmatprep.subr.mxu0 0.0
        %6132 = vmatpush1.msra.mxu0 0.0
        %6133 = vmatprep.subr.mxu0 0.0
        %6134 = vmatpush1.msra.mxu0 0.0
        %6135 = vmatprep.subr.mxu0 0.0
        %6136 = vmatpush1.msra.mxu0 0.0
        %6137 = vmatprep.subr.mxu0 0.0
        %6138 = vmatpush1.msra.mxu0 0.0
        %6139 = vmatprep.subr.mxu0 0.0
        %6140 = vmatpush1.msra.mxu0 0.0
        %6141 = vmatprep.subr.mxu0 0.0
        %6142 = vmatpush1.msra.mxu0 0.0
        %6143 = vmatprep.subr.mxu0 0.0
        %6144 = vmatpush1.msra.mxu0 0.0
        %6145 = vmatprep.subr.mxu0 0.0
        %6146 = vmatpush1.msra.mxu0 0.0
        %6147 = vmatprep.subr.mxu0 0.0
        %6148 = vmatpush1.msra.mxu0 0.0
        %6149 = vmatprep.subr.mxu0 0.0
        %6150 = vmatpush1.msra.mxu0 0.0
        %6151 = vmatprep.subr.mxu0 0.0
        %6152 = vmatpush1.msra.mxu0 %v6118
        %6153 = vmatprep.subr.mxu0 0.0
        %6154 = vmatpush1.msra.mxu0 %v6116
        %6155 = vmatprep.subr.mxu0 0.0
        %6156 = vmatpush1.msra.mxu0 %v4574
        %6157 = vmatprep.subr.mxu0 0.0
        %6158 = vmatpush1.msra.mxu0 %v4569
        %6159 = vmatprep.subr.mxu0 0.0
        %6160 = vmatpush2.msra.mxu0 0.0
        %6161 = vmatprep.subr.mxu0 0.0
        %6162 = vmatpush2.msra.mxu0 0.0
        %6163 = vmatprep.subr.mxu0 0.0
        %6164 = vmatpush2.msra.mxu0 0.0
        %6165 = vmatprep.subr.mxu0 0.0
        %6166 = vmatpush2.msra.mxu0 0.0
        %6167 = vmatprep.subr.mxu0 0.0
        %6168 = vmatpush2.msra.mxu0 0.0
        %6169 = vmatprep.subr.mxu0 0.0
        %6170 = vmatpush2.msra.mxu0 0.0
        %6171 = vmatprep.subr.mxu0 0.0
        %6172 = vmatpush2.msra.mxu0 0.0
        %6173 = vmatprep.subr.mxu0 0.0
        %6174 = vmatpush2.msra.mxu0 0.0
        %6175 = vmatprep.subr.mxu0 0.0
        %6176 = vmatpush2.msra.mxu0 0.0
        %6177 = vmatprep.subr.mxu0 0.0
        %6178 = vmatpush2.msra.mxu0 0.0
        %6179 = vmatprep.subr.mxu0 0.0
        %6180 = vmatpush2.msra.mxu0 0.0
        %6181 = vmatprep.subr.mxu0 0.0
        %6182 = vmatpush2.msra.mxu0 0.0
        %6183 = vmatprep.subr.mxu0 0.0
        %6184 = vmatpush2.msra.mxu0 0.0
        %6185 = vmatprep.subr.mxu0 0.0
        %6186 = vmatpush2.msra.mxu0 0.0
        %6187 = vmatprep.subr.mxu0 0.0
        %6188 = vmatpush2.msra.mxu0 0.0
        %6189 = vmatprep.subr.mxu0 0.0
        %6190 = vmatpush2.msra.mxu0 0.0
        %6191 = vmatprep.mubr.f32.mxu0 0.0
        %6192 = vmatmul.mubr.f32.gmra.mxu0 %v6122
        %v6193 = vpop.f32.mrf.mxu0
        %v6194 = vadd.f32 0.0, %v6193
        %v6195 = vpop.f32.mrf.mxu0
        %6196 = vmatprep.mubr.f32.mxu0 0.0
        %6197 = vmatmul.mubr.f32.gmra.mxu0 %v6125
        %v6198 = vpop.f32.mrf.mxu0
        %v6199 = vadd.f32 0.0, %v6198
        %v6200 = vpop.f32.mrf.mxu0
        %6201 = vdwg.mxu0
        %v6202 = vmul.f32 %v6194, 0.5
        %v6203 = vmul.f32 %v6199, 0.5
        %6206 = vrot.lane.b32.xlu0 %v4579, 96
        %v6207 = vpop.permute.xlu0 %6206
        %6208 = vrot.lane.b32.xlu0 %v4584, 96
        %v6209 = vpop.permute.xlu0 %6208
        %6212 = vxpose.xlu0.b32.start [1/16] %v6207, 128
        %6213 = vxpose.xlu0.b32.cont [2/16] %v6209, 128
        %6214 = vxpose.xlu0.b32.cont [3/16] 0.0, 128
        %6215 = vxpose.xlu0.b32.cont [4/16] 0.0, 128
        %6216 = vxpose.xlu0.b32.cont [5/16] 0.0, 128
        %6217 = vxpose.xlu0.b32.cont [6/16] 0.0, 128
        %6218 = vxpose.xlu0.b32.cont [7/16] 0.0, 128
        %6219 = vxpose.xlu0.b32.cont [8/16] 0.0, 128
        %6220 = vxpose.xlu0.b32.cont [9/16] 0.0, 128
        %6221 = vxpose.xlu0.b32.cont [10/16] 0.0, 128
        %6222 = vxpose.xlu0.b32.cont [11/16] 0.0, 128
        %6223 = vxpose.xlu0.b32.cont [12/16] 0.0, 128
        %6224 = vxpose.xlu0.b32.cont [13/16] 0.0, 128
        %6225 = vxpose.xlu0.b32.cont [14/16] 0.0, 128
        %6226 = vxpose.xlu0.b32.cont [15/16] 0.0, 128
        %6227 = vxpose.xlu0.b32.end [16/16] 0.0, 128
        %v6228 = vpop.trf.xlu0
        %v6229 = vpop.trf.xlu0
        %v6230 = vpop.trf.xlu0
        %v6231 = vpop.trf.xlu0
        %v6232 = vpop.trf.xlu0
        %v6233 = vpop.trf.xlu0
        %v6234 = vpop.trf.xlu0
        %v6235 = vpop.trf.xlu0
        %v6236 = vpop.trf.xlu0
        %v6237 = vpop.trf.xlu0
        %v6238 = vpop.trf.xlu0
        %v6239 = vpop.trf.xlu0
        %v6240 = vpop.trf.xlu0
        %v6241 = vpop.trf.xlu0
        %v6242 = vpop.trf.xlu0
        %v6243 = vpop.trf.xlu0
        %v6244 = vlaneseq
        %v6245 = vshrl.u32 %v6244, 7
        %v6246 = vsub.s32 0, %v6245
        %v6247 = vrot.slane %v6228, %v6246
        %v6248 = vlaneseq
        %v6249 = vshrl.u32 %v6248, 7
        %v6250 = vsub.s32 1, %v6249
        %v6251 = vrot.slane %v6228, %v6250
        %6252 = vrot.lane.b32.xlu0 %v4579, 127
        %v6253 = vpop.permute.xlu0 %6252
        %6254 = vrot.lane.b32.xlu0 %v4584, 127
        %v6255 = vpop.permute.xlu0 %6254
        %6256 = vset.pattern.permute.xlu0 34
        %6257 = vperm.xlu0 %6256, %v4579
        %v6258 = vpop.permute.xlu0 %6257
        %6260 = vset.pattern.permute.xlu0 34
        %6261 = vperm.xlu0 %6260, %v4584
        %v6262 = vpop.permute.xlu0 %6261
        %6264 = vset.pattern.permute.xlu0 34
        %6265 = vperm.xlu0 %6264, %v6253
        %v6266 = vpop.permute.xlu0 %6265
        %6268 = vset.pattern.permute.xlu0 34
        %6269 = vperm.xlu0 %6268, %v6255
        %v6270 = vpop.permute.xlu0 %6269
        %v6272 = vadd.f32 %v6247, %v6258
        %v6273 = vadd.f32 %v6247, %v6262
        %v6274 = vadd.f32 %v6251, %v6266
        %v6275 = vadd.f32 %v6251, %v6270
        %vm6276 = vcmp.gt.f32.partialorder %v6272, 0.0
        %vm6277 = vcmp.gt.f32.partialorder %v6273, 0.0
        %vm6278 = vcmp.gt.f32.partialorder %v6274, 0.0
        %vm6279 = vcmp.gt.f32.partialorder %v6275, 0.0
        %v6280 = vmul.f32 %v6272, 0.2
        %v6281 = vmul.f32 %v6273, 0.2
        %v6282 = vmul.f32 %v6274, 0.2
        %v6283 = vmul.f32 %v6275, 0.2
        %v6284 = vsel %vm6276, %v6272, %v6280
        %v6285 = vsel %vm6277, %v6273, %v6281
        %v6286 = vsel %vm6278, %v6274, %v6282
        %v6287 = vsel %vm6279, %v6275, %v6283
        %v6288 = vadd.f32 %v6284, %v2050
        %v6289 = vadd.f32 %v6285, %v2051
        %v6290 = vadd.f32 %v6286, %v2050
        %v6291 = vadd.f32 %v6287, %v2051
        %v6292 = vsel %vm495, %v6288, -inf
        %6293 = vmax.xlane.f32.xlu0 %v6292
        %v6294 = vpop.xlane.xlu0 %6293
        %v6295 = vsel %vm495, %v6289, -inf
        %6296 = vmax.xlane.f32.xlu0 %v6295
        %v6297 = vpop.xlane.xlu0 %6296
        %v6298 = vsel %vm495, %v6290, -inf
        %6299 = vmax.xlane.f32.xlu0 %v6298
        %v6300 = vpop.xlane.xlu0 %6299
        %v6301 = vsel %vm495, %v6291, -inf
        %6302 = vmax.xlane.f32.xlu0 %v6301
        %v6303 = vpop.xlane.xlu0 %6302
        %v6304 = vsub.f32 %v6288, %v6294
        %v6305 = vsub.f32 %v6289, %v6297
        %v6306 = vsub.f32 %v6290, %v6300
        %v6307 = vsub.f32 %v6291, %v6303
        %v6308 = vmul.f32 %v6304, 1.442695
        %v6309 = vpow.pop %v6308
        %v6310 = vmul.f32 %v6305, 1.442695
        %v6311 = vpow.pop %v6310
        %v6312 = vmul.f32 %v6306, 1.442695
        %v6313 = vpow.pop %v6312
        %v6314 = vmul.f32 %v6307, 1.442695
        %v6315 = vpow.pop %v6314
        %v6316 = vsel %vm495, %v6309, 0.0
        %6317 = vadd.xlane.f32.xlu0 %v6316
        %v6318 = vpop.xlane.xlu0 %6317
        %v6319 = vsel %vm495, %v6311, 0.0
        %6320 = vadd.xlane.f32.xlu0 %v6319
        %v6321 = vpop.xlane.xlu0 %6320
        %v6322 = vsel %vm495, %v6313, 0.0
        %6323 = vadd.xlane.f32.xlu0 %v6322
        %v6324 = vpop.xlane.xlu0 %6323
        %v6325 = vsel %vm495, %v6315, 0.0
        %6326 = vadd.xlane.f32.xlu0 %v6325
        %v6327 = vpop.xlane.xlu0 %6326
        %v6328 = vrcp.pop %v6318
        %v6329 = vrcp.pop %v6321
        %v6330 = vrcp.pop %v6324
        %v6331 = vrcp.pop %v6327
        %v6332 = vmul.f32 %v6309, %v6328
        %v6333 = vmul.f32 %v6311, %v6329
        %v6334 = vmul.f32 %v6313, %v6330
        %v6335 = vmul.f32 %v6315, %v6331
        %6338 = vrot.lane.b32.xlu0 %v6334, 16
        %v6339 = vpop.permute.xlu0 %6338
        %6340 = vrot.lane.b32.xlu0 %v6335, 16
        %v6341 = vpop.permute.xlu0 %6340
        %v6344 = vsel %vm495, %v6332, %v6339
        %v6345 = vsel %vm495, %v6333, %v6341
        %6346 = vrot.lane.b32.xlu0 %v4579, 112
        %v6347 = vpop.permute.xlu0 %6346
        %6348 = vrot.lane.b32.xlu0 %v4584, 112
        %v6349 = vpop.permute.xlu0 %6348
        %v6353 = vsel %vm554, %v6344, 0
        %v6356 = vsel %vm554, %v6345, 0
        %6358 = vmatprep.subr.mxu0 0.0
        %6359 = vmatpush1.msra.mxu0 0.0
        %6360 = vmatprep.subr.mxu0 0.0
        %6361 = vmatpush1.msra.mxu0 0.0
        %6362 = vmatprep.subr.mxu0 0.0
        %6363 = vmatpush1.msra.mxu0 0.0
        %6364 = vmatprep.subr.mxu0 0.0
        %6365 = vmatpush1.msra.mxu0 0.0
        %6366 = vmatprep.subr.mxu0 0.0
        %6367 = vmatpush1.msra.mxu0 0.0
        %6368 = vmatprep.subr.mxu0 0.0
        %6369 = vmatpush1.msra.mxu0 0.0
        %6370 = vmatprep.subr.mxu0 0.0
        %6371 = vmatpush1.msra.mxu0 0.0
        %6372 = vmatprep.subr.mxu0 0.0
        %6373 = vmatpush1.msra.mxu0 0.0
        %6374 = vmatprep.subr.mxu0 0.0
        %6375 = vmatpush1.msra.mxu0 0.0
        %6376 = vmatprep.subr.mxu0 0.0
        %6377 = vmatpush1.msra.mxu0 0.0
        %6378 = vmatprep.subr.mxu0 0.0
        %6379 = vmatpush1.msra.mxu0 0.0
        %6380 = vmatprep.subr.mxu0 0.0
        %6381 = vmatpush1.msra.mxu0 0.0
        %6382 = vmatprep.subr.mxu0 0.0
        %6383 = vmatpush1.msra.mxu0 %v6349
        %6384 = vmatprep.subr.mxu0 0.0
        %6385 = vmatpush1.msra.mxu0 %v6347
        %6386 = vmatprep.subr.mxu0 0.0
        %6387 = vmatpush1.msra.mxu0 %v4584
        %6388 = vmatprep.subr.mxu0 0.0
        %6389 = vmatpush1.msra.mxu0 %v4579
        %6390 = vmatprep.subr.mxu0 0.0
        %6391 = vmatpush2.msra.mxu0 0.0
        %6392 = vmatprep.subr.mxu0 0.0
        %6393 = vmatpush2.msra.mxu0 0.0
        %6394 = vmatprep.subr.mxu0 0.0
        %6395 = vmatpush2.msra.mxu0 0.0
        %6396 = vmatprep.subr.mxu0 0.0
        %6397 = vmatpush2.msra.mxu0 0.0
        %6398 = vmatprep.subr.mxu0 0.0
        %6399 = vmatpush2.msra.mxu0 0.0
        %6400 = vmatprep.subr.mxu0 0.0
        %6401 = vmatpush2.msra.mxu0 0.0
        %6402 = vmatprep.subr.mxu0 0.0
        %6403 = vmatpush2.msra.mxu0 0.0
        %6404 = vmatprep.subr.mxu0 0.0
        %6405 = vmatpush2.msra.mxu0 0.0
        %6406 = vmatprep.subr.mxu0 0.0
        %6407 = vmatpush2.msra.mxu0 0.0
        %6408 = vmatprep.subr.mxu0 0.0
        %6409 = vmatpush2.msra.mxu0 0.0
        %6410 = vmatprep.subr.mxu0 0.0
        %6411 = vmatpush2.msra.mxu0 0.0
        %6412 = vmatprep.subr.mxu0 0.0
        %6413 = vmatpush2.msra.mxu0 0.0
        %6414 = vmatprep.subr.mxu0 0.0
        %6415 = vmatpush2.msra.mxu0 0.0
        %6416 = vmatprep.subr.mxu0 0.0
        %6417 = vmatpush2.msra.mxu0 0.0
        %6418 = vmatprep.subr.mxu0 0.0
        %6419 = vmatpush2.msra.mxu0 0.0
        %6420 = vmatprep.subr.mxu0 0.0
        %6421 = vmatpush2.msra.mxu0 0.0
        %6422 = vmatprep.mubr.f32.mxu0 0.0
        %6423 = vmatmul.mubr.f32.gmra.mxu0 %v6353
        %v6424 = vpop.f32.mrf.mxu0
        %v6425 = vadd.f32 0.0, %v6424
        %v6426 = vpop.f32.mrf.mxu0
        %6427 = vmatprep.mubr.f32.mxu0 0.0
        %6428 = vmatmul.mubr.f32.gmra.mxu0 %v6356
        %v6429 = vpop.f32.mrf.mxu0
        %v6430 = vadd.f32 0.0, %v6429
        %v6431 = vpop.f32.mrf.mxu0
        %6432 = vdwg.mxu0
        %v6433 = vmul.f32 %v6425, 0.5
        %v6434 = vmul.f32 %v6430, 0.5
        %v6435 = vlaneseq
        %v6436 = vshrl.u32 %v6435, 7
        %v6437 = vsub.s32 0, %v6436
        %v6438 = vrot.slane %v4393, %v6437
        %v6439 = vadd.f32 %v4816, %v6438
        %v6440 = vadd.f32 %v4817, %v6438
        %v6441 = vadd.f32 %v5047, %v6438
        %v6442 = vadd.f32 %v5048, %v6438
        %v6443 = vadd.f32 %v5278, %v6438
        %v6444 = vadd.f32 %v5279, %v6438
        %v6445 = vadd.f32 %v5509, %v6438
        %v6446 = vadd.f32 %v5510, %v6438
        %v6447 = vadd.f32 %v5740, %v6438
        %v6448 = vadd.f32 %v5741, %v6438
        %v6449 = vadd.f32 %v5971, %v6438
        %v6450 = vadd.f32 %v5972, %v6438
        %v6451 = vadd.f32 %v6202, %v6438
        %v6452 = vadd.f32 %v6203, %v6438
        %v6453 = vadd.f32 %v6433, %v6438
        %v6454 = vadd.f32 %v6434, %v6438
        %v6455 = vld [vmem:[%s2 + $0x60] sm:$0xff]
        %v6456 = vld [vmem:[%s2 + $0x68] sm:$0xff]
        %6458 = vset.pattern.permute.xlu0 0
        %6459 = vperm.xlu0 %6458, %v6456
        %v6460 = vpop.permute.xlu0 %6459
        %v6463 = vsel %vm495, %v6455, 0
        %v6466 = vsel %vm495, %v6439, 0
        %v6469 = vsel %vm495, %v6440, 0
        %v6472 = vsel %vm495, %v6441, 0
        %v6475 = vsel %vm495, %v6442, 0
        %v6478 = vsel %vm495, %v6443, 0
        %v6481 = vsel %vm495, %v6444, 0
        %v6484 = vsel %vm495, %v6445, 0
        %v6487 = vsel %vm495, %v6446, 0
        %v6490 = vsel %vm495, %v6447, 0
        %v6493 = vsel %vm495, %v6448, 0
        %v6496 = vsel %vm495, %v6449, 0
        %v6499 = vsel %vm495, %v6450, 0
        %v6502 = vsel %vm495, %v6451, 0
        %v6505 = vsel %vm495, %v6452, 0
        %v6508 = vsel %vm495, %v6453, 0
        %v6511 = vsel %vm495, %v6454, 0
        %6513 = vmatprep.subr.mxu0 0.0
        %6514 = vmatpush1.xpose.msra.mxu0 %v6511
        %6515 = vmatprep.subr.mxu0 0.0
        %6516 = vmatpush1.xpose.msra.mxu0 %v6508
        %6517 = vmatprep.subr.mxu0 0.0
        %6518 = vmatpush1.xpose.msra.mxu0 %v6505
        %6519 = vmatprep.subr.mxu0 0.0
        %6520 = vmatpush1.xpose.msra.mxu0 %v6502
        %6521 = vmatprep.subr.mxu0 0.0
        %6522 = vmatpush1.xpose.msra.mxu0 %v6499
        %6523 = vmatprep.subr.mxu0 0.0
        %6524 = vmatpush1.xpose.msra.mxu0 %v6496
        %6525 = vmatprep.subr.mxu0 0.0
        %6526 = vmatpush1.xpose.msra.mxu0 %v6493
        %6527 = vmatprep.subr.mxu0 0.0
        %6528 = vmatpush1.xpose.msra.mxu0 %v6490
        %6529 = vmatprep.subr.mxu0 0.0
        %6530 = vmatpush1.xpose.msra.mxu0 %v6487
        %6531 = vmatprep.subr.mxu0 0.0
        %6532 = vmatpush1.xpose.msra.mxu0 %v6484
        %6533 = vmatprep.subr.mxu0 0.0
        %6534 = vmatpush1.xpose.msra.mxu0 %v6481
        %6535 = vmatprep.subr.mxu0 0.0
        %6536 = vmatpush1.xpose.msra.mxu0 %v6478
        %6537 = vmatprep.subr.mxu0 0.0
        %6538 = vmatpush1.xpose.msra.mxu0 %v6475
        %6539 = vmatprep.subr.mxu0 0.0
        %6540 = vmatpush1.xpose.msra.mxu0 %v6472
        %6541 = vmatprep.subr.mxu0 0.0
        %6542 = vmatpush1.xpose.msra.mxu0 %v6469
        %6543 = vmatprep.subr.mxu0 0.0
        %6544 = vmatpush1.xpose.msra.mxu0 %v6466
        %6545 = vmatprep.subr.mxu0 0.0
        %6546 = vmatpush2.xpose.msra.mxu0 0.0
        %6547 = vmatprep.subr.mxu0 0.0
        %6548 = vmatpush2.xpose.msra.mxu0 0.0
        %6549 = vmatprep.subr.mxu0 0.0
        %6550 = vmatpush2.xpose.msra.mxu0 0.0
        %6551 = vmatprep.subr.mxu0 0.0
        %6552 = vmatpush2.xpose.msra.mxu0 0.0
        %6553 = vmatprep.subr.mxu0 0.0
        %6554 = vmatpush2.xpose.msra.mxu0 0.0
        %6555 = vmatprep.subr.mxu0 0.0
        %6556 = vmatpush2.xpose.msra.mxu0 0.0
        %6557 = vmatprep.subr.mxu0 0.0
        %6558 = vmatpush2.xpose.msra.mxu0 0.0
        %6559 = vmatprep.subr.mxu0 0.0
        %6560 = vmatpush2.xpose.msra.mxu0 0.0
        %6561 = vmatprep.subr.mxu0 0.0
        %6562 = vmatpush2.xpose.msra.mxu0 0.0
        %6563 = vmatprep.subr.mxu0 0.0
        %6564 = vmatpush2.xpose.msra.mxu0 0.0
        %6565 = vmatprep.subr.mxu0 0.0
        %6566 = vmatpush2.xpose.msra.mxu0 0.0
        %6567 = vmatprep.subr.mxu0 0.0
        %6568 = vmatpush2.xpose.msra.mxu0 0.0
        %6569 = vmatprep.subr.mxu0 0.0
        %6570 = vmatpush2.xpose.msra.mxu0 0.0
        %6571 = vmatprep.subr.mxu0 0.0
        %6572 = vmatpush2.xpose.msra.mxu0 0.0
        %6573 = vmatprep.subr.mxu0 0.0
        %6574 = vmatpush2.xpose.msra.mxu0 0.0
        %6575 = vmatprep.subr.mxu0 0.0
        %6576 = vmatpush2.xpose.msra.mxu0 0.0
        %6577 = vmatprep.mubr.f32.mxu0 0.0
        %6578 = vmatmul.mubr.f32.gmra.mxu0 %v6463
        %v6579 = vpop.f32.mrf.mxu0
        %v6580 = vadd.f32 %v6460, %v6579
        %v6581 = vpop.f32.mrf.mxu0
        %6582 = vdwg.mxu0
        %v6583 = vmul.f32 %v6580, 1.442695
        %v6584 = vpow.pop %v6583
        %vm6585 = vcmask 1043456
        %v6586 = vsel %vm6585, %v6580, %v6584
        %6587 = vst [vmem:[%s180] sm:$0xff] %v6586
        %s6588 = sand.u32 %s98, 1
        %s6589 = scalar_lea.sflag [#allocation3], %s6588
        %s6590 = sand.u32 %s98, 1
        %s6591 = smul.addr %s6590, 8
        %s6592 = scalar_lea.vmem [#allocation2], %s6591
        // Predicated region
        $region33: #{tpu_custom_call.1} parent=31 // pred_check
          %p6593 = pneg %p108
        $region34: #{tpu_custom_call.1} parent=31 // pred_check_branch
          %6595 = sbr.rel (%p6593) target = $region36
        $region35: #{tpu_custom_call.1} parent=31 // pred_region
          %s6597 = ssub.s32 128, 128
          %6598 = vsyncadd %s6589, %s6597
          %s6599 = smul.addr %s17, 128
          %s6600 = scalar_lea.hbm %s3, %s6599
          %s6602 = sshll.u32 %s6592, 4
          %s6603 = int_to_ptr.vmem [resolvable:$true] %s6602
          %6605 = dma.vmem_to_hbm [thread:$0]  %s6603, 128, %s6600, %s6589
        $region36: #{tpu_custom_call.1} parent=31 // pred_fallthru
          _
      $region32: #{tpu_custom_call.1} parent=5 // pred_fallthru
        _
      %p6606 = scmp.le.s32.totalorder 2, %s12
      // Predicated region
      $region37: #{tpu_custom_call.1} parent=5 // pred_check
        %p6607 = pneg %p6606
      $region38: #{tpu_custom_call.1} parent=5 // pred_check_branch
        %6609 = sbr.rel (%p6607) target = $region40
      $region39: #{tpu_custom_call.1} parent=5 // pred_region
        %s6610 = ssub.s32 %s12, 2
        // Predicated region
        $region41: #{tpu_custom_call.1} parent=39 // pred_check
          %p6611 = pneg %p114
        $region42: #{tpu_custom_call.1} parent=39 // pred_check_branch
          %6613 = sbr.rel (%p6611) target = $region44
        $region43: #{tpu_custom_call.1} parent=39 // pred_region
          %s6614 = sand.u32 %s99, 1
          %s6615 = scalar_lea.sflag [#allocation3], %s6614
          %s6616 = sand.u32 %s99, 1
          %s6617 = smul.addr %s6616, 8
          %s6618 = scalar_lea.vmem [#allocation2], %s6617
          %6619 = dma.done %s6615, 128
        $region44: #{tpu_custom_call.1} parent=39 // pred_fallthru
          _
      $region40: #{tpu_custom_call.1} parent=5 // pred_fallthru
        _
    $region6: #{tpu_custom_call.1} parent=1 // loop_footer
      %s16 = sadd.s32 1, %s12
    $region7: #{tpu_custom_call.1} parent=1 // loop_footer_branch
      %11 = sbr.rel target = $region3
    $region8: #{tpu_custom_call.1} parent=1 // loop_exit
      _
    %6620 = vsyncpa [#allocation3], 1
    %s6621 = scalar_lea.sflag [#allocation3], 1
    %6622 = vsyncpa %s6621, 1

</llo_original>
